<compile_context>
chip_gen: v7x
topology: tpu7x:2x2x1
jax: 0.10.0
libtpu: 0.0.40
codegen_flags: <defaults>
</compile_context>

<pallas_src>
import jax
import jax.numpy as jnp
from jax import lax
from jax.experimental import pallas as pl
from jax.experimental.pallas import tpu as pltpu


def _tap_src(e, d):
    """Output parity e (0/1) + 3x3 tap offset d (0..2) -> (source 2x2 slot
    parity, pooled-coordinate offset in {-1, 0, +1})."""
    dr = (e + d + 1) % 2
    dp = (e - 1 + d - dr) // 2
    return dr, dp


def _make_kernel(H, W, Cin, TH):
    HWt = TH * W

    def kernel(xs_ref, sub_ref, scale_ref, shift_ref, w_ref, b_ref,
               out_ref, qpad_ref, imcol_ref):
        rt = pl.program_id(1)

        # Build the 4 pooled-resolution quadrant planes (unpool slot + BN +
        # ReLU) once per batch element; scratch persists across the row-tile
        # axis, and the interior is fully rewritten here so the halo stays 0.
        @pl.when(rt == 0)
        def _build_qpad():
            xs = xs_ref[0]                                  # (H, W, Cin) f32
            sub = sub_ref[0].astype(jnp.int32)              # widen i8 -> i32
            shift_b = jnp.broadcast_to(shift_ref[...], (H, W, Cin))
            y = xs * scale_ref[...] + shift_b               # BN affine, hoisted
            dt = qpad_ref.dtype
            zrow = jnp.zeros((1, W + 2, Cin), dt)
            zcol = jnp.zeros((H + 2, 1, Cin), dt)
            for s in range(4):
                # Non-selected positions unpool to 0 -> BN gives shift -> ReLU.
                q = jnp.maximum(jnp.where(sub == s, y, shift_b), 0.0)
                qpad_ref[s, pl.ds(1, H), pl.ds(1, W), :] = q.astype(dt)
                # zero only the 1-px halo, and only when qpad is (re)built
                qpad_ref[s, pl.ds(0, 1), :, :] = zrow
                qpad_ref[s, pl.ds(H + 1, 1), :, :] = zrow
                qpad_ref[s, :, pl.ds(0, 1), :] = zcol
                qpad_ref[s, :, pl.ds(W + 1, 1), :] = zcol

        r0 = pl.multiple_of(rt * TH, TH)

        # 3x3 SAME conv of the (implicit) unpooled image, one output parity
        # (er, ec) at a time: build ONE im2col matrix (TH*W, 9*Cin) for this
        # row tile and issue a single K = 9*Cin MXU matmul (operands already
        # in matmul dtype, f32 accumulation), add bias, lane-dense store.
        for er in range(2):
            for ec in range(2):
                for dh in range(3):
                    dr, di = _tap_src(er, dh)
                    for dw in range(3):
                        dc, dj = _tap_src(ec, dw)
                        s = 2 * dr + dc
                        t = dh * 3 + dw
                        win = qpad_ref[s, pl.ds(r0 + 1 + di, TH),
                                       pl.ds(1 + dj, W), :]
                        imcol_ref[:, pl.ds(t * Cin, Cin)] = win.reshape(HWt, Cin)
                acc = jnp.dot(imcol_ref[...], w_ref[...],
                              preferred_element_type=jnp.float32)
                out_ref[0, er, ec] = (acc + b_ref[...]).astype(out_ref.dtype)

    return kernel


def decoder_block_forward(x, x_trace, indices, params, eps=1e-5,
                          matmul_dtype=jnp.bfloat16):
    """DecoderBlock.forward.  x, x_trace, indices are pooled NCHW (N,Cin,H,W).

    NOTE: `indices` must come from nn.MaxPool2d(2, return_indices=True), i.e.
    each flat index lies inside its own pooled cell's 2x2 window; other pooling
    configurations (ceil_mode, stride != kernel) are not supported here.
    """
    gamma = params["gamma"].astype(jnp.float32)
    beta = params["beta"].astype(jnp.float32)
    w_oihw = params["w"].astype(jnp.float32)
    b = params["b"].astype(jnp.float32)

    xs = x if x_trace is None else x + x_trace
    xs = xs.astype(jnp.float32)
    N, Cin, H, W = xs.shape
    H2, W2 = 2 * H, 2 * W
    Cout = w_oihw.shape[0]

    # Training-mode BatchNorm statistics of the *unpooled* tensor, computed
    # from the pooled tensor in ONE pass (the unpool scatter preserves channel
    # sums and sums-of-squares; the remaining 3/4 entries are zeros).
    count = N * H2 * W2
    s1 = jnp.sum(xs, axis=(0, 2, 3))
    s2 = jnp.sum(xs * xs, axis=(0, 2, 3))
    mean = s1 / count
    var = s2 / count - mean * mean                       # biased variance
    scale = gamma * lax.rsqrt(var + eps)
    shift = beta - mean * scale

    # Compact 2x2 sub-index (0..3) from the MaxPool2d flat output indices,
    # stored as int8 (4x less HBM/DMA traffic than int32).
    sub = (((indices // W2) % 2) * 2 + ((indices % W2) % 2)).astype(jnp.int8)

    # NCHW -> NHWC at pooled resolution (1/4 of the unpooled footprint).
    xs_nhwc = jnp.transpose(xs, (0, 2, 3, 1))
    sub_nhwc = jnp.transpose(sub, (0, 2, 3, 1))

    # Conv weights as a (9*Cin, Cout_pad) im2col matrix; Cout padded to a
    # multiple of 128 so the kernel's output stores are lane-dense.
    cout_pad = max(128, ((Cout + 127) // 128) * 128)
    wmat = jnp.transpose(w_oihw, (2, 3, 1, 0)).reshape(9 * Cin, Cout)
    wmat = jnp.pad(wmat, ((0, 0), (0, cout_pad - Cout))).astype(matmul_dtype)
    bias = jnp.pad(b, (0, cout_pad - Cout)).reshape(1, cout_pad)

    mm_bytes = jnp.dtype(matmul_dtype).itemsize

    def working_set(th):
        qpad = 4 * (H + 2) * (W + 2) * Cin * mm_bytes
        imcol = th * W * 9 * Cin * mm_bytes
        inblk = 2 * (H * W * Cin * (4 + 1) + 2 * Cin * 4)     # xs f32 + sub i8
        wblk = 2 * (9 * Cin * cout_pad * mm_bytes + cout_pad * 4)
        outblk = 2 * (4 * th * W * cout_pad * 4)              # f32, double-buffered
        return qpad + imcol + inblk + wblk + outblk

    try:
        vmem_cap = int(pltpu.get_tpu_info().vmem_capacity_bytes)
    except Exception:
        vmem_cap = 64 * 1024 * 1024                            # conservative (v7x)

    # Largest pooled-row tile whose per-step working set fits the VMEM budget.
    # On v5e/v6e (128 MiB) this keeps whole-image tiles (fewer per-step
    # overheads); on v7x (64 MiB) it falls back to row tiling automatically.
    budget = min(int(0.5 * vmem_cap), 96 * 1024 * 1024)
    cands = [t for t in range(H, 0, -1)
             if H % t == 0 and (t == H or (t * W) % 8 == 0)]
    TH = cands[-1]
    for t in cands:
        if working_set(t) <= budget:
            TH = t
            break
    RT = H // TH

    need = working_set(TH)
    vmem_limit = max(32 * 1024 * 1024,
                     min(int(0.85 * vmem_cap), 2 * need + (4 << 20)))
    vmem_limit = max(vmem_limit, need + (4 << 20))

    hw = H * W
    flops = 2 * N * 4 * hw * 9 * Cin * cout_pad
    bytes_accessed = (4 * xs_nhwc.size + sub_nhwc.size
                      + 4 * N * 4 * hw * cout_pad
                      + mm_bytes * wmat.size + 4 * (bias.size + 2 * Cin))

    kernel = _make_kernel(H, W, Cin, TH)

    out5 = pl.pallas_call(
        kernel,
        out_shape=jax.ShapeDtypeStruct((N, 2, 2, hw, cout_pad), jnp.float32),
        grid_spec=pltpu.PrefetchScalarGridSpec(
            num_scalar_prefetch=0,
            grid=(N, RT),
            in_specs=[
                pl.BlockSpec((1, H, W, Cin), lambda n, r: (n, 0, 0, 0)),
                pl.BlockSpec((1, H, W, Cin), lambda n, r: (n, 0, 0, 0)),
                pl.BlockSpec((1, 1, Cin), lambda n, r: (0, 0, 0)),
                pl.BlockSpec((1, 1, Cin), lambda n, r: (0, 0, 0)),
                pl.BlockSpec((9 * Cin, cout_pad), lambda n, r: (0, 0)),
                pl.BlockSpec((1, cout_pad), lambda n, r: (0, 0)),
            ],
            out_specs=pl.BlockSpec((1, 2, 2, TH * W, cout_pad),
                                   lambda n, r: (n, 0, 0, r, 0)),
            scratch_shapes=[
                pltpu.VMEM((4, H + 2, W + 2, Cin), matmul_dtype),  # padded q planes
                pltpu.VMEM((TH * W, 9 * Cin), matmul_dtype),       # im2col buffer
            ],
        ),
        compiler_params=pltpu.CompilerParams(
            dimension_semantics=("parallel", "arbitrary"),
            vmem_limit_bytes=vmem_limit,
        ),
        cost_estimate=pl.CostEstimate(flops=flops, transcendentals=0,
                                      bytes_accessed=bytes_accessed),
    )(xs_nhwc, sub_nhwc,
      scale.reshape(1, 1, Cin), shift.reshape(1, 1, Cin),
      wmat, bias)

    # (n, er, ec, i*W+j, c_pad) -> NCHW (n, c, 2i+er, 2j+ec)
    out = out5[..., :Cout].reshape(N, 2, 2, H, W, Cout)
    out = jnp.transpose(out, (0, 5, 3, 1, 4, 2)).reshape(N, Cout, H2, W2)
    return out


def _reference_nchw(x, x_trace, indices, params, eps=1e-5):
    """Pure-JAX reference mirroring the PyTorch module (training-mode BN)."""
    gamma, beta, w, b = params["gamma"], params["beta"], params["w"], params["b"]
    if x_trace is None:
        x_trace = jnp.zeros_like(x)
    xs = x + x_trace
    N, C, H, W = xs.shape
    H2, W2 = 2 * H, 2 * W
    up = jnp.zeros((N, C, H2 * W2), xs.dtype)
    n_idx = jnp.arange(N)[:, None, None]
    c_idx = jnp.arange(C)[None, :, None]
    up = up.at[n_idx, c_idx, indices.reshape(N, C, H * W)].set(xs.reshape(N, C, H * W))
    up = up.reshape(N, C, H2, W2)
    mean = up.mean(axis=(0, 2, 3), keepdims=True)
    var = up.var(axis=(0, 2, 3), keepdims=True)
    y = (up - mean) / jnp.sqrt(var + eps) * gamma[None, :, None, None] \
        + beta[None, :, None, None]
    y = jnp.maximum(y, 0.0)
    out = lax.conv_general_dilated(y, w, (1, 1), ((1, 1), (1, 1)),
                                   dimension_numbers=("NCHW", "OIHW", "NCHW"))
    return out + b[None, :, None, None]


if __name__ == "__main__":
    key = jax.random.PRNGKey(0)
    k1, k2, k3, k4, k5, k6, k7 = jax.random.split(key, 7)

    N, Cin, Cout, H, W = 2, 4, 4, 16, 16
    H2, W2 = 2 * H, 2 * W

    x = jax.random.normal(k1, (N, Cin, H, W), jnp.float32)
    x_trace = jax.random.normal(k2, (N, Cin, H, W), jnp.float32)

    # indices as produced by nn.MaxPool2d(2, return_indices=True): flat index
    # into the (H2, W2) plane, lying inside each pooled cell's 2x2 window.
    rh = jax.random.randint(k3, (N, Cin, H, W), 0, 2)
    rw = jax.random.randint(k4, (N, Cin, H, W), 0, 2)
    hh = jnp.arange(H)[None, None, :, None]
    ww = jnp.arange(W)[None, None, None, :]
    indices = ((2 * hh + rh) * W2 + (2 * ww + rw)).astype(jnp.int32)

    params = {
        "gamma": 1.0 + 0.1 * jax.random.normal(k5, (Cin,), jnp.float32),
        "beta": 0.1 * jax.random.normal(k6, (Cin,), jnp.float32),
        "w": 0.1 * jax.random.normal(k7, (Cout, Cin, 3, 3), jnp.float32),
        "b": 0.05 * jnp.arange(Cout, dtype=jnp.float32),
    }

    ref = _reference_nchw(x, x_trace, indices, params)

    # exact path (f32 MXU operands / f32 scratch): tight tolerance
    out_f32 = jax.block_until_ready(
        decoder_block_forward(x, x_trace, indices, params,
                              matmul_dtype=jnp.float32))
    assert out_f32.shape == (N, Cout, H2, W2)
    assert jnp.allclose(out_f32, ref, atol=1e-4, rtol=1e-4), \
        float(jnp.max(jnp.abs(out_f32 - ref)))

    # default perf path (bf16 MXU operands + bf16 scratch, f32 accumulation)
    out_bf16 = jax.block_until_ready(
        decoder_block_forward(x, x_trace, indices, params))
    assert jnp.allclose(out_bf16, ref, atol=5e-2, rtol=5e-2), \
        float(jnp.max(jnp.abs(out_bf16 - ref)))

    print("KERNEL_OK")
</pallas_src>

<mosaic_0001>
module attributes {stable_mosaic.version = 11 : i64} {
  func.func @kernel(%arg0: i32, %arg1: i32, %arg2: memref<1x16x16x4xf32, #tpu.memory_space<vmem>>, %arg3: memref<1x16x16x4xi8, #tpu.memory_space<vmem>>, %arg4: memref<1x1x4xf32, #tpu.memory_space<vmem>>, %arg5: memref<1x1x4xf32, #tpu.memory_space<vmem>>, %arg6: memref<36x128xf32, #tpu.memory_space<vmem>>, %arg7: memref<1x128xf32, #tpu.memory_space<vmem>>, %arg8: memref<1x2x2x256x128xf32, #tpu.memory_space<vmem>>, %arg9: memref<4x18x18x4xf32, #tpu.memory_space<vmem>>, %arg10: memref<256x36xf32, #tpu.memory_space<vmem>>) attributes {dimension_semantics = [#tpu.dimension_semantics<parallel>, #tpu.dimension_semantics<arbitrary>], iteration_bounds = array<i64: 2, 1>, scalar_prefetch = 0 : i64, scratch_operands = 2 : i64, tpu.core_type = #tpu.core_type<tc>, window_params = [{transform_indices = @transform_0, window_bounds = array<i64: 1, 16, 16, 4>}, {transform_indices = @transform_1, window_bounds = array<i64: 1, 16, 16, 4>}, {pipeline_mode = #tpu.pipeline_mode<synchronous>, transform_indices = @transform_2, window_bounds = array<i64: 1, 1, 4>}, {pipeline_mode = #tpu.pipeline_mode<synchronous>, transform_indices = @transform_3, window_bounds = array<i64: 1, 1, 4>}, {pipeline_mode = #tpu.pipeline_mode<synchronous>, transform_indices = @transform_4, window_bounds = array<i64: 36, 128>}, {pipeline_mode = #tpu.pipeline_mode<synchronous>, transform_indices = @transform_5, window_bounds = array<i64: 1, 128>}, {transform_indices = @transform_6, window_bounds = array<i64: 1, 2, 2, 256, 128>}]} {
    %c0_i32 = arith.constant 0 : i32
    %0 = arith.cmpi eq, %arg1, %c0_i32 : i32
    %1 = arith.extui %0 : i1 to i32
    %c0_i32_0 = arith.constant 0 : i32
    %2 = arith.cmpi ne, %1, %c0_i32_0 : i32
    scf.if %2 {
      %c0_286 = arith.constant 0 : index
      %c0_287 = arith.constant 0 : index
      %c0_288 = arith.constant 0 : index
      %c0_289 = arith.constant 0 : index
      %293 = vector.load %arg2[%c0_286, %c0_287, %c0_288, %c0_289] : memref<1x16x16x4xf32, #tpu.memory_space<vmem>>, vector<1x16x16x4xf32>
      %294 = vector.shape_cast %293 : vector<1x16x16x4xf32> to vector<16x16x4xf32>
      %c0_290 = arith.constant 0 : index
      %c0_291 = arith.constant 0 : index
      %c0_292 = arith.constant 0 : index
      %c0_293 = arith.constant 0 : index
      %295 = vector.load %arg3[%c0_290, %c0_291, %c0_292, %c0_293] : memref<1x16x16x4xi8, #tpu.memory_space<vmem>>, vector<1x16x16x4xi8>
      %296 = vector.shape_cast %295 : vector<1x16x16x4xi8> to vector<16x16x4xi8>
      %297 = arith.extsi %296 : vector<16x16x4xi8> to vector<16x16x4xi32>
      %c0_294 = arith.constant 0 : index
      %c0_295 = arith.constant 0 : index
      %c0_296 = arith.constant 0 : index
      %298 = vector.load %arg5[%c0_294, %c0_295, %c0_296] : memref<1x1x4xf32, #tpu.memory_space<vmem>>, vector<1x1x4xf32>
      %299 = vector.shape_cast %298 : vector<1x1x4xf32> to vector<1x1x4xf32>
      %300 = vector.broadcast %299 : vector<1x1x4xf32> to vector<16x16x4xf32>
      %c0_297 = arith.constant 0 : index
      %c0_298 = arith.constant 0 : index
      %c0_299 = arith.constant 0 : index
      %301 = vector.load %arg4[%c0_297, %c0_298, %c0_299] : memref<1x1x4xf32, #tpu.memory_space<vmem>>, vector<1x1x4xf32>
      %302 = vector.broadcast %301 : vector<1x1x4xf32> to vector<16x16x4xf32>
      %303 = arith.mulf %294, %302 : vector<16x16x4xf32>
      %304 = arith.addf %303, %300 : vector<16x16x4xf32>
      %cst_300 = arith.constant 0.000000e+00 : f32
      %305 = vector.broadcast %cst_300 : f32 to vector<1x18x4xf32>
      %cst_301 = arith.constant 0.000000e+00 : f32
      %306 = vector.broadcast %cst_301 : f32 to vector<18x1x4xf32>
      %c0_i32_302 = arith.constant 0 : i32
      %307 = vector.broadcast %c0_i32_302 : i32 to vector<16x16x4xi32>
      %308 = arith.cmpi eq, %297, %307 : vector<16x16x4xi32>
      %309 = arith.select %308, %304, %300 : vector<16x16x4xi1>, vector<16x16x4xf32>
      %cst_303 = arith.constant 0.000000e+00 : f32
      %310 = vector.broadcast %cst_303 : f32 to vector<16x16x4xf32>
      %311 = arith.maximumf %309, %310 : vector<16x16x4xf32>
      %c0_304 = arith.constant 0 : index
      %c1_305 = arith.constant 1 : index
      %c1_306 = arith.constant 1 : index
      %c0_307 = arith.constant 0 : index
      %312 = vector.load %arg9[%c0_304, %c1_305, %c1_306, %c0_307] : memref<4x18x18x4xf32, #tpu.memory_space<vmem>>, vector<1x16x16x4xf32>
      %313 = vector.shape_cast %312 : vector<1x16x16x4xf32> to vector<16x16x4xf32>
      %314 = vector.shape_cast %311 : vector<16x16x4xf32> to vector<1x16x16x4xf32>
      tpu.vector_store %arg9[%c0_304, %c1_305, %c1_306, %c0_307], %314 {strides = array<i32>} : memref<4x18x18x4xf32, #tpu.memory_space<vmem>>, vector<1x16x16x4xf32>,
      %c0_308 = arith.constant 0 : index
      %c0_309 = arith.constant 0 : index
      %c0_310 = arith.constant 0 : index
      %c0_311 = arith.constant 0 : index
      %315 = vector.load %arg9[%c0_308, %c0_309, %c0_310, %c0_311] : memref<4x18x18x4xf32, #tpu.memory_space<vmem>>, vector<1x1x18x4xf32>
      %316 = vector.shape_cast %315 : vector<1x1x18x4xf32> to vector<1x18x4xf32>
      %317 = vector.shape_cast %305 : vector<1x18x4xf32> to vector<1x1x18x4xf32>
      tpu.vector_store %arg9[%c0_308, %c0_309, %c0_310, %c0_311], %317 {strides = array<i32>} : memref<4x18x18x4xf32, #tpu.memory_space<vmem>>, vector<1x1x18x4xf32>,
      %c0_312 = arith.constant 0 : index
      %c17 = arith.constant 17 : index
      %c0_313 = arith.constant 0 : index
      %c0_314 = arith.constant 0 : index
      %318 = vector.load %arg9[%c0_312, %c17, %c0_313, %c0_314] : memref<4x18x18x4xf32, #tpu.memory_space<vmem>>, vector<1x1x18x4xf32>
      %319 = vector.shape_cast %318 : vector<1x1x18x4xf32> to vector<1x18x4xf32>
      %320 = vector.shape_cast %305 : vector<1x18x4xf32> to vector<1x1x18x4xf32>
      tpu.vector_store %arg9[%c0_312, %c17, %c0_313, %c0_314], %320 {strides = array<i32>} : memref<4x18x18x4xf32, #tpu.memory_space<vmem>>, vector<1x1x18x4xf32>,
      %c0_315 = arith.constant 0 : index
      %c0_316 = arith.constant 0 : index
      %c0_317 = arith.constant 0 : index
      %c0_318 = arith.constant 0 : index
      %321 = vector.load %arg9[%c0_315, %c0_316, %c0_317, %c0_318] : memref<4x18x18x4xf32, #tpu.memory_space<vmem>>, vector<1x18x1x4xf32>
      %322 = vector.shape_cast %321 : vector<1x18x1x4xf32> to vector<18x1x4xf32>
      %323 = vector.shape_cast %306 : vector<18x1x4xf32> to vector<1x18x1x4xf32>
      tpu.vector_store %arg9[%c0_315, %c0_316, %c0_317, %c0_318], %323 {strides = array<i32>} : memref<4x18x18x4xf32, #tpu.memory_space<vmem>>, vector<1x18x1x4xf32>,
      %c0_319 = arith.constant 0 : index
      %c0_320 = arith.constant 0 : index
      %c17_321 = arith.constant 17 : index
      %c0_322 = arith.constant 0 : index
      %324 = vector.load %arg9[%c0_319, %c0_320, %c17_321, %c0_322] : memref<4x18x18x4xf32, #tpu.memory_space<vmem>>, vector<1x18x1x4xf32>
      %325 = vector.shape_cast %324 : vector<1x18x1x4xf32> to vector<18x1x4xf32>
      %326 = vector.shape_cast %306 : vector<18x1x4xf32> to vector<1x18x1x4xf32>
      tpu.vector_store %arg9[%c0_319, %c0_320, %c17_321, %c0_322], %326 {strides = array<i32>} : memref<4x18x18x4xf32, #tpu.memory_space<vmem>>, vector<1x18x1x4xf32>,
      %c1_i32_323 = arith.constant 1 : i32
      %327 = vector.broadcast %c1_i32_323 : i32 to vector<16x16x4xi32>
      %328 = arith.cmpi eq, %297, %327 : vector<16x16x4xi32>
      %329 = arith.select %328, %304, %300 : vector<16x16x4xi1>, vector<16x16x4xf32>
      %cst_324 = arith.constant 0.000000e+00 : f32
      %330 = vector.broadcast %cst_324 : f32 to vector<16x16x4xf32>
      %331 = arith.maximumf %329, %330 : vector<16x16x4xf32>
      %c1_325 = arith.constant 1 : index
      %c1_326 = arith.constant 1 : index
      %c1_327 = arith.constant 1 : index
      %c0_328 = arith.constant 0 : index
      %332 = vector.load %arg9[%c1_325, %c1_326, %c1_327, %c0_328] : memref<4x18x18x4xf32, #tpu.memory_space<vmem>>, vector<1x16x16x4xf32>
      %333 = vector.shape_cast %332 : vector<1x16x16x4xf32> to vector<16x16x4xf32>
      %334 = vector.shape_cast %331 : vector<16x16x4xf32> to vector<1x16x16x4xf32>
      tpu.vector_store %arg9[%c1_325, %c1_326, %c1_327, %c0_328], %334 {strides = array<i32>} : memref<4x18x18x4xf32, #tpu.memory_space<vmem>>, vector<1x16x16x4xf32>,
      %c1_329 = arith.constant 1 : index
      %c0_330 = arith.constant 0 : index
      %c0_331 = arith.constant 0 : index
      %c0_332 = arith.constant 0 : index
      %335 = vector.load %arg9[%c1_329, %c0_330, %c0_331, %c0_332] : memref<4x18x18x4xf32, #tpu.memory_space<vmem>>, vector<1x1x18x4xf32>
      %336 = vector.shape_cast %335 : vector<1x1x18x4xf32> to vector<1x18x4xf32>
      %337 = vector.shape_cast %305 : vector<1x18x4xf32> to vector<1x1x18x4xf32>
      tpu.vector_store %arg9[%c1_329, %c0_330, %c0_331, %c0_332], %337 {strides = array<i32>} : memref<4x18x18x4xf32, #tpu.memory_space<vmem>>, vector<1x1x18x4xf32>,
      %c1_333 = arith.constant 1 : index
      %c17_334 = arith.constant 17 : index
      %c0_335 = arith.constant 0 : index
      %c0_336 = arith.constant 0 : index
      %338 = vector.load %arg9[%c1_333, %c17_334, %c0_335, %c0_336] : memref<4x18x18x4xf32, #tpu.memory_space<vmem>>, vector<1x1x18x4xf32>
      %339 = vector.shape_cast %338 : vector<1x1x18x4xf32> to vector<1x18x4xf32>
      %340 = vector.shape_cast %305 : vector<1x18x4xf32> to vector<1x1x18x4xf32>
      tpu.vector_store %arg9[%c1_333, %c17_334, %c0_335, %c0_336], %340 {strides = array<i32>} : memref<4x18x18x4xf32, #tpu.memory_space<vmem>>, vector<1x1x18x4xf32>,
      %c1_337 = arith.constant 1 : index
      %c0_338 = arith.constant 0 : index
      %c0_339 = arith.constant 0 : index
      %c0_340 = arith.constant 0 : index
      %341 = vector.load %arg9[%c1_337, %c0_338, %c0_339, %c0_340] : memref<4x18x18x4xf32, #tpu.memory_space<vmem>>, vector<1x18x1x4xf32>
      %342 = vector.shape_cast %341 : vector<1x18x1x4xf32> to vector<18x1x4xf32>
      %343 = vector.shape_cast %306 : vector<18x1x4xf32> to vector<1x18x1x4xf32>
      tpu.vector_store %arg9[%c1_337, %c0_338, %c0_339, %c0_340], %343 {strides = array<i32>} : memref<4x18x18x4xf32, #tpu.memory_space<vmem>>, vector<1x18x1x4xf32>,
      %c1_341 = arith.constant 1 : index
      %c0_342 = arith.constant 0 : index
      %c17_343 = arith.constant 17 : index
      %c0_344 = arith.constant 0 : index
      %344 = vector.load %arg9[%c1_341, %c0_342, %c17_343, %c0_344] : memref<4x18x18x4xf32, #tpu.memory_space<vmem>>, vector<1x18x1x4xf32>
      %345 = vector.shape_cast %344 : vector<1x18x1x4xf32> to vector<18x1x4xf32>
      %346 = vector.shape_cast %306 : vector<18x1x4xf32> to vector<1x18x1x4xf32>
      tpu.vector_store %arg9[%c1_341, %c0_342, %c17_343, %c0_344], %346 {strides = array<i32>} : memref<4x18x18x4xf32, #tpu.memory_space<vmem>>, vector<1x18x1x4xf32>,
      %c2_i32 = arith.constant 2 : i32
      %347 = vector.broadcast %c2_i32 : i32 to vector<16x16x4xi32>
      %348 = arith.cmpi eq, %297, %347 : vector<16x16x4xi32>
      %349 = arith.select %348, %304, %300 : vector<16x16x4xi1>, vector<16x16x4xf32>
      %cst_345 = arith.constant 0.000000e+00 : f32
      %350 = vector.broadcast %cst_345 : f32 to vector<16x16x4xf32>
      %351 = arith.maximumf %349, %350 : vector<16x16x4xf32>
      %c2_346 = arith.constant 2 : index
      %c1_347 = arith.constant 1 : index
      %c1_348 = arith.constant 1 : index
      %c0_349 = arith.constant 0 : index
      %352 = vector.load %arg9[%c2_346, %c1_347, %c1_348, %c0_349] : memref<4x18x18x4xf32, #tpu.memory_space<vmem>>, vector<1x16x16x4xf32>
      %353 = vector.shape_cast %352 : vector<1x16x16x4xf32> to vector<16x16x4xf32>
      %354 = vector.shape_cast %351 : vector<16x16x4xf32> to vector<1x16x16x4xf32>
      tpu.vector_store %arg9[%c2_346, %c1_347, %c1_348, %c0_349], %354 {strides = array<i32>} : memref<4x18x18x4xf32, #tpu.memory_space<vmem>>, vector<1x16x16x4xf32>,
      %c2_350 = arith.constant 2 : index
      %c0_351 = arith.constant 0 : index
      %c0_352 = arith.constant 0 : index
      %c0_353 = arith.constant 0 : index
      %355 = vector.load %arg9[%c2_350, %c0_351, %c0_352, %c0_353] : memref<4x18x18x4xf32, #tpu.memory_space<vmem>>, vector<1x1x18x4xf32>
      %356 = vector.shape_cast %355 : vector<1x1x18x4xf32> to vector<1x18x4xf32>
      %357 = vector.shape_cast %305 : vector<1x18x4xf32> to vector<1x1x18x4xf32>
      tpu.vector_store %arg9[%c2_350, %c0_351, %c0_352, %c0_353], %357 {strides = array<i32>} : memref<4x18x18x4xf32, #tpu.memory_space<vmem>>, vector<1x1x18x4xf32>,
      %c2_354 = arith.constant 2 : index
      %c17_355 = arith.constant 17 : index
      %c0_356 = arith.constant 0 : index
      %c0_357 = arith.constant 0 : index
      %358 = vector.load %arg9[%c2_354, %c17_355, %c0_356, %c0_357] : memref<4x18x18x4xf32, #tpu.memory_space<vmem>>, vector<1x1x18x4xf32>
      %359 = vector.shape_cast %358 : vector<1x1x18x4xf32> to vector<1x18x4xf32>
      %360 = vector.shape_cast %305 : vector<1x18x4xf32> to vector<1x1x18x4xf32>
      tpu.vector_store %arg9[%c2_354, %c17_355, %c0_356, %c0_357], %360 {strides = array<i32>} : memref<4x18x18x4xf32, #tpu.memory_space<vmem>>, vector<1x1x18x4xf32>,
      %c2_358 = arith.constant 2 : index
      %c0_359 = arith.constant 0 : index
      %c0_360 = arith.constant 0 : index
      %c0_361 = arith.constant 0 : index
      %361 = vector.load %arg9[%c2_358, %c0_359, %c0_360, %c0_361] : memref<4x18x18x4xf32, #tpu.memory_space<vmem>>, vector<1x18x1x4xf32>
      %362 = vector.shape_cast %361 : vector<1x18x1x4xf32> to vector<18x1x4xf32>
      %363 = vector.shape_cast %306 : vector<18x1x4xf32> to vector<1x18x1x4xf32>
      tpu.vector_store %arg9[%c2_358, %c0_359, %c0_360, %c0_361], %363 {strides = array<i32>} : memref<4x18x18x4xf32, #tpu.memory_space<vmem>>, vector<1x18x1x4xf32>,
      %c2_362 = arith.constant 2 : index
      %c0_363 = arith.constant 0 : index
      %c17_364 = arith.constant 17 : index
      %c0_365 = arith.constant 0 : index
      %364 = vector.load %arg9[%c2_362, %c0_363, %c17_364, %c0_365] : memref<4x18x18x4xf32, #tpu.memory_space<vmem>>, vector<1x18x1x4xf32>
      %365 = vector.shape_cast %364 : vector<1x18x1x4xf32> to vector<18x1x4xf32>
      %366 = vector.shape_cast %306 : vector<18x1x4xf32> to vector<1x18x1x4xf32>
      tpu.vector_store %arg9[%c2_362, %c0_363, %c17_364, %c0_365], %366 {strides = array<i32>} : memref<4x18x18x4xf32, #tpu.memory_space<vmem>>, vector<1x18x1x4xf32>,
      %c3_i32 = arith.constant 3 : i32
      %367 = vector.broadcast %c3_i32 : i32 to vector<16x16x4xi32>
      %368 = arith.cmpi eq, %297, %367 : vector<16x16x4xi32>
      %369 = arith.select %368, %304, %300 : vector<16x16x4xi1>, vector<16x16x4xf32>
      %cst_366 = arith.constant 0.000000e+00 : f32
      %370 = vector.broadcast %cst_366 : f32 to vector<16x16x4xf32>
      %371 = arith.maximumf %369, %370 : vector<16x16x4xf32>
      %c3_367 = arith.constant 3 : index
      %c1_368 = arith.constant 1 : index
      %c1_369 = arith.constant 1 : index
      %c0_370 = arith.constant 0 : index
      %372 = vector.load %arg9[%c3_367, %c1_368, %c1_369, %c0_370] : memref<4x18x18x4xf32, #tpu.memory_space<vmem>>, vector<1x16x16x4xf32>
      %373 = vector.shape_cast %372 : vector<1x16x16x4xf32> to vector<16x16x4xf32>
      %374 = vector.shape_cast %371 : vector<16x16x4xf32> to vector<1x16x16x4xf32>
      tpu.vector_store %arg9[%c3_367, %c1_368, %c1_369, %c0_370], %374 {strides = array<i32>} : memref<4x18x18x4xf32, #tpu.memory_space<vmem>>, vector<1x16x16x4xf32>,
      %c3_371 = arith.constant 3 : index
      %c0_372 = arith.constant 0 : index
      %c0_373 = arith.constant 0 : index
      %c0_374 = arith.constant 0 : index
      %375 = vector.load %arg9[%c3_371, %c0_372, %c0_373, %c0_374] : memref<4x18x18x4xf32, #tpu.memory_space<vmem>>, vector<1x1x18x4xf32>
      %376 = vector.shape_cast %375 : vector<1x1x18x4xf32> to vector<1x18x4xf32>
      %377 = vector.shape_cast %305 : vector<1x18x4xf32> to vector<1x1x18x4xf32>
      tpu.vector_store %arg9[%c3_371, %c0_372, %c0_373, %c0_374], %377 {strides = array<i32>} : memref<4x18x18x4xf32, #tpu.memory_space<vmem>>, vector<1x1x18x4xf32>,
      %c3_375 = arith.constant 3 : index
      %c17_376 = arith.constant 17 : index
      %c0_377 = arith.constant 0 : index
      %c0_378 = arith.constant 0 : index
      %378 = vector.load %arg9[%c3_375, %c17_376, %c0_377, %c0_378] : memref<4x18x18x4xf32, #tpu.memory_space<vmem>>, vector<1x1x18x4xf32>
      %379 = vector.shape_cast %378 : vector<1x1x18x4xf32> to vector<1x18x4xf32>
      %380 = vector.shape_cast %305 : vector<1x18x4xf32> to vector<1x1x18x4xf32>
      tpu.vector_store %arg9[%c3_375, %c17_376, %c0_377, %c0_378], %380 {strides = array<i32>} : memref<4x18x18x4xf32, #tpu.memory_space<vmem>>, vector<1x1x18x4xf32>,
      %c3_379 = arith.constant 3 : index
      %c0_380 = arith.constant 0 : index
      %c0_381 = arith.constant 0 : index
      %c0_382 = arith.constant 0 : index
      %381 = vector.load %arg9[%c3_379, %c0_380, %c0_381, %c0_382] : memref<4x18x18x4xf32, #tpu.memory_space<vmem>>, vector<1x18x1x4xf32>
      %382 = vector.shape_cast %381 : vector<1x18x1x4xf32> to vector<18x1x4xf32>
      %383 = vector.shape_cast %306 : vector<18x1x4xf32> to vector<1x18x1x4xf32>
      tpu.vector_store %arg9[%c3_379, %c0_380, %c0_381, %c0_382], %383 {strides = array<i32>} : memref<4x18x18x4xf32, #tpu.memory_space<vmem>>, vector<1x18x1x4xf32>,
      %c3_383 = arith.constant 3 : index
      %c0_384 = arith.constant 0 : index
      %c17_385 = arith.constant 17 : index
      %c0_386 = arith.constant 0 : index
      %384 = vector.load %arg9[%c3_383, %c0_384, %c17_385, %c0_386] : memref<4x18x18x4xf32, #tpu.memory_space<vmem>>, vector<1x18x1x4xf32>
      %385 = vector.shape_cast %384 : vector<1x18x1x4xf32> to vector<18x1x4xf32>
      %386 = vector.shape_cast %306 : vector<18x1x4xf32> to vector<1x18x1x4xf32>
      tpu.vector_store %arg9[%c3_383, %c0_384, %c17_385, %c0_386], %386 {strides = array<i32>} : memref<4x18x18x4xf32, #tpu.memory_space<vmem>>, vector<1x18x1x4xf32>,
    } else {
    }
    %c16_i32 = arith.constant 16 : i32
    %3 = arith.muli %arg1, %c16_i32 : i32
    %4 = tpu.assume_multiple %3, 16 : i32
    %c1_i32 = arith.constant 1 : i32
    %5 = arith.addi %4, %c1_i32 : i32
    %c-1_i32 = arith.constant -1 : i32
    %6 = arith.addi %5, %c-1_i32 : i32
    %c3 = arith.constant 3 : index
    %7 = arith.index_cast %6 : i32 to index
    %c0 = arith.constant 0 : index
    %c0_1 = arith.constant 0 : index
    %8 = vector.load %arg9[%c3, %7, %c0, %c0_1] : memref<4x18x18x4xf32, #tpu.memory_space<vmem>>, vector<1x16x16x4xf32>
    %9 = vector.shape_cast %8 : vector<1x16x16x4xf32> to vector<16x16x4xf32>
    %10 = vector.shape_cast %9 : vector<16x16x4xf32> to vector<256x4xf32>
    %c0_2 = arith.constant 0 : index
    %c0_3 = arith.constant 0 : index
    %11 = vector.load %arg10[%c0_2, %c0_3] : memref<256x36xf32, #tpu.memory_space<vmem>>, vector<256x4xf32>
    tpu.vector_store %arg10[%c0_2, %c0_3], %10 {strides = array<i32>} : memref<256x36xf32, #tpu.memory_space<vmem>>, vector<256x4xf32>,
    %c1_i32_4 = arith.constant 1 : i32
    %12 = arith.addi %4, %c1_i32_4 : i32
    %c-1_i32_5 = arith.constant -1 : i32
    %13 = arith.addi %12, %c-1_i32_5 : i32
    %c2 = arith.constant 2 : index
    %14 = arith.index_cast %13 : i32 to index
    %c1 = arith.constant 1 : index
    %c0_6 = arith.constant 0 : index
    %15 = vector.load %arg9[%c2, %14, %c1, %c0_6] : memref<4x18x18x4xf32, #tpu.memory_space<vmem>>, vector<1x16x16x4xf32>
    %16 = vector.shape_cast %15 : vector<1x16x16x4xf32> to vector<16x16x4xf32>
    %17 = vector.shape_cast %16 : vector<16x16x4xf32> to vector<256x4xf32>
    %c0_7 = arith.constant 0 : index
    %c4 = arith.constant 4 : index
    %18 = vector.load %arg10[%c0_7, %c4] : memref<256x36xf32, #tpu.memory_space<vmem>>, vector<256x4xf32>
    tpu.vector_store %arg10[%c0_7, %c4], %17 {strides = array<i32>} : memref<256x36xf32, #tpu.memory_space<vmem>>, vector<256x4xf32>,
    %c1_i32_8 = arith.constant 1 : i32
    %19 = arith.addi %4, %c1_i32_8 : i32
    %c-1_i32_9 = arith.constant -1 : i32
    %20 = arith.addi %19, %c-1_i32_9 : i32
    %c3_10 = arith.constant 3 : index
    %21 = arith.index_cast %20 : i32 to index
    %c1_11 = arith.constant 1 : index
    %c0_12 = arith.constant 0 : index
    %22 = vector.load %arg9[%c3_10, %21, %c1_11, %c0_12] : memref<4x18x18x4xf32, #tpu.memory_space<vmem>>, vector<1x16x16x4xf32>
    %23 = vector.shape_cast %22 : vector<1x16x16x4xf32> to vector<16x16x4xf32>
    %24 = vector.shape_cast %23 : vector<16x16x4xf32> to vector<256x4xf32>
    %c0_13 = arith.constant 0 : index
    %c8 = arith.constant 8 : index
    %25 = vector.load %arg10[%c0_13, %c8] : memref<256x36xf32, #tpu.memory_space<vmem>>, vector<256x4xf32>
    tpu.vector_store %arg10[%c0_13, %c8], %24 {strides = array<i32>} : memref<256x36xf32, #tpu.memory_space<vmem>>, vector<256x4xf32>,
    %c1_i32_14 = arith.constant 1 : i32
    %26 = arith.addi %4, %c1_i32_14 : i32
    %c0_i32_15 = arith.constant 0 : i32
    %27 = arith.addi %26, %c0_i32_15 : i32
    %c1_16 = arith.constant 1 : index
    %28 = arith.index_cast %27 : i32 to index
    %c0_17 = arith.constant 0 : index
    %c0_18 = arith.constant 0 : index
    %29 = vector.load %arg9[%c1_16, %28, %c0_17, %c0_18] : memref<4x18x18x4xf32, #tpu.memory_space<vmem>>, vector<1x16x16x4xf32>
    %30 = vector.shape_cast %29 : vector<1x16x16x4xf32> to vector<16x16x4xf32>
    %31 = vector.shape_cast %30 : vector<16x16x4xf32> to vector<256x4xf32>
    %c0_19 = arith.constant 0 : index
    %c12 = arith.constant 12 : index
    %32 = vector.load %arg10[%c0_19, %c12] : memref<256x36xf32, #tpu.memory_space<vmem>>, vector<256x4xf32>
    tpu.vector_store %arg10[%c0_19, %c12], %31 {strides = array<i32>} : memref<256x36xf32, #tpu.memory_space<vmem>>, vector<256x4xf32>,
    %c1_i32_20 = arith.constant 1 : i32
    %33 = arith.addi %4, %c1_i32_20 : i32
    %c0_i32_21 = arith.constant 0 : i32
    %34 = arith.addi %33, %c0_i32_21 : i32
    %c0_22 = arith.constant 0 : index
    %35 = arith.index_cast %34 : i32 to index
    %c1_23 = arith.constant 1 : index
    %c0_24 = arith.constant 0 : index
    %36 = vector.load %arg9[%c0_22, %35, %c1_23, %c0_24] : memref<4x18x18x4xf32, #tpu.memory_space<vmem>>, vector<1x16x16x4xf32>
    %37 = vector.shape_cast %36 : vector<1x16x16x4xf32> to vector<16x16x4xf32>
    %38 = vector.shape_cast %37 : vector<16x16x4xf32> to vector<256x4xf32>
    %c0_25 = arith.constant 0 : index
    %c16 = arith.constant 16 : index
    %39 = vector.load %arg10[%c0_25, %c16] : memref<256x36xf32, #tpu.memory_space<vmem>>, vector<256x4xf32>
    tpu.vector_store %arg10[%c0_25, %c16], %38 {strides = array<i32>} : memref<256x36xf32, #tpu.memory_space<vmem>>, vector<256x4xf32>,
    %c1_i32_26 = arith.constant 1 : i32
    %40 = arith.addi %4, %c1_i32_26 : i32
    %c0_i32_27 = arith.constant 0 : i32
    %41 = arith.addi %40, %c0_i32_27 : i32
    %c1_28 = arith.constant 1 : index
    %42 = arith.index_cast %41 : i32 to index
    %c1_29 = arith.constant 1 : index
    %c0_30 = arith.constant 0 : index
    %43 = vector.load %arg9[%c1_28, %42, %c1_29, %c0_30] : memref<4x18x18x4xf32, #tpu.memory_space<vmem>>, vector<1x16x16x4xf32>
    %44 = vector.shape_cast %43 : vector<1x16x16x4xf32> to vector<16x16x4xf32>
    %45 = vector.shape_cast %44 : vector<16x16x4xf32> to vector<256x4xf32>
    %c0_31 = arith.constant 0 : index
    %c20 = arith.constant 20 : index
    %46 = vector.load %arg10[%c0_31, %c20] : memref<256x36xf32, #tpu.memory_space<vmem>>, vector<256x4xf32>
    tpu.vector_store %arg10[%c0_31, %c20], %45 {strides = array<i32>} : memref<256x36xf32, #tpu.memory_space<vmem>>, vector<256x4xf32>,
    %c1_i32_32 = arith.constant 1 : i32
    %47 = arith.addi %4, %c1_i32_32 : i32
    %c0_i32_33 = arith.constant 0 : i32
    %48 = arith.addi %47, %c0_i32_33 : i32
    %c3_34 = arith.constant 3 : index
    %49 = arith.index_cast %48 : i32 to index
    %c0_35 = arith.constant 0 : index
    %c0_36 = arith.constant 0 : index
    %50 = vector.load %arg9[%c3_34, %49, %c0_35, %c0_36] : memref<4x18x18x4xf32, #tpu.memory_space<vmem>>, vector<1x16x16x4xf32>
    %51 = vector.shape_cast %50 : vector<1x16x16x4xf32> to vector<16x16x4xf32>
    %52 = vector.shape_cast %51 : vector<16x16x4xf32> to vector<256x4xf32>
    %c0_37 = arith.constant 0 : index
    %c24 = arith.constant 24 : index
    %53 = vector.load %arg10[%c0_37, %c24] : memref<256x36xf32, #tpu.memory_space<vmem>>, vector<256x4xf32>
    tpu.vector_store %arg10[%c0_37, %c24], %52 {strides = array<i32>} : memref<256x36xf32, #tpu.memory_space<vmem>>, vector<256x4xf32>,
    %c1_i32_38 = arith.constant 1 : i32
    %54 = arith.addi %4, %c1_i32_38 : i32
    %c0_i32_39 = arith.constant 0 : i32
    %55 = arith.addi %54, %c0_i32_39 : i32
    %c2_40 = arith.constant 2 : index
    %56 = arith.index_cast %55 : i32 to index
    %c1_41 = arith.constant 1 : index
    %c0_42 = arith.constant 0 : index
    %57 = vector.load %arg9[%c2_40, %56, %c1_41, %c0_42] : memref<4x18x18x4xf32, #tpu.memory_space<vmem>>, vector<1x16x16x4xf32>
    %58 = vector.shape_cast %57 : vector<1x16x16x4xf32> to vector<16x16x4xf32>
    %59 = vector.shape_cast %58 : vector<16x16x4xf32> to vector<256x4xf32>
    %c0_43 = arith.constant 0 : index
    %c28 = arith.constant 28 : index
    %60 = vector.load %arg10[%c0_43, %c28] : memref<256x36xf32, #tpu.memory_space<vmem>>, vector<256x4xf32>
    tpu.vector_store %arg10[%c0_43, %c28], %59 {strides = array<i32>} : memref<256x36xf32, #tpu.memory_space<vmem>>, vector<256x4xf32>,
    %c1_i32_44 = arith.constant 1 : i32
    %61 = arith.addi %4, %c1_i32_44 : i32
    %c0_i32_45 = arith.constant 0 : i32
    %62 = arith.addi %61, %c0_i32_45 : i32
    %c3_46 = arith.constant 3 : index
    %63 = arith.index_cast %62 : i32 to index
    %c1_47 = arith.constant 1 : index
    %c0_48 = arith.constant 0 : index
    %64 = vector.load %arg9[%c3_46, %63, %c1_47, %c0_48] : memref<4x18x18x4xf32, #tpu.memory_space<vmem>>, vector<1x16x16x4xf32>
    %65 = vector.shape_cast %64 : vector<1x16x16x4xf32> to vector<16x16x4xf32>
    %66 = vector.shape_cast %65 : vector<16x16x4xf32> to vector<256x4xf32>
    %c0_49 = arith.constant 0 : index
    %c32 = arith.constant 32 : index
    %67 = vector.load %arg10[%c0_49, %c32] : memref<256x36xf32, #tpu.memory_space<vmem>>, vector<256x4xf32>
    tpu.vector_store %arg10[%c0_49, %c32], %66 {strides = array<i32>} : memref<256x36xf32, #tpu.memory_space<vmem>>, vector<256x4xf32>,
    %c0_50 = arith.constant 0 : index
    %c0_51 = arith.constant 0 : index
    %68 = vector.load %arg10[%c0_50, %c0_51] : memref<256x36xf32, #tpu.memory_space<vmem>>, vector<256x36xf32>
    %c0_52 = arith.constant 0 : index
    %c0_53 = arith.constant 0 : index
    %69 = vector.load %arg6[%c0_52, %c0_53] : memref<36x128xf32, #tpu.memory_space<vmem>>, vector<36x128xf32>
    %cst = arith.constant dense<0.000000e+00> : vector<256x128xf32>
    %70 = tpu.matmul %68, %69, %cst {dimension_numbers = #tpu.dot_dimension_numbers<[1], [0], [0], [1], [0, 0, 1, 1], [], []>} : vector<256x36xf32>, vector<36x128xf32>, vector<256x128xf32> -> vector<256x128xf32>
    %c0_54 = arith.constant 0 : index
    %c0_55 = arith.constant 0 : index
    %71 = vector.load %arg7[%c0_54, %c0_55] : memref<1x128xf32, #tpu.memory_space<vmem>>, vector<1x128xf32>
    %72 = vector.broadcast %71 : vector<1x128xf32> to vector<256x128xf32>
    %73 = arith.addf %70, %72 : vector<256x128xf32>
    %c0_56 = arith.constant 0 : index
    %c0_57 = arith.constant 0 : index
    %c0_58 = arith.constant 0 : index
    %c0_59 = arith.constant 0 : index
    %c0_60 = arith.constant 0 : index
    %74 = vector.load %arg8[%c0_56, %c0_57, %c0_58, %c0_59, %c0_60] : memref<1x2x2x256x128xf32, #tpu.memory_space<vmem>>, vector<1x1x1x256x128xf32>
    %75 = vector.shape_cast %74 : vector<1x1x1x256x128xf32> to vector<256x128xf32>
    %76 = vector.shape_cast %73 : vector<256x128xf32> to vector<1x1x1x256x128xf32>
    tpu.vector_store %arg8[%c0_56, %c0_57, %c0_58, %c0_59, %c0_60], %76 {strides = array<i32>} : memref<1x2x2x256x128xf32, #tpu.memory_space<vmem>>, vector<1x1x1x256x128xf32>,
    %c1_i32_61 = arith.constant 1 : i32
    %77 = arith.addi %4, %c1_i32_61 : i32
    %c-1_i32_62 = arith.constant -1 : i32
    %78 = arith.addi %77, %c-1_i32_62 : i32
    %c2_63 = arith.constant 2 : index
    %79 = arith.index_cast %78 : i32 to index
    %c1_64 = arith.constant 1 : index
    %c0_65 = arith.constant 0 : index
    %80 = vector.load %arg9[%c2_63, %79, %c1_64, %c0_65] : memref<4x18x18x4xf32, #tpu.memory_space<vmem>>, vector<1x16x16x4xf32>
    %81 = vector.shape_cast %80 : vector<1x16x16x4xf32> to vector<16x16x4xf32>
    %82 = vector.shape_cast %81 : vector<16x16x4xf32> to vector<256x4xf32>
    %c0_66 = arith.constant 0 : index
    %c0_67 = arith.constant 0 : index
    %83 = vector.load %arg10[%c0_66, %c0_67] : memref<256x36xf32, #tpu.memory_space<vmem>>, vector<256x4xf32>
    tpu.vector_store %arg10[%c0_66, %c0_67], %82 {strides = array<i32>} : memref<256x36xf32, #tpu.memory_space<vmem>>, vector<256x4xf32>,
    %c1_i32_68 = arith.constant 1 : i32
    %84 = arith.addi %4, %c1_i32_68 : i32
    %c-1_i32_69 = arith.constant -1 : i32
    %85 = arith.addi %84, %c-1_i32_69 : i32
    %c3_70 = arith.constant 3 : index
    %86 = arith.index_cast %85 : i32 to index
    %c1_71 = arith.constant 1 : index
    %c0_72 = arith.constant 0 : index
    %87 = vector.load %arg9[%c3_70, %86, %c1_71, %c0_72] : memref<4x18x18x4xf32, #tpu.memory_space<vmem>>, vector<1x16x16x4xf32>
    %88 = vector.shape_cast %87 : vector<1x16x16x4xf32> to vector<16x16x4xf32>
    %89 = vector.shape_cast %88 : vector<16x16x4xf32> to vector<256x4xf32>
    %c0_73 = arith.constant 0 : index
    %c4_74 = arith.constant 4 : index
    %90 = vector.load %arg10[%c0_73, %c4_74] : memref<256x36xf32, #tpu.memory_space<vmem>>, vector<256x4xf32>
    tpu.vector_store %arg10[%c0_73, %c4_74], %89 {strides = array<i32>} : memref<256x36xf32, #tpu.memory_space<vmem>>, vector<256x4xf32>,
    %c1_i32_75 = arith.constant 1 : i32
    %91 = arith.addi %4, %c1_i32_75 : i32
    %c-1_i32_76 = arith.constant -1 : i32
    %92 = arith.addi %91, %c-1_i32_76 : i32
    %c2_77 = arith.constant 2 : index
    %93 = arith.index_cast %92 : i32 to index
    %c2_78 = arith.constant 2 : index
    %c0_79 = arith.constant 0 : index
    %94 = vector.load %arg9[%c2_77, %93, %c2_78, %c0_79] : memref<4x18x18x4xf32, #tpu.memory_space<vmem>>, vector<1x16x16x4xf32>
    %95 = vector.shape_cast %94 : vector<1x16x16x4xf32> to vector<16x16x4xf32>
    %96 = vector.shape_cast %95 : vector<16x16x4xf32> to vector<256x4xf32>
    %c0_80 = arith.constant 0 : index
    %c8_81 = arith.constant 8 : index
    %97 = vector.load %arg10[%c0_80, %c8_81] : memref<256x36xf32, #tpu.memory_space<vmem>>, vector<256x4xf32>
    tpu.vector_store %arg10[%c0_80, %c8_81], %96 {strides = array<i32>} : memref<256x36xf32, #tpu.memory_space<vmem>>, vector<256x4xf32>,
    %c1_i32_82 = arith.constant 1 : i32
    %98 = arith.addi %4, %c1_i32_82 : i32
    %c0_i32_83 = arith.constant 0 : i32
    %99 = arith.addi %98, %c0_i32_83 : i32
    %c0_84 = arith.constant 0 : index
    %100 = arith.index_cast %99 : i32 to index
    %c1_85 = arith.constant 1 : index
    %c0_86 = arith.constant 0 : index
    %101 = vector.load %arg9[%c0_84, %100, %c1_85, %c0_86] : memref<4x18x18x4xf32, #tpu.memory_space<vmem>>, vector<1x16x16x4xf32>
    %102 = vector.shape_cast %101 : vector<1x16x16x4xf32> to vector<16x16x4xf32>
    %103 = vector.shape_cast %102 : vector<16x16x4xf32> to vector<256x4xf32>
    %c0_87 = arith.constant 0 : index
    %c12_88 = arith.constant 12 : index
    %104 = vector.load %arg10[%c0_87, %c12_88] : memref<256x36xf32, #tpu.memory_space<vmem>>, vector<256x4xf32>
    tpu.vector_store %arg10[%c0_87, %c12_88], %103 {strides = array<i32>} : memref<256x36xf32, #tpu.memory_space<vmem>>, vector<256x4xf32>,
    %c1_i32_89 = arith.constant 1 : i32
    %105 = arith.addi %4, %c1_i32_89 : i32
    %c0_i32_90 = arith.constant 0 : i32
    %106 = arith.addi %105, %c0_i32_90 : i32
    %c1_91 = arith.constant 1 : index
    %107 = arith.index_cast %106 : i32 to index
    %c1_92 = arith.constant 1 : index
    %c0_93 = arith.constant 0 : index
    %108 = vector.load %arg9[%c1_91, %107, %c1_92, %c0_93] : memref<4x18x18x4xf32, #tpu.memory_space<vmem>>, vector<1x16x16x4xf32>
    %109 = vector.shape_cast %108 : vector<1x16x16x4xf32> to vector<16x16x4xf32>
    %110 = vector.shape_cast %109 : vector<16x16x4xf32> to vector<256x4xf32>
    %c0_94 = arith.constant 0 : index
    %c16_95 = arith.constant 16 : index
    %111 = vector.load %arg10[%c0_94, %c16_95] : memref<256x36xf32, #tpu.memory_space<vmem>>, vector<256x4xf32>
    tpu.vector_store %arg10[%c0_94, %c16_95], %110 {strides = array<i32>} : memref<256x36xf32, #tpu.memory_space<vmem>>, vector<256x4xf32>,
    %c1_i32_96 = arith.constant 1 : i32
    %112 = arith.addi %4, %c1_i32_96 : i32
    %c0_i32_97 = arith.constant 0 : i32
    %113 = arith.addi %112, %c0_i32_97 : i32
    %c0_98 = arith.constant 0 : index
    %114 = arith.index_cast %113 : i32 to index
    %c2_99 = arith.constant 2 : index
    %c0_100 = arith.constant 0 : index
    %115 = vector.load %arg9[%c0_98, %114, %c2_99, %c0_100] : memref<4x18x18x4xf32, #tpu.memory_space<vmem>>, vector<1x16x16x4xf32>
    %116 = vector.shape_cast %115 : vector<1x16x16x4xf32> to vector<16x16x4xf32>
    %117 = vector.shape_cast %116 : vector<16x16x4xf32> to vector<256x4xf32>
    %c0_101 = arith.constant 0 : index
    %c20_102 = arith.constant 20 : index
    %118 = vector.load %arg10[%c0_101, %c20_102] : memref<256x36xf32, #tpu.memory_space<vmem>>, vector<256x4xf32>
    tpu.vector_store %arg10[%c0_101, %c20_102], %117 {strides = array<i32>} : memref<256x36xf32, #tpu.memory_space<vmem>>, vector<256x4xf32>,
    %c1_i32_103 = arith.constant 1 : i32
    %119 = arith.addi %4, %c1_i32_103 : i32
    %c0_i32_104 = arith.constant 0 : i32
    %120 = arith.addi %119, %c0_i32_104 : i32
    %c2_105 = arith.constant 2 : index
    %121 = arith.index_cast %120 : i32 to index
    %c1_106 = arith.constant 1 : index
    %c0_107 = arith.constant 0 : index
    %122 = vector.load %arg9[%c2_105, %121, %c1_106, %c0_107] : memref<4x18x18x4xf32, #tpu.memory_space<vmem>>, vector<1x16x16x4xf32>
    %123 = vector.shape_cast %122 : vector<1x16x16x4xf32> to vector<16x16x4xf32>
    %124 = vector.shape_cast %123 : vector<16x16x4xf32> to vector<256x4xf32>
    %c0_108 = arith.constant 0 : index
    %c24_109 = arith.constant 24 : index
    %125 = vector.load %arg10[%c0_108, %c24_109] : memref<256x36xf32, #tpu.memory_space<vmem>>, vector<256x4xf32>
    tpu.vector_store %arg10[%c0_108, %c24_109], %124 {strides = array<i32>} : memref<256x36xf32, #tpu.memory_space<vmem>>, vector<256x4xf32>,
    %c1_i32_110 = arith.constant 1 : i32
    %126 = arith.addi %4, %c1_i32_110 : i32
    %c0_i32_111 = arith.constant 0 : i32
    %127 = arith.addi %126, %c0_i32_111 : i32
    %c3_112 = arith.constant 3 : index
    %128 = arith.index_cast %127 : i32 to index
    %c1_113 = arith.constant 1 : index
    %c0_114 = arith.constant 0 : index
    %129 = vector.load %arg9[%c3_112, %128, %c1_113, %c0_114] : memref<4x18x18x4xf32, #tpu.memory_space<vmem>>, vector<1x16x16x4xf32>
    %130 = vector.shape_cast %129 : vector<1x16x16x4xf32> to vector<16x16x4xf32>
    %131 = vector.shape_cast %130 : vector<16x16x4xf32> to vector<256x4xf32>
    %c0_115 = arith.constant 0 : index
    %c28_116 = arith.constant 28 : index
    %132 = vector.load %arg10[%c0_115, %c28_116] : memref<256x36xf32, #tpu.memory_space<vmem>>, vector<256x4xf32>
    tpu.vector_store %arg10[%c0_115, %c28_116], %131 {strides = array<i32>} : memref<256x36xf32, #tpu.memory_space<vmem>>, vector<256x4xf32>,
    %c1_i32_117 = arith.constant 1 : i32
    %133 = arith.addi %4, %c1_i32_117 : i32
    %c0_i32_118 = arith.constant 0 : i32
    %134 = arith.addi %133, %c0_i32_118 : i32
    %c2_119 = arith.constant 2 : index
    %135 = arith.index_cast %134 : i32 to index
    %c2_120 = arith.constant 2 : index
    %c0_121 = arith.constant 0 : index
    %136 = vector.load %arg9[%c2_119, %135, %c2_120, %c0_121] : memref<4x18x18x4xf32, #tpu.memory_space<vmem>>, vector<1x16x16x4xf32>
    %137 = vector.shape_cast %136 : vector<1x16x16x4xf32> to vector<16x16x4xf32>
    %138 = vector.shape_cast %137 : vector<16x16x4xf32> to vector<256x4xf32>
    %c0_122 = arith.constant 0 : index
    %c32_123 = arith.constant 32 : index
    %139 = vector.load %arg10[%c0_122, %c32_123] : memref<256x36xf32, #tpu.memory_space<vmem>>, vector<256x4xf32>
    tpu.vector_store %arg10[%c0_122, %c32_123], %138 {strides = array<i32>} : memref<256x36xf32, #tpu.memory_space<vmem>>, vector<256x4xf32>,
    %c0_124 = arith.constant 0 : index
    %c0_125 = arith.constant 0 : index
    %140 = vector.load %arg10[%c0_124, %c0_125] : memref<256x36xf32, #tpu.memory_space<vmem>>, vector<256x36xf32>
    %c0_126 = arith.constant 0 : index
    %c0_127 = arith.constant 0 : index
    %141 = vector.load %arg6[%c0_126, %c0_127] : memref<36x128xf32, #tpu.memory_space<vmem>>, vector<36x128xf32>
    %cst_128 = arith.constant dense<0.000000e+00> : vector<256x128xf32>
    %142 = tpu.matmul %140, %141, %cst_128 {dimension_numbers = #tpu.dot_dimension_numbers<[1], [0], [0], [1], [0, 0, 1, 1], [], []>} : vector<256x36xf32>, vector<36x128xf32>, vector<256x128xf32> -> vector<256x128xf32>
    %c0_129 = arith.constant 0 : index
    %c0_130 = arith.constant 0 : index
    %143 = vector.load %arg7[%c0_129, %c0_130] : memref<1x128xf32, #tpu.memory_space<vmem>>, vector<1x128xf32>
    %144 = vector.broadcast %143 : vector<1x128xf32> to vector<256x128xf32>
    %145 = arith.addf %142, %144 : vector<256x128xf32>
    %c0_131 = arith.constant 0 : index
    %c0_132 = arith.constant 0 : index
    %c1_133 = arith.constant 1 : index
    %c0_134 = arith.constant 0 : index
    %c0_135 = arith.constant 0 : index
    %146 = vector.load %arg8[%c0_131, %c0_132, %c1_133, %c0_134, %c0_135] : memref<1x2x2x256x128xf32, #tpu.memory_space<vmem>>, vector<1x1x1x256x128xf32>
    %147 = vector.shape_cast %146 : vector<1x1x1x256x128xf32> to vector<256x128xf32>
    %148 = vector.shape_cast %145 : vector<256x128xf32> to vector<1x1x1x256x128xf32>
    tpu.vector_store %arg8[%c0_131, %c0_132, %c1_133, %c0_134, %c0_135], %148 {strides = array<i32>} : memref<1x2x2x256x128xf32, #tpu.memory_space<vmem>>, vector<1x1x1x256x128xf32>,
    %c1_i32_136 = arith.constant 1 : i32
    %149 = arith.addi %4, %c1_i32_136 : i32
    %c0_i32_137 = arith.constant 0 : i32
    %150 = arith.addi %149, %c0_i32_137 : i32
    %c1_138 = arith.constant 1 : index
    %151 = arith.index_cast %150 : i32 to index
    %c0_139 = arith.constant 0 : index
    %c0_140 = arith.constant 0 : index
    %152 = vector.load %arg9[%c1_138, %151, %c0_139, %c0_140] : memref<4x18x18x4xf32, #tpu.memory_space<vmem>>, vector<1x16x16x4xf32>
    %153 = vector.shape_cast %152 : vector<1x16x16x4xf32> to vector<16x16x4xf32>
    %154 = vector.shape_cast %153 : vector<16x16x4xf32> to vector<256x4xf32>
    %c0_141 = arith.constant 0 : index
    %c0_142 = arith.constant 0 : index
    %155 = vector.load %arg10[%c0_141, %c0_142] : memref<256x36xf32, #tpu.memory_space<vmem>>, vector<256x4xf32>
    tpu.vector_store %arg10[%c0_141, %c0_142], %154 {strides = array<i32>} : memref<256x36xf32, #tpu.memory_space<vmem>>, vector<256x4xf32>,
    %c1_i32_143 = arith.constant 1 : i32
    %156 = arith.addi %4, %c1_i32_143 : i32
    %c0_i32_144 = arith.constant 0 : i32
    %157 = arith.addi %156, %c0_i32_144 : i32
    %c0_145 = arith.constant 0 : index
    %158 = arith.index_cast %157 : i32 to index
    %c1_146 = arith.constant 1 : index
    %c0_147 = arith.constant 0 : index
    %159 = vector.load %arg9[%c0_145, %158, %c1_146, %c0_147] : memref<4x18x18x4xf32, #tpu.memory_space<vmem>>, vector<1x16x16x4xf32>
    %160 = vector.shape_cast %159 : vector<1x16x16x4xf32> to vector<16x16x4xf32>
    %161 = vector.shape_cast %160 : vector<16x16x4xf32> to vector<256x4xf32>
    %c0_148 = arith.constant 0 : index
    %c4_149 = arith.constant 4 : index
    %162 = vector.load %arg10[%c0_148, %c4_149] : memref<256x36xf32, #tpu.memory_space<vmem>>, vector<256x4xf32>
    tpu.vector_store %arg10[%c0_148, %c4_149], %161 {strides = array<i32>} : memref<256x36xf32, #tpu.memory_space<vmem>>, vector<256x4xf32>,
    %c1_i32_150 = arith.constant 1 : i32
    %163 = arith.addi %4, %c1_i32_150 : i32
    %c0_i32_151 = arith.constant 0 : i32
    %164 = arith.addi %163, %c0_i32_151 : i32
    %c1_152 = arith.constant 1 : index
    %165 = arith.index_cast %164 : i32 to index
    %c1_153 = arith.constant 1 : index
    %c0_154 = arith.constant 0 : index
    %166 = vector.load %arg9[%c1_152, %165, %c1_153, %c0_154] : memref<4x18x18x4xf32, #tpu.memory_space<vmem>>, vector<1x16x16x4xf32>
    %167 = vector.shape_cast %166 : vector<1x16x16x4xf32> to vector<16x16x4xf32>
    %168 = vector.shape_cast %167 : vector<16x16x4xf32> to vector<256x4xf32>
    %c0_155 = arith.constant 0 : index
    %c8_156 = arith.constant 8 : index
    %169 = vector.load %arg10[%c0_155, %c8_156] : memref<256x36xf32, #tpu.memory_space<vmem>>, vector<256x4xf32>
    tpu.vector_store %arg10[%c0_155, %c8_156], %168 {strides = array<i32>} : memref<256x36xf32, #tpu.memory_space<vmem>>, vector<256x4xf32>,
    %c1_i32_157 = arith.constant 1 : i32
    %170 = arith.addi %4, %c1_i32_157 : i32
    %c0_i32_158 = arith.constant 0 : i32
    %171 = arith.addi %170, %c0_i32_158 : i32
    %c3_159 = arith.constant 3 : index
    %172 = arith.index_cast %171 : i32 to index
    %c0_160 = arith.constant 0 : index
    %c0_161 = arith.constant 0 : index
    %173 = vector.load %arg9[%c3_159, %172, %c0_160, %c0_161] : memref<4x18x18x4xf32, #tpu.memory_space<vmem>>, vector<1x16x16x4xf32>
    %174 = vector.shape_cast %173 : vector<1x16x16x4xf32> to vector<16x16x4xf32>
    %175 = vector.shape_cast %174 : vector<16x16x4xf32> to vector<256x4xf32>
    %c0_162 = arith.constant 0 : index
    %c12_163 = arith.constant 12 : index
    %176 = vector.load %arg10[%c0_162, %c12_163] : memref<256x36xf32, #tpu.memory_space<vmem>>, vector<256x4xf32>
    tpu.vector_store %arg10[%c0_162, %c12_163], %175 {strides = array<i32>} : memref<256x36xf32, #tpu.memory_space<vmem>>, vector<256x4xf32>,
    %c1_i32_164 = arith.constant 1 : i32
    %177 = arith.addi %4, %c1_i32_164 : i32
    %c0_i32_165 = arith.constant 0 : i32
    %178 = arith.addi %177, %c0_i32_165 : i32
    %c2_166 = arith.constant 2 : index
    %179 = arith.index_cast %178 : i32 to index
    %c1_167 = arith.constant 1 : index
    %c0_168 = arith.constant 0 : index
    %180 = vector.load %arg9[%c2_166, %179, %c1_167, %c0_168] : memref<4x18x18x4xf32, #tpu.memory_space<vmem>>, vector<1x16x16x4xf32>
    %181 = vector.shape_cast %180 : vector<1x16x16x4xf32> to vector<16x16x4xf32>
    %182 = vector.shape_cast %181 : vector<16x16x4xf32> to vector<256x4xf32>
    %c0_169 = arith.constant 0 : index
    %c16_170 = arith.constant 16 : index
    %183 = vector.load %arg10[%c0_169, %c16_170] : memref<256x36xf32, #tpu.memory_space<vmem>>, vector<256x4xf32>
    tpu.vector_store %arg10[%c0_169, %c16_170], %182 {strides = array<i32>} : memref<256x36xf32, #tpu.memory_space<vmem>>, vector<256x4xf32>,
    %c1_i32_171 = arith.constant 1 : i32
    %184 = arith.addi %4, %c1_i32_171 : i32
    %c0_i32_172 = arith.constant 0 : i32
    %185 = arith.addi %184, %c0_i32_172 : i32
    %c3_173 = arith.constant 3 : index
    %186 = arith.index_cast %185 : i32 to index
    %c1_174 = arith.constant 1 : index
    %c0_175 = arith.constant 0 : index
    %187 = vector.load %arg9[%c3_173, %186, %c1_174, %c0_175] : memref<4x18x18x4xf32, #tpu.memory_space<vmem>>, vector<1x16x16x4xf32>
    %188 = vector.shape_cast %187 : vector<1x16x16x4xf32> to vector<16x16x4xf32>
    %189 = vector.shape_cast %188 : vector<16x16x4xf32> to vector<256x4xf32>
    %c0_176 = arith.constant 0 : index
    %c20_177 = arith.constant 20 : index
    %190 = vector.load %arg10[%c0_176, %c20_177] : memref<256x36xf32, #tpu.memory_space<vmem>>, vector<256x4xf32>
    tpu.vector_store %arg10[%c0_176, %c20_177], %189 {strides = array<i32>} : memref<256x36xf32, #tpu.memory_space<vmem>>, vector<256x4xf32>,
    %c1_i32_178 = arith.constant 1 : i32
    %191 = arith.addi %4, %c1_i32_178 : i32
    %c1_i32_179 = arith.constant 1 : i32
    %192 = arith.addi %191, %c1_i32_179 : i32
    %c1_180 = arith.constant 1 : index
    %193 = arith.index_cast %192 : i32 to index
    %c0_181 = arith.constant 0 : index
    %c0_182 = arith.constant 0 : index
    %194 = vector.load %arg9[%c1_180, %193, %c0_181, %c0_182] : memref<4x18x18x4xf32, #tpu.memory_space<vmem>>, vector<1x16x16x4xf32>
    %195 = vector.shape_cast %194 : vector<1x16x16x4xf32> to vector<16x16x4xf32>
    %196 = vector.shape_cast %195 : vector<16x16x4xf32> to vector<256x4xf32>
    %c0_183 = arith.constant 0 : index
    %c24_184 = arith.constant 24 : index
    %197 = vector.load %arg10[%c0_183, %c24_184] : memref<256x36xf32, #tpu.memory_space<vmem>>, vector<256x4xf32>
    tpu.vector_store %arg10[%c0_183, %c24_184], %196 {strides = array<i32>} : memref<256x36xf32, #tpu.memory_space<vmem>>, vector<256x4xf32>,
    %c1_i32_185 = arith.constant 1 : i32
    %198 = arith.addi %4, %c1_i32_185 : i32
    %c1_i32_186 = arith.constant 1 : i32
    %199 = arith.addi %198, %c1_i32_186 : i32
    %c0_187 = arith.constant 0 : index
    %200 = arith.index_cast %199 : i32 to index
    %c1_188 = arith.constant 1 : index
    %c0_189 = arith.constant 0 : index
    %201 = vector.load %arg9[%c0_187, %200, %c1_188, %c0_189] : memref<4x18x18x4xf32, #tpu.memory_space<vmem>>, vector<1x16x16x4xf32>
    %202 = vector.shape_cast %201 : vector<1x16x16x4xf32> to vector<16x16x4xf32>
    %203 = vector.shape_cast %202 : vector<16x16x4xf32> to vector<256x4xf32>
    %c0_190 = arith.constant 0 : index
    %c28_191 = arith.constant 28 : index
    %204 = vector.load %arg10[%c0_190, %c28_191] : memref<256x36xf32, #tpu.memory_space<vmem>>, vector<256x4xf32>
    tpu.vector_store %arg10[%c0_190, %c28_191], %203 {strides = array<i32>} : memref<256x36xf32, #tpu.memory_space<vmem>>, vector<256x4xf32>,
    %c1_i32_192 = arith.constant 1 : i32
    %205 = arith.addi %4, %c1_i32_192 : i32
    %c1_i32_193 = arith.constant 1 : i32
    %206 = arith.addi %205, %c1_i32_193 : i32
    %c1_194 = arith.constant 1 : index
    %207 = arith.index_cast %206 : i32 to index
    %c1_195 = arith.constant 1 : index
    %c0_196 = arith.constant 0 : index
    %208 = vector.load %arg9[%c1_194, %207, %c1_195, %c0_196] : memref<4x18x18x4xf32, #tpu.memory_space<vmem>>, vector<1x16x16x4xf32>
    %209 = vector.shape_cast %208 : vector<1x16x16x4xf32> to vector<16x16x4xf32>
    %210 = vector.shape_cast %209 : vector<16x16x4xf32> to vector<256x4xf32>
    %c0_197 = arith.constant 0 : index
    %c32_198 = arith.constant 32 : index
    %211 = vector.load %arg10[%c0_197, %c32_198] : memref<256x36xf32, #tpu.memory_space<vmem>>, vector<256x4xf32>
    tpu.vector_store %arg10[%c0_197, %c32_198], %210 {strides = array<i32>} : memref<256x36xf32, #tpu.memory_space<vmem>>, vector<256x4xf32>,
    %c0_199 = arith.constant 0 : index
    %c0_200 = arith.constant 0 : index
    %212 = vector.load %arg10[%c0_199, %c0_200] : memref<256x36xf32, #tpu.memory_space<vmem>>, vector<256x36xf32>
    %c0_201 = arith.constant 0 : index
    %c0_202 = arith.constant 0 : index
    %213 = vector.load %arg6[%c0_201, %c0_202] : memref<36x128xf32, #tpu.memory_space<vmem>>, vector<36x128xf32>
    %cst_203 = arith.constant dense<0.000000e+00> : vector<256x128xf32>
    %214 = tpu.matmul %212, %213, %cst_203 {dimension_numbers = #tpu.dot_dimension_numbers<[1], [0], [0], [1], [0, 0, 1, 1], [], []>} : vector<256x36xf32>, vector<36x128xf32>, vector<256x128xf32> -> vector<256x128xf32>
    %c0_204 = arith.constant 0 : index
    %c0_205 = arith.constant 0 : index
    %215 = vector.load %arg7[%c0_204, %c0_205] : memref<1x128xf32, #tpu.memory_space<vmem>>, vector<1x128xf32>
    %216 = vector.broadcast %215 : vector<1x128xf32> to vector<256x128xf32>
    %217 = arith.addf %214, %216 : vector<256x128xf32>
    %c0_206 = arith.constant 0 : index
    %c1_207 = arith.constant 1 : index
    %c0_208 = arith.constant 0 : index
    %c0_209 = arith.constant 0 : index
    %c0_210 = arith.constant 0 : index
    %218 = vector.load %arg8[%c0_206, %c1_207, %c0_208, %c0_209, %c0_210] : memref<1x2x2x256x128xf32, #tpu.memory_space<vmem>>, vector<1x1x1x256x128xf32>
    %219 = vector.shape_cast %218 : vector<1x1x1x256x128xf32> to vector<256x128xf32>
    %220 = vector.shape_cast %217 : vector<256x128xf32> to vector<1x1x1x256x128xf32>
    tpu.vector_store %arg8[%c0_206, %c1_207, %c0_208, %c0_209, %c0_210], %220 {strides = array<i32>} : memref<1x2x2x256x128xf32, #tpu.memory_space<vmem>>, vector<1x1x1x256x128xf32>,
    %c1_i32_211 = arith.constant 1 : i32
    %221 = arith.addi %4, %c1_i32_211 : i32
    %c0_i32_212 = arith.constant 0 : i32
    %222 = arith.addi %221, %c0_i32_212 : i32
    %c0_213 = arith.constant 0 : index
    %223 = arith.index_cast %222 : i32 to index
    %c1_214 = arith.constant 1 : index
    %c0_215 = arith.constant 0 : index
    %224 = vector.load %arg9[%c0_213, %223, %c1_214, %c0_215] : memref<4x18x18x4xf32, #tpu.memory_space<vmem>>, vector<1x16x16x4xf32>
    %225 = vector.shape_cast %224 : vector<1x16x16x4xf32> to vector<16x16x4xf32>
    %226 = vector.shape_cast %225 : vector<16x16x4xf32> to vector<256x4xf32>
    %c0_216 = arith.constant 0 : index
    %c0_217 = arith.constant 0 : index
    %227 = vector.load %arg10[%c0_216, %c0_217] : memref<256x36xf32, #tpu.memory_space<vmem>>, vector<256x4xf32>
    tpu.vector_store %arg10[%c0_216, %c0_217], %226 {strides = array<i32>} : memref<256x36xf32, #tpu.memory_space<vmem>>, vector<256x4xf32>,
    %c1_i32_218 = arith.constant 1 : i32
    %228 = arith.addi %4, %c1_i32_218 : i32
    %c0_i32_219 = arith.constant 0 : i32
    %229 = arith.addi %228, %c0_i32_219 : i32
    %c1_220 = arith.constant 1 : index
    %230 = arith.index_cast %229 : i32 to index
    %c1_221 = arith.constant 1 : index
    %c0_222 = arith.constant 0 : index
    %231 = vector.load %arg9[%c1_220, %230, %c1_221, %c0_222] : memref<4x18x18x4xf32, #tpu.memory_space<vmem>>, vector<1x16x16x4xf32>
    %232 = vector.shape_cast %231 : vector<1x16x16x4xf32> to vector<16x16x4xf32>
    %233 = vector.shape_cast %232 : vector<16x16x4xf32> to vector<256x4xf32>
    %c0_223 = arith.constant 0 : index
    %c4_224 = arith.constant 4 : index
    %234 = vector.load %arg10[%c0_223, %c4_224] : memref<256x36xf32, #tpu.memory_space<vmem>>, vector<256x4xf32>
    tpu.vector_store %arg10[%c0_223, %c4_224], %233 {strides = array<i32>} : memref<256x36xf32, #tpu.memory_space<vmem>>, vector<256x4xf32>,
    %c1_i32_225 = arith.constant 1 : i32
    %235 = arith.addi %4, %c1_i32_225 : i32
    %c0_i32_226 = arith.constant 0 : i32
    %236 = arith.addi %235, %c0_i32_226 : i32
    %c0_227 = arith.constant 0 : index
    %237 = arith.index_cast %236 : i32 to index
    %c2_228 = arith.constant 2 : index
    %c0_229 = arith.constant 0 : index
    %238 = vector.load %arg9[%c0_227, %237, %c2_228, %c0_229] : memref<4x18x18x4xf32, #tpu.memory_space<vmem>>, vector<1x16x16x4xf32>
    %239 = vector.shape_cast %238 : vector<1x16x16x4xf32> to vector<16x16x4xf32>
    %240 = vector.shape_cast %239 : vector<16x16x4xf32> to vector<256x4xf32>
    %c0_230 = arith.constant 0 : index
    %c8_231 = arith.constant 8 : index
    %241 = vector.load %arg10[%c0_230, %c8_231] : memref<256x36xf32, #tpu.memory_space<vmem>>, vector<256x4xf32>
    tpu.vector_store %arg10[%c0_230, %c8_231], %240 {strides = array<i32>} : memref<256x36xf32, #tpu.memory_space<vmem>>, vector<256x4xf32>,
    %c1_i32_232 = arith.constant 1 : i32
    %242 = arith.addi %4, %c1_i32_232 : i32
    %c0_i32_233 = arith.constant 0 : i32
    %243 = arith.addi %242, %c0_i32_233 : i32
    %c2_234 = arith.constant 2 : index
    %244 = arith.index_cast %243 : i32 to index
    %c1_235 = arith.constant 1 : index
    %c0_236 = arith.constant 0 : index
    %245 = vector.load %arg9[%c2_234, %244, %c1_235, %c0_236] : memref<4x18x18x4xf32, #tpu.memory_space<vmem>>, vector<1x16x16x4xf32>
    %246 = vector.shape_cast %245 : vector<1x16x16x4xf32> to vector<16x16x4xf32>
    %247 = vector.shape_cast %246 : vector<16x16x4xf32> to vector<256x4xf32>
    %c0_237 = arith.constant 0 : index
    %c12_238 = arith.constant 12 : index
    %248 = vector.load %arg10[%c0_237, %c12_238] : memref<256x36xf32, #tpu.memory_space<vmem>>, vector<256x4xf32>
    tpu.vector_store %arg10[%c0_237, %c12_238], %247 {strides = array<i32>} : memref<256x36xf32, #tpu.memory_space<vmem>>, vector<256x4xf32>,
    %c1_i32_239 = arith.constant 1 : i32
    %249 = arith.addi %4, %c1_i32_239 : i32
    %c0_i32_240 = arith.constant 0 : i32
    %250 = arith.addi %249, %c0_i32_240 : i32
    %c3_241 = arith.constant 3 : index
    %251 = arith.index_cast %250 : i32 to index
    %c1_242 = arith.constant 1 : index
    %c0_243 = arith.constant 0 : index
    %252 = vector.load %arg9[%c3_241, %251, %c1_242, %c0_243] : memref<4x18x18x4xf32, #tpu.memory_space<vmem>>, vector<1x16x16x4xf32>
    %253 = vector.shape_cast %252 : vector<1x16x16x4xf32> to vector<16x16x4xf32>
    %254 = vector.shape_cast %253 : vector<16x16x4xf32> to vector<256x4xf32>
    %c0_244 = arith.constant 0 : index
    %c16_245 = arith.constant 16 : index
    %255 = vector.load %arg10[%c0_244, %c16_245] : memref<256x36xf32, #tpu.memory_space<vmem>>, vector<256x4xf32>
    tpu.vector_store %arg10[%c0_244, %c16_245], %254 {strides = array<i32>} : memref<256x36xf32, #tpu.memory_space<vmem>>, vector<256x4xf32>,
    %c1_i32_246 = arith.constant 1 : i32
    %256 = arith.addi %4, %c1_i32_246 : i32
    %c0_i32_247 = arith.constant 0 : i32
    %257 = arith.addi %256, %c0_i32_247 : i32
    %c2_248 = arith.constant 2 : index
    %258 = arith.index_cast %257 : i32 to index
    %c2_249 = arith.constant 2 : index
    %c0_250 = arith.constant 0 : index
    %259 = vector.load %arg9[%c2_248, %258, %c2_249, %c0_250] : memref<4x18x18x4xf32, #tpu.memory_space<vmem>>, vector<1x16x16x4xf32>
    %260 = vector.shape_cast %259 : vector<1x16x16x4xf32> to vector<16x16x4xf32>
    %261 = vector.shape_cast %260 : vector<16x16x4xf32> to vector<256x4xf32>
    %c0_251 = arith.constant 0 : index
    %c20_252 = arith.constant 20 : index
    %262 = vector.load %arg10[%c0_251, %c20_252] : memref<256x36xf32, #tpu.memory_space<vmem>>, vector<256x4xf32>
    tpu.vector_store %arg10[%c0_251, %c20_252], %261 {strides = array<i32>} : memref<256x36xf32, #tpu.memory_space<vmem>>, vector<256x4xf32>,
    %c1_i32_253 = arith.constant 1 : i32
    %263 = arith.addi %4, %c1_i32_253 : i32
    %c1_i32_254 = arith.constant 1 : i32
    %264 = arith.addi %263, %c1_i32_254 : i32
    %c0_255 = arith.constant 0 : index
    %265 = arith.index_cast %264 : i32 to index
    %c1_256 = arith.constant 1 : index
    %c0_257 = arith.constant 0 : index
    %266 = vector.load %arg9[%c0_255, %265, %c1_256, %c0_257] : memref<4x18x18x4xf32, #tpu.memory_space<vmem>>, vector<1x16x16x4xf32>
    %267 = vector.shape_cast %266 : vector<1x16x16x4xf32> to vector<16x16x4xf32>
    %268 = vector.shape_cast %267 : vector<16x16x4xf32> to vector<256x4xf32>
    %c0_258 = arith.constant 0 : index
    %c24_259 = arith.constant 24 : index
    %269 = vector.load %arg10[%c0_258, %c24_259] : memref<256x36xf32, #tpu.memory_space<vmem>>, vector<256x4xf32>
    tpu.vector_store %arg10[%c0_258, %c24_259], %268 {strides = array<i32>} : memref<256x36xf32, #tpu.memory_space<vmem>>, vector<256x4xf32>,
    %c1_i32_260 = arith.constant 1 : i32
    %270 = arith.addi %4, %c1_i32_260 : i32
    %c1_i32_261 = arith.constant 1 : i32
    %271 = arith.addi %270, %c1_i32_261 : i32
    %c1_262 = arith.constant 1 : index
    %272 = arith.index_cast %271 : i32 to index
    %c1_263 = arith.constant 1 : index
    %c0_264 = arith.constant 0 : index
    %273 = vector.load %arg9[%c1_262, %272, %c1_263, %c0_264] : memref<4x18x18x4xf32, #tpu.memory_space<vmem>>, vector<1x16x16x4xf32>
    %274 = vector.shape_cast %273 : vector<1x16x16x4xf32> to vector<16x16x4xf32>
    %275 = vector.shape_cast %274 : vector<16x16x4xf32> to vector<256x4xf32>
    %c0_265 = arith.constant 0 : index
    %c28_266 = arith.constant 28 : index
    %276 = vector.load %arg10[%c0_265, %c28_266] : memref<256x36xf32, #tpu.memory_space<vmem>>, vector<256x4xf32>
    tpu.vector_store %arg10[%c0_265, %c28_266], %275 {strides = array<i32>} : memref<256x36xf32, #tpu.memory_space<vmem>>, vector<256x4xf32>,
    %c1_i32_267 = arith.constant 1 : i32
    %277 = arith.addi %4, %c1_i32_267 : i32
    %c1_i32_268 = arith.constant 1 : i32
    %278 = arith.addi %277, %c1_i32_268 : i32
    %c0_269 = arith.constant 0 : index
    %279 = arith.index_cast %278 : i32 to index
    %c2_270 = arith.constant 2 : index
    %c0_271 = arith.constant 0 : index
    %280 = vector.load %arg9[%c0_269, %279, %c2_270, %c0_271] : memref<4x18x18x4xf32, #tpu.memory_space<vmem>>, vector<1x16x16x4xf32>
    %281 = vector.shape_cast %280 : vector<1x16x16x4xf32> to vector<16x16x4xf32>
    %282 = vector.shape_cast %281 : vector<16x16x4xf32> to vector<256x4xf32>
    %c0_272 = arith.constant 0 : index
    %c32_273 = arith.constant 32 : index
    %283 = vector.load %arg10[%c0_272, %c32_273] : memref<256x36xf32, #tpu.memory_space<vmem>>, vector<256x4xf32>
    tpu.vector_store %arg10[%c0_272, %c32_273], %282 {strides = array<i32>} : memref<256x36xf32, #tpu.memory_space<vmem>>, vector<256x4xf32>,
    %c0_274 = arith.constant 0 : index
    %c0_275 = arith.constant 0 : index
    %284 = vector.load %arg10[%c0_274, %c0_275] : memref<256x36xf32, #tpu.memory_space<vmem>>, vector<256x36xf32>
    %c0_276 = arith.constant 0 : index
    %c0_277 = arith.constant 0 : index
    %285 = vector.load %arg6[%c0_276, %c0_277] : memref<36x128xf32, #tpu.memory_space<vmem>>, vector<36x128xf32>
    %cst_278 = arith.constant dense<0.000000e+00> : vector<256x128xf32>
    %286 = tpu.matmul %284, %285, %cst_278 {dimension_numbers = #tpu.dot_dimension_numbers<[1], [0], [0], [1], [0, 0, 1, 1], [], []>} : vector<256x36xf32>, vector<36x128xf32>, vector<256x128xf32> -> vector<256x128xf32>
    %c0_279 = arith.constant 0 : index
    %c0_280 = arith.constant 0 : index
    %287 = vector.load %arg7[%c0_279, %c0_280] : memref<1x128xf32, #tpu.memory_space<vmem>>, vector<1x128xf32>
    %288 = vector.broadcast %287 : vector<1x128xf32> to vector<256x128xf32>
    %289 = arith.addf %286, %288 : vector<256x128xf32>
    %c0_281 = arith.constant 0 : index
    %c1_282 = arith.constant 1 : index
    %c1_283 = arith.constant 1 : index
    %c0_284 = arith.constant 0 : index
    %c0_285 = arith.constant 0 : index
    %290 = vector.load %arg8[%c0_281, %c1_282, %c1_283, %c0_284, %c0_285] : memref<1x2x2x256x128xf32, #tpu.memory_space<vmem>>, vector<1x1x1x256x128xf32>
    %291 = vector.shape_cast %290 : vector<1x1x1x256x128xf32> to vector<256x128xf32>
    %292 = vector.shape_cast %289 : vector<256x128xf32> to vector<1x1x1x256x128xf32>
    tpu.vector_store %arg8[%c0_281, %c1_282, %c1_283, %c0_284, %c0_285], %292 {strides = array<i32>} : memref<1x2x2x256x128xf32, #tpu.memory_space<vmem>>, vector<1x1x1x256x128xf32>,
    return
  }
  func.func @transform_0(%arg0: i32, %arg1: i32) -> (i32, i32, i32, i32) {
    %c0_i32 = arith.constant 0 : i32
    %c0_i32_0 = arith.constant 0 : i32
    %c0_i32_1 = arith.constant 0 : i32
    %c0_i32_2 = arith.constant 0 : i32
    return %arg0, %c0_i32, %c0_i32_0, %c0_i32_1 : i32, i32, i32, i32
  }
  func.func @transform_1(%arg0: i32, %arg1: i32) -> (i32, i32, i32, i32) {
    %c0_i32 = arith.constant 0 : i32
    %c0_i32_0 = arith.constant 0 : i32
    %c0_i32_1 = arith.constant 0 : i32
    %c0_i32_2 = arith.constant 0 : i32
    return %arg0, %c0_i32, %c0_i32_0, %c0_i32_1 : i32, i32, i32, i32
  }
  func.func @transform_2(%arg0: i32, %arg1: i32) -> (i32, i32, i32) {
    %c0_i32 = arith.constant 0 : i32
    %c0_i32_0 = arith.constant 0 : i32
    %c0_i32_1 = arith.constant 0 : i32
    %c0_i32_2 = arith.constant 0 : i32
    return %c0_i32, %c0_i32_0, %c0_i32_1 : i32, i32, i32
  }
  func.func @transform_3(%arg0: i32, %arg1: i32) -> (i32, i32, i32) {
    %c0_i32 = arith.constant 0 : i32
    %c0_i32_0 = arith.constant 0 : i32
    %c0_i32_1 = arith.constant 0 : i32
    %c0_i32_2 = arith.constant 0 : i32
    return %c0_i32, %c0_i32_0, %c0_i32_1 : i32, i32, i32
  }
  func.func @transform_4(%arg0: i32, %arg1: i32) -> (i32, i32) {
    %c0_i32 = arith.constant 0 : i32
    %c0_i32_0 = arith.constant 0 : i32
    %c0_i32_1 = arith.constant 0 : i32
    return %c0_i32, %c0_i32_0 : i32, i32
  }
  func.func @transform_5(%arg0: i32, %arg1: i32) -> (i32, i32) {
    %c0_i32 = arith.constant 0 : i32
    %c0_i32_0 = arith.constant 0 : i32
    %c0_i32_1 = arith.constant 0 : i32
    return %c0_i32, %c0_i32_0 : i32, i32
  }
  func.func @transform_6(%arg0: i32, %arg1: i32) -> (i32, i32, i32, i32, i32) {
    %c0_i32 = arith.constant 0 : i32
    %c0_i32_0 = arith.constant 0 : i32
    %c0_i32_1 = arith.constant 0 : i32
    %c0_i32_2 = arith.constant 0 : i32
    return %arg0, %c0_i32, %c0_i32_0, %arg1, %c0_i32_1 : i32, i32, i32, i32, i32
  }
}

</mosaic_0001>

<llo_original>
// kernel: tpu_custom_call.1
$region0: #{tpu_custom_call.1}
  #allocation0 [shape = 'u32[]', space=smem, size = 0x4, offset = 0x4, fixed_abs, tag = 'smem constant byte address 0x4 - core index']
  #allocation1 [shape = 'u32[144,128]{1,0:T(1,128)}', space=vmem, size = 0x12000, scoped, tag = 'internal scratch']
  #allocation2 [shape = 'f32[4,18,18,4]{3,2,1,0:T(8,128)}', space=vmem, size = 0xd8000, scoped, tag = 'scratch operand']
  #allocation3 [shape = 'f32[256,36]{1,0:T(8,128)}', space=vmem, size = 0x20000, scoped, tag = 'scratch operand']
  %s0 = inlined_call_operand.vmem [shape: f32[2,16,16,4], index: 0, kind: input, shape index: {}]
  %s1 = inlined_call_operand.vmem [shape: s8[2,16,16,4], index: 1, kind: input, shape index: {}]
  %s2 = inlined_call_operand.vmem [shape: f32[1,1,4], index: 2, kind: input, shape index: {}]
  %s3 = inlined_call_operand.vmem [shape: f32[1,1,4], index: 3, kind: input, shape index: {}]
  %s4 = inlined_call_operand.vmem [shape: f32[36,128], index: 4, kind: input, shape index: {}]
  %s5 = inlined_call_operand.vmem [shape: f32[1,128], index: 5, kind: input, shape index: {}]
  %s6 = inlined_call_operand.hbm [shape: f32[2,2,2,256,128], index: 6, kind: output, shape index: {}]
  %s7 = sld [smem:[#allocation0]]
  $region61: #{tpu_custom_call.1} parent=0
    _
  %s9 = ssub.s32 1, %s7
  %s10 = scalar_select 0, %s9, %s7
  $region1: #{tpu_custom_call.1} parent=0
    #allocation4 [shape = 'u8[1048576]{0}', space=vmem, size = 0x100000, scoped, tag = 'output window, operand 0']
    #allocation5 [shape = 's32[2]{0}', space=sflag, size = 0x8, scoped, tag = 'scoped memory for tpu_custom_call.1']
    %11 = vsyncpa [#allocation5], 0
    %s12 = scalar_lea.sflag [#allocation5], 1
    %13 = vsyncpa %s12, 0
    loop: start=0, step=1, limit=4
    $region2: #{tpu_custom_call.1} parent=1 // loop_pre_header
      _
    $region3: #{tpu_custom_call.1} parent=1 // loop_header
      %s15 = sphi 0, %s19
      %p16 = scmp.ge.s32.totalorder %s15, 4
      %s22 = sphi 0, %s34
      %s23 = sphi 0, %s30
      %s24 = sphi 0, %s22
      %s25 = sphi 0, %s23
      %s26 = sphi 0, %s24
      %s27 = sphi 0, %s25
      %s37 = sphi 0, %s39
      %s40 = sphi 0, %s37
      %s41 = sphi 0, %s40
      %s57 = sphi 0, %s41
      %s63 = sphi 0, %s65
      %s66 = sphi 0, %s63
      %s67 = sphi 0, %s66
      %s83 = sphi 0, %s67
      %s87 = sphi 0, %s87
      %s89 = sphi 0, %s87
      %s90 = sphi 0, %s89
      %s104 = sphi 0, %s90
      %s108 = sphi 0, %s108
      %s110 = sphi 0, %s108
      %s111 = sphi 0, %s110
      %s125 = sphi 0, %s111
      %s129 = sphi 0, %s129
      %s131 = sphi 0, %s129
      %s132 = sphi 0, %s131
      %s146 = sphi 0, %s132
      %s150 = sphi 0, %s150
      %s152 = sphi 0, %s150
      %s153 = sphi 0, %s152
      %s167 = sphi 0, %s153
      %s175 = sphi 0, %s177
      %s178 = sphi 0, %s175
      %s179 = sphi 0, %s178
      %s195 = sphi 0, %s179
    $region4: #{tpu_custom_call.1} parent=1 // loop_header_branch
      %18 = sbr.rel (%p16) target = $region8
    $region5: #{tpu_custom_call.1} parent=1 // loop_body
      %s20 = ssub.s32 %s15, 1
      %s21 = ssub.s32 %s15, 2
      %s28 = sadd.s32 1, %s23
      %p29 = scmp.ge.s32.totalorder %s28, 1
      %s30 = scalar_select %p29, 0, %s28
      %s31 = sadd.s32 1, %s22
      %s32 = scalar_select %p29, %s31, %s22
      %p33 = scmp.ge.s32.totalorder %s32, 2
      %s34 = scalar_select %p33, 0, %s32
      %s35 = ssub.s32 %s22, %s34
      %p36 = scmp.eq.s32.totalorder %s35, 0
      %s38 = sadd.s32 %s37, 1
      %s39 = scalar_select %p36, %s37, %s38
      %p42 = pneg %p36
      %p43 = scmp.eq.s32.totalorder %s15, 1
      %p44 = por %p42, %p43
      %p45 = scmp.ne.s32.totalorder %s37, %s40
      %p46 = scmp.eq.s32.totalorder %s15, 0
      %p47 = por %p45, %p46
      %p48 = scmp.ne.s32.totalorder %s37, %s40
      %p49 = scmp.eq.s32.totalorder %s20, 1
      %p50 = por %p48, %p49
      %p51 = scmp.ne.s32.totalorder %s40, %s41
      %p52 = scmp.eq.s32.totalorder %s20, 0
      %p53 = por %p51, %p52
      %p54 = scmp.ne.s32.totalorder %s40, %s41
      %p55 = scmp.eq.s32.totalorder %s21, 1
      %p56 = por %p54, %p55
      %p58 = scmp.ne.s32.totalorder %s41, %s57
      %p59 = scmp.eq.s32.totalorder %s21, 0
      %p60 = por %p58, %p59
      %s61 = ssub.s32 %s22, %s34
      %p62 = scmp.eq.s32.totalorder %s61, 0
      %s64 = sadd.s32 %s63, 1
      %s65 = scalar_select %p62, %s63, %s64
      %p68 = pneg %p62
      %p69 = scmp.eq.s32.totalorder %s15, 1
      %p70 = por %p68, %p69
      %p71 = scmp.ne.s32.totalorder %s63, %s66
      %p72 = scmp.eq.s32.totalorder %s15, 0
      %p73 = por %p71, %p72
      %p74 = scmp.ne.s32.totalorder %s63, %s66
      %p75 = scmp.eq.s32.totalorder %s20, 1
      %p76 = por %p74, %p75
      %p77 = scmp.ne.s32.totalorder %s66, %s67
      %p78 = scmp.eq.s32.totalorder %s20, 0
      %p79 = por %p77, %p78
      %p80 = scmp.ne.s32.totalorder %s66, %s67
      %p81 = scmp.eq.s32.totalorder %s21, 1
      %p82 = por %p80, %p81
      %p84 = scmp.ne.s32.totalorder %s67, %s83
      %p85 = scmp.eq.s32.totalorder %s21, 0
      %p86 = por %p84, %p85
      %s88 = sadd.s32 %s87, 1
      %p91 = scmp.eq.s32.totalorder %s15, 1
      %p92 = scmp.ne.s32.totalorder %s87, %s89
      %p93 = scmp.eq.s32.totalorder %s15, 0
      %p94 = por %p92, %p93
      %p95 = scmp.ne.s32.totalorder %s87, %s89
      %p96 = scmp.eq.s32.totalorder %s20, 1
      %p97 = por %p95, %p96
      %p98 = scmp.ne.s32.totalorder %s89, %s90
      %p99 = scmp.eq.s32.totalorder %s20, 0
      %p100 = por %p98, %p99
      %p101 = scmp.ne.s32.totalorder %s89, %s90
      %p102 = scmp.eq.s32.totalorder %s21, 1
      %p103 = por %p101, %p102
      %p105 = scmp.ne.s32.totalorder %s90, %s104
      %p106 = scmp.eq.s32.totalorder %s21, 0
      %p107 = por %p105, %p106
      %s109 = sadd.s32 %s108, 1
      %p112 = scmp.eq.s32.totalorder %s15, 1
      %p113 = scmp.ne.s32.totalorder %s108, %s110
      %p114 = scmp.eq.s32.totalorder %s15, 0
      %p115 = por %p113, %p114
      %p116 = scmp.ne.s32.totalorder %s108, %s110
      %p117 = scmp.eq.s32.totalorder %s20, 1
      %p118 = por %p116, %p117
      %p119 = scmp.ne.s32.totalorder %s110, %s111
      %p120 = scmp.eq.s32.totalorder %s20, 0
      %p121 = por %p119, %p120
      %p122 = scmp.ne.s32.totalorder %s110, %s111
      %p123 = scmp.eq.s32.totalorder %s21, 1
      %p124 = por %p122, %p123
      %p126 = scmp.ne.s32.totalorder %s111, %s125
      %p127 = scmp.eq.s32.totalorder %s21, 0
      %p128 = por %p126, %p127
      %s130 = sadd.s32 %s129, 1
      %p133 = scmp.eq.s32.totalorder %s15, 1
      %p134 = scmp.ne.s32.totalorder %s129, %s131
      %p135 = scmp.eq.s32.totalorder %s15, 0
      %p136 = por %p134, %p135
      %p137 = scmp.ne.s32.totalorder %s129, %s131
      %p138 = scmp.eq.s32.totalorder %s20, 1
      %p139 = por %p137, %p138
      %p140 = scmp.ne.s32.totalorder %s131, %s132
      %p141 = scmp.eq.s32.totalorder %s20, 0
      %p142 = por %p140, %p141
      %p143 = scmp.ne.s32.totalorder %s131, %s132
      %p144 = scmp.eq.s32.totalorder %s21, 1
      %p145 = por %p143, %p144
      %p147 = scmp.ne.s32.totalorder %s132, %s146
      %p148 = scmp.eq.s32.totalorder %s21, 0
      %p149 = por %p147, %p148
      %s151 = sadd.s32 %s150, 1
      %p154 = scmp.eq.s32.totalorder %s15, 1
      %p155 = scmp.ne.s32.totalorder %s150, %s152
      %p156 = scmp.eq.s32.totalorder %s15, 0
      %p157 = por %p155, %p156
      %p158 = scmp.ne.s32.totalorder %s150, %s152
      %p159 = scmp.eq.s32.totalorder %s20, 1
      %p160 = por %p158, %p159
      %p161 = scmp.ne.s32.totalorder %s152, %s153
      %p162 = scmp.eq.s32.totalorder %s20, 0
      %p163 = por %p161, %p162
      %p164 = scmp.ne.s32.totalorder %s152, %s153
      %p165 = scmp.eq.s32.totalorder %s21, 1
      %p166 = por %p164, %p165
      %p168 = scmp.ne.s32.totalorder %s153, %s167
      %p169 = scmp.eq.s32.totalorder %s21, 0
      %p170 = por %p168, %p169
      %s171 = ssub.s32 %s22, %s34
      %s172 = ssub.s32 %s23, %s30
      %s173 = sor.u32 %s171, %s172
      %p174 = scmp.eq.s32.totalorder %s173, 0
      %s176 = sadd.s32 %s175, 1
      %s177 = scalar_select %p174, %s175, %s176
      %p180 = pneg %p174
      %p181 = scmp.eq.s32.totalorder %s15, 1
      %p182 = por %p180, %p181
      %p183 = scmp.ne.s32.totalorder %s175, %s178
      %p184 = scmp.eq.s32.totalorder %s15, 0
      %p185 = por %p183, %p184
      %p186 = scmp.ne.s32.totalorder %s175, %s178
      %p187 = scmp.eq.s32.totalorder %s20, 1
      %p188 = por %p186, %p187
      %p189 = scmp.ne.s32.totalorder %s178, %s179
      %p190 = scmp.eq.s32.totalorder %s20, 0
      %p191 = por %p189, %p190
      %p192 = scmp.ne.s32.totalorder %s178, %s179
      %p193 = scmp.eq.s32.totalorder %s21, 1
      %p194 = por %p192, %p193
      %p196 = scmp.ne.s32.totalorder %s179, %s195
      %p197 = scmp.eq.s32.totalorder %s21, 0
      %p198 = por %p196, %p197
      %p199 = scmp.le.s32.totalorder 1, %s15
      %p200 = scmp.lt.s32.totalorder %s15, 3
      %p201 = pnand %p199, %p200
      %p202 = pneg %p201
      // Predicated region
      $region9: #{tpu_custom_call.1} parent=5 // pred_check
        _
      $region10: #{tpu_custom_call.1} parent=5 // pred_check_branch
        %204 = sbr.rel (%p201) target = $region12
      $region11: #{tpu_custom_call.1} parent=5 // pred_region
        %s205 = ssub.s32 %s15, 1
        // Predicated region
        $region13: #{tpu_custom_call.1} parent=11 // pred_check
          %p206 = pneg %p100
        $region14: #{tpu_custom_call.1} parent=11 // pred_check_branch
          %208 = sbr.rel (%p206) target = $region16
        $region15: #{tpu_custom_call.1} parent=11 // pred_region
          _
        $region16: #{tpu_custom_call.1} parent=11 // pred_fallthru
          _
        // Predicated region
        $region17: #{tpu_custom_call.1} parent=11 // pred_check
          %p209 = pneg %p121
        $region18: #{tpu_custom_call.1} parent=11 // pred_check_branch
          %211 = sbr.rel (%p209) target = $region20
        $region19: #{tpu_custom_call.1} parent=11 // pred_region
          _
        $region20: #{tpu_custom_call.1} parent=11 // pred_fallthru
          _
        // Predicated region
        $region21: #{tpu_custom_call.1} parent=11 // pred_check
          %p212 = pneg %p142
        $region22: #{tpu_custom_call.1} parent=11 // pred_check_branch
          %214 = sbr.rel (%p212) target = $region24
        $region23: #{tpu_custom_call.1} parent=11 // pred_region
          _
        $region24: #{tpu_custom_call.1} parent=11 // pred_fallthru
          _
        // Predicated region
        $region25: #{tpu_custom_call.1} parent=11 // pred_check
          %p215 = pneg %p163
        $region26: #{tpu_custom_call.1} parent=11 // pred_check_branch
          %217 = sbr.rel (%p215) target = $region28
        $region27: #{tpu_custom_call.1} parent=11 // pred_region
          _
        $region28: #{tpu_custom_call.1} parent=11 // pred_fallthru
          _
      $region12: #{tpu_custom_call.1} parent=5 // pred_fallthru
        _
      %p218 = scmp.lt.s32.totalorder %s15, 2
      // Predicated region
      $region29: #{tpu_custom_call.1} parent=5 // pred_check
        %p219 = pneg %p218
      $region30: #{tpu_custom_call.1} parent=5 // pred_check_branch
        %221 = sbr.rel (%p219) target = $region32
      $region31: #{tpu_custom_call.1} parent=5 // pred_region
        // Predicated region
        $region33: #{tpu_custom_call.1} parent=31 // pred_check
          %p222 = pneg %p47
        $region34: #{tpu_custom_call.1} parent=31 // pred_check_branch
          %224 = sbr.rel (%p222) target = $region36
        $region35: #{tpu_custom_call.1} parent=31 // pred_region
          %p225 = scmp.lt.s32.totalorder %s22, 1
          %s226 = scalar_select %p225, %s22, 1
          %s227 = smul.addr %s226, 32
          %s228 = smul.addr %s227, 8
          %s229 = scalar_lea.vmem %s0, %s228
        $region36: #{tpu_custom_call.1} parent=31 // pred_fallthru
          _
        // Predicated region
        $region37: #{tpu_custom_call.1} parent=31 // pred_check
          %p230 = pneg %p73
        $region38: #{tpu_custom_call.1} parent=31 // pred_check_branch
          %232 = sbr.rel (%p230) target = $region40
        $region39: #{tpu_custom_call.1} parent=31 // pred_region
          %p233 = scmp.lt.s32.totalorder %s22, 1
          %s234 = scalar_select %p233, %s22, 1
          %s235 = smul.addr %s234, 32
          %s236 = smul.addr %s235, 2
          %s237 = scalar_lea.vmem %s1, %s236
        $region40: #{tpu_custom_call.1} parent=31 // pred_fallthru
          _
      $region32: #{tpu_custom_call.1} parent=5 // pred_fallthru
        _
      %p238 = scmp.le.s32.totalorder 1, %s15
      %p239 = scmp.lt.s32.totalorder %s15, 3
      %p240 = pnand %p238, %p239
      %p241 = pneg %p240
      // Predicated region
      $region41: #{tpu_custom_call.1} parent=5 // pred_check
        _
      $region42: #{tpu_custom_call.1} parent=5 // pred_check_branch
        %243 = sbr.rel (%p240) target = $region44
      $region43: #{tpu_custom_call.1} parent=5 // pred_region
        %s244 = ssub.s32 %s15, 1
        %p245 = scmp.lt.s32.totalorder %s24, 1
        %s246 = scalar_select %p245, %s24, 1
        %s247 = smul.addr %s246, 32
        %s248 = smul.addr %s247, 8
        %s249 = scalar_lea.vmem %s0, %s248
        %p250 = pneg %p53
        %p251 = pneg %p50
        %p252 = scmp.lt.s32.totalorder %s24, 1
        %s253 = scalar_select %p252, %s24, 1
        %s254 = smul.addr %s253, 32
        %s255 = smul.addr %s254, 2
        %s256 = scalar_lea.vmem %s1, %s255
        %p257 = pneg %p79
        %p258 = pneg %p76
        %p259 = pneg %p100
        %p260 = pneg %p97
        %p261 = pneg %p121
        %p262 = pneg %p118
        %p263 = pneg %p142
        %p264 = pneg %p139
        %p265 = pneg %p163
        %p266 = pneg %p160
        %p267 = pneg %p191
        %p268 = pneg %p188
        %s269 = sand.u32 %s178, 1
        %s270 = scalar_lea.sflag [#allocation5], %s269
        %s271 = sand.u32 %s178, 1
        %s272 = smul.addr %s271, 1024
        %s273 = scalar_lea.vmem [#allocation4], %s272
        %p274 = scmp.lt.s32.totalorder %s24, 1
        %s275 = scalar_select %p274, %s24, 1
        %s276 = smul.addr %s275, 32
        %s277 = smul.addr %s276, 8
        %s278 = scalar_lea.vmem %s0, %s277
        %p279 = scmp.lt.s32.totalorder %s24, 1
        %s280 = scalar_select %p279, %s24, 1
        %s281 = smul.addr %s280, 32
        %s282 = smul.addr %s281, 2
        %s283 = scalar_lea.vmem %s1, %s282
        %s284 = smul.u32 32, %s25
        %p285 = scmp.eq.s32.totalorder %s25, 0
        // Predicated region
        $region45: #{tpu_custom_call.1} parent=43 // pred_check
          %p286 = pneg %p285
        $region46: #{tpu_custom_call.1} parent=43 // pred_check_branch
          %288 = sbr.rel (%p286) target = $region48
        $region47: #{tpu_custom_call.1} parent=43 // pred_region
          %v289 = vld [vmem:[%s278] sm:$0xff]
          %v290 = vld [vmem:[%s278 + $0x8] sm:$0xff]
          %v291 = vld [vmem:[%s278 + $0x10] sm:$0xff]
          %v292 = vld [vmem:[%s278 + $0x18] sm:$0xff]
          %v293 = vld [vmem:[%s278 + $0x20] sm:$0xff]
          %v294 = vld [vmem:[%s278 + $0x28] sm:$0xff]
          %v295 = vld [vmem:[%s278 + $0x30] sm:$0xff]
          %v296 = vld [vmem:[%s278 + $0x38] sm:$0xff]
          %v297 = vld [vmem:[%s278 + $0x40] sm:$0xff]
          %v298 = vld [vmem:[%s278 + $0x48] sm:$0xff]
          %v299 = vld [vmem:[%s278 + $0x50] sm:$0xff]
          %v300 = vld [vmem:[%s278 + $0x58] sm:$0xff]
          %v301 = vld [vmem:[%s278 + $0x60] sm:$0xff]
          %v302 = vld [vmem:[%s278 + $0x68] sm:$0xff]
          %v303 = vld [vmem:[%s278 + $0x70] sm:$0xff]
          %v304 = vld [vmem:[%s278 + $0x78] sm:$0xff]
          %v305 = vld [vmem:[%s278 + $0x80] sm:$0xff]
          %v306 = vld [vmem:[%s278 + $0x88] sm:$0xff]
          %v307 = vld [vmem:[%s278 + $0x90] sm:$0xff]
          %v308 = vld [vmem:[%s278 + $0x98] sm:$0xff]
          %v309 = vld [vmem:[%s278 + $0xa0] sm:$0xff]
          %v310 = vld [vmem:[%s278 + $0xa8] sm:$0xff]
          %v311 = vld [vmem:[%s278 + $0xb0] sm:$0xff]
          %v312 = vld [vmem:[%s278 + $0xb8] sm:$0xff]
          %v313 = vld [vmem:[%s278 + $0xc0] sm:$0xff]
          %v314 = vld [vmem:[%s278 + $0xc8] sm:$0xff]
          %v315 = vld [vmem:[%s278 + $0xd0] sm:$0xff]
          %v316 = vld [vmem:[%s278 + $0xd8] sm:$0xff]
          %v317 = vld [vmem:[%s278 + $0xe0] sm:$0xff]
          %v318 = vld [vmem:[%s278 + $0xe8] sm:$0xff]
          %v319 = vld [vmem:[%s278 + $0xf0] sm:$0xff]
          %v320 = vld [vmem:[%s278 + $0xf8] sm:$0xff]
          %v321 = vld [vmem:[%s283] sm:$0x3]
          %v322 = vld [vmem:[%s283 + $0x2] sm:$0x3]
          %v323 = vld [vmem:[%s283 + $0x4] sm:$0x3]
          %v324 = vld [vmem:[%s283 + $0x6] sm:$0x3]
          %v325 = vld [vmem:[%s283 + $0x8] sm:$0x3]
          %v326 = vld [vmem:[%s283 + $0xa] sm:$0x3]
          %v327 = vld [vmem:[%s283 + $0xc] sm:$0x3]
          %v328 = vld [vmem:[%s283 + $0xe] sm:$0x3]
          %v329 = vld [vmem:[%s283 + $0x10] sm:$0x3]
          %v330 = vld [vmem:[%s283 + $0x12] sm:$0x3]
          %v331 = vld [vmem:[%s283 + $0x14] sm:$0x3]
          %v332 = vld [vmem:[%s283 + $0x16] sm:$0x3]
          %v333 = vld [vmem:[%s283 + $0x18] sm:$0x3]
          %v334 = vld [vmem:[%s283 + $0x1a] sm:$0x3]
          %v335 = vld [vmem:[%s283 + $0x1c] sm:$0x3]
          %v336 = vld [vmem:[%s283 + $0x1e] sm:$0x3]
          %v337 = vld [vmem:[%s283 + $0x20] sm:$0x3]
          %v338 = vld [vmem:[%s283 + $0x22] sm:$0x3]
          %v339 = vld [vmem:[%s283 + $0x24] sm:$0x3]
          %v340 = vld [vmem:[%s283 + $0x26] sm:$0x3]
          %v341 = vld [vmem:[%s283 + $0x28] sm:$0x3]
          %v342 = vld [vmem:[%s283 + $0x2a] sm:$0x3]
          %v343 = vld [vmem:[%s283 + $0x2c] sm:$0x3]
          %v344 = vld [vmem:[%s283 + $0x2e] sm:$0x3]
          %v345 = vld [vmem:[%s283 + $0x30] sm:$0x3]
          %v346 = vld [vmem:[%s283 + $0x32] sm:$0x3]
          %v347 = vld [vmem:[%s283 + $0x34] sm:$0x3]
          %v348 = vld [vmem:[%s283 + $0x36] sm:$0x3]
          %v349 = vld [vmem:[%s283 + $0x38] sm:$0x3]
          %v350 = vld [vmem:[%s283 + $0x3a] sm:$0x3]
          %v351 = vld [vmem:[%s283 + $0x3c] sm:$0x3]
          %v352 = vld [vmem:[%s283 + $0x3e] sm:$0x3]
          %v353 = vunpack.c.0.s8 %v321
          %v354 = vunpack.c.0.s8 %v322
          %v355 = vunpack.c.0.s8 %v323
          %v356 = vunpack.c.0.s8 %v324
          %v357 = vunpack.c.0.s8 %v325
          %v358 = vunpack.c.0.s8 %v326
          %v359 = vunpack.c.0.s8 %v327
          %v360 = vunpack.c.0.s8 %v328
          %v361 = vunpack.c.0.s8 %v329
          %v362 = vunpack.c.0.s8 %v330
          %v363 = vunpack.c.0.s8 %v331
          %v364 = vunpack.c.0.s8 %v332
          %v365 = vunpack.c.0.s8 %v333
          %v366 = vunpack.c.0.s8 %v334
          %v367 = vunpack.c.0.s8 %v335
          %v368 = vunpack.c.0.s8 %v336
          %v369 = vunpack.c.0.s8 %v337
          %v370 = vunpack.c.0.s8 %v338
          %v371 = vunpack.c.0.s8 %v339
          %v372 = vunpack.c.0.s8 %v340
          %v373 = vunpack.c.0.s8 %v341
          %v374 = vunpack.c.0.s8 %v342
          %v375 = vunpack.c.0.s8 %v343
          %v376 = vunpack.c.0.s8 %v344
          %v377 = vunpack.c.0.s8 %v345
          %v378 = vunpack.c.0.s8 %v346
          %v379 = vunpack.c.0.s8 %v347
          %v380 = vunpack.c.0.s8 %v348
          %v381 = vunpack.c.0.s8 %v349
          %v382 = vunpack.c.0.s8 %v350
          %v383 = vunpack.c.0.s8 %v351
          %v384 = vunpack.c.0.s8 %v352
          %v385 = vld [vmem:[%s3] sm:$0x1]
          %v387 = vlaneseq
          %v388 = vshrl.u32 %v387, 7
          %v389 = vsub.s32 0, %v388
          %v390 = vrot.slane %v385, %v389
          %v392 = vld [vmem:[%s2] sm:$0x1]
          %v394 = vlaneseq
          %v395 = vshrl.u32 %v394, 7
          %v396 = vsub.s32 0, %v395
          %v397 = vrot.slane %v392, %v396
          %v399 = vmul.f32 %v289, %v397
          %v400 = vmul.f32 %v290, %v397
          %v401 = vmul.f32 %v291, %v397
          %v402 = vmul.f32 %v292, %v397
          %v403 = vmul.f32 %v293, %v397
          %v404 = vmul.f32 %v294, %v397
          %v405 = vmul.f32 %v295, %v397
          %v406 = vmul.f32 %v296, %v397
          %v407 = vmul.f32 %v297, %v397
          %v408 = vmul.f32 %v298, %v397
          %v409 = vmul.f32 %v299, %v397
          %v410 = vmul.f32 %v300, %v397
          %v411 = vmul.f32 %v301, %v397
          %v412 = vmul.f32 %v302, %v397
          %v413 = vmul.f32 %v303, %v397
          %v414 = vmul.f32 %v304, %v397
          %v415 = vmul.f32 %v305, %v397
          %v416 = vmul.f32 %v306, %v397
          %v417 = vmul.f32 %v307, %v397
          %v418 = vmul.f32 %v308, %v397
          %v419 = vmul.f32 %v309, %v397
          %v420 = vmul.f32 %v310, %v397
          %v421 = vmul.f32 %v311, %v397
          %v422 = vmul.f32 %v312, %v397
          %v423 = vmul.f32 %v313, %v397
          %v424 = vmul.f32 %v314, %v397
          %v425 = vmul.f32 %v315, %v397
          %v426 = vmul.f32 %v316, %v397
          %v427 = vmul.f32 %v317, %v397
          %v428 = vmul.f32 %v318, %v397
          %v429 = vmul.f32 %v319, %v397
          %v430 = vmul.f32 %v320, %v397
          %v431 = vadd.f32 %v399, %v390
          %v432 = vadd.f32 %v400, %v390
          %v433 = vadd.f32 %v401, %v390
          %v434 = vadd.f32 %v402, %v390
          %v435 = vadd.f32 %v403, %v390
          %v436 = vadd.f32 %v404, %v390
          %v437 = vadd.f32 %v405, %v390
          %v438 = vadd.f32 %v406, %v390
          %v439 = vadd.f32 %v407, %v390
          %v440 = vadd.f32 %v408, %v390
          %v441 = vadd.f32 %v409, %v390
          %v442 = vadd.f32 %v410, %v390
          %v443 = vadd.f32 %v411, %v390
          %v444 = vadd.f32 %v412, %v390
          %v445 = vadd.f32 %v413, %v390
          %v446 = vadd.f32 %v414, %v390
          %v447 = vadd.f32 %v415, %v390
          %v448 = vadd.f32 %v416, %v390
          %v449 = vadd.f32 %v417, %v390
          %v450 = vadd.f32 %v418, %v390
          %v451 = vadd.f32 %v419, %v390
          %v452 = vadd.f32 %v420, %v390
          %v453 = vadd.f32 %v421, %v390
          %v454 = vadd.f32 %v422, %v390
          %v455 = vadd.f32 %v423, %v390
          %v456 = vadd.f32 %v424, %v390
          %v457 = vadd.f32 %v425, %v390
          %v458 = vadd.f32 %v426, %v390
          %v459 = vadd.f32 %v427, %v390
          %v460 = vadd.f32 %v428, %v390
          %v461 = vadd.f32 %v429, %v390
          %v462 = vadd.f32 %v430, %v390
          %vm463 = vcmp.eq.s32.totalorder %v353, 0
          %vm464 = vcmp.eq.s32.totalorder %v354, 0
          %vm465 = vcmp.eq.s32.totalorder %v355, 0
          %vm466 = vcmp.eq.s32.totalorder %v356, 0
          %vm467 = vcmp.eq.s32.totalorder %v357, 0
          %vm468 = vcmp.eq.s32.totalorder %v358, 0
          %vm469 = vcmp.eq.s32.totalorder %v359, 0
          %vm470 = vcmp.eq.s32.totalorder %v360, 0
          %vm471 = vcmp.eq.s32.totalorder %v361, 0
          %vm472 = vcmp.eq.s32.totalorder %v362, 0
          %vm473 = vcmp.eq.s32.totalorder %v363, 0
          %vm474 = vcmp.eq.s32.totalorder %v364, 0
          %vm475 = vcmp.eq.s32.totalorder %v365, 0
          %vm476 = vcmp.eq.s32.totalorder %v366, 0
          %vm477 = vcmp.eq.s32.totalorder %v367, 0
          %vm478 = vcmp.eq.s32.totalorder %v368, 0
          %vm479 = vcmp.eq.s32.totalorder %v369, 0
          %vm480 = vcmp.eq.s32.totalorder %v370, 0
          %vm481 = vcmp.eq.s32.totalorder %v371, 0
          %vm482 = vcmp.eq.s32.totalorder %v372, 0
          %vm483 = vcmp.eq.s32.totalorder %v373, 0
          %vm484 = vcmp.eq.s32.totalorder %v374, 0
          %vm485 = vcmp.eq.s32.totalorder %v375, 0
          %vm486 = vcmp.eq.s32.totalorder %v376, 0
          %vm487 = vcmp.eq.s32.totalorder %v377, 0
          %vm488 = vcmp.eq.s32.totalorder %v378, 0
          %vm489 = vcmp.eq.s32.totalorder %v379, 0
          %vm490 = vcmp.eq.s32.totalorder %v380, 0
          %vm491 = vcmp.eq.s32.totalorder %v381, 0
          %vm492 = vcmp.eq.s32.totalorder %v382, 0
          %vm493 = vcmp.eq.s32.totalorder %v383, 0
          %vm494 = vcmp.eq.s32.totalorder %v384, 0
          %v495 = vsel %vm463, %v431, %v390
          %v496 = vsel %vm464, %v432, %v390
          %v497 = vsel %vm465, %v433, %v390
          %v498 = vsel %vm466, %v434, %v390
          %v499 = vsel %vm467, %v435, %v390
          %v500 = vsel %vm468, %v436, %v390
          %v501 = vsel %vm469, %v437, %v390
          %v502 = vsel %vm470, %v438, %v390
          %v503 = vsel %vm471, %v439, %v390
          %v504 = vsel %vm472, %v440, %v390
          %v505 = vsel %vm473, %v441, %v390
          %v506 = vsel %vm474, %v442, %v390
          %v507 = vsel %vm475, %v443, %v390
          %v508 = vsel %vm476, %v444, %v390
          %v509 = vsel %vm477, %v445, %v390
          %v510 = vsel %vm478, %v446, %v390
          %v511 = vsel %vm479, %v447, %v390
          %v512 = vsel %vm480, %v448, %v390
          %v513 = vsel %vm481, %v449, %v390
          %v514 = vsel %vm482, %v450, %v390
          %v515 = vsel %vm483, %v451, %v390
          %v516 = vsel %vm484, %v452, %v390
          %v517 = vsel %vm485, %v453, %v390
          %v518 = vsel %vm486, %v454, %v390
          %v519 = vsel %vm487, %v455, %v390
          %v520 = vsel %vm488, %v456, %v390
          %v521 = vsel %vm489, %v457, %v390
          %v522 = vsel %vm490, %v458, %v390
          %v523 = vsel %vm491, %v459, %v390
          %v524 = vsel %vm492, %v460, %v390
          %v525 = vsel %vm493, %v461, %v390
          %v526 = vsel %vm494, %v462, %v390
          %v527 = vmax.f32 %v495, 0.0
          %v528 = vmax.f32 %v496, 0.0
          %v529 = vmax.f32 %v497, 0.0
          %v530 = vmax.f32 %v498, 0.0
          %v531 = vmax.f32 %v499, 0.0
          %v532 = vmax.f32 %v500, 0.0
          %v533 = vmax.f32 %v501, 0.0
          %v534 = vmax.f32 %v502, 0.0
          %v535 = vmax.f32 %v503, 0.0
          %v536 = vmax.f32 %v504, 0.0
          %v537 = vmax.f32 %v505, 0.0
          %v538 = vmax.f32 %v506, 0.0
          %v539 = vmax.f32 %v507, 0.0
          %v540 = vmax.f32 %v508, 0.0
          %v541 = vmax.f32 %v509, 0.0
          %v542 = vmax.f32 %v510, 0.0
          %v543 = vmax.f32 %v511, 0.0
          %v544 = vmax.f32 %v512, 0.0
          %v545 = vmax.f32 %v513, 0.0
          %v546 = vmax.f32 %v514, 0.0
          %v547 = vmax.f32 %v515, 0.0
          %v548 = vmax.f32 %v516, 0.0
          %v549 = vmax.f32 %v517, 0.0
          %v550 = vmax.f32 %v518, 0.0
          %v551 = vmax.f32 %v519, 0.0
          %v552 = vmax.f32 %v520, 0.0
          %v553 = vmax.f32 %v521, 0.0
          %v554 = vmax.f32 %v522, 0.0
          %v555 = vmax.f32 %v523, 0.0
          %v556 = vmax.f32 %v524, 0.0
          %v557 = vmax.f32 %v525, 0.0
          %v558 = vmax.f32 %v526, 0.0
          %s559 = scalar_lea.vmem [#allocation2], 24
          %vm560 = vcmask 31744
          %561 = vst.msk [vmem:[%s559 + $0x1] sm:$0xff] %vm560, %v527
          %562 = vst.msk [vmem:[%s559 + $0x9] sm:$0xff] %vm560, %v528
          %563 = vst.msk [vmem:[%s559 + $0x19] sm:$0xff] %vm560, %v529
          %564 = vst.msk [vmem:[%s559 + $0x21] sm:$0xff] %vm560, %v530
          %565 = vst.msk [vmem:[%s559 + $0x31] sm:$0xff] %vm560, %v531
          %566 = vst.msk [vmem:[%s559 + $0x39] sm:$0xff] %vm560, %v532
          %567 = vst.msk [vmem:[%s559 + $0x49] sm:$0xff] %vm560, %v533
          %568 = vst.msk [vmem:[%s559 + $0x51] sm:$0xff] %vm560, %v534
          %569 = vst.msk [vmem:[%s559 + $0x61] sm:$0xff] %vm560, %v535
          %570 = vst.msk [vmem:[%s559 + $0x69] sm:$0xff] %vm560, %v536
          %571 = vst.msk [vmem:[%s559 + $0x79] sm:$0xff] %vm560, %v537
          %572 = vst.msk [vmem:[%s559 + $0x81] sm:$0xff] %vm560, %v538
          %573 = vst.msk [vmem:[%s559 + $0x91] sm:$0xff] %vm560, %v539
          %574 = vst.msk [vmem:[%s559 + $0x99] sm:$0xff] %vm560, %v540
          %575 = vst.msk [vmem:[%s559 + $0xa9] sm:$0xff] %vm560, %v541
          %576 = vst.msk [vmem:[%s559 + $0xb1] sm:$0xff] %vm560, %v542
          %577 = vst.msk [vmem:[%s559 + $0xc1] sm:$0xff] %vm560, %v543
          %578 = vst.msk [vmem:[%s559 + $0xc9] sm:$0xff] %vm560, %v544
          %579 = vst.msk [vmem:[%s559 + $0xd9] sm:$0xff] %vm560, %v545
          %580 = vst.msk [vmem:[%s559 + $0xe1] sm:$0xff] %vm560, %v546
          %581 = vst.msk [vmem:[%s559 + $0xf1] sm:$0xff] %vm560, %v547
          %582 = vst.msk [vmem:[%s559 + $0xf9] sm:$0xff] %vm560, %v548
          %583 = vst.msk [vmem:[%s559 + $0x109] sm:$0xff] %vm560, %v549
          %584 = vst.msk [vmem:[%s559 + $0x111] sm:$0xff] %vm560, %v550
          %585 = vst.msk [vmem:[%s559 + $0x121] sm:$0xff] %vm560, %v551
          %586 = vst.msk [vmem:[%s559 + $0x129] sm:$0xff] %vm560, %v552
          %587 = vst.msk [vmem:[%s559 + $0x139] sm:$0xff] %vm560, %v553
          %588 = vst.msk [vmem:[%s559 + $0x141] sm:$0xff] %vm560, %v554
          %589 = vst.msk [vmem:[%s559 + $0x151] sm:$0xff] %vm560, %v555
          %590 = vst.msk [vmem:[%s559 + $0x159] sm:$0xff] %vm560, %v556
          %591 = vst.msk [vmem:[%s559 + $0x169] sm:$0xff] %vm560, %v557
          %592 = vst.msk [vmem:[%s559 + $0x171] sm:$0xff] %vm560, %v558
          %593 = vst.msk [vmem:[#allocation2] sm:$0xff] %vm560, 0.0
          %594 = vst.msk [vmem:[#allocation2 + $0x8] sm:$0xff] %vm560, 0.0
          %vm595 = vcmask 25600
          %596 = vst.msk [vmem:[#allocation2 + $0x10] sm:$0x3] %vm595, 0.0
          %s597 = scalar_lea.vmem [#allocation2], 408
          %598 = vst.msk [vmem:[%s597] sm:$0xff] %vm560, 0.0
          %599 = vst.msk [vmem:[%s597 + $0x8] sm:$0xff] %vm560, 0.0
          %600 = vst.msk [vmem:[%s597 + $0x10] sm:$0x3] %vm595, 0.0
          %vm601 = vcmask 24576
          %602 = vst.msk [vmem:[#allocation2] sm:$0x1] %vm601, 0.0
          %603 = vst.msk [vmem:[#allocation2 + $0x18] sm:$0x1] %vm601, 0.0
          %604 = vst.msk [vmem:[#allocation2 + $0x30] sm:$0x1] %vm601, 0.0
          %605 = vst.msk [vmem:[#allocation2 + $0x48] sm:$0x1] %vm601, 0.0
          %606 = vst.msk [vmem:[#allocation2 + $0x60] sm:$0x1] %vm601, 0.0
          %607 = vst.msk [vmem:[#allocation2 + $0x78] sm:$0x1] %vm601, 0.0
          %608 = vst.msk [vmem:[#allocation2 + $0x90] sm:$0x1] %vm601, 0.0
          %609 = vst.msk [vmem:[#allocation2 + $0xa8] sm:$0x1] %vm601, 0.0
          %610 = vst.msk [vmem:[#allocation2 + $0xc0] sm:$0x1] %vm601, 0.0
          %611 = vst.msk [vmem:[#allocation2 + $0xd8] sm:$0x1] %vm601, 0.0
          %612 = vst.msk [vmem:[#allocation2 + $0xf0] sm:$0x1] %vm601, 0.0
          %613 = vst.msk [vmem:[#allocation2 + $0x108] sm:$0x1] %vm601, 0.0
          %614 = vst.msk [vmem:[#allocation2 + $0x120] sm:$0x1] %vm601, 0.0
          %615 = vst.msk [vmem:[#allocation2 + $0x138] sm:$0x1] %vm601, 0.0
          %616 = vst.msk [vmem:[#allocation2 + $0x150] sm:$0x1] %vm601, 0.0
          %617 = vst.msk [vmem:[#allocation2 + $0x168] sm:$0x1] %vm601, 0.0
          %618 = vst.msk [vmem:[#allocation2 + $0x180] sm:$0x1] %vm601, 0.0
          %619 = vst.msk [vmem:[#allocation2 + $0x198] sm:$0x1] %vm601, 0.0
          %620 = vst.msk [vmem:[#allocation2 + $0x11] sm:$0x1] %vm601, 0.0
          %621 = vst.msk [vmem:[#allocation2 + $0x29] sm:$0x1] %vm601, 0.0
          %622 = vst.msk [vmem:[#allocation2 + $0x41] sm:$0x1] %vm601, 0.0
          %623 = vst.msk [vmem:[#allocation2 + $0x59] sm:$0x1] %vm601, 0.0
          %624 = vst.msk [vmem:[#allocation2 + $0x71] sm:$0x1] %vm601, 0.0
          %625 = vst.msk [vmem:[#allocation2 + $0x89] sm:$0x1] %vm601, 0.0
          %626 = vst.msk [vmem:[#allocation2 + $0xa1] sm:$0x1] %vm601, 0.0
          %627 = vst.msk [vmem:[#allocation2 + $0xb9] sm:$0x1] %vm601, 0.0
          %628 = vst.msk [vmem:[#allocation2 + $0xd1] sm:$0x1] %vm601, 0.0
          %629 = vst.msk [vmem:[#allocation2 + $0xe9] sm:$0x1] %vm601, 0.0
          %630 = vst.msk [vmem:[#allocation2 + $0x101] sm:$0x1] %vm601, 0.0
          %631 = vst.msk [vmem:[#allocation2 + $0x119] sm:$0x1] %vm601, 0.0
          %632 = vst.msk [vmem:[#allocation2 + $0x131] sm:$0x1] %vm601, 0.0
          %633 = vst.msk [vmem:[#allocation2 + $0x149] sm:$0x1] %vm601, 0.0
          %634 = vst.msk [vmem:[#allocation2 + $0x161] sm:$0x1] %vm601, 0.0
          %635 = vst.msk [vmem:[#allocation2 + $0x179] sm:$0x1] %vm601, 0.0
          %636 = vst.msk [vmem:[#allocation2 + $0x191] sm:$0x1] %vm601, 0.0
          %637 = vst.msk [vmem:[#allocation2 + $0x1a9] sm:$0x1] %vm601, 0.0
          %vm638 = vcmp.eq.s32.totalorder %v353, 1
          %vm639 = vcmp.eq.s32.totalorder %v354, 1
          %vm640 = vcmp.eq.s32.totalorder %v355, 1
          %vm641 = vcmp.eq.s32.totalorder %v356, 1
          %vm642 = vcmp.eq.s32.totalorder %v357, 1
          %vm643 = vcmp.eq.s32.totalorder %v358, 1
          %vm644 = vcmp.eq.s32.totalorder %v359, 1
          %vm645 = vcmp.eq.s32.totalorder %v360, 1
          %vm646 = vcmp.eq.s32.totalorder %v361, 1
          %vm647 = vcmp.eq.s32.totalorder %v362, 1
          %vm648 = vcmp.eq.s32.totalorder %v363, 1
          %vm649 = vcmp.eq.s32.totalorder %v364, 1
          %vm650 = vcmp.eq.s32.totalorder %v365, 1
          %vm651 = vcmp.eq.s32.totalorder %v366, 1
          %vm652 = vcmp.eq.s32.totalorder %v367, 1
          %vm653 = vcmp.eq.s32.totalorder %v368, 1
          %vm654 = vcmp.eq.s32.totalorder %v369, 1
          %vm655 = vcmp.eq.s32.totalorder %v370, 1
          %vm656 = vcmp.eq.s32.totalorder %v371, 1
          %vm657 = vcmp.eq.s32.totalorder %v372, 1
          %vm658 = vcmp.eq.s32.totalorder %v373, 1
          %vm659 = vcmp.eq.s32.totalorder %v374, 1
          %vm660 = vcmp.eq.s32.totalorder %v375, 1
          %vm661 = vcmp.eq.s32.totalorder %v376, 1
          %vm662 = vcmp.eq.s32.totalorder %v377, 1
          %vm663 = vcmp.eq.s32.totalorder %v378, 1
          %vm664 = vcmp.eq.s32.totalorder %v379, 1
          %vm665 = vcmp.eq.s32.totalorder %v380, 1
          %vm666 = vcmp.eq.s32.totalorder %v381, 1
          %vm667 = vcmp.eq.s32.totalorder %v382, 1
          %vm668 = vcmp.eq.s32.totalorder %v383, 1
          %vm669 = vcmp.eq.s32.totalorder %v384, 1
          %v670 = vsel %vm638, %v431, %v390
          %v671 = vsel %vm639, %v432, %v390
          %v672 = vsel %vm640, %v433, %v390
          %v673 = vsel %vm641, %v434, %v390
          %v674 = vsel %vm642, %v435, %v390
          %v675 = vsel %vm643, %v436, %v390
          %v676 = vsel %vm644, %v437, %v390
          %v677 = vsel %vm645, %v438, %v390
          %v678 = vsel %vm646, %v439, %v390
          %v679 = vsel %vm647, %v440, %v390
          %v680 = vsel %vm648, %v441, %v390
          %v681 = vsel %vm649, %v442, %v390
          %v682 = vsel %vm650, %v443, %v390
          %v683 = vsel %vm651, %v444, %v390
          %v684 = vsel %vm652, %v445, %v390
          %v685 = vsel %vm653, %v446, %v390
          %v686 = vsel %vm654, %v447, %v390
          %v687 = vsel %vm655, %v448, %v390
          %v688 = vsel %vm656, %v449, %v390
          %v689 = vsel %vm657, %v450, %v390
          %v690 = vsel %vm658, %v451, %v390
          %v691 = vsel %vm659, %v452, %v390
          %v692 = vsel %vm660, %v453, %v390
          %v693 = vsel %vm661, %v454, %v390
          %v694 = vsel %vm662, %v455, %v390
          %v695 = vsel %vm663, %v456, %v390
          %v696 = vsel %vm664, %v457, %v390
          %v697 = vsel %vm665, %v458, %v390
          %v698 = vsel %vm666, %v459, %v390
          %v699 = vsel %vm667, %v460, %v390
          %v700 = vsel %vm668, %v461, %v390
          %v701 = vsel %vm669, %v462, %v390
          %v702 = vmax.f32 %v670, 0.0
          %v703 = vmax.f32 %v671, 0.0
          %v704 = vmax.f32 %v672, 0.0
          %v705 = vmax.f32 %v673, 0.0
          %v706 = vmax.f32 %v674, 0.0
          %v707 = vmax.f32 %v675, 0.0
          %v708 = vmax.f32 %v676, 0.0
          %v709 = vmax.f32 %v677, 0.0
          %v710 = vmax.f32 %v678, 0.0
          %v711 = vmax.f32 %v679, 0.0
          %v712 = vmax.f32 %v680, 0.0
          %v713 = vmax.f32 %v681, 0.0
          %v714 = vmax.f32 %v682, 0.0
          %v715 = vmax.f32 %v683, 0.0
          %v716 = vmax.f32 %v684, 0.0
          %v717 = vmax.f32 %v685, 0.0
          %v718 = vmax.f32 %v686, 0.0
          %v719 = vmax.f32 %v687, 0.0
          %v720 = vmax.f32 %v688, 0.0
          %v721 = vmax.f32 %v689, 0.0
          %v722 = vmax.f32 %v690, 0.0
          %v723 = vmax.f32 %v691, 0.0
          %v724 = vmax.f32 %v692, 0.0
          %v725 = vmax.f32 %v693, 0.0
          %v726 = vmax.f32 %v694, 0.0
          %v727 = vmax.f32 %v695, 0.0
          %v728 = vmax.f32 %v696, 0.0
          %v729 = vmax.f32 %v697, 0.0
          %v730 = vmax.f32 %v698, 0.0
          %v731 = vmax.f32 %v699, 0.0
          %v732 = vmax.f32 %v700, 0.0
          %v733 = vmax.f32 %v701, 0.0
          %s734 = scalar_lea.vmem [#allocation2], 456
          %735 = vst.msk [vmem:[%s734 + $0x1] sm:$0xff] %vm560, %v702
          %736 = vst.msk [vmem:[%s734 + $0x9] sm:$0xff] %vm560, %v703
          %737 = vst.msk [vmem:[%s734 + $0x19] sm:$0xff] %vm560, %v704
          %738 = vst.msk [vmem:[%s734 + $0x21] sm:$0xff] %vm560, %v705
          %739 = vst.msk [vmem:[%s734 + $0x31] sm:$0xff] %vm560, %v706
          %740 = vst.msk [vmem:[%s734 + $0x39] sm:$0xff] %vm560, %v707
          %741 = vst.msk [vmem:[%s734 + $0x49] sm:$0xff] %vm560, %v708
          %742 = vst.msk [vmem:[%s734 + $0x51] sm:$0xff] %vm560, %v709
          %743 = vst.msk [vmem:[%s734 + $0x61] sm:$0xff] %vm560, %v710
          %744 = vst.msk [vmem:[%s734 + $0x69] sm:$0xff] %vm560, %v711
          %745 = vst.msk [vmem:[%s734 + $0x79] sm:$0xff] %vm560, %v712
          %746 = vst.msk [vmem:[%s734 + $0x81] sm:$0xff] %vm560, %v713
          %747 = vst.msk [vmem:[%s734 + $0x91] sm:$0xff] %vm560, %v714
          %748 = vst.msk [vmem:[%s734 + $0x99] sm:$0xff] %vm560, %v715
          %749 = vst.msk [vmem:[%s734 + $0xa9] sm:$0xff] %vm560, %v716
          %750 = vst.msk [vmem:[%s734 + $0xb1] sm:$0xff] %vm560, %v717
          %751 = vst.msk [vmem:[%s734 + $0xc1] sm:$0xff] %vm560, %v718
          %752 = vst.msk [vmem:[%s734 + $0xc9] sm:$0xff] %vm560, %v719
          %753 = vst.msk [vmem:[%s734 + $0xd9] sm:$0xff] %vm560, %v720
          %754 = vst.msk [vmem:[%s734 + $0xe1] sm:$0xff] %vm560, %v721
          %755 = vst.msk [vmem:[%s734 + $0xf1] sm:$0xff] %vm560, %v722
          %756 = vst.msk [vmem:[%s734 + $0xf9] sm:$0xff] %vm560, %v723
          %757 = vst.msk [vmem:[%s734 + $0x109] sm:$0xff] %vm560, %v724
          %758 = vst.msk [vmem:[%s734 + $0x111] sm:$0xff] %vm560, %v725
          %759 = vst.msk [vmem:[%s734 + $0x121] sm:$0xff] %vm560, %v726
          %760 = vst.msk [vmem:[%s734 + $0x129] sm:$0xff] %vm560, %v727
          %761 = vst.msk [vmem:[%s734 + $0x139] sm:$0xff] %vm560, %v728
          %762 = vst.msk [vmem:[%s734 + $0x141] sm:$0xff] %vm560, %v729
          %763 = vst.msk [vmem:[%s734 + $0x151] sm:$0xff] %vm560, %v730
          %764 = vst.msk [vmem:[%s734 + $0x159] sm:$0xff] %vm560, %v731
          %765 = vst.msk [vmem:[%s734 + $0x169] sm:$0xff] %vm560, %v732
          %766 = vst.msk [vmem:[%s734 + $0x171] sm:$0xff] %vm560, %v733
          %s767 = scalar_lea.vmem [#allocation2], 432
          %768 = vst.msk [vmem:[%s767] sm:$0xff] %vm560, 0.0
          %769 = vst.msk [vmem:[%s767 + $0x8] sm:$0xff] %vm560, 0.0
          %770 = vst.msk [vmem:[%s767 + $0x10] sm:$0x3] %vm595, 0.0
          %s771 = scalar_lea.vmem [#allocation2], 840
          %772 = vst.msk [vmem:[%s771] sm:$0xff] %vm560, 0.0
          %773 = vst.msk [vmem:[%s771 + $0x8] sm:$0xff] %vm560, 0.0
          %774 = vst.msk [vmem:[%s771 + $0x10] sm:$0x3] %vm595, 0.0
          %775 = vst.msk [vmem:[%s767] sm:$0x1] %vm601, 0.0
          %776 = vst.msk [vmem:[%s767 + $0x18] sm:$0x1] %vm601, 0.0
          %777 = vst.msk [vmem:[%s767 + $0x30] sm:$0x1] %vm601, 0.0
          %778 = vst.msk [vmem:[%s767 + $0x48] sm:$0x1] %vm601, 0.0
          %779 = vst.msk [vmem:[%s767 + $0x60] sm:$0x1] %vm601, 0.0
          %780 = vst.msk [vmem:[%s767 + $0x78] sm:$0x1] %vm601, 0.0
          %781 = vst.msk [vmem:[%s767 + $0x90] sm:$0x1] %vm601, 0.0
          %782 = vst.msk [vmem:[%s767 + $0xa8] sm:$0x1] %vm601, 0.0
          %783 = vst.msk [vmem:[%s767 + $0xc0] sm:$0x1] %vm601, 0.0
          %784 = vst.msk [vmem:[%s767 + $0xd8] sm:$0x1] %vm601, 0.0
          %785 = vst.msk [vmem:[%s767 + $0xf0] sm:$0x1] %vm601, 0.0
          %786 = vst.msk [vmem:[%s767 + $0x108] sm:$0x1] %vm601, 0.0
          %787 = vst.msk [vmem:[%s767 + $0x120] sm:$0x1] %vm601, 0.0
          %788 = vst.msk [vmem:[%s767 + $0x138] sm:$0x1] %vm601, 0.0
          %789 = vst.msk [vmem:[%s767 + $0x150] sm:$0x1] %vm601, 0.0
          %790 = vst.msk [vmem:[%s767 + $0x168] sm:$0x1] %vm601, 0.0
          %791 = vst.msk [vmem:[%s767 + $0x180] sm:$0x1] %vm601, 0.0
          %792 = vst.msk [vmem:[%s767 + $0x198] sm:$0x1] %vm601, 0.0
          %793 = vst.msk [vmem:[%s767 + $0x11] sm:$0x1] %vm601, 0.0
          %794 = vst.msk [vmem:[%s767 + $0x29] sm:$0x1] %vm601, 0.0
          %795 = vst.msk [vmem:[%s767 + $0x41] sm:$0x1] %vm601, 0.0
          %796 = vst.msk [vmem:[%s767 + $0x59] sm:$0x1] %vm601, 0.0
          %797 = vst.msk [vmem:[%s767 + $0x71] sm:$0x1] %vm601, 0.0
          %798 = vst.msk [vmem:[%s767 + $0x89] sm:$0x1] %vm601, 0.0
          %799 = vst.msk [vmem:[%s767 + $0xa1] sm:$0x1] %vm601, 0.0
          %800 = vst.msk [vmem:[%s767 + $0xb9] sm:$0x1] %vm601, 0.0
          %801 = vst.msk [vmem:[%s767 + $0xd1] sm:$0x1] %vm601, 0.0
          %802 = vst.msk [vmem:[%s767 + $0xe9] sm:$0x1] %vm601, 0.0
          %803 = vst.msk [vmem:[%s767 + $0x101] sm:$0x1] %vm601, 0.0
          %804 = vst.msk [vmem:[%s767 + $0x119] sm:$0x1] %vm601, 0.0
          %805 = vst.msk [vmem:[%s767 + $0x131] sm:$0x1] %vm601, 0.0
          %806 = vst.msk [vmem:[%s767 + $0x149] sm:$0x1] %vm601, 0.0
          %807 = vst.msk [vmem:[%s767 + $0x161] sm:$0x1] %vm601, 0.0
          %808 = vst.msk [vmem:[%s767 + $0x179] sm:$0x1] %vm601, 0.0
          %809 = vst.msk [vmem:[%s767 + $0x191] sm:$0x1] %vm601, 0.0
          %810 = vst.msk [vmem:[%s767 + $0x1a9] sm:$0x1] %vm601, 0.0
          %vm811 = vcmp.eq.s32.totalorder %v353, 2
          %vm812 = vcmp.eq.s32.totalorder %v354, 2
          %vm813 = vcmp.eq.s32.totalorder %v355, 2
          %vm814 = vcmp.eq.s32.totalorder %v356, 2
          %vm815 = vcmp.eq.s32.totalorder %v357, 2
          %vm816 = vcmp.eq.s32.totalorder %v358, 2
          %vm817 = vcmp.eq.s32.totalorder %v359, 2
          %vm818 = vcmp.eq.s32.totalorder %v360, 2
          %vm819 = vcmp.eq.s32.totalorder %v361, 2
          %vm820 = vcmp.eq.s32.totalorder %v362, 2
          %vm821 = vcmp.eq.s32.totalorder %v363, 2
          %vm822 = vcmp.eq.s32.totalorder %v364, 2
          %vm823 = vcmp.eq.s32.totalorder %v365, 2
          %vm824 = vcmp.eq.s32.totalorder %v366, 2
          %vm825 = vcmp.eq.s32.totalorder %v367, 2
          %vm826 = vcmp.eq.s32.totalorder %v368, 2
          %vm827 = vcmp.eq.s32.totalorder %v369, 2
          %vm828 = vcmp.eq.s32.totalorder %v370, 2
          %vm829 = vcmp.eq.s32.totalorder %v371, 2
          %vm830 = vcmp.eq.s32.totalorder %v372, 2
          %vm831 = vcmp.eq.s32.totalorder %v373, 2
          %vm832 = vcmp.eq.s32.totalorder %v374, 2
          %vm833 = vcmp.eq.s32.totalorder %v375, 2
          %vm834 = vcmp.eq.s32.totalorder %v376, 2
          %vm835 = vcmp.eq.s32.totalorder %v377, 2
          %vm836 = vcmp.eq.s32.totalorder %v378, 2
          %vm837 = vcmp.eq.s32.totalorder %v379, 2
          %vm838 = vcmp.eq.s32.totalorder %v380, 2
          %vm839 = vcmp.eq.s32.totalorder %v381, 2
          %vm840 = vcmp.eq.s32.totalorder %v382, 2
          %vm841 = vcmp.eq.s32.totalorder %v383, 2
          %vm842 = vcmp.eq.s32.totalorder %v384, 2
          %v843 = vsel %vm811, %v431, %v390
          %v844 = vsel %vm812, %v432, %v390
          %v845 = vsel %vm813, %v433, %v390
          %v846 = vsel %vm814, %v434, %v390
          %v847 = vsel %vm815, %v435, %v390
          %v848 = vsel %vm816, %v436, %v390
          %v849 = vsel %vm817, %v437, %v390
          %v850 = vsel %vm818, %v438, %v390
          %v851 = vsel %vm819, %v439, %v390
          %v852 = vsel %vm820, %v440, %v390
          %v853 = vsel %vm821, %v441, %v390
          %v854 = vsel %vm822, %v442, %v390
          %v855 = vsel %vm823, %v443, %v390
          %v856 = vsel %vm824, %v444, %v390
          %v857 = vsel %vm825, %v445, %v390
          %v858 = vsel %vm826, %v446, %v390
          %v859 = vsel %vm827, %v447, %v390
          %v860 = vsel %vm828, %v448, %v390
          %v861 = vsel %vm829, %v449, %v390
          %v862 = vsel %vm830, %v450, %v390
          %v863 = vsel %vm831, %v451, %v390
          %v864 = vsel %vm832, %v452, %v390
          %v865 = vsel %vm833, %v453, %v390
          %v866 = vsel %vm834, %v454, %v390
          %v867 = vsel %vm835, %v455, %v390
          %v868 = vsel %vm836, %v456, %v390
          %v869 = vsel %vm837, %v457, %v390
          %v870 = vsel %vm838, %v458, %v390
          %v871 = vsel %vm839, %v459, %v390
          %v872 = vsel %vm840, %v460, %v390
          %v873 = vsel %vm841, %v461, %v390
          %v874 = vsel %vm842, %v462, %v390
          %v875 = vmax.f32 %v843, 0.0
          %v876 = vmax.f32 %v844, 0.0
          %v877 = vmax.f32 %v845, 0.0
          %v878 = vmax.f32 %v846, 0.0
          %v879 = vmax.f32 %v847, 0.0
          %v880 = vmax.f32 %v848, 0.0
          %v881 = vmax.f32 %v849, 0.0
          %v882 = vmax.f32 %v850, 0.0
          %v883 = vmax.f32 %v851, 0.0
          %v884 = vmax.f32 %v852, 0.0
          %v885 = vmax.f32 %v853, 0.0
          %v886 = vmax.f32 %v854, 0.0
          %v887 = vmax.f32 %v855, 0.0
          %v888 = vmax.f32 %v856, 0.0
          %v889 = vmax.f32 %v857, 0.0
          %v890 = vmax.f32 %v858, 0.0
          %v891 = vmax.f32 %v859, 0.0
          %v892 = vmax.f32 %v860, 0.0
          %v893 = vmax.f32 %v861, 0.0
          %v894 = vmax.f32 %v862, 0.0
          %v895 = vmax.f32 %v863, 0.0
          %v896 = vmax.f32 %v864, 0.0
          %v897 = vmax.f32 %v865, 0.0
          %v898 = vmax.f32 %v866, 0.0
          %v899 = vmax.f32 %v867, 0.0
          %v900 = vmax.f32 %v868, 0.0
          %v901 = vmax.f32 %v869, 0.0
          %v902 = vmax.f32 %v870, 0.0
          %v903 = vmax.f32 %v871, 0.0
          %v904 = vmax.f32 %v872, 0.0
          %v905 = vmax.f32 %v873, 0.0
          %v906 = vmax.f32 %v874, 0.0
          %s907 = scalar_lea.vmem [#allocation2], 888
          %908 = vst.msk [vmem:[%s907 + $0x1] sm:$0xff] %vm560, %v875
          %909 = vst.msk [vmem:[%s907 + $0x9] sm:$0xff] %vm560, %v876
          %910 = vst.msk [vmem:[%s907 + $0x19] sm:$0xff] %vm560, %v877
          %911 = vst.msk [vmem:[%s907 + $0x21] sm:$0xff] %vm560, %v878
          %912 = vst.msk [vmem:[%s907 + $0x31] sm:$0xff] %vm560, %v879
          %913 = vst.msk [vmem:[%s907 + $0x39] sm:$0xff] %vm560, %v880
          %914 = vst.msk [vmem:[%s907 + $0x49] sm:$0xff] %vm560, %v881
          %915 = vst.msk [vmem:[%s907 + $0x51] sm:$0xff] %vm560, %v882
          %916 = vst.msk [vmem:[%s907 + $0x61] sm:$0xff] %vm560, %v883
          %917 = vst.msk [vmem:[%s907 + $0x69] sm:$0xff] %vm560, %v884
          %918 = vst.msk [vmem:[%s907 + $0x79] sm:$0xff] %vm560, %v885
          %919 = vst.msk [vmem:[%s907 + $0x81] sm:$0xff] %vm560, %v886
          %920 = vst.msk [vmem:[%s907 + $0x91] sm:$0xff] %vm560, %v887
          %921 = vst.msk [vmem:[%s907 + $0x99] sm:$0xff] %vm560, %v888
          %922 = vst.msk [vmem:[%s907 + $0xa9] sm:$0xff] %vm560, %v889
          %923 = vst.msk [vmem:[%s907 + $0xb1] sm:$0xff] %vm560, %v890
          %924 = vst.msk [vmem:[%s907 + $0xc1] sm:$0xff] %vm560, %v891
          %925 = vst.msk [vmem:[%s907 + $0xc9] sm:$0xff] %vm560, %v892
          %926 = vst.msk [vmem:[%s907 + $0xd9] sm:$0xff] %vm560, %v893
          %927 = vst.msk [vmem:[%s907 + $0xe1] sm:$0xff] %vm560, %v894
          %928 = vst.msk [vmem:[%s907 + $0xf1] sm:$0xff] %vm560, %v895
          %929 = vst.msk [vmem:[%s907 + $0xf9] sm:$0xff] %vm560, %v896
          %930 = vst.msk [vmem:[%s907 + $0x109] sm:$0xff] %vm560, %v897
          %931 = vst.msk [vmem:[%s907 + $0x111] sm:$0xff] %vm560, %v898
          %932 = vst.msk [vmem:[%s907 + $0x121] sm:$0xff] %vm560, %v899
          %933 = vst.msk [vmem:[%s907 + $0x129] sm:$0xff] %vm560, %v900
          %934 = vst.msk [vmem:[%s907 + $0x139] sm:$0xff] %vm560, %v901
          %935 = vst.msk [vmem:[%s907 + $0x141] sm:$0xff] %vm560, %v902
          %936 = vst.msk [vmem:[%s907 + $0x151] sm:$0xff] %vm560, %v903
          %937 = vst.msk [vmem:[%s907 + $0x159] sm:$0xff] %vm560, %v904
          %938 = vst.msk [vmem:[%s907 + $0x169] sm:$0xff] %vm560, %v905
          %939 = vst.msk [vmem:[%s907 + $0x171] sm:$0xff] %vm560, %v906
          %s940 = scalar_lea.vmem [#allocation2], 864
          %941 = vst.msk [vmem:[%s940] sm:$0xff] %vm560, 0.0
          %942 = vst.msk [vmem:[%s940 + $0x8] sm:$0xff] %vm560, 0.0
          %943 = vst.msk [vmem:[%s940 + $0x10] sm:$0x3] %vm595, 0.0
          %s944 = scalar_lea.vmem [#allocation2], 1272
          %945 = vst.msk [vmem:[%s944] sm:$0xff] %vm560, 0.0
          %946 = vst.msk [vmem:[%s944 + $0x8] sm:$0xff] %vm560, 0.0
          %947 = vst.msk [vmem:[%s944 + $0x10] sm:$0x3] %vm595, 0.0
          %948 = vst.msk [vmem:[%s940] sm:$0x1] %vm601, 0.0
          %949 = vst.msk [vmem:[%s940 + $0x18] sm:$0x1] %vm601, 0.0
          %950 = vst.msk [vmem:[%s940 + $0x30] sm:$0x1] %vm601, 0.0
          %951 = vst.msk [vmem:[%s940 + $0x48] sm:$0x1] %vm601, 0.0
          %952 = vst.msk [vmem:[%s940 + $0x60] sm:$0x1] %vm601, 0.0
          %953 = vst.msk [vmem:[%s940 + $0x78] sm:$0x1] %vm601, 0.0
          %954 = vst.msk [vmem:[%s940 + $0x90] sm:$0x1] %vm601, 0.0
          %955 = vst.msk [vmem:[%s940 + $0xa8] sm:$0x1] %vm601, 0.0
          %956 = vst.msk [vmem:[%s940 + $0xc0] sm:$0x1] %vm601, 0.0
          %957 = vst.msk [vmem:[%s940 + $0xd8] sm:$0x1] %vm601, 0.0
          %958 = vst.msk [vmem:[%s940 + $0xf0] sm:$0x1] %vm601, 0.0
          %959 = vst.msk [vmem:[%s940 + $0x108] sm:$0x1] %vm601, 0.0
          %960 = vst.msk [vmem:[%s940 + $0x120] sm:$0x1] %vm601, 0.0
          %961 = vst.msk [vmem:[%s940 + $0x138] sm:$0x1] %vm601, 0.0
          %962 = vst.msk [vmem:[%s940 + $0x150] sm:$0x1] %vm601, 0.0
          %963 = vst.msk [vmem:[%s940 + $0x168] sm:$0x1] %vm601, 0.0
          %964 = vst.msk [vmem:[%s940 + $0x180] sm:$0x1] %vm601, 0.0
          %965 = vst.msk [vmem:[%s940 + $0x198] sm:$0x1] %vm601, 0.0
          %966 = vst.msk [vmem:[%s940 + $0x11] sm:$0x1] %vm601, 0.0
          %967 = vst.msk [vmem:[%s940 + $0x29] sm:$0x1] %vm601, 0.0
          %968 = vst.msk [vmem:[%s940 + $0x41] sm:$0x1] %vm601, 0.0
          %969 = vst.msk [vmem:[%s940 + $0x59] sm:$0x1] %vm601, 0.0
          %970 = vst.msk [vmem:[%s940 + $0x71] sm:$0x1] %vm601, 0.0
          %971 = vst.msk [vmem:[%s940 + $0x89] sm:$0x1] %vm601, 0.0
          %972 = vst.msk [vmem:[%s940 + $0xa1] sm:$0x1] %vm601, 0.0
          %973 = vst.msk [vmem:[%s940 + $0xb9] sm:$0x1] %vm601, 0.0
          %974 = vst.msk [vmem:[%s940 + $0xd1] sm:$0x1] %vm601, 0.0
          %975 = vst.msk [vmem:[%s940 + $0xe9] sm:$0x1] %vm601, 0.0
          %976 = vst.msk [vmem:[%s940 + $0x101] sm:$0x1] %vm601, 0.0
          %977 = vst.msk [vmem:[%s940 + $0x119] sm:$0x1] %vm601, 0.0
          %978 = vst.msk [vmem:[%s940 + $0x131] sm:$0x1] %vm601, 0.0
          %979 = vst.msk [vmem:[%s940 + $0x149] sm:$0x1] %vm601, 0.0
          %980 = vst.msk [vmem:[%s940 + $0x161] sm:$0x1] %vm601, 0.0
          %981 = vst.msk [vmem:[%s940 + $0x179] sm:$0x1] %vm601, 0.0
          %982 = vst.msk [vmem:[%s940 + $0x191] sm:$0x1] %vm601, 0.0
          %983 = vst.msk [vmem:[%s940 + $0x1a9] sm:$0x1] %vm601, 0.0
          %vm984 = vcmp.eq.s32.totalorder %v353, 3
          %vm985 = vcmp.eq.s32.totalorder %v354, 3
          %vm986 = vcmp.eq.s32.totalorder %v355, 3
          %vm987 = vcmp.eq.s32.totalorder %v356, 3
          %vm988 = vcmp.eq.s32.totalorder %v357, 3
          %vm989 = vcmp.eq.s32.totalorder %v358, 3
          %vm990 = vcmp.eq.s32.totalorder %v359, 3
          %vm991 = vcmp.eq.s32.totalorder %v360, 3
          %vm992 = vcmp.eq.s32.totalorder %v361, 3
          %vm993 = vcmp.eq.s32.totalorder %v362, 3
          %vm994 = vcmp.eq.s32.totalorder %v363, 3
          %vm995 = vcmp.eq.s32.totalorder %v364, 3
          %vm996 = vcmp.eq.s32.totalorder %v365, 3
          %vm997 = vcmp.eq.s32.totalorder %v366, 3
          %vm998 = vcmp.eq.s32.totalorder %v367, 3
          %vm999 = vcmp.eq.s32.totalorder %v368, 3
          %vm1000 = vcmp.eq.s32.totalorder %v369, 3
          %vm1001 = vcmp.eq.s32.totalorder %v370, 3
          %vm1002 = vcmp.eq.s32.totalorder %v371, 3
          %vm1003 = vcmp.eq.s32.totalorder %v372, 3
          %vm1004 = vcmp.eq.s32.totalorder %v373, 3
          %vm1005 = vcmp.eq.s32.totalorder %v374, 3
          %vm1006 = vcmp.eq.s32.totalorder %v375, 3
          %vm1007 = vcmp.eq.s32.totalorder %v376, 3
          %vm1008 = vcmp.eq.s32.totalorder %v377, 3
          %vm1009 = vcmp.eq.s32.totalorder %v378, 3
          %vm1010 = vcmp.eq.s32.totalorder %v379, 3
          %vm1011 = vcmp.eq.s32.totalorder %v380, 3
          %vm1012 = vcmp.eq.s32.totalorder %v381, 3
          %vm1013 = vcmp.eq.s32.totalorder %v382, 3
          %vm1014 = vcmp.eq.s32.totalorder %v383, 3
          %vm1015 = vcmp.eq.s32.totalorder %v384, 3
          %v1016 = vsel %vm984, %v431, %v390
          %v1017 = vsel %vm985, %v432, %v390
          %v1018 = vsel %vm986, %v433, %v390
          %v1019 = vsel %vm987, %v434, %v390
          %v1020 = vsel %vm988, %v435, %v390
          %v1021 = vsel %vm989, %v436, %v390
          %v1022 = vsel %vm990, %v437, %v390
          %v1023 = vsel %vm991, %v438, %v390
          %v1024 = vsel %vm992, %v439, %v390
          %v1025 = vsel %vm993, %v440, %v390
          %v1026 = vsel %vm994, %v441, %v390
          %v1027 = vsel %vm995, %v442, %v390
          %v1028 = vsel %vm996, %v443, %v390
          %v1029 = vsel %vm997, %v444, %v390
          %v1030 = vsel %vm998, %v445, %v390
          %v1031 = vsel %vm999, %v446, %v390
          %v1032 = vsel %vm1000, %v447, %v390
          %v1033 = vsel %vm1001, %v448, %v390
          %v1034 = vsel %vm1002, %v449, %v390
          %v1035 = vsel %vm1003, %v450, %v390
          %v1036 = vsel %vm1004, %v451, %v390
          %v1037 = vsel %vm1005, %v452, %v390
          %v1038 = vsel %vm1006, %v453, %v390
          %v1039 = vsel %vm1007, %v454, %v390
          %v1040 = vsel %vm1008, %v455, %v390
          %v1041 = vsel %vm1009, %v456, %v390
          %v1042 = vsel %vm1010, %v457, %v390
          %v1043 = vsel %vm1011, %v458, %v390
          %v1044 = vsel %vm1012, %v459, %v390
          %v1045 = vsel %vm1013, %v460, %v390
          %v1046 = vsel %vm1014, %v461, %v390
          %v1047 = vsel %vm1015, %v462, %v390
          %v1048 = vmax.f32 %v1016, 0.0
          %v1049 = vmax.f32 %v1017, 0.0
          %v1050 = vmax.f32 %v1018, 0.0
          %v1051 = vmax.f32 %v1019, 0.0
          %v1052 = vmax.f32 %v1020, 0.0
          %v1053 = vmax.f32 %v1021, 0.0
          %v1054 = vmax.f32 %v1022, 0.0
          %v1055 = vmax.f32 %v1023, 0.0
          %v1056 = vmax.f32 %v1024, 0.0
          %v1057 = vmax.f32 %v1025, 0.0
          %v1058 = vmax.f32 %v1026, 0.0
          %v1059 = vmax.f32 %v1027, 0.0
          %v1060 = vmax.f32 %v1028, 0.0
          %v1061 = vmax.f32 %v1029, 0.0
          %v1062 = vmax.f32 %v1030, 0.0
          %v1063 = vmax.f32 %v1031, 0.0
          %v1064 = vmax.f32 %v1032, 0.0
          %v1065 = vmax.f32 %v1033, 0.0
          %v1066 = vmax.f32 %v1034, 0.0
          %v1067 = vmax.f32 %v1035, 0.0
          %v1068 = vmax.f32 %v1036, 0.0
          %v1069 = vmax.f32 %v1037, 0.0
          %v1070 = vmax.f32 %v1038, 0.0
          %v1071 = vmax.f32 %v1039, 0.0
          %v1072 = vmax.f32 %v1040, 0.0
          %v1073 = vmax.f32 %v1041, 0.0
          %v1074 = vmax.f32 %v1042, 0.0
          %v1075 = vmax.f32 %v1043, 0.0
          %v1076 = vmax.f32 %v1044, 0.0
          %v1077 = vmax.f32 %v1045, 0.0
          %v1078 = vmax.f32 %v1046, 0.0
          %v1079 = vmax.f32 %v1047, 0.0
          %s1080 = scalar_lea.vmem [#allocation2], 1320
          %1081 = vst.msk [vmem:[%s1080 + $0x1] sm:$0xff] %vm560, %v1048
          %1082 = vst.msk [vmem:[%s1080 + $0x9] sm:$0xff] %vm560, %v1049
          %1083 = vst.msk [vmem:[%s1080 + $0x19] sm:$0xff] %vm560, %v1050
          %1084 = vst.msk [vmem:[%s1080 + $0x21] sm:$0xff] %vm560, %v1051
          %1085 = vst.msk [vmem:[%s1080 + $0x31] sm:$0xff] %vm560, %v1052
          %1086 = vst.msk [vmem:[%s1080 + $0x39] sm:$0xff] %vm560, %v1053
          %1087 = vst.msk [vmem:[%s1080 + $0x49] sm:$0xff] %vm560, %v1054
          %1088 = vst.msk [vmem:[%s1080 + $0x51] sm:$0xff] %vm560, %v1055
          %1089 = vst.msk [vmem:[%s1080 + $0x61] sm:$0xff] %vm560, %v1056
          %1090 = vst.msk [vmem:[%s1080 + $0x69] sm:$0xff] %vm560, %v1057
          %1091 = vst.msk [vmem:[%s1080 + $0x79] sm:$0xff] %vm560, %v1058
          %1092 = vst.msk [vmem:[%s1080 + $0x81] sm:$0xff] %vm560, %v1059
          %1093 = vst.msk [vmem:[%s1080 + $0x91] sm:$0xff] %vm560, %v1060
          %1094 = vst.msk [vmem:[%s1080 + $0x99] sm:$0xff] %vm560, %v1061
          %1095 = vst.msk [vmem:[%s1080 + $0xa9] sm:$0xff] %vm560, %v1062
          %1096 = vst.msk [vmem:[%s1080 + $0xb1] sm:$0xff] %vm560, %v1063
          %1097 = vst.msk [vmem:[%s1080 + $0xc1] sm:$0xff] %vm560, %v1064
          %1098 = vst.msk [vmem:[%s1080 + $0xc9] sm:$0xff] %vm560, %v1065
          %1099 = vst.msk [vmem:[%s1080 + $0xd9] sm:$0xff] %vm560, %v1066
          %1100 = vst.msk [vmem:[%s1080 + $0xe1] sm:$0xff] %vm560, %v1067
          %1101 = vst.msk [vmem:[%s1080 + $0xf1] sm:$0xff] %vm560, %v1068
          %1102 = vst.msk [vmem:[%s1080 + $0xf9] sm:$0xff] %vm560, %v1069
          %1103 = vst.msk [vmem:[%s1080 + $0x109] sm:$0xff] %vm560, %v1070
          %1104 = vst.msk [vmem:[%s1080 + $0x111] sm:$0xff] %vm560, %v1071
          %1105 = vst.msk [vmem:[%s1080 + $0x121] sm:$0xff] %vm560, %v1072
          %1106 = vst.msk [vmem:[%s1080 + $0x129] sm:$0xff] %vm560, %v1073
          %1107 = vst.msk [vmem:[%s1080 + $0x139] sm:$0xff] %vm560, %v1074
          %1108 = vst.msk [vmem:[%s1080 + $0x141] sm:$0xff] %vm560, %v1075
          %1109 = vst.msk [vmem:[%s1080 + $0x151] sm:$0xff] %vm560, %v1076
          %1110 = vst.msk [vmem:[%s1080 + $0x159] sm:$0xff] %vm560, %v1077
          %1111 = vst.msk [vmem:[%s1080 + $0x169] sm:$0xff] %vm560, %v1078
          %1112 = vst.msk [vmem:[%s1080 + $0x171] sm:$0xff] %vm560, %v1079
          %s1113 = scalar_lea.vmem [#allocation2], 1296
          %1114 = vst.msk [vmem:[%s1113] sm:$0xff] %vm560, 0.0
          %1115 = vst.msk [vmem:[%s1113 + $0x8] sm:$0xff] %vm560, 0.0
          %1116 = vst.msk [vmem:[%s1113 + $0x10] sm:$0x3] %vm595, 0.0
          %s1117 = scalar_lea.vmem [#allocation2], 1704
          %1118 = vst.msk [vmem:[%s1117] sm:$0xff] %vm560, 0.0
          %1119 = vst.msk [vmem:[%s1117 + $0x8] sm:$0xff] %vm560, 0.0
          %1120 = vst.msk [vmem:[%s1117 + $0x10] sm:$0x3] %vm595, 0.0
          %1121 = vst.msk [vmem:[%s1113] sm:$0x1] %vm601, 0.0
          %1122 = vst.msk [vmem:[%s1113 + $0x18] sm:$0x1] %vm601, 0.0
          %1123 = vst.msk [vmem:[%s1113 + $0x30] sm:$0x1] %vm601, 0.0
          %1124 = vst.msk [vmem:[%s1113 + $0x48] sm:$0x1] %vm601, 0.0
          %1125 = vst.msk [vmem:[%s1113 + $0x60] sm:$0x1] %vm601, 0.0
          %1126 = vst.msk [vmem:[%s1113 + $0x78] sm:$0x1] %vm601, 0.0
          %1127 = vst.msk [vmem:[%s1113 + $0x90] sm:$0x1] %vm601, 0.0
          %1128 = vst.msk [vmem:[%s1113 + $0xa8] sm:$0x1] %vm601, 0.0
          %1129 = vst.msk [vmem:[%s1113 + $0xc0] sm:$0x1] %vm601, 0.0
          %1130 = vst.msk [vmem:[%s1113 + $0xd8] sm:$0x1] %vm601, 0.0
          %1131 = vst.msk [vmem:[%s1113 + $0xf0] sm:$0x1] %vm601, 0.0
          %1132 = vst.msk [vmem:[%s1113 + $0x108] sm:$0x1] %vm601, 0.0
          %1133 = vst.msk [vmem:[%s1113 + $0x120] sm:$0x1] %vm601, 0.0
          %1134 = vst.msk [vmem:[%s1113 + $0x138] sm:$0x1] %vm601, 0.0
          %1135 = vst.msk [vmem:[%s1113 + $0x150] sm:$0x1] %vm601, 0.0
          %1136 = vst.msk [vmem:[%s1113 + $0x168] sm:$0x1] %vm601, 0.0
          %1137 = vst.msk [vmem:[%s1113 + $0x180] sm:$0x1] %vm601, 0.0
          %1138 = vst.msk [vmem:[%s1113 + $0x198] sm:$0x1] %vm601, 0.0
          %1139 = vst.msk [vmem:[%s1113 + $0x11] sm:$0x1] %vm601, 0.0
          %1140 = vst.msk [vmem:[%s1113 + $0x29] sm:$0x1] %vm601, 0.0
          %1141 = vst.msk [vmem:[%s1113 + $0x41] sm:$0x1] %vm601, 0.0
          %1142 = vst.msk [vmem:[%s1113 + $0x59] sm:$0x1] %vm601, 0.0
          %1143 = vst.msk [vmem:[%s1113 + $0x71] sm:$0x1] %vm601, 0.0
          %1144 = vst.msk [vmem:[%s1113 + $0x89] sm:$0x1] %vm601, 0.0
          %1145 = vst.msk [vmem:[%s1113 + $0xa1] sm:$0x1] %vm601, 0.0
          %1146 = vst.msk [vmem:[%s1113 + $0xb9] sm:$0x1] %vm601, 0.0
          %1147 = vst.msk [vmem:[%s1113 + $0xd1] sm:$0x1] %vm601, 0.0
          %1148 = vst.msk [vmem:[%s1113 + $0xe9] sm:$0x1] %vm601, 0.0
          %1149 = vst.msk [vmem:[%s1113 + $0x101] sm:$0x1] %vm601, 0.0
          %1150 = vst.msk [vmem:[%s1113 + $0x119] sm:$0x1] %vm601, 0.0
          %1151 = vst.msk [vmem:[%s1113 + $0x131] sm:$0x1] %vm601, 0.0
          %1152 = vst.msk [vmem:[%s1113 + $0x149] sm:$0x1] %vm601, 0.0
          %1153 = vst.msk [vmem:[%s1113 + $0x161] sm:$0x1] %vm601, 0.0
          %1154 = vst.msk [vmem:[%s1113 + $0x179] sm:$0x1] %vm601, 0.0
          %1155 = vst.msk [vmem:[%s1113 + $0x191] sm:$0x1] %vm601, 0.0
          %1156 = vst.msk [vmem:[%s1113 + $0x1a9] sm:$0x1] %vm601, 0.0
        $region48: #{tpu_custom_call.1} parent=43 // pred_fallthru
          _
        %s1157 = smul.u32 %s25, 16
        %s1158 = smul.u32 %s1157, 24
        %s1159 = sadd.s32 %s1158, 1296
        %s1160 = scalar_lea.vmem [#allocation2], %s1159
        %v1161 = vld [vmem:[%s1160] sm:$0xff]
        %v1162 = vld [vmem:[%s1160 + $0x8] sm:$0xff]
        %v1163 = vld [vmem:[%s1160 + $0x18] sm:$0xff]
        %v1164 = vld [vmem:[%s1160 + $0x20] sm:$0xff]
        %v1165 = vld [vmem:[%s1160 + $0x30] sm:$0xff]
        %v1166 = vld [vmem:[%s1160 + $0x38] sm:$0xff]
        %v1167 = vld [vmem:[%s1160 + $0x48] sm:$0xff]
        %v1168 = vld [vmem:[%s1160 + $0x50] sm:$0xff]
        %v1169 = vld [vmem:[%s1160 + $0x60] sm:$0xff]
        %v1170 = vld [vmem:[%s1160 + $0x68] sm:$0xff]
        %v1171 = vld [vmem:[%s1160 + $0x78] sm:$0xff]
        %v1172 = vld [vmem:[%s1160 + $0x80] sm:$0xff]
        %v1173 = vld [vmem:[%s1160 + $0x90] sm:$0xff]
        %v1174 = vld [vmem:[%s1160 + $0x98] sm:$0xff]
        %v1175 = vld [vmem:[%s1160 + $0xa8] sm:$0xff]
        %v1176 = vld [vmem:[%s1160 + $0xb0] sm:$0xff]
        %v1177 = vld [vmem:[%s1160 + $0xc0] sm:$0xff]
        %v1178 = vld [vmem:[%s1160 + $0xc8] sm:$0xff]
        %v1179 = vld [vmem:[%s1160 + $0xd8] sm:$0xff]
        %v1180 = vld [vmem:[%s1160 + $0xe0] sm:$0xff]
        %v1181 = vld [vmem:[%s1160 + $0xf0] sm:$0xff]
        %v1182 = vld [vmem:[%s1160 + $0xf8] sm:$0xff]
        %v1183 = vld [vmem:[%s1160 + $0x108] sm:$0xff]
        %v1184 = vld [vmem:[%s1160 + $0x110] sm:$0xff]
        %v1185 = vld [vmem:[%s1160 + $0x120] sm:$0xff]
        %v1186 = vld [vmem:[%s1160 + $0x128] sm:$0xff]
        %v1187 = vld [vmem:[%s1160 + $0x138] sm:$0xff]
        %v1188 = vld [vmem:[%s1160 + $0x140] sm:$0xff]
        %v1189 = vld [vmem:[%s1160 + $0x150] sm:$0xff]
        %v1190 = vld [vmem:[%s1160 + $0x158] sm:$0xff]
        %v1191 = vld [vmem:[%s1160 + $0x168] sm:$0xff]
        %v1192 = vld [vmem:[%s1160 + $0x170] sm:$0xff]
        %vm1193 = vcmask 31744
        %1194 = vst.msk [vmem:[#allocation3] sm:$0xff] %vm1193, %v1161
        %1195 = vst.msk [vmem:[#allocation3 + $0x8] sm:$0xff] %vm1193, %v1162
        %1196 = vst.msk [vmem:[#allocation3 + $0x10] sm:$0xff] %vm1193, %v1163
        %1197 = vst.msk [vmem:[#allocation3 + $0x18] sm:$0xff] %vm1193, %v1164
        %1198 = vst.msk [vmem:[#allocation3 + $0x20] sm:$0xff] %vm1193, %v1165
        %1199 = vst.msk [vmem:[#allocation3 + $0x28] sm:$0xff] %vm1193, %v1166
        %1200 = vst.msk [vmem:[#allocation3 + $0x30] sm:$0xff] %vm1193, %v1167
        %1201 = vst.msk [vmem:[#allocation3 + $0x38] sm:$0xff] %vm1193, %v1168
        %1202 = vst.msk [vmem:[#allocation3 + $0x40] sm:$0xff] %vm1193, %v1169
        %1203 = vst.msk [vmem:[#allocation3 + $0x48] sm:$0xff] %vm1193, %v1170
        %1204 = vst.msk [vmem:[#allocation3 + $0x50] sm:$0xff] %vm1193, %v1171
        %1205 = vst.msk [vmem:[#allocation3 + $0x58] sm:$0xff] %vm1193, %v1172
        %1206 = vst.msk [vmem:[#allocation3 + $0x60] sm:$0xff] %vm1193, %v1173
        %1207 = vst.msk [vmem:[#allocation3 + $0x68] sm:$0xff] %vm1193, %v1174
        %1208 = vst.msk [vmem:[#allocation3 + $0x70] sm:$0xff] %vm1193, %v1175
        %1209 = vst.msk [vmem:[#allocation3 + $0x78] sm:$0xff] %vm1193, %v1176
        %1210 = vst.msk [vmem:[#allocation3 + $0x80] sm:$0xff] %vm1193, %v1177
        %1211 = vst.msk [vmem:[#allocation3 + $0x88] sm:$0xff] %vm1193, %v1178
        %1212 = vst.msk [vmem:[#allocation3 + $0x90] sm:$0xff] %vm1193, %v1179
        %1213 = vst.msk [vmem:[#allocation3 + $0x98] sm:$0xff] %vm1193, %v1180
        %1214 = vst.msk [vmem:[#allocation3 + $0xa0] sm:$0xff] %vm1193, %v1181
        %1215 = vst.msk [vmem:[#allocation3 + $0xa8] sm:$0xff] %vm1193, %v1182
        %1216 = vst.msk [vmem:[#allocation3 + $0xb0] sm:$0xff] %vm1193, %v1183
        %1217 = vst.msk [vmem:[#allocation3 + $0xb8] sm:$0xff] %vm1193, %v1184
        %1218 = vst.msk [vmem:[#allocation3 + $0xc0] sm:$0xff] %vm1193, %v1185
        %1219 = vst.msk [vmem:[#allocation3 + $0xc8] sm:$0xff] %vm1193, %v1186
        %1220 = vst.msk [vmem:[#allocation3 + $0xd0] sm:$0xff] %vm1193, %v1187
        %1221 = vst.msk [vmem:[#allocation3 + $0xd8] sm:$0xff] %vm1193, %v1188
        %1222 = vst.msk [vmem:[#allocation3 + $0xe0] sm:$0xff] %vm1193, %v1189
        %1223 = vst.msk [vmem:[#allocation3 + $0xe8] sm:$0xff] %vm1193, %v1190
        %1224 = vst.msk [vmem:[#allocation3 + $0xf0] sm:$0xff] %vm1193, %v1191
        %1225 = vst.msk [vmem:[#allocation3 + $0xf8] sm:$0xff] %vm1193, %v1192
        %s1226 = sadd.s32 %s1158, 864
        %s1227 = scalar_lea.vmem [#allocation2], %s1226
        %v1228 = vld [vmem:[%s1227 + $0x1] sm:$0xff]
        %v1229 = vld [vmem:[%s1227 + $0x9] sm:$0xff]
        %v1230 = vld [vmem:[%s1227 + $0x19] sm:$0xff]
        %v1231 = vld [vmem:[%s1227 + $0x21] sm:$0xff]
        %v1232 = vld [vmem:[%s1227 + $0x31] sm:$0xff]
        %v1233 = vld [vmem:[%s1227 + $0x39] sm:$0xff]
        %v1234 = vld [vmem:[%s1227 + $0x49] sm:$0xff]
        %v1235 = vld [vmem:[%s1227 + $0x51] sm:$0xff]
        %v1236 = vld [vmem:[%s1227 + $0x61] sm:$0xff]
        %v1237 = vld [vmem:[%s1227 + $0x69] sm:$0xff]
        %v1238 = vld [vmem:[%s1227 + $0x79] sm:$0xff]
        %v1239 = vld [vmem:[%s1227 + $0x81] sm:$0xff]
        %v1240 = vld [vmem:[%s1227 + $0x91] sm:$0xff]
        %v1241 = vld [vmem:[%s1227 + $0x99] sm:$0xff]
        %v1242 = vld [vmem:[%s1227 + $0xa9] sm:$0xff]
        %v1243 = vld [vmem:[%s1227 + $0xb1] sm:$0xff]
        %v1244 = vld [vmem:[%s1227 + $0xc1] sm:$0xff]
        %v1245 = vld [vmem:[%s1227 + $0xc9] sm:$0xff]
        %v1246 = vld [vmem:[%s1227 + $0xd9] sm:$0xff]
        %v1247 = vld [vmem:[%s1227 + $0xe1] sm:$0xff]
        %v1248 = vld [vmem:[%s1227 + $0xf1] sm:$0xff]
        %v1249 = vld [vmem:[%s1227 + $0xf9] sm:$0xff]
        %v1250 = vld [vmem:[%s1227 + $0x109] sm:$0xff]
        %v1251 = vld [vmem:[%s1227 + $0x111] sm:$0xff]
        %v1252 = vld [vmem:[%s1227 + $0x121] sm:$0xff]
        %v1253 = vld [vmem:[%s1227 + $0x129] sm:$0xff]
        %v1254 = vld [vmem:[%s1227 + $0x139] sm:$0xff]
        %v1255 = vld [vmem:[%s1227 + $0x141] sm:$0xff]
        %v1256 = vld [vmem:[%s1227 + $0x151] sm:$0xff]
        %v1257 = vld [vmem:[%s1227 + $0x159] sm:$0xff]
        %v1258 = vld [vmem:[%s1227 + $0x169] sm:$0xff]
        %v1259 = vld [vmem:[%s1227 + $0x171] sm:$0xff]
        %1292 = vrot.lane.b32.xlu0 %v1228, 4
        %v1293 = vpop.permute.xlu0 %1292
        %1294 = vrot.lane.b32.xlu0 %v1229, 4
        %v1295 = vpop.permute.xlu0 %1294
        %1296 = vrot.lane.b32.xlu0 %v1230, 4
        %v1297 = vpop.permute.xlu0 %1296
        %1298 = vrot.lane.b32.xlu0 %v1231, 4
        %v1299 = vpop.permute.xlu0 %1298
        %1300 = vrot.lane.b32.xlu0 %v1232, 4
        %v1301 = vpop.permute.xlu0 %1300
        %1302 = vrot.lane.b32.xlu0 %v1233, 4
        %v1303 = vpop.permute.xlu0 %1302
        %1304 = vrot.lane.b32.xlu0 %v1234, 4
        %v1305 = vpop.permute.xlu0 %1304
        %1306 = vrot.lane.b32.xlu0 %v1235, 4
        %v1307 = vpop.permute.xlu0 %1306
        %1308 = vrot.lane.b32.xlu0 %v1236, 4
        %v1309 = vpop.permute.xlu0 %1308
        %1310 = vrot.lane.b32.xlu0 %v1237, 4
        %v1311 = vpop.permute.xlu0 %1310
        %1312 = vrot.lane.b32.xlu0 %v1238, 4
        %v1313 = vpop.permute.xlu0 %1312
        %1314 = vrot.lane.b32.xlu0 %v1239, 4
        %v1315 = vpop.permute.xlu0 %1314
        %1316 = vrot.lane.b32.xlu0 %v1240, 4
        %v1317 = vpop.permute.xlu0 %1316
        %1318 = vrot.lane.b32.xlu0 %v1241, 4
        %v1319 = vpop.permute.xlu0 %1318
        %1320 = vrot.lane.b32.xlu0 %v1242, 4
        %v1321 = vpop.permute.xlu0 %1320
        %1322 = vrot.lane.b32.xlu0 %v1243, 4
        %v1323 = vpop.permute.xlu0 %1322
        %1324 = vrot.lane.b32.xlu0 %v1244, 4
        %v1325 = vpop.permute.xlu0 %1324
        %1326 = vrot.lane.b32.xlu0 %v1245, 4
        %v1327 = vpop.permute.xlu0 %1326
        %1328 = vrot.lane.b32.xlu0 %v1246, 4
        %v1329 = vpop.permute.xlu0 %1328
        %1330 = vrot.lane.b32.xlu0 %v1247, 4
        %v1331 = vpop.permute.xlu0 %1330
        %1332 = vrot.lane.b32.xlu0 %v1248, 4
        %v1333 = vpop.permute.xlu0 %1332
        %1334 = vrot.lane.b32.xlu0 %v1249, 4
        %v1335 = vpop.permute.xlu0 %1334
        %1336 = vrot.lane.b32.xlu0 %v1250, 4
        %v1337 = vpop.permute.xlu0 %1336
        %1338 = vrot.lane.b32.xlu0 %v1251, 4
        %v1339 = vpop.permute.xlu0 %1338
        %1340 = vrot.lane.b32.xlu0 %v1252, 4
        %v1341 = vpop.permute.xlu0 %1340
        %1342 = vrot.lane.b32.xlu0 %v1253, 4
        %v1343 = vpop.permute.xlu0 %1342
        %1344 = vrot.lane.b32.xlu0 %v1254, 4
        %v1345 = vpop.permute.xlu0 %1344
        %1346 = vrot.lane.b32.xlu0 %v1255, 4
        %v1347 = vpop.permute.xlu0 %1346
        %1348 = vrot.lane.b32.xlu0 %v1256, 4
        %v1349 = vpop.permute.xlu0 %1348
        %1350 = vrot.lane.b32.xlu0 %v1257, 4
        %v1351 = vpop.permute.xlu0 %1350
        %1352 = vrot.lane.b32.xlu0 %v1258, 4
        %v1353 = vpop.permute.xlu0 %1352
        %1354 = vrot.lane.b32.xlu0 %v1259, 4
        %v1355 = vpop.permute.xlu0 %1354
        %vm1388 = vcmask 64544
        %1389 = vst.msk [vmem:[#allocation3] sm:$0xff] %vm1388, %v1293
        %1390 = vst.msk [vmem:[#allocation3 + $0x8] sm:$0xff] %vm1388, %v1295
        %1391 = vst.msk [vmem:[#allocation3 + $0x10] sm:$0xff] %vm1388, %v1297
        %1392 = vst.msk [vmem:[#allocation3 + $0x18] sm:$0xff] %vm1388, %v1299
        %1393 = vst.msk [vmem:[#allocation3 + $0x20] sm:$0xff] %vm1388, %v1301
        %1394 = vst.msk [vmem:[#allocation3 + $0x28] sm:$0xff] %vm1388, %v1303
        %1395 = vst.msk [vmem:[#allocation3 + $0x30] sm:$0xff] %vm1388, %v1305
        %1396 = vst.msk [vmem:[#allocation3 + $0x38] sm:$0xff] %vm1388, %v1307
        %1397 = vst.msk [vmem:[#allocation3 + $0x40] sm:$0xff] %vm1388, %v1309
        %1398 = vst.msk [vmem:[#allocation3 + $0x48] sm:$0xff] %vm1388, %v1311
        %1399 = vst.msk [vmem:[#allocation3 + $0x50] sm:$0xff] %vm1388, %v1313
        %1400 = vst.msk [vmem:[#allocation3 + $0x58] sm:$0xff] %vm1388, %v1315
        %1401 = vst.msk [vmem:[#allocation3 + $0x60] sm:$0xff] %vm1388, %v1317
        %1402 = vst.msk [vmem:[#allocation3 + $0x68] sm:$0xff] %vm1388, %v1319
        %1403 = vst.msk [vmem:[#allocation3 + $0x70] sm:$0xff] %vm1388, %v1321
        %1404 = vst.msk [vmem:[#allocation3 + $0x78] sm:$0xff] %vm1388, %v1323
        %1405 = vst.msk [vmem:[#allocation3 + $0x80] sm:$0xff] %vm1388, %v1325
        %1406 = vst.msk [vmem:[#allocation3 + $0x88] sm:$0xff] %vm1388, %v1327
        %1407 = vst.msk [vmem:[#allocation3 + $0x90] sm:$0xff] %vm1388, %v1329
        %1408 = vst.msk [vmem:[#allocation3 + $0x98] sm:$0xff] %vm1388, %v1331
        %1409 = vst.msk [vmem:[#allocation3 + $0xa0] sm:$0xff] %vm1388, %v1333
        %1410 = vst.msk [vmem:[#allocation3 + $0xa8] sm:$0xff] %vm1388, %v1335
        %1411 = vst.msk [vmem:[#allocation3 + $0xb0] sm:$0xff] %vm1388, %v1337
        %1412 = vst.msk [vmem:[#allocation3 + $0xb8] sm:$0xff] %vm1388, %v1339
        %1413 = vst.msk [vmem:[#allocation3 + $0xc0] sm:$0xff] %vm1388, %v1341
        %1414 = vst.msk [vmem:[#allocation3 + $0xc8] sm:$0xff] %vm1388, %v1343
        %1415 = vst.msk [vmem:[#allocation3 + $0xd0] sm:$0xff] %vm1388, %v1345
        %1416 = vst.msk [vmem:[#allocation3 + $0xd8] sm:$0xff] %vm1388, %v1347
        %1417 = vst.msk [vmem:[#allocation3 + $0xe0] sm:$0xff] %vm1388, %v1349
        %1418 = vst.msk [vmem:[#allocation3 + $0xe8] sm:$0xff] %vm1388, %v1351
        %1419 = vst.msk [vmem:[#allocation3 + $0xf0] sm:$0xff] %vm1388, %v1353
        %1420 = vst.msk [vmem:[#allocation3 + $0xf8] sm:$0xff] %vm1388, %v1355
        %v1421 = vld [vmem:[%s1160 + $0x1] sm:$0xff]
        %v1422 = vld [vmem:[%s1160 + $0x9] sm:$0xff]
        %v1423 = vld [vmem:[%s1160 + $0x19] sm:$0xff]
        %v1424 = vld [vmem:[%s1160 + $0x21] sm:$0xff]
        %v1425 = vld [vmem:[%s1160 + $0x31] sm:$0xff]
        %v1426 = vld [vmem:[%s1160 + $0x39] sm:$0xff]
        %v1427 = vld [vmem:[%s1160 + $0x49] sm:$0xff]
        %v1428 = vld [vmem:[%s1160 + $0x51] sm:$0xff]
        %v1429 = vld [vmem:[%s1160 + $0x61] sm:$0xff]
        %v1430 = vld [vmem:[%s1160 + $0x69] sm:$0xff]
        %v1431 = vld [vmem:[%s1160 + $0x79] sm:$0xff]
        %v1432 = vld [vmem:[%s1160 + $0x81] sm:$0xff]
        %v1433 = vld [vmem:[%s1160 + $0x91] sm:$0xff]
        %v1434 = vld [vmem:[%s1160 + $0x99] sm:$0xff]
        %v1435 = vld [vmem:[%s1160 + $0xa9] sm:$0xff]
        %v1436 = vld [vmem:[%s1160 + $0xb1] sm:$0xff]
        %v1437 = vld [vmem:[%s1160 + $0xc1] sm:$0xff]
        %v1438 = vld [vmem:[%s1160 + $0xc9] sm:$0xff]
        %v1439 = vld [vmem:[%s1160 + $0xd9] sm:$0xff]
        %v1440 = vld [vmem:[%s1160 + $0xe1] sm:$0xff]
        %v1441 = vld [vmem:[%s1160 + $0xf1] sm:$0xff]
        %v1442 = vld [vmem:[%s1160 + $0xf9] sm:$0xff]
        %v1443 = vld [vmem:[%s1160 + $0x109] sm:$0xff]
        %v1444 = vld [vmem:[%s1160 + $0x111] sm:$0xff]
        %v1445 = vld [vmem:[%s1160 + $0x121] sm:$0xff]
        %v1446 = vld [vmem:[%s1160 + $0x129] sm:$0xff]
        %v1447 = vld [vmem:[%s1160 + $0x139] sm:$0xff]
        %v1448 = vld [vmem:[%s1160 + $0x141] sm:$0xff]
        %v1449 = vld [vmem:[%s1160 + $0x151] sm:$0xff]
        %v1450 = vld [vmem:[%s1160 + $0x159] sm:$0xff]
        %v1451 = vld [vmem:[%s1160 + $0x169] sm:$0xff]
        %v1452 = vld [vmem:[%s1160 + $0x171] sm:$0xff]
        %1485 = vrot.lane.b32.xlu0 %v1421, 8
        %v1486 = vpop.permute.xlu0 %1485
        %1487 = vrot.lane.b32.xlu0 %v1422, 8
        %v1488 = vpop.permute.xlu0 %1487
        %1489 = vrot.lane.b32.xlu0 %v1423, 8
        %v1490 = vpop.permute.xlu0 %1489
        %1491 = vrot.lane.b32.xlu0 %v1424, 8
        %v1492 = vpop.permute.xlu0 %1491
        %1493 = vrot.lane.b32.xlu0 %v1425, 8
        %v1494 = vpop.permute.xlu0 %1493
        %1495 = vrot.lane.b32.xlu0 %v1426, 8
        %v1496 = vpop.permute.xlu0 %1495
        %1497 = vrot.lane.b32.xlu0 %v1427, 8
        %v1498 = vpop.permute.xlu0 %1497
        %1499 = vrot.lane.b32.xlu0 %v1428, 8
        %v1500 = vpop.permute.xlu0 %1499
        %1501 = vrot.lane.b32.xlu0 %v1429, 8
        %v1502 = vpop.permute.xlu0 %1501
        %1503 = vrot.lane.b32.xlu0 %v1430, 8
        %v1504 = vpop.permute.xlu0 %1503
        %1505 = vrot.lane.b32.xlu0 %v1431, 8
        %v1506 = vpop.permute.xlu0 %1505
        %1507 = vrot.lane.b32.xlu0 %v1432, 8
        %v1508 = vpop.permute.xlu0 %1507
        %1509 = vrot.lane.b32.xlu0 %v1433, 8
        %v1510 = vpop.permute.xlu0 %1509
        %1511 = vrot.lane.b32.xlu0 %v1434, 8
        %v1512 = vpop.permute.xlu0 %1511
        %1513 = vrot.lane.b32.xlu0 %v1435, 8
        %v1514 = vpop.permute.xlu0 %1513
        %1515 = vrot.lane.b32.xlu0 %v1436, 8
        %v1516 = vpop.permute.xlu0 %1515
        %1517 = vrot.lane.b32.xlu0 %v1437, 8
        %v1518 = vpop.permute.xlu0 %1517
        %1519 = vrot.lane.b32.xlu0 %v1438, 8
        %v1520 = vpop.permute.xlu0 %1519
        %1521 = vrot.lane.b32.xlu0 %v1439, 8
        %v1522 = vpop.permute.xlu0 %1521
        %1523 = vrot.lane.b32.xlu0 %v1440, 8
        %v1524 = vpop.permute.xlu0 %1523
        %1525 = vrot.lane.b32.xlu0 %v1441, 8
        %v1526 = vpop.permute.xlu0 %1525
        %1527 = vrot.lane.b32.xlu0 %v1442, 8
        %v1528 = vpop.permute.xlu0 %1527
        %1529 = vrot.lane.b32.xlu0 %v1443, 8
        %v1530 = vpop.permute.xlu0 %1529
        %1531 = vrot.lane.b32.xlu0 %v1444, 8
        %v1532 = vpop.permute.xlu0 %1531
        %1533 = vrot.lane.b32.xlu0 %v1445, 8
        %v1534 = vpop.permute.xlu0 %1533
        %1535 = vrot.lane.b32.xlu0 %v1446, 8
        %v1536 = vpop.permute.xlu0 %1535
        %1537 = vrot.lane.b32.xlu0 %v1447, 8
        %v1538 = vpop.permute.xlu0 %1537
        %1539 = vrot.lane.b32.xlu0 %v1448, 8
        %v1540 = vpop.permute.xlu0 %1539
        %1541 = vrot.lane.b32.xlu0 %v1449, 8
        %v1542 = vpop.permute.xlu0 %1541
        %1543 = vrot.lane.b32.xlu0 %v1450, 8
        %v1544 = vpop.permute.xlu0 %1543
        %1545 = vrot.lane.b32.xlu0 %v1451, 8
        %v1546 = vpop.permute.xlu0 %1545
        %1547 = vrot.lane.b32.xlu0 %v1452, 8
        %v1548 = vpop.permute.xlu0 %1547
        %vm1581 = vcmask 97344
        %1582 = vst.msk [vmem:[#allocation3] sm:$0xff] %vm1581, %v1486
        %1583 = vst.msk [vmem:[#allocation3 + $0x8] sm:$0xff] %vm1581, %v1488
        %1584 = vst.msk [vmem:[#allocation3 + $0x10] sm:$0xff] %vm1581, %v1490
        %1585 = vst.msk [vmem:[#allocation3 + $0x18] sm:$0xff] %vm1581, %v1492
        %1586 = vst.msk [vmem:[#allocation3 + $0x20] sm:$0xff] %vm1581, %v1494
        %1587 = vst.msk [vmem:[#allocation3 + $0x28] sm:$0xff] %vm1581, %v1496
        %1588 = vst.msk [vmem:[#allocation3 + $0x30] sm:$0xff] %vm1581, %v1498
        %1589 = vst.msk [vmem:[#allocation3 + $0x38] sm:$0xff] %vm1581, %v1500
        %1590 = vst.msk [vmem:[#allocation3 + $0x40] sm:$0xff] %vm1581, %v1502
        %1591 = vst.msk [vmem:[#allocation3 + $0x48] sm:$0xff] %vm1581, %v1504
        %1592 = vst.msk [vmem:[#allocation3 + $0x50] sm:$0xff] %vm1581, %v1506
        %1593 = vst.msk [vmem:[#allocation3 + $0x58] sm:$0xff] %vm1581, %v1508
        %1594 = vst.msk [vmem:[#allocation3 + $0x60] sm:$0xff] %vm1581, %v1510
        %1595 = vst.msk [vmem:[#allocation3 + $0x68] sm:$0xff] %vm1581, %v1512
        %1596 = vst.msk [vmem:[#allocation3 + $0x70] sm:$0xff] %vm1581, %v1514
        %1597 = vst.msk [vmem:[#allocation3 + $0x78] sm:$0xff] %vm1581, %v1516
        %1598 = vst.msk [vmem:[#allocation3 + $0x80] sm:$0xff] %vm1581, %v1518
        %1599 = vst.msk [vmem:[#allocation3 + $0x88] sm:$0xff] %vm1581, %v1520
        %1600 = vst.msk [vmem:[#allocation3 + $0x90] sm:$0xff] %vm1581, %v1522
        %1601 = vst.msk [vmem:[#allocation3 + $0x98] sm:$0xff] %vm1581, %v1524
        %1602 = vst.msk [vmem:[#allocation3 + $0xa0] sm:$0xff] %vm1581, %v1526
        %1603 = vst.msk [vmem:[#allocation3 + $0xa8] sm:$0xff] %vm1581, %v1528
        %1604 = vst.msk [vmem:[#allocation3 + $0xb0] sm:$0xff] %vm1581, %v1530
        %1605 = vst.msk [vmem:[#allocation3 + $0xb8] sm:$0xff] %vm1581, %v1532
        %1606 = vst.msk [vmem:[#allocation3 + $0xc0] sm:$0xff] %vm1581, %v1534
        %1607 = vst.msk [vmem:[#allocation3 + $0xc8] sm:$0xff] %vm1581, %v1536
        %1608 = vst.msk [vmem:[#allocation3 + $0xd0] sm:$0xff] %vm1581, %v1538
        %1609 = vst.msk [vmem:[#allocation3 + $0xd8] sm:$0xff] %vm1581, %v1540
        %1610 = vst.msk [vmem:[#allocation3 + $0xe0] sm:$0xff] %vm1581, %v1542
        %1611 = vst.msk [vmem:[#allocation3 + $0xe8] sm:$0xff] %vm1581, %v1544
        %1612 = vst.msk [vmem:[#allocation3 + $0xf0] sm:$0xff] %vm1581, %v1546
        %1613 = vst.msk [vmem:[#allocation3 + $0xf8] sm:$0xff] %vm1581, %v1548
        %s1614 = sadd.s32 %s1157, 1
        %s1615 = smul.u32 %s1614, 24
        %s1616 = sadd.s32 %s1615, 432
        %s1617 = scalar_lea.vmem [#allocation2], %s1616
        %v1618 = vld [vmem:[%s1617] sm:$0xff]
        %v1619 = vld [vmem:[%s1617 + $0x8] sm:$0xff]
        %v1620 = vld [vmem:[%s1617 + $0x18] sm:$0xff]
        %v1621 = vld [vmem:[%s1617 + $0x20] sm:$0xff]
        %v1622 = vld [vmem:[%s1617 + $0x30] sm:$0xff]
        %v1623 = vld [vmem:[%s1617 + $0x38] sm:$0xff]
        %v1624 = vld [vmem:[%s1617 + $0x48] sm:$0xff]
        %v1625 = vld [vmem:[%s1617 + $0x50] sm:$0xff]
        %v1626 = vld [vmem:[%s1617 + $0x60] sm:$0xff]
        %v1627 = vld [vmem:[%s1617 + $0x68] sm:$0xff]
        %v1628 = vld [vmem:[%s1617 + $0x78] sm:$0xff]
        %v1629 = vld [vmem:[%s1617 + $0x80] sm:$0xff]
        %v1630 = vld [vmem:[%s1617 + $0x90] sm:$0xff]
        %v1631 = vld [vmem:[%s1617 + $0x98] sm:$0xff]
        %v1632 = vld [vmem:[%s1617 + $0xa8] sm:$0xff]
        %v1633 = vld [vmem:[%s1617 + $0xb0] sm:$0xff]
        %v1634 = vld [vmem:[%s1617 + $0xc0] sm:$0xff]
        %v1635 = vld [vmem:[%s1617 + $0xc8] sm:$0xff]
        %v1636 = vld [vmem:[%s1617 + $0xd8] sm:$0xff]
        %v1637 = vld [vmem:[%s1617 + $0xe0] sm:$0xff]
        %v1638 = vld [vmem:[%s1617 + $0xf0] sm:$0xff]
        %v1639 = vld [vmem:[%s1617 + $0xf8] sm:$0xff]
        %v1640 = vld [vmem:[%s1617 + $0x108] sm:$0xff]
        %v1641 = vld [vmem:[%s1617 + $0x110] sm:$0xff]
        %v1642 = vld [vmem:[%s1617 + $0x120] sm:$0xff]
        %v1643 = vld [vmem:[%s1617 + $0x128] sm:$0xff]
        %v1644 = vld [vmem:[%s1617 + $0x138] sm:$0xff]
        %v1645 = vld [vmem:[%s1617 + $0x140] sm:$0xff]
        %v1646 = vld [vmem:[%s1617 + $0x150] sm:$0xff]
        %v1647 = vld [vmem:[%s1617 + $0x158] sm:$0xff]
        %v1648 = vld [vmem:[%s1617 + $0x168] sm:$0xff]
        %v1649 = vld [vmem:[%s1617 + $0x170] sm:$0xff]
        %1682 = vrot.lane.b32.xlu0 %v1618, 12
        %v1683 = vpop.permute.xlu0 %1682
        %1684 = vrot.lane.b32.xlu0 %v1619, 12
        %v1685 = vpop.permute.xlu0 %1684
        %1686 = vrot.lane.b32.xlu0 %v1620, 12
        %v1687 = vpop.permute.xlu0 %1686
        %1688 = vrot.lane.b32.xlu0 %v1621, 12
        %v1689 = vpop.permute.xlu0 %1688
        %1690 = vrot.lane.b32.xlu0 %v1622, 12
        %v1691 = vpop.permute.xlu0 %1690
        %1692 = vrot.lane.b32.xlu0 %v1623, 12
        %v1693 = vpop.permute.xlu0 %1692
        %1694 = vrot.lane.b32.xlu0 %v1624, 12
        %v1695 = vpop.permute.xlu0 %1694
        %1696 = vrot.lane.b32.xlu0 %v1625, 12
        %v1697 = vpop.permute.xlu0 %1696
        %1698 = vrot.lane.b32.xlu0 %v1626, 12
        %v1699 = vpop.permute.xlu0 %1698
        %1700 = vrot.lane.b32.xlu0 %v1627, 12
        %v1701 = vpop.permute.xlu0 %1700
        %1702 = vrot.lane.b32.xlu0 %v1628, 12
        %v1703 = vpop.permute.xlu0 %1702
        %1704 = vrot.lane.b32.xlu0 %v1629, 12
        %v1705 = vpop.permute.xlu0 %1704
        %1706 = vrot.lane.b32.xlu0 %v1630, 12
        %v1707 = vpop.permute.xlu0 %1706
        %1708 = vrot.lane.b32.xlu0 %v1631, 12
        %v1709 = vpop.permute.xlu0 %1708
        %1710 = vrot.lane.b32.xlu0 %v1632, 12
        %v1711 = vpop.permute.xlu0 %1710
        %1712 = vrot.lane.b32.xlu0 %v1633, 12
        %v1713 = vpop.permute.xlu0 %1712
        %1714 = vrot.lane.b32.xlu0 %v1634, 12
        %v1715 = vpop.permute.xlu0 %1714
        %1716 = vrot.lane.b32.xlu0 %v1635, 12
        %v1717 = vpop.permute.xlu0 %1716
        %1718 = vrot.lane.b32.xlu0 %v1636, 12
        %v1719 = vpop.permute.xlu0 %1718
        %1720 = vrot.lane.b32.xlu0 %v1637, 12
        %v1721 = vpop.permute.xlu0 %1720
        %1722 = vrot.lane.b32.xlu0 %v1638, 12
        %v1723 = vpop.permute.xlu0 %1722
        %1724 = vrot.lane.b32.xlu0 %v1639, 12
        %v1725 = vpop.permute.xlu0 %1724
        %1726 = vrot.lane.b32.xlu0 %v1640, 12
        %v1727 = vpop.permute.xlu0 %1726
        %1728 = vrot.lane.b32.xlu0 %v1641, 12
        %v1729 = vpop.permute.xlu0 %1728
        %1730 = vrot.lane.b32.xlu0 %v1642, 12
        %v1731 = vpop.permute.xlu0 %1730
        %1732 = vrot.lane.b32.xlu0 %v1643, 12
        %v1733 = vpop.permute.xlu0 %1732
        %1734 = vrot.lane.b32.xlu0 %v1644, 12
        %v1735 = vpop.permute.xlu0 %1734
        %1736 = vrot.lane.b32.xlu0 %v1645, 12
        %v1737 = vpop.permute.xlu0 %1736
        %1738 = vrot.lane.b32.xlu0 %v1646, 12
        %v1739 = vpop.permute.xlu0 %1738
        %1740 = vrot.lane.b32.xlu0 %v1647, 12
        %v1741 = vpop.permute.xlu0 %1740
        %1742 = vrot.lane.b32.xlu0 %v1648, 12
        %v1743 = vpop.permute.xlu0 %1742
        %1744 = vrot.lane.b32.xlu0 %v1649, 12
        %v1745 = vpop.permute.xlu0 %1744
        %vm1778 = vcmask 130144
        %1779 = vst.msk [vmem:[#allocation3] sm:$0xff] %vm1778, %v1683
        %1780 = vst.msk [vmem:[#allocation3 + $0x8] sm:$0xff] %vm1778, %v1685
        %1781 = vst.msk [vmem:[#allocation3 + $0x10] sm:$0xff] %vm1778, %v1687
        %1782 = vst.msk [vmem:[#allocation3 + $0x18] sm:$0xff] %vm1778, %v1689
        %1783 = vst.msk [vmem:[#allocation3 + $0x20] sm:$0xff] %vm1778, %v1691
        %1784 = vst.msk [vmem:[#allocation3 + $0x28] sm:$0xff] %vm1778, %v1693
        %1785 = vst.msk [vmem:[#allocation3 + $0x30] sm:$0xff] %vm1778, %v1695
        %1786 = vst.msk [vmem:[#allocation3 + $0x38] sm:$0xff] %vm1778, %v1697
        %1787 = vst.msk [vmem:[#allocation3 + $0x40] sm:$0xff] %vm1778, %v1699
        %1788 = vst.msk [vmem:[#allocation3 + $0x48] sm:$0xff] %vm1778, %v1701
        %1789 = vst.msk [vmem:[#allocation3 + $0x50] sm:$0xff] %vm1778, %v1703
        %1790 = vst.msk [vmem:[#allocation3 + $0x58] sm:$0xff] %vm1778, %v1705
        %1791 = vst.msk [vmem:[#allocation3 + $0x60] sm:$0xff] %vm1778, %v1707
        %1792 = vst.msk [vmem:[#allocation3 + $0x68] sm:$0xff] %vm1778, %v1709
        %1793 = vst.msk [vmem:[#allocation3 + $0x70] sm:$0xff] %vm1778, %v1711
        %1794 = vst.msk [vmem:[#allocation3 + $0x78] sm:$0xff] %vm1778, %v1713
        %1795 = vst.msk [vmem:[#allocation3 + $0x80] sm:$0xff] %vm1778, %v1715
        %1796 = vst.msk [vmem:[#allocation3 + $0x88] sm:$0xff] %vm1778, %v1717
        %1797 = vst.msk [vmem:[#allocation3 + $0x90] sm:$0xff] %vm1778, %v1719
        %1798 = vst.msk [vmem:[#allocation3 + $0x98] sm:$0xff] %vm1778, %v1721
        %1799 = vst.msk [vmem:[#allocation3 + $0xa0] sm:$0xff] %vm1778, %v1723
        %1800 = vst.msk [vmem:[#allocation3 + $0xa8] sm:$0xff] %vm1778, %v1725
        %1801 = vst.msk [vmem:[#allocation3 + $0xb0] sm:$0xff] %vm1778, %v1727
        %1802 = vst.msk [vmem:[#allocation3 + $0xb8] sm:$0xff] %vm1778, %v1729
        %1803 = vst.msk [vmem:[#allocation3 + $0xc0] sm:$0xff] %vm1778, %v1731
        %1804 = vst.msk [vmem:[#allocation3 + $0xc8] sm:$0xff] %vm1778, %v1733
        %1805 = vst.msk [vmem:[#allocation3 + $0xd0] sm:$0xff] %vm1778, %v1735
        %1806 = vst.msk [vmem:[#allocation3 + $0xd8] sm:$0xff] %vm1778, %v1737
        %1807 = vst.msk [vmem:[#allocation3 + $0xe0] sm:$0xff] %vm1778, %v1739
        %1808 = vst.msk [vmem:[#allocation3 + $0xe8] sm:$0xff] %vm1778, %v1741
        %1809 = vst.msk [vmem:[#allocation3 + $0xf0] sm:$0xff] %vm1778, %v1743
        %1810 = vst.msk [vmem:[#allocation3 + $0xf8] sm:$0xff] %vm1778, %v1745
        %s1811 = scalar_lea.vmem [#allocation2], %s1615
        %v1812 = vld [vmem:[%s1811 + $0x1] sm:$0xff]
        %v1813 = vld [vmem:[%s1811 + $0x9] sm:$0xff]
        %v1814 = vld [vmem:[%s1811 + $0x19] sm:$0xff]
        %v1815 = vld [vmem:[%s1811 + $0x21] sm:$0xff]
        %v1816 = vld [vmem:[%s1811 + $0x31] sm:$0xff]
        %v1817 = vld [vmem:[%s1811 + $0x39] sm:$0xff]
        %v1818 = vld [vmem:[%s1811 + $0x49] sm:$0xff]
        %v1819 = vld [vmem:[%s1811 + $0x51] sm:$0xff]
        %v1820 = vld [vmem:[%s1811 + $0x61] sm:$0xff]
        %v1821 = vld [vmem:[%s1811 + $0x69] sm:$0xff]
        %v1822 = vld [vmem:[%s1811 + $0x79] sm:$0xff]
        %v1823 = vld [vmem:[%s1811 + $0x81] sm:$0xff]
        %v1824 = vld [vmem:[%s1811 + $0x91] sm:$0xff]
        %v1825 = vld [vmem:[%s1811 + $0x99] sm:$0xff]
        %v1826 = vld [vmem:[%s1811 + $0xa9] sm:$0xff]
        %v1827 = vld [vmem:[%s1811 + $0xb1] sm:$0xff]
        %v1828 = vld [vmem:[%s1811 + $0xc1] sm:$0xff]
        %v1829 = vld [vmem:[%s1811 + $0xc9] sm:$0xff]
        %v1830 = vld [vmem:[%s1811 + $0xd9] sm:$0xff]
        %v1831 = vld [vmem:[%s1811 + $0xe1] sm:$0xff]
        %v1832 = vld [vmem:[%s1811 + $0xf1] sm:$0xff]
        %v1833 = vld [vmem:[%s1811 + $0xf9] sm:$0xff]
        %v1834 = vld [vmem:[%s1811 + $0x109] sm:$0xff]
        %v1835 = vld [vmem:[%s1811 + $0x111] sm:$0xff]
        %v1836 = vld [vmem:[%s1811 + $0x121] sm:$0xff]
        %v1837 = vld [vmem:[%s1811 + $0x129] sm:$0xff]
        %v1838 = vld [vmem:[%s1811 + $0x139] sm:$0xff]
        %v1839 = vld [vmem:[%s1811 + $0x141] sm:$0xff]
        %v1840 = vld [vmem:[%s1811 + $0x151] sm:$0xff]
        %v1841 = vld [vmem:[%s1811 + $0x159] sm:$0xff]
        %v1842 = vld [vmem:[%s1811 + $0x169] sm:$0xff]
        %v1843 = vld [vmem:[%s1811 + $0x171] sm:$0xff]
        %1876 = vrot.lane.b32.xlu0 %v1812, 16
        %v1877 = vpop.permute.xlu0 %1876
        %1878 = vrot.lane.b32.xlu0 %v1813, 16
        %v1879 = vpop.permute.xlu0 %1878
        %1880 = vrot.lane.b32.xlu0 %v1814, 16
        %v1881 = vpop.permute.xlu0 %1880
        %1882 = vrot.lane.b32.xlu0 %v1815, 16
        %v1883 = vpop.permute.xlu0 %1882
        %1884 = vrot.lane.b32.xlu0 %v1816, 16
        %v1885 = vpop.permute.xlu0 %1884
        %1886 = vrot.lane.b32.xlu0 %v1817, 16
        %v1887 = vpop.permute.xlu0 %1886
        %1888 = vrot.lane.b32.xlu0 %v1818, 16
        %v1889 = vpop.permute.xlu0 %1888
        %1890 = vrot.lane.b32.xlu0 %v1819, 16
        %v1891 = vpop.permute.xlu0 %1890
        %1892 = vrot.lane.b32.xlu0 %v1820, 16
        %v1893 = vpop.permute.xlu0 %1892
        %1894 = vrot.lane.b32.xlu0 %v1821, 16
        %v1895 = vpop.permute.xlu0 %1894
        %1896 = vrot.lane.b32.xlu0 %v1822, 16
        %v1897 = vpop.permute.xlu0 %1896
        %1898 = vrot.lane.b32.xlu0 %v1823, 16
        %v1899 = vpop.permute.xlu0 %1898
        %1900 = vrot.lane.b32.xlu0 %v1824, 16
        %v1901 = vpop.permute.xlu0 %1900
        %1902 = vrot.lane.b32.xlu0 %v1825, 16
        %v1903 = vpop.permute.xlu0 %1902
        %1904 = vrot.lane.b32.xlu0 %v1826, 16
        %v1905 = vpop.permute.xlu0 %1904
        %1906 = vrot.lane.b32.xlu0 %v1827, 16
        %v1907 = vpop.permute.xlu0 %1906
        %1908 = vrot.lane.b32.xlu0 %v1828, 16
        %v1909 = vpop.permute.xlu0 %1908
        %1910 = vrot.lane.b32.xlu0 %v1829, 16
        %v1911 = vpop.permute.xlu0 %1910
        %1912 = vrot.lane.b32.xlu0 %v1830, 16
        %v1913 = vpop.permute.xlu0 %1912
        %1914 = vrot.lane.b32.xlu0 %v1831, 16
        %v1915 = vpop.permute.xlu0 %1914
        %1916 = vrot.lane.b32.xlu0 %v1832, 16
        %v1917 = vpop.permute.xlu0 %1916
        %1918 = vrot.lane.b32.xlu0 %v1833, 16
        %v1919 = vpop.permute.xlu0 %1918
        %1920 = vrot.lane.b32.xlu0 %v1834, 16
        %v1921 = vpop.permute.xlu0 %1920
        %1922 = vrot.lane.b32.xlu0 %v1835, 16
        %v1923 = vpop.permute.xlu0 %1922
        %1924 = vrot.lane.b32.xlu0 %v1836, 16
        %v1925 = vpop.permute.xlu0 %1924
        %1926 = vrot.lane.b32.xlu0 %v1837, 16
        %v1927 = vpop.permute.xlu0 %1926
        %1928 = vrot.lane.b32.xlu0 %v1838, 16
        %v1929 = vpop.permute.xlu0 %1928
        %1930 = vrot.lane.b32.xlu0 %v1839, 16
        %v1931 = vpop.permute.xlu0 %1930
        %1932 = vrot.lane.b32.xlu0 %v1840, 16
        %v1933 = vpop.permute.xlu0 %1932
        %1934 = vrot.lane.b32.xlu0 %v1841, 16
        %v1935 = vpop.permute.xlu0 %1934
        %1936 = vrot.lane.b32.xlu0 %v1842, 16
        %v1937 = vpop.permute.xlu0 %1936
        %1938 = vrot.lane.b32.xlu0 %v1843, 16
        %v1939 = vpop.permute.xlu0 %1938
        %vm1972 = vcmask 162944
        %1973 = vst.msk [vmem:[#allocation3] sm:$0xff] %vm1972, %v1877
        %1974 = vst.msk [vmem:[#allocation3 + $0x8] sm:$0xff] %vm1972, %v1879
        %1975 = vst.msk [vmem:[#allocation3 + $0x10] sm:$0xff] %vm1972, %v1881
        %1976 = vst.msk [vmem:[#allocation3 + $0x18] sm:$0xff] %vm1972, %v1883
        %1977 = vst.msk [vmem:[#allocation3 + $0x20] sm:$0xff] %vm1972, %v1885
        %1978 = vst.msk [vmem:[#allocation3 + $0x28] sm:$0xff] %vm1972, %v1887
        %1979 = vst.msk [vmem:[#allocation3 + $0x30] sm:$0xff] %vm1972, %v1889
        %1980 = vst.msk [vmem:[#allocation3 + $0x38] sm:$0xff] %vm1972, %v1891
        %1981 = vst.msk [vmem:[#allocation3 + $0x40] sm:$0xff] %vm1972, %v1893
        %1982 = vst.msk [vmem:[#allocation3 + $0x48] sm:$0xff] %vm1972, %v1895
        %1983 = vst.msk [vmem:[#allocation3 + $0x50] sm:$0xff] %vm1972, %v1897
        %1984 = vst.msk [vmem:[#allocation3 + $0x58] sm:$0xff] %vm1972, %v1899
        %1985 = vst.msk [vmem:[#allocation3 + $0x60] sm:$0xff] %vm1972, %v1901
        %1986 = vst.msk [vmem:[#allocation3 + $0x68] sm:$0xff] %vm1972, %v1903
        %1987 = vst.msk [vmem:[#allocation3 + $0x70] sm:$0xff] %vm1972, %v1905
        %1988 = vst.msk [vmem:[#allocation3 + $0x78] sm:$0xff] %vm1972, %v1907
        %1989 = vst.msk [vmem:[#allocation3 + $0x80] sm:$0xff] %vm1972, %v1909
        %1990 = vst.msk [vmem:[#allocation3 + $0x88] sm:$0xff] %vm1972, %v1911
        %1991 = vst.msk [vmem:[#allocation3 + $0x90] sm:$0xff] %vm1972, %v1913
        %1992 = vst.msk [vmem:[#allocation3 + $0x98] sm:$0xff] %vm1972, %v1915
        %1993 = vst.msk [vmem:[#allocation3 + $0xa0] sm:$0xff] %vm1972, %v1917
        %1994 = vst.msk [vmem:[#allocation3 + $0xa8] sm:$0xff] %vm1972, %v1919
        %1995 = vst.msk [vmem:[#allocation3 + $0xb0] sm:$0xff] %vm1972, %v1921
        %1996 = vst.msk [vmem:[#allocation3 + $0xb8] sm:$0xff] %vm1972, %v1923
        %1997 = vst.msk [vmem:[#allocation3 + $0xc0] sm:$0xff] %vm1972, %v1925
        %1998 = vst.msk [vmem:[#allocation3 + $0xc8] sm:$0xff] %vm1972, %v1927
        %1999 = vst.msk [vmem:[#allocation3 + $0xd0] sm:$0xff] %vm1972, %v1929
        %2000 = vst.msk [vmem:[#allocation3 + $0xd8] sm:$0xff] %vm1972, %v1931
        %2001 = vst.msk [vmem:[#allocation3 + $0xe0] sm:$0xff] %vm1972, %v1933
        %2002 = vst.msk [vmem:[#allocation3 + $0xe8] sm:$0xff] %vm1972, %v1935
        %2003 = vst.msk [vmem:[#allocation3 + $0xf0] sm:$0xff] %vm1972, %v1937
        %2004 = vst.msk [vmem:[#allocation3 + $0xf8] sm:$0xff] %vm1972, %v1939
        %v2005 = vld [vmem:[%s1617 + $0x1] sm:$0xff]
        %v2006 = vld [vmem:[%s1617 + $0x9] sm:$0xff]
        %v2007 = vld [vmem:[%s1617 + $0x19] sm:$0xff]
        %v2008 = vld [vmem:[%s1617 + $0x21] sm:$0xff]
        %v2009 = vld [vmem:[%s1617 + $0x31] sm:$0xff]
        %v2010 = vld [vmem:[%s1617 + $0x39] sm:$0xff]
        %v2011 = vld [vmem:[%s1617 + $0x49] sm:$0xff]
        %v2012 = vld [vmem:[%s1617 + $0x51] sm:$0xff]
        %v2013 = vld [vmem:[%s1617 + $0x61] sm:$0xff]
        %v2014 = vld [vmem:[%s1617 + $0x69] sm:$0xff]
        %v2015 = vld [vmem:[%s1617 + $0x79] sm:$0xff]
        %v2016 = vld [vmem:[%s1617 + $0x81] sm:$0xff]
        %v2017 = vld [vmem:[%s1617 + $0x91] sm:$0xff]
        %v2018 = vld [vmem:[%s1617 + $0x99] sm:$0xff]
        %v2019 = vld [vmem:[%s1617 + $0xa9] sm:$0xff]
        %v2020 = vld [vmem:[%s1617 + $0xb1] sm:$0xff]
        %v2021 = vld [vmem:[%s1617 + $0xc1] sm:$0xff]
        %v2022 = vld [vmem:[%s1617 + $0xc9] sm:$0xff]
        %v2023 = vld [vmem:[%s1617 + $0xd9] sm:$0xff]
        %v2024 = vld [vmem:[%s1617 + $0xe1] sm:$0xff]
        %v2025 = vld [vmem:[%s1617 + $0xf1] sm:$0xff]
        %v2026 = vld [vmem:[%s1617 + $0xf9] sm:$0xff]
        %v2027 = vld [vmem:[%s1617 + $0x109] sm:$0xff]
        %v2028 = vld [vmem:[%s1617 + $0x111] sm:$0xff]
        %v2029 = vld [vmem:[%s1617 + $0x121] sm:$0xff]
        %v2030 = vld [vmem:[%s1617 + $0x129] sm:$0xff]
        %v2031 = vld [vmem:[%s1617 + $0x139] sm:$0xff]
        %v2032 = vld [vmem:[%s1617 + $0x141] sm:$0xff]
        %v2033 = vld [vmem:[%s1617 + $0x151] sm:$0xff]
        %v2034 = vld [vmem:[%s1617 + $0x159] sm:$0xff]
        %v2035 = vld [vmem:[%s1617 + $0x169] sm:$0xff]
        %v2036 = vld [vmem:[%s1617 + $0x171] sm:$0xff]
        %2069 = vrot.lane.b32.xlu0 %v2005, 20
        %v2070 = vpop.permute.xlu0 %2069
        %2071 = vrot.lane.b32.xlu0 %v2006, 20
        %v2072 = vpop.permute.xlu0 %2071
        %2073 = vrot.lane.b32.xlu0 %v2007, 20
        %v2074 = vpop.permute.xlu0 %2073
        %2075 = vrot.lane.b32.xlu0 %v2008, 20
        %v2076 = vpop.permute.xlu0 %2075
        %2077 = vrot.lane.b32.xlu0 %v2009, 20
        %v2078 = vpop.permute.xlu0 %2077
        %2079 = vrot.lane.b32.xlu0 %v2010, 20
        %v2080 = vpop.permute.xlu0 %2079
        %2081 = vrot.lane.b32.xlu0 %v2011, 20
        %v2082 = vpop.permute.xlu0 %2081
        %2083 = vrot.lane.b32.xlu0 %v2012, 20
        %v2084 = vpop.permute.xlu0 %2083
        %2085 = vrot.lane.b32.xlu0 %v2013, 20
        %v2086 = vpop.permute.xlu0 %2085
        %2087 = vrot.lane.b32.xlu0 %v2014, 20
        %v2088 = vpop.permute.xlu0 %2087
        %2089 = vrot.lane.b32.xlu0 %v2015, 20
        %v2090 = vpop.permute.xlu0 %2089
        %2091 = vrot.lane.b32.xlu0 %v2016, 20
        %v2092 = vpop.permute.xlu0 %2091
        %2093 = vrot.lane.b32.xlu0 %v2017, 20
        %v2094 = vpop.permute.xlu0 %2093
        %2095 = vrot.lane.b32.xlu0 %v2018, 20
        %v2096 = vpop.permute.xlu0 %2095
        %2097 = vrot.lane.b32.xlu0 %v2019, 20
        %v2098 = vpop.permute.xlu0 %2097
        %2099 = vrot.lane.b32.xlu0 %v2020, 20
        %v2100 = vpop.permute.xlu0 %2099
        %2101 = vrot.lane.b32.xlu0 %v2021, 20
        %v2102 = vpop.permute.xlu0 %2101
        %2103 = vrot.lane.b32.xlu0 %v2022, 20
        %v2104 = vpop.permute.xlu0 %2103
        %2105 = vrot.lane.b32.xlu0 %v2023, 20
        %v2106 = vpop.permute.xlu0 %2105
        %2107 = vrot.lane.b32.xlu0 %v2024, 20
        %v2108 = vpop.permute.xlu0 %2107
        %2109 = vrot.lane.b32.xlu0 %v2025, 20
        %v2110 = vpop.permute.xlu0 %2109
        %2111 = vrot.lane.b32.xlu0 %v2026, 20
        %v2112 = vpop.permute.xlu0 %2111
        %2113 = vrot.lane.b32.xlu0 %v2027, 20
        %v2114 = vpop.permute.xlu0 %2113
        %2115 = vrot.lane.b32.xlu0 %v2028, 20
        %v2116 = vpop.permute.xlu0 %2115
        %2117 = vrot.lane.b32.xlu0 %v2029, 20
        %v2118 = vpop.permute.xlu0 %2117
        %2119 = vrot.lane.b32.xlu0 %v2030, 20
        %v2120 = vpop.permute.xlu0 %2119
        %2121 = vrot.lane.b32.xlu0 %v2031, 20
        %v2122 = vpop.permute.xlu0 %2121
        %2123 = vrot.lane.b32.xlu0 %v2032, 20
        %v2124 = vpop.permute.xlu0 %2123
        %2125 = vrot.lane.b32.xlu0 %v2033, 20
        %v2126 = vpop.permute.xlu0 %2125
        %2127 = vrot.lane.b32.xlu0 %v2034, 20
        %v2128 = vpop.permute.xlu0 %2127
        %2129 = vrot.lane.b32.xlu0 %v2035, 20
        %v2130 = vpop.permute.xlu0 %2129
        %2131 = vrot.lane.b32.xlu0 %v2036, 20
        %v2132 = vpop.permute.xlu0 %2131
        %vm2165 = vcmask 195744
        %2166 = vst.msk [vmem:[#allocation3] sm:$0xff] %vm2165, %v2070
        %2167 = vst.msk [vmem:[#allocation3 + $0x8] sm:$0xff] %vm2165, %v2072
        %2168 = vst.msk [vmem:[#allocation3 + $0x10] sm:$0xff] %vm2165, %v2074
        %2169 = vst.msk [vmem:[#allocation3 + $0x18] sm:$0xff] %vm2165, %v2076
        %2170 = vst.msk [vmem:[#allocation3 + $0x20] sm:$0xff] %vm2165, %v2078
        %2171 = vst.msk [vmem:[#allocation3 + $0x28] sm:$0xff] %vm2165, %v2080
        %2172 = vst.msk [vmem:[#allocation3 + $0x30] sm:$0xff] %vm2165, %v2082
        %2173 = vst.msk [vmem:[#allocation3 + $0x38] sm:$0xff] %vm2165, %v2084
        %2174 = vst.msk [vmem:[#allocation3 + $0x40] sm:$0xff] %vm2165, %v2086
        %2175 = vst.msk [vmem:[#allocation3 + $0x48] sm:$0xff] %vm2165, %v2088
        %2176 = vst.msk [vmem:[#allocation3 + $0x50] sm:$0xff] %vm2165, %v2090
        %2177 = vst.msk [vmem:[#allocation3 + $0x58] sm:$0xff] %vm2165, %v2092
        %2178 = vst.msk [vmem:[#allocation3 + $0x60] sm:$0xff] %vm2165, %v2094
        %2179 = vst.msk [vmem:[#allocation3 + $0x68] sm:$0xff] %vm2165, %v2096
        %2180 = vst.msk [vmem:[#allocation3 + $0x70] sm:$0xff] %vm2165, %v2098
        %2181 = vst.msk [vmem:[#allocation3 + $0x78] sm:$0xff] %vm2165, %v2100
        %2182 = vst.msk [vmem:[#allocation3 + $0x80] sm:$0xff] %vm2165, %v2102
        %2183 = vst.msk [vmem:[#allocation3 + $0x88] sm:$0xff] %vm2165, %v2104
        %2184 = vst.msk [vmem:[#allocation3 + $0x90] sm:$0xff] %vm2165, %v2106
        %2185 = vst.msk [vmem:[#allocation3 + $0x98] sm:$0xff] %vm2165, %v2108
        %2186 = vst.msk [vmem:[#allocation3 + $0xa0] sm:$0xff] %vm2165, %v2110
        %2187 = vst.msk [vmem:[#allocation3 + $0xa8] sm:$0xff] %vm2165, %v2112
        %2188 = vst.msk [vmem:[#allocation3 + $0xb0] sm:$0xff] %vm2165, %v2114
        %2189 = vst.msk [vmem:[#allocation3 + $0xb8] sm:$0xff] %vm2165, %v2116
        %2190 = vst.msk [vmem:[#allocation3 + $0xc0] sm:$0xff] %vm2165, %v2118
        %2191 = vst.msk [vmem:[#allocation3 + $0xc8] sm:$0xff] %vm2165, %v2120
        %2192 = vst.msk [vmem:[#allocation3 + $0xd0] sm:$0xff] %vm2165, %v2122
        %2193 = vst.msk [vmem:[#allocation3 + $0xd8] sm:$0xff] %vm2165, %v2124
        %2194 = vst.msk [vmem:[#allocation3 + $0xe0] sm:$0xff] %vm2165, %v2126
        %2195 = vst.msk [vmem:[#allocation3 + $0xe8] sm:$0xff] %vm2165, %v2128
        %2196 = vst.msk [vmem:[#allocation3 + $0xf0] sm:$0xff] %vm2165, %v2130
        %2197 = vst.msk [vmem:[#allocation3 + $0xf8] sm:$0xff] %vm2165, %v2132
        %s2198 = sadd.s32 %s1615, 1296
        %s2199 = scalar_lea.vmem [#allocation2], %s2198
        %v2200 = vld [vmem:[%s2199] sm:$0xff]
        %v2201 = vld [vmem:[%s2199 + $0x8] sm:$0xff]
        %v2202 = vld [vmem:[%s2199 + $0x18] sm:$0xff]
        %v2203 = vld [vmem:[%s2199 + $0x20] sm:$0xff]
        %v2204 = vld [vmem:[%s2199 + $0x30] sm:$0xff]
        %v2205 = vld [vmem:[%s2199 + $0x38] sm:$0xff]
        %v2206 = vld [vmem:[%s2199 + $0x48] sm:$0xff]
        %v2207 = vld [vmem:[%s2199 + $0x50] sm:$0xff]
        %v2208 = vld [vmem:[%s2199 + $0x60] sm:$0xff]
        %v2209 = vld [vmem:[%s2199 + $0x68] sm:$0xff]
        %v2210 = vld [vmem:[%s2199 + $0x78] sm:$0xff]
        %v2211 = vld [vmem:[%s2199 + $0x80] sm:$0xff]
        %v2212 = vld [vmem:[%s2199 + $0x90] sm:$0xff]
        %v2213 = vld [vmem:[%s2199 + $0x98] sm:$0xff]
        %v2214 = vld [vmem:[%s2199 + $0xa8] sm:$0xff]
        %v2215 = vld [vmem:[%s2199 + $0xb0] sm:$0xff]
        %v2216 = vld [vmem:[%s2199 + $0xc0] sm:$0xff]
        %v2217 = vld [vmem:[%s2199 + $0xc8] sm:$0xff]
        %v2218 = vld [vmem:[%s2199 + $0xd8] sm:$0xff]
        %v2219 = vld [vmem:[%s2199 + $0xe0] sm:$0xff]
        %v2220 = vld [vmem:[%s2199 + $0xf0] sm:$0xff]
        %v2221 = vld [vmem:[%s2199 + $0xf8] sm:$0xff]
        %v2222 = vld [vmem:[%s2199 + $0x108] sm:$0xff]
        %v2223 = vld [vmem:[%s2199 + $0x110] sm:$0xff]
        %v2224 = vld [vmem:[%s2199 + $0x120] sm:$0xff]
        %v2225 = vld [vmem:[%s2199 + $0x128] sm:$0xff]
        %v2226 = vld [vmem:[%s2199 + $0x138] sm:$0xff]
        %v2227 = vld [vmem:[%s2199 + $0x140] sm:$0xff]
        %v2228 = vld [vmem:[%s2199 + $0x150] sm:$0xff]
        %v2229 = vld [vmem:[%s2199 + $0x158] sm:$0xff]
        %v2230 = vld [vmem:[%s2199 + $0x168] sm:$0xff]
        %v2231 = vld [vmem:[%s2199 + $0x170] sm:$0xff]
        %2264 = vrot.lane.b32.xlu0 %v2200, 24
        %v2265 = vpop.permute.xlu0 %2264
        %2266 = vrot.lane.b32.xlu0 %v2201, 24
        %v2267 = vpop.permute.xlu0 %2266
        %2268 = vrot.lane.b32.xlu0 %v2202, 24
        %v2269 = vpop.permute.xlu0 %2268
        %2270 = vrot.lane.b32.xlu0 %v2203, 24
        %v2271 = vpop.permute.xlu0 %2270
        %2272 = vrot.lane.b32.xlu0 %v2204, 24
        %v2273 = vpop.permute.xlu0 %2272
        %2274 = vrot.lane.b32.xlu0 %v2205, 24
        %v2275 = vpop.permute.xlu0 %2274
        %2276 = vrot.lane.b32.xlu0 %v2206, 24
        %v2277 = vpop.permute.xlu0 %2276
        %2278 = vrot.lane.b32.xlu0 %v2207, 24
        %v2279 = vpop.permute.xlu0 %2278
        %2280 = vrot.lane.b32.xlu0 %v2208, 24
        %v2281 = vpop.permute.xlu0 %2280
        %2282 = vrot.lane.b32.xlu0 %v2209, 24
        %v2283 = vpop.permute.xlu0 %2282
        %2284 = vrot.lane.b32.xlu0 %v2210, 24
        %v2285 = vpop.permute.xlu0 %2284
        %2286 = vrot.lane.b32.xlu0 %v2211, 24
        %v2287 = vpop.permute.xlu0 %2286
        %2288 = vrot.lane.b32.xlu0 %v2212, 24
        %v2289 = vpop.permute.xlu0 %2288
        %2290 = vrot.lane.b32.xlu0 %v2213, 24
        %v2291 = vpop.permute.xlu0 %2290
        %2292 = vrot.lane.b32.xlu0 %v2214, 24
        %v2293 = vpop.permute.xlu0 %2292
        %2294 = vrot.lane.b32.xlu0 %v2215, 24
        %v2295 = vpop.permute.xlu0 %2294
        %2296 = vrot.lane.b32.xlu0 %v2216, 24
        %v2297 = vpop.permute.xlu0 %2296
        %2298 = vrot.lane.b32.xlu0 %v2217, 24
        %v2299 = vpop.permute.xlu0 %2298
        %2300 = vrot.lane.b32.xlu0 %v2218, 24
        %v2301 = vpop.permute.xlu0 %2300
        %2302 = vrot.lane.b32.xlu0 %v2219, 24
        %v2303 = vpop.permute.xlu0 %2302
        %2304 = vrot.lane.b32.xlu0 %v2220, 24
        %v2305 = vpop.permute.xlu0 %2304
        %2306 = vrot.lane.b32.xlu0 %v2221, 24
        %v2307 = vpop.permute.xlu0 %2306
        %2308 = vrot.lane.b32.xlu0 %v2222, 24
        %v2309 = vpop.permute.xlu0 %2308
        %2310 = vrot.lane.b32.xlu0 %v2223, 24
        %v2311 = vpop.permute.xlu0 %2310
        %2312 = vrot.lane.b32.xlu0 %v2224, 24
        %v2313 = vpop.permute.xlu0 %2312
        %2314 = vrot.lane.b32.xlu0 %v2225, 24
        %v2315 = vpop.permute.xlu0 %2314
        %2316 = vrot.lane.b32.xlu0 %v2226, 24
        %v2317 = vpop.permute.xlu0 %2316
        %2318 = vrot.lane.b32.xlu0 %v2227, 24
        %v2319 = vpop.permute.xlu0 %2318
        %2320 = vrot.lane.b32.xlu0 %v2228, 24
        %v2321 = vpop.permute.xlu0 %2320
        %2322 = vrot.lane.b32.xlu0 %v2229, 24
        %v2323 = vpop.permute.xlu0 %2322
        %2324 = vrot.lane.b32.xlu0 %v2230, 24
        %v2325 = vpop.permute.xlu0 %2324
        %2326 = vrot.lane.b32.xlu0 %v2231, 24
        %v2327 = vpop.permute.xlu0 %2326
        %vm2360 = vcmask 228544
        %2361 = vst.msk [vmem:[#allocation3] sm:$0xff] %vm2360, %v2265
        %2362 = vst.msk [vmem:[#allocation3 + $0x8] sm:$0xff] %vm2360, %v2267
        %2363 = vst.msk [vmem:[#allocation3 + $0x10] sm:$0xff] %vm2360, %v2269
        %2364 = vst.msk [vmem:[#allocation3 + $0x18] sm:$0xff] %vm2360, %v2271
        %2365 = vst.msk [vmem:[#allocation3 + $0x20] sm:$0xff] %vm2360, %v2273
        %2366 = vst.msk [vmem:[#allocation3 + $0x28] sm:$0xff] %vm2360, %v2275
        %2367 = vst.msk [vmem:[#allocation3 + $0x30] sm:$0xff] %vm2360, %v2277
        %2368 = vst.msk [vmem:[#allocation3 + $0x38] sm:$0xff] %vm2360, %v2279
        %2369 = vst.msk [vmem:[#allocation3 + $0x40] sm:$0xff] %vm2360, %v2281
        %2370 = vst.msk [vmem:[#allocation3 + $0x48] sm:$0xff] %vm2360, %v2283
        %2371 = vst.msk [vmem:[#allocation3 + $0x50] sm:$0xff] %vm2360, %v2285
        %2372 = vst.msk [vmem:[#allocation3 + $0x58] sm:$0xff] %vm2360, %v2287
        %2373 = vst.msk [vmem:[#allocation3 + $0x60] sm:$0xff] %vm2360, %v2289
        %2374 = vst.msk [vmem:[#allocation3 + $0x68] sm:$0xff] %vm2360, %v2291
        %2375 = vst.msk [vmem:[#allocation3 + $0x70] sm:$0xff] %vm2360, %v2293
        %2376 = vst.msk [vmem:[#allocation3 + $0x78] sm:$0xff] %vm2360, %v2295
        %2377 = vst.msk [vmem:[#allocation3 + $0x80] sm:$0xff] %vm2360, %v2297
        %2378 = vst.msk [vmem:[#allocation3 + $0x88] sm:$0xff] %vm2360, %v2299
        %2379 = vst.msk [vmem:[#allocation3 + $0x90] sm:$0xff] %vm2360, %v2301
        %2380 = vst.msk [vmem:[#allocation3 + $0x98] sm:$0xff] %vm2360, %v2303
        %2381 = vst.msk [vmem:[#allocation3 + $0xa0] sm:$0xff] %vm2360, %v2305
        %2382 = vst.msk [vmem:[#allocation3 + $0xa8] sm:$0xff] %vm2360, %v2307
        %2383 = vst.msk [vmem:[#allocation3 + $0xb0] sm:$0xff] %vm2360, %v2309
        %2384 = vst.msk [vmem:[#allocation3 + $0xb8] sm:$0xff] %vm2360, %v2311
        %2385 = vst.msk [vmem:[#allocation3 + $0xc0] sm:$0xff] %vm2360, %v2313
        %2386 = vst.msk [vmem:[#allocation3 + $0xc8] sm:$0xff] %vm2360, %v2315
        %2387 = vst.msk [vmem:[#allocation3 + $0xd0] sm:$0xff] %vm2360, %v2317
        %2388 = vst.msk [vmem:[#allocation3 + $0xd8] sm:$0xff] %vm2360, %v2319
        %2389 = vst.msk [vmem:[#allocation3 + $0xe0] sm:$0xff] %vm2360, %v2321
        %2390 = vst.msk [vmem:[#allocation3 + $0xe8] sm:$0xff] %vm2360, %v2323
        %2391 = vst.msk [vmem:[#allocation3 + $0xf0] sm:$0xff] %vm2360, %v2325
        %2392 = vst.msk [vmem:[#allocation3 + $0xf8] sm:$0xff] %vm2360, %v2327
        %s2393 = sadd.s32 %s1615, 864
        %s2394 = scalar_lea.vmem [#allocation2], %s2393
        %v2395 = vld [vmem:[%s2394 + $0x1] sm:$0xff]
        %v2396 = vld [vmem:[%s2394 + $0x9] sm:$0xff]
        %v2397 = vld [vmem:[%s2394 + $0x19] sm:$0xff]
        %v2398 = vld [vmem:[%s2394 + $0x21] sm:$0xff]
        %v2399 = vld [vmem:[%s2394 + $0x31] sm:$0xff]
        %v2400 = vld [vmem:[%s2394 + $0x39] sm:$0xff]
        %v2401 = vld [vmem:[%s2394 + $0x49] sm:$0xff]
        %v2402 = vld [vmem:[%s2394 + $0x51] sm:$0xff]
        %v2403 = vld [vmem:[%s2394 + $0x61] sm:$0xff]
        %v2404 = vld [vmem:[%s2394 + $0x69] sm:$0xff]
        %v2405 = vld [vmem:[%s2394 + $0x79] sm:$0xff]
        %v2406 = vld [vmem:[%s2394 + $0x81] sm:$0xff]
        %v2407 = vld [vmem:[%s2394 + $0x91] sm:$0xff]
        %v2408 = vld [vmem:[%s2394 + $0x99] sm:$0xff]
        %v2409 = vld [vmem:[%s2394 + $0xa9] sm:$0xff]
        %v2410 = vld [vmem:[%s2394 + $0xb1] sm:$0xff]
        %v2411 = vld [vmem:[%s2394 + $0xc1] sm:$0xff]
        %v2412 = vld [vmem:[%s2394 + $0xc9] sm:$0xff]
        %v2413 = vld [vmem:[%s2394 + $0xd9] sm:$0xff]
        %v2414 = vld [vmem:[%s2394 + $0xe1] sm:$0xff]
        %v2415 = vld [vmem:[%s2394 + $0xf1] sm:$0xff]
        %v2416 = vld [vmem:[%s2394 + $0xf9] sm:$0xff]
        %v2417 = vld [vmem:[%s2394 + $0x109] sm:$0xff]
        %v2418 = vld [vmem:[%s2394 + $0x111] sm:$0xff]
        %v2419 = vld [vmem:[%s2394 + $0x121] sm:$0xff]
        %v2420 = vld [vmem:[%s2394 + $0x129] sm:$0xff]
        %v2421 = vld [vmem:[%s2394 + $0x139] sm:$0xff]
        %v2422 = vld [vmem:[%s2394 + $0x141] sm:$0xff]
        %v2423 = vld [vmem:[%s2394 + $0x151] sm:$0xff]
        %v2424 = vld [vmem:[%s2394 + $0x159] sm:$0xff]
        %v2425 = vld [vmem:[%s2394 + $0x169] sm:$0xff]
        %v2426 = vld [vmem:[%s2394 + $0x171] sm:$0xff]
        %2459 = vrot.lane.b32.xlu0 %v2395, 28
        %v2460 = vpop.permute.xlu0 %2459
        %2461 = vrot.lane.b32.xlu0 %v2396, 28
        %v2462 = vpop.permute.xlu0 %2461
        %2463 = vrot.lane.b32.xlu0 %v2397, 28
        %v2464 = vpop.permute.xlu0 %2463
        %2465 = vrot.lane.b32.xlu0 %v2398, 28
        %v2466 = vpop.permute.xlu0 %2465
        %2467 = vrot.lane.b32.xlu0 %v2399, 28
        %v2468 = vpop.permute.xlu0 %2467
        %2469 = vrot.lane.b32.xlu0 %v2400, 28
        %v2470 = vpop.permute.xlu0 %2469
        %2471 = vrot.lane.b32.xlu0 %v2401, 28
        %v2472 = vpop.permute.xlu0 %2471
        %2473 = vrot.lane.b32.xlu0 %v2402, 28
        %v2474 = vpop.permute.xlu0 %2473
        %2475 = vrot.lane.b32.xlu0 %v2403, 28
        %v2476 = vpop.permute.xlu0 %2475
        %2477 = vrot.lane.b32.xlu0 %v2404, 28
        %v2478 = vpop.permute.xlu0 %2477
        %2479 = vrot.lane.b32.xlu0 %v2405, 28
        %v2480 = vpop.permute.xlu0 %2479
        %2481 = vrot.lane.b32.xlu0 %v2406, 28
        %v2482 = vpop.permute.xlu0 %2481
        %2483 = vrot.lane.b32.xlu0 %v2407, 28
        %v2484 = vpop.permute.xlu0 %2483
        %2485 = vrot.lane.b32.xlu0 %v2408, 28
        %v2486 = vpop.permute.xlu0 %2485
        %2487 = vrot.lane.b32.xlu0 %v2409, 28
        %v2488 = vpop.permute.xlu0 %2487
        %2489 = vrot.lane.b32.xlu0 %v2410, 28
        %v2490 = vpop.permute.xlu0 %2489
        %2491 = vrot.lane.b32.xlu0 %v2411, 28
        %v2492 = vpop.permute.xlu0 %2491
        %2493 = vrot.lane.b32.xlu0 %v2412, 28
        %v2494 = vpop.permute.xlu0 %2493
        %2495 = vrot.lane.b32.xlu0 %v2413, 28
        %v2496 = vpop.permute.xlu0 %2495
        %2497 = vrot.lane.b32.xlu0 %v2414, 28
        %v2498 = vpop.permute.xlu0 %2497
        %2499 = vrot.lane.b32.xlu0 %v2415, 28
        %v2500 = vpop.permute.xlu0 %2499
        %2501 = vrot.lane.b32.xlu0 %v2416, 28
        %v2502 = vpop.permute.xlu0 %2501
        %2503 = vrot.lane.b32.xlu0 %v2417, 28
        %v2504 = vpop.permute.xlu0 %2503
        %2505 = vrot.lane.b32.xlu0 %v2418, 28
        %v2506 = vpop.permute.xlu0 %2505
        %2507 = vrot.lane.b32.xlu0 %v2419, 28
        %v2508 = vpop.permute.xlu0 %2507
        %2509 = vrot.lane.b32.xlu0 %v2420, 28
        %v2510 = vpop.permute.xlu0 %2509
        %2511 = vrot.lane.b32.xlu0 %v2421, 28
        %v2512 = vpop.permute.xlu0 %2511
        %2513 = vrot.lane.b32.xlu0 %v2422, 28
        %v2514 = vpop.permute.xlu0 %2513
        %2515 = vrot.lane.b32.xlu0 %v2423, 28
        %v2516 = vpop.permute.xlu0 %2515
        %2517 = vrot.lane.b32.xlu0 %v2424, 28
        %v2518 = vpop.permute.xlu0 %2517
        %2519 = vrot.lane.b32.xlu0 %v2425, 28
        %v2520 = vpop.permute.xlu0 %2519
        %2521 = vrot.lane.b32.xlu0 %v2426, 28
        %v2522 = vpop.permute.xlu0 %2521
        %vm2555 = vcmask 261344
        %2556 = vst.msk [vmem:[#allocation3] sm:$0xff] %vm2555, %v2460
        %2557 = vst.msk [vmem:[#allocation3 + $0x8] sm:$0xff] %vm2555, %v2462
        %2558 = vst.msk [vmem:[#allocation3 + $0x10] sm:$0xff] %vm2555, %v2464
        %2559 = vst.msk [vmem:[#allocation3 + $0x18] sm:$0xff] %vm2555, %v2466
        %2560 = vst.msk [vmem:[#allocation3 + $0x20] sm:$0xff] %vm2555, %v2468
        %2561 = vst.msk [vmem:[#allocation3 + $0x28] sm:$0xff] %vm2555, %v2470
        %2562 = vst.msk [vmem:[#allocation3 + $0x30] sm:$0xff] %vm2555, %v2472
        %2563 = vst.msk [vmem:[#allocation3 + $0x38] sm:$0xff] %vm2555, %v2474
        %2564 = vst.msk [vmem:[#allocation3 + $0x40] sm:$0xff] %vm2555, %v2476
        %2565 = vst.msk [vmem:[#allocation3 + $0x48] sm:$0xff] %vm2555, %v2478
        %2566 = vst.msk [vmem:[#allocation3 + $0x50] sm:$0xff] %vm2555, %v2480
        %2567 = vst.msk [vmem:[#allocation3 + $0x58] sm:$0xff] %vm2555, %v2482
        %2568 = vst.msk [vmem:[#allocation3 + $0x60] sm:$0xff] %vm2555, %v2484
        %2569 = vst.msk [vmem:[#allocation3 + $0x68] sm:$0xff] %vm2555, %v2486
        %2570 = vst.msk [vmem:[#allocation3 + $0x70] sm:$0xff] %vm2555, %v2488
        %2571 = vst.msk [vmem:[#allocation3 + $0x78] sm:$0xff] %vm2555, %v2490
        %2572 = vst.msk [vmem:[#allocation3 + $0x80] sm:$0xff] %vm2555, %v2492
        %2573 = vst.msk [vmem:[#allocation3 + $0x88] sm:$0xff] %vm2555, %v2494
        %2574 = vst.msk [vmem:[#allocation3 + $0x90] sm:$0xff] %vm2555, %v2496
        %2575 = vst.msk [vmem:[#allocation3 + $0x98] sm:$0xff] %vm2555, %v2498
        %2576 = vst.msk [vmem:[#allocation3 + $0xa0] sm:$0xff] %vm2555, %v2500
        %2577 = vst.msk [vmem:[#allocation3 + $0xa8] sm:$0xff] %vm2555, %v2502
        %2578 = vst.msk [vmem:[#allocation3 + $0xb0] sm:$0xff] %vm2555, %v2504
        %2579 = vst.msk [vmem:[#allocation3 + $0xb8] sm:$0xff] %vm2555, %v2506
        %2580 = vst.msk [vmem:[#allocation3 + $0xc0] sm:$0xff] %vm2555, %v2508
        %2581 = vst.msk [vmem:[#allocation3 + $0xc8] sm:$0xff] %vm2555, %v2510
        %2582 = vst.msk [vmem:[#allocation3 + $0xd0] sm:$0xff] %vm2555, %v2512
        %2583 = vst.msk [vmem:[#allocation3 + $0xd8] sm:$0xff] %vm2555, %v2514
        %2584 = vst.msk [vmem:[#allocation3 + $0xe0] sm:$0xff] %vm2555, %v2516
        %2585 = vst.msk [vmem:[#allocation3 + $0xe8] sm:$0xff] %vm2555, %v2518
        %2586 = vst.msk [vmem:[#allocation3 + $0xf0] sm:$0xff] %vm2555, %v2520
        %2587 = vst.msk [vmem:[#allocation3 + $0xf8] sm:$0xff] %vm2555, %v2522
        %v2588 = vld [vmem:[%s2199 + $0x1] sm:$0xff]
        %v2589 = vld [vmem:[%s2199 + $0x9] sm:$0xff]
        %v2590 = vld [vmem:[%s2199 + $0x19] sm:$0xff]
        %v2591 = vld [vmem:[%s2199 + $0x21] sm:$0xff]
        %v2592 = vld [vmem:[%s2199 + $0x31] sm:$0xff]
        %v2593 = vld [vmem:[%s2199 + $0x39] sm:$0xff]
        %v2594 = vld [vmem:[%s2199 + $0x49] sm:$0xff]
        %v2595 = vld [vmem:[%s2199 + $0x51] sm:$0xff]
        %v2596 = vld [vmem:[%s2199 + $0x61] sm:$0xff]
        %v2597 = vld [vmem:[%s2199 + $0x69] sm:$0xff]
        %v2598 = vld [vmem:[%s2199 + $0x79] sm:$0xff]
        %v2599 = vld [vmem:[%s2199 + $0x81] sm:$0xff]
        %v2600 = vld [vmem:[%s2199 + $0x91] sm:$0xff]
        %v2601 = vld [vmem:[%s2199 + $0x99] sm:$0xff]
        %v2602 = vld [vmem:[%s2199 + $0xa9] sm:$0xff]
        %v2603 = vld [vmem:[%s2199 + $0xb1] sm:$0xff]
        %v2604 = vld [vmem:[%s2199 + $0xc1] sm:$0xff]
        %v2605 = vld [vmem:[%s2199 + $0xc9] sm:$0xff]
        %v2606 = vld [vmem:[%s2199 + $0xd9] sm:$0xff]
        %v2607 = vld [vmem:[%s2199 + $0xe1] sm:$0xff]
        %v2608 = vld [vmem:[%s2199 + $0xf1] sm:$0xff]
        %v2609 = vld [vmem:[%s2199 + $0xf9] sm:$0xff]
        %v2610 = vld [vmem:[%s2199 + $0x109] sm:$0xff]
        %v2611 = vld [vmem:[%s2199 + $0x111] sm:$0xff]
        %v2612 = vld [vmem:[%s2199 + $0x121] sm:$0xff]
        %v2613 = vld [vmem:[%s2199 + $0x129] sm:$0xff]
        %v2614 = vld [vmem:[%s2199 + $0x139] sm:$0xff]
        %v2615 = vld [vmem:[%s2199 + $0x141] sm:$0xff]
        %v2616 = vld [vmem:[%s2199 + $0x151] sm:$0xff]
        %v2617 = vld [vmem:[%s2199 + $0x159] sm:$0xff]
        %v2618 = vld [vmem:[%s2199 + $0x169] sm:$0xff]
        %v2619 = vld [vmem:[%s2199 + $0x171] sm:$0xff]
        %2652 = vrot.lane.b32.xlu0 %v2588, 32
        %v2653 = vpop.permute.xlu0 %2652
        %2654 = vrot.lane.b32.xlu0 %v2589, 32
        %v2655 = vpop.permute.xlu0 %2654
        %2656 = vrot.lane.b32.xlu0 %v2590, 32
        %v2657 = vpop.permute.xlu0 %2656
        %2658 = vrot.lane.b32.xlu0 %v2591, 32
        %v2659 = vpop.permute.xlu0 %2658
        %2660 = vrot.lane.b32.xlu0 %v2592, 32
        %v2661 = vpop.permute.xlu0 %2660
        %2662 = vrot.lane.b32.xlu0 %v2593, 32
        %v2663 = vpop.permute.xlu0 %2662
        %2664 = vrot.lane.b32.xlu0 %v2594, 32
        %v2665 = vpop.permute.xlu0 %2664
        %2666 = vrot.lane.b32.xlu0 %v2595, 32
        %v2667 = vpop.permute.xlu0 %2666
        %2668 = vrot.lane.b32.xlu0 %v2596, 32
        %v2669 = vpop.permute.xlu0 %2668
        %2670 = vrot.lane.b32.xlu0 %v2597, 32
        %v2671 = vpop.permute.xlu0 %2670
        %2672 = vrot.lane.b32.xlu0 %v2598, 32
        %v2673 = vpop.permute.xlu0 %2672
        %2674 = vrot.lane.b32.xlu0 %v2599, 32
        %v2675 = vpop.permute.xlu0 %2674
        %2676 = vrot.lane.b32.xlu0 %v2600, 32
        %v2677 = vpop.permute.xlu0 %2676
        %2678 = vrot.lane.b32.xlu0 %v2601, 32
        %v2679 = vpop.permute.xlu0 %2678
        %2680 = vrot.lane.b32.xlu0 %v2602, 32
        %v2681 = vpop.permute.xlu0 %2680
        %2682 = vrot.lane.b32.xlu0 %v2603, 32
        %v2683 = vpop.permute.xlu0 %2682
        %2684 = vrot.lane.b32.xlu0 %v2604, 32
        %v2685 = vpop.permute.xlu0 %2684
        %2686 = vrot.lane.b32.xlu0 %v2605, 32
        %v2687 = vpop.permute.xlu0 %2686
        %2688 = vrot.lane.b32.xlu0 %v2606, 32
        %v2689 = vpop.permute.xlu0 %2688
        %2690 = vrot.lane.b32.xlu0 %v2607, 32
        %v2691 = vpop.permute.xlu0 %2690
        %2692 = vrot.lane.b32.xlu0 %v2608, 32
        %v2693 = vpop.permute.xlu0 %2692
        %2694 = vrot.lane.b32.xlu0 %v2609, 32
        %v2695 = vpop.permute.xlu0 %2694
        %2696 = vrot.lane.b32.xlu0 %v2610, 32
        %v2697 = vpop.permute.xlu0 %2696
        %2698 = vrot.lane.b32.xlu0 %v2611, 32
        %v2699 = vpop.permute.xlu0 %2698
        %2700 = vrot.lane.b32.xlu0 %v2612, 32
        %v2701 = vpop.permute.xlu0 %2700
        %2702 = vrot.lane.b32.xlu0 %v2613, 32
        %v2703 = vpop.permute.xlu0 %2702
        %2704 = vrot.lane.b32.xlu0 %v2614, 32
        %v2705 = vpop.permute.xlu0 %2704
        %2706 = vrot.lane.b32.xlu0 %v2615, 32
        %v2707 = vpop.permute.xlu0 %2706
        %2708 = vrot.lane.b32.xlu0 %v2616, 32
        %v2709 = vpop.permute.xlu0 %2708
        %2710 = vrot.lane.b32.xlu0 %v2617, 32
        %v2711 = vpop.permute.xlu0 %2710
        %2712 = vrot.lane.b32.xlu0 %v2618, 32
        %v2713 = vpop.permute.xlu0 %2712
        %2714 = vrot.lane.b32.xlu0 %v2619, 32
        %v2715 = vpop.permute.xlu0 %2714
        %vm2748 = vcmask 294144
        %2749 = vst.msk [vmem:[#allocation3] sm:$0xff] %vm2748, %v2653
        %2750 = vst.msk [vmem:[#allocation3 + $0x8] sm:$0xff] %vm2748, %v2655
        %2751 = vst.msk [vmem:[#allocation3 + $0x10] sm:$0xff] %vm2748, %v2657
        %2752 = vst.msk [vmem:[#allocation3 + $0x18] sm:$0xff] %vm2748, %v2659
        %2753 = vst.msk [vmem:[#allocation3 + $0x20] sm:$0xff] %vm2748, %v2661
        %2754 = vst.msk [vmem:[#allocation3 + $0x28] sm:$0xff] %vm2748, %v2663
        %2755 = vst.msk [vmem:[#allocation3 + $0x30] sm:$0xff] %vm2748, %v2665
        %2756 = vst.msk [vmem:[#allocation3 + $0x38] sm:$0xff] %vm2748, %v2667
        %2757 = vst.msk [vmem:[#allocation3 + $0x40] sm:$0xff] %vm2748, %v2669
        %2758 = vst.msk [vmem:[#allocation3 + $0x48] sm:$0xff] %vm2748, %v2671
        %2759 = vst.msk [vmem:[#allocation3 + $0x50] sm:$0xff] %vm2748, %v2673
        %2760 = vst.msk [vmem:[#allocation3 + $0x58] sm:$0xff] %vm2748, %v2675
        %2761 = vst.msk [vmem:[#allocation3 + $0x60] sm:$0xff] %vm2748, %v2677
        %2762 = vst.msk [vmem:[#allocation3 + $0x68] sm:$0xff] %vm2748, %v2679
        %2763 = vst.msk [vmem:[#allocation3 + $0x70] sm:$0xff] %vm2748, %v2681
        %2764 = vst.msk [vmem:[#allocation3 + $0x78] sm:$0xff] %vm2748, %v2683
        %2765 = vst.msk [vmem:[#allocation3 + $0x80] sm:$0xff] %vm2748, %v2685
        %2766 = vst.msk [vmem:[#allocation3 + $0x88] sm:$0xff] %vm2748, %v2687
        %2767 = vst.msk [vmem:[#allocation3 + $0x90] sm:$0xff] %vm2748, %v2689
        %2768 = vst.msk [vmem:[#allocation3 + $0x98] sm:$0xff] %vm2748, %v2691
        %2769 = vst.msk [vmem:[#allocation3 + $0xa0] sm:$0xff] %vm2748, %v2693
        %2770 = vst.msk [vmem:[#allocation3 + $0xa8] sm:$0xff] %vm2748, %v2695
        %2771 = vst.msk [vmem:[#allocation3 + $0xb0] sm:$0xff] %vm2748, %v2697
        %2772 = vst.msk [vmem:[#allocation3 + $0xb8] sm:$0xff] %vm2748, %v2699
        %2773 = vst.msk [vmem:[#allocation3 + $0xc0] sm:$0xff] %vm2748, %v2701
        %2774 = vst.msk [vmem:[#allocation3 + $0xc8] sm:$0xff] %vm2748, %v2703
        %2775 = vst.msk [vmem:[#allocation3 + $0xd0] sm:$0xff] %vm2748, %v2705
        %2776 = vst.msk [vmem:[#allocation3 + $0xd8] sm:$0xff] %vm2748, %v2707
        %2777 = vst.msk [vmem:[#allocation3 + $0xe0] sm:$0xff] %vm2748, %v2709
        %2778 = vst.msk [vmem:[#allocation3 + $0xe8] sm:$0xff] %vm2748, %v2711
        %2779 = vst.msk [vmem:[#allocation3 + $0xf0] sm:$0xff] %vm2748, %v2713
        %2780 = vst.msk [vmem:[#allocation3 + $0xf8] sm:$0xff] %vm2748, %v2715
        %v2781 = vld [vmem:[#allocation3] sm:$0xff]
        %v2782 = vld [vmem:[#allocation3 + $0x8] sm:$0xff]
        %v2783 = vld [vmem:[#allocation3 + $0x10] sm:$0xff]
        %v2784 = vld [vmem:[#allocation3 + $0x18] sm:$0xff]
        %v2785 = vld [vmem:[#allocation3 + $0x20] sm:$0xff]
        %v2786 = vld [vmem:[#allocation3 + $0x28] sm:$0xff]
        %v2787 = vld [vmem:[#allocation3 + $0x30] sm:$0xff]
        %v2788 = vld [vmem:[#allocation3 + $0x38] sm:$0xff]
        %v2789 = vld [vmem:[#allocation3 + $0x40] sm:$0xff]
        %v2790 = vld [vmem:[#allocation3 + $0x48] sm:$0xff]
        %v2791 = vld [vmem:[#allocation3 + $0x50] sm:$0xff]
        %v2792 = vld [vmem:[#allocation3 + $0x58] sm:$0xff]
        %v2793 = vld [vmem:[#allocation3 + $0x60] sm:$0xff]
        %v2794 = vld [vmem:[#allocation3 + $0x68] sm:$0xff]
        %v2795 = vld [vmem:[#allocation3 + $0x70] sm:$0xff]
        %v2796 = vld [vmem:[#allocation3 + $0x78] sm:$0xff]
        %v2797 = vld [vmem:[#allocation3 + $0x80] sm:$0xff]
        %v2798 = vld [vmem:[#allocation3 + $0x88] sm:$0xff]
        %v2799 = vld [vmem:[#allocation3 + $0x90] sm:$0xff]
        %v2800 = vld [vmem:[#allocation3 + $0x98] sm:$0xff]
        %v2801 = vld [vmem:[#allocation3 + $0xa0] sm:$0xff]
        %v2802 = vld [vmem:[#allocation3 + $0xa8] sm:$0xff]
        %v2803 = vld [vmem:[#allocation3 + $0xb0] sm:$0xff]
        %v2804 = vld [vmem:[#allocation3 + $0xb8] sm:$0xff]
        %v2805 = vld [vmem:[#allocation3 + $0xc0] sm:$0xff]
        %v2806 = vld [vmem:[#allocation3 + $0xc8] sm:$0xff]
        %v2807 = vld [vmem:[#allocation3 + $0xd0] sm:$0xff]
        %v2808 = vld [vmem:[#allocation3 + $0xd8] sm:$0xff]
        %v2809 = vld [vmem:[#allocation3 + $0xe0] sm:$0xff]
        %v2810 = vld [vmem:[#allocation3 + $0xe8] sm:$0xff]
        %v2811 = vld [vmem:[#allocation3 + $0xf0] sm:$0xff]
        %v2812 = vld [vmem:[#allocation3 + $0xf8] sm:$0xff]
        %v2813 = vld [vmem:[%s4] sm:$0xff]
        %v2814 = vld [vmem:[%s4 + $0x8] sm:$0xff]
        %v2815 = vld [vmem:[%s4 + $0x10] sm:$0xff]
        %v2816 = vld [vmem:[%s4 + $0x18] sm:$0xff]
        %v2817 = vld [vmem:[%s4 + $0x20] sm:$0xf]
        %v2818 = vld [vmem:[%s5] sm:$0x1]
        %v2820 = vlaneseq
        %v2821 = vshrl.u32 %v2820, 7
        %v2822 = vsub.s32 0, %v2821
        %v2823 = vrot.slane %v2818, %v2822
        %vm2825 = vcmask 293888
        %v2827 = vsel %vm2825, %v2781, 0
        %v2830 = vsel %vm2825, %v2782, 0
        %v2833 = vsel %vm2825, %v2783, 0
        %v2836 = vsel %vm2825, %v2784, 0
        %v2839 = vsel %vm2825, %v2785, 0
        %v2842 = vsel %vm2825, %v2786, 0
        %v2845 = vsel %vm2825, %v2787, 0
        %v2848 = vsel %vm2825, %v2788, 0
        %v2851 = vsel %vm2825, %v2789, 0
        %v2854 = vsel %vm2825, %v2790, 0
        %v2857 = vsel %vm2825, %v2791, 0
        %v2860 = vsel %vm2825, %v2792, 0
        %v2863 = vsel %vm2825, %v2793, 0
        %v2866 = vsel %vm2825, %v2794, 0
        %v2869 = vsel %vm2825, %v2795, 0
        %v2872 = vsel %vm2825, %v2796, 0
        %v2875 = vsel %vm2825, %v2797, 0
        %v2878 = vsel %vm2825, %v2798, 0
        %v2881 = vsel %vm2825, %v2799, 0
        %v2884 = vsel %vm2825, %v2800, 0
        %v2887 = vsel %vm2825, %v2801, 0
        %v2890 = vsel %vm2825, %v2802, 0
        %v2893 = vsel %vm2825, %v2803, 0
        %v2896 = vsel %vm2825, %v2804, 0
        %v2899 = vsel %vm2825, %v2805, 0
        %v2902 = vsel %vm2825, %v2806, 0
        %v2905 = vsel %vm2825, %v2807, 0
        %v2908 = vsel %vm2825, %v2808, 0
        %v2911 = vsel %vm2825, %v2809, 0
        %v2914 = vsel %vm2825, %v2810, 0
        %v2917 = vsel %vm2825, %v2811, 0
        %v2920 = vsel %vm2825, %v2812, 0
        %vm2922 = vcmask 1043456
        %v2924 = vsel %vm2922, %v2817, 0
        %2926 = vmatprep.subr.mxu0 0.0
        %2927 = vmatpush1.msra.mxu0 %v2813
        %2928 = vmatprep.subr.mxu0 0.0
        %2929 = vmatpush1.msra.mxu0 %v2814
        %2930 = vmatprep.subr.mxu0 0.0
        %2931 = vmatpush1.msra.mxu0 %v2815
        %2932 = vmatprep.subr.mxu0 0.0
        %2933 = vmatpush1.msra.mxu0 %v2816
        %2934 = vmatprep.subr.mxu0 0.0
        %2935 = vmatpush1.msra.mxu0 %v2924
        %2936 = vmatprep.subr.mxu0 0.0
        %2937 = vmatpush1.msra.mxu0 0.0
        %2938 = vmatprep.subr.mxu0 0.0
        %2939 = vmatpush1.msra.mxu0 0.0
        %2940 = vmatprep.subr.mxu0 0.0
        %2941 = vmatpush1.msra.mxu0 0.0
        %2942 = vmatprep.subr.mxu0 0.0
        %2943 = vmatpush1.msra.mxu0 0.0
        %2944 = vmatprep.subr.mxu0 0.0
        %2945 = vmatpush1.msra.mxu0 0.0
        %2946 = vmatprep.subr.mxu0 0.0
        %2947 = vmatpush1.msra.mxu0 0.0
        %2948 = vmatprep.subr.mxu0 0.0
        %2949 = vmatpush1.msra.mxu0 0.0
        %2950 = vmatprep.subr.mxu0 0.0
        %2951 = vmatpush1.msra.mxu0 0.0
        %2952 = vmatprep.subr.mxu0 0.0
        %2953 = vmatpush1.msra.mxu0 0.0
        %2954 = vmatprep.subr.mxu0 0.0
        %2955 = vmatpush1.msra.mxu0 0.0
        %2956 = vmatprep.subr.mxu0 0.0
        %2957 = vmatpush1.msra.mxu0 0.0
        %2958 = vmatprep.subr.mxu0 0.0
        %2959 = vmatpush1.msra.mxu0 0.0
        %2960 = vmatprep.subr.mxu0 0.0
        %2961 = vmatpush1.msra.mxu0 0.0
        %2962 = vmatprep.subr.mxu0 0.0
        %2963 = vmatpush1.msra.mxu0 0.0
        %2964 = vmatprep.subr.mxu0 0.0
        %2965 = vmatpush1.msra.mxu0 0.0
        %2966 = vmatprep.subr.mxu0 0.0
        %2967 = vmatpush1.msra.mxu0 0.0
        %2968 = vmatprep.subr.mxu0 0.0
        %2969 = vmatpush1.msra.mxu0 0.0
        %2970 = vmatprep.subr.mxu0 0.0
        %2971 = vmatpush1.msra.mxu0 0.0
        %2972 = vmatprep.subr.mxu0 0.0
        %2973 = vmatpush1.msra.mxu0 0.0
        %2974 = vmatprep.subr.mxu0 0.0
        %2975 = vmatpush1.msra.mxu0 0.0
        %2976 = vmatprep.subr.mxu0 0.0
        %2977 = vmatpush1.msra.mxu0 0.0
        %2978 = vmatprep.subr.mxu0 0.0
        %2979 = vmatpush1.msra.mxu0 0.0
        %2980 = vmatprep.subr.mxu0 0.0
        %2981 = vmatpush1.msra.mxu0 0.0
        %2982 = vmatprep.subr.mxu0 0.0
        %2983 = vmatpush1.msra.mxu0 0.0
        %2984 = vmatprep.subr.mxu0 0.0
        %2985 = vmatpush1.msra.mxu0 0.0
        %2986 = vmatprep.subr.mxu0 0.0
        %2987 = vmatpush1.msra.mxu0 0.0
        %2988 = vmatprep.subr.mxu0 0.0
        %2989 = vmatpush1.msra.mxu0 0.0
        %2990 = vmatprep.mubr.f32.mxu0 0.0
        %2991 = vmatmul.mubr.f32.gmra.mrb[0].mxu0 %v2827
        %v2992 = vpop.f32.mrb[0].mxu0
        %v2993 = vadd.f32 %v2823, %v2992
        %v2994 = vpop.f32.mrb[0].mxu0
        %2995 = vmatprep.mubr.f32.mxu0 0.0
        %2996 = vmatmul.mubr.f32.gmra.mrb[0].mxu0 %v2830
        %v2997 = vpop.f32.mrb[0].mxu0
        %v2998 = vadd.f32 %v2823, %v2997
        %v2999 = vpop.f32.mrb[0].mxu0
        %3000 = vmatprep.mubr.f32.mxu0 0.0
        %3001 = vmatmul.mubr.f32.gmra.mrb[0].mxu0 %v2833
        %v3002 = vpop.f32.mrb[0].mxu0
        %v3003 = vadd.f32 %v2823, %v3002
        %v3004 = vpop.f32.mrb[0].mxu0
        %3005 = vmatprep.mubr.f32.mxu0 0.0
        %3006 = vmatmul.mubr.f32.gmra.mrb[0].mxu0 %v2836
        %v3007 = vpop.f32.mrb[0].mxu0
        %v3008 = vadd.f32 %v2823, %v3007
        %v3009 = vpop.f32.mrb[0].mxu0
        %3010 = vmatprep.mubr.f32.mxu0 0.0
        %3011 = vmatmul.mubr.f32.gmra.mrb[0].mxu0 %v2839
        %v3012 = vpop.f32.mrb[0].mxu0
        %v3013 = vadd.f32 %v2823, %v3012
        %v3014 = vpop.f32.mrb[0].mxu0
        %3015 = vmatprep.mubr.f32.mxu0 0.0
        %3016 = vmatmul.mubr.f32.gmra.mrb[0].mxu0 %v2842
        %v3017 = vpop.f32.mrb[0].mxu0
        %v3018 = vadd.f32 %v2823, %v3017
        %v3019 = vpop.f32.mrb[0].mxu0
        %3020 = vmatprep.mubr.f32.mxu0 0.0
        %3021 = vmatmul.mubr.f32.gmra.mrb[0].mxu0 %v2845
        %v3022 = vpop.f32.mrb[0].mxu0
        %v3023 = vadd.f32 %v2823, %v3022
        %v3024 = vpop.f32.mrb[0].mxu0
        %3025 = vmatprep.mubr.f32.mxu0 0.0
        %3026 = vmatmul.mubr.f32.gmra.mrb[0].mxu0 %v2848
        %v3027 = vpop.f32.mrb[0].mxu0
        %v3028 = vadd.f32 %v2823, %v3027
        %v3029 = vpop.f32.mrb[0].mxu0
        %3030 = vmatprep.mubr.f32.mxu0 0.0
        %3031 = vmatmul.mubr.f32.gmra.mrb[0].mxu0 %v2851
        %v3032 = vpop.f32.mrb[0].mxu0
        %v3033 = vadd.f32 %v2823, %v3032
        %v3034 = vpop.f32.mrb[0].mxu0
        %3035 = vmatprep.mubr.f32.mxu0 0.0
        %3036 = vmatmul.mubr.f32.gmra.mrb[0].mxu0 %v2854
        %v3037 = vpop.f32.mrb[0].mxu0
        %v3038 = vadd.f32 %v2823, %v3037
        %v3039 = vpop.f32.mrb[0].mxu0
        %3040 = vmatprep.mubr.f32.mxu0 0.0
        %3041 = vmatmul.mubr.f32.gmra.mrb[0].mxu0 %v2857
        %v3042 = vpop.f32.mrb[0].mxu0
        %v3043 = vadd.f32 %v2823, %v3042
        %v3044 = vpop.f32.mrb[0].mxu0
        %3045 = vmatprep.mubr.f32.mxu0 0.0
        %3046 = vmatmul.mubr.f32.gmra.mrb[0].mxu0 %v2860
        %v3047 = vpop.f32.mrb[0].mxu0
        %v3048 = vadd.f32 %v2823, %v3047
        %v3049 = vpop.f32.mrb[0].mxu0
        %3050 = vmatprep.mubr.f32.mxu0 0.0
        %3051 = vmatmul.mubr.f32.gmra.mrb[0].mxu0 %v2863
        %v3052 = vpop.f32.mrb[0].mxu0
        %v3053 = vadd.f32 %v2823, %v3052
        %v3054 = vpop.f32.mrb[0].mxu0
        %3055 = vmatprep.mubr.f32.mxu0 0.0
        %3056 = vmatmul.mubr.f32.gmra.mrb[0].mxu0 %v2866
        %v3057 = vpop.f32.mrb[0].mxu0
        %v3058 = vadd.f32 %v2823, %v3057
        %v3059 = vpop.f32.mrb[0].mxu0
        %3060 = vmatprep.mubr.f32.mxu0 0.0
        %3061 = vmatmul.mubr.f32.gmra.mrb[0].mxu0 %v2869
        %v3062 = vpop.f32.mrb[0].mxu0
        %v3063 = vadd.f32 %v2823, %v3062
        %v3064 = vpop.f32.mrb[0].mxu0
        %3065 = vmatprep.mubr.f32.mxu0 0.0
        %3066 = vmatmul.mubr.f32.gmra.mrb[0].mxu0 %v2872
        %v3067 = vpop.f32.mrb[0].mxu0
        %v3068 = vadd.f32 %v2823, %v3067
        %v3069 = vpop.f32.mrb[0].mxu0
        %3070 = vmatprep.mubr.f32.mxu0 0.0
        %3071 = vmatmul.mubr.f32.gmra.mrb[0].mxu0 %v2875
        %v3072 = vpop.f32.mrb[0].mxu0
        %v3073 = vadd.f32 %v2823, %v3072
        %v3074 = vpop.f32.mrb[0].mxu0
        %3075 = vmatprep.mubr.f32.mxu0 0.0
        %3076 = vmatmul.mubr.f32.gmra.mrb[0].mxu0 %v2878
        %v3077 = vpop.f32.mrb[0].mxu0
        %v3078 = vadd.f32 %v2823, %v3077
        %v3079 = vpop.f32.mrb[0].mxu0
        %3080 = vmatprep.mubr.f32.mxu0 0.0
        %3081 = vmatmul.mubr.f32.gmra.mrb[0].mxu0 %v2881
        %v3082 = vpop.f32.mrb[0].mxu0
        %v3083 = vadd.f32 %v2823, %v3082
        %v3084 = vpop.f32.mrb[0].mxu0
        %3085 = vmatprep.mubr.f32.mxu0 0.0
        %3086 = vmatmul.mubr.f32.gmra.mrb[0].mxu0 %v2884
        %v3087 = vpop.f32.mrb[0].mxu0
        %v3088 = vadd.f32 %v2823, %v3087
        %v3089 = vpop.f32.mrb[0].mxu0
        %3090 = vmatprep.mubr.f32.mxu0 0.0
        %3091 = vmatmul.mubr.f32.gmra.mrb[0].mxu0 %v2887
        %v3092 = vpop.f32.mrb[0].mxu0
        %v3093 = vadd.f32 %v2823, %v3092
        %v3094 = vpop.f32.mrb[0].mxu0
        %3095 = vmatprep.mubr.f32.mxu0 0.0
        %3096 = vmatmul.mubr.f32.gmra.mrb[0].mxu0 %v2890
        %v3097 = vpop.f32.mrb[0].mxu0
        %v3098 = vadd.f32 %v2823, %v3097
        %v3099 = vpop.f32.mrb[0].mxu0
        %3100 = vmatprep.mubr.f32.mxu0 0.0
        %3101 = vmatmul.mubr.f32.gmra.mrb[0].mxu0 %v2893
        %v3102 = vpop.f32.mrb[0].mxu0
        %v3103 = vadd.f32 %v2823, %v3102
        %v3104 = vpop.f32.mrb[0].mxu0
        %3105 = vmatprep.mubr.f32.mxu0 0.0
        %3106 = vmatmul.mubr.f32.gmra.mrb[0].mxu0 %v2896
        %v3107 = vpop.f32.mrb[0].mxu0
        %v3108 = vadd.f32 %v2823, %v3107
        %v3109 = vpop.f32.mrb[0].mxu0
        %3110 = vmatprep.mubr.f32.mxu0 0.0
        %3111 = vmatmul.mubr.f32.gmra.mrb[0].mxu0 %v2899
        %v3112 = vpop.f32.mrb[0].mxu0
        %v3113 = vadd.f32 %v2823, %v3112
        %v3114 = vpop.f32.mrb[0].mxu0
        %3115 = vmatprep.mubr.f32.mxu0 0.0
        %3116 = vmatmul.mubr.f32.gmra.mrb[0].mxu0 %v2902
        %v3117 = vpop.f32.mrb[0].mxu0
        %v3118 = vadd.f32 %v2823, %v3117
        %v3119 = vpop.f32.mrb[0].mxu0
        %3120 = vmatprep.mubr.f32.mxu0 0.0
        %3121 = vmatmul.mubr.f32.gmra.mrb[0].mxu0 %v2905
        %v3122 = vpop.f32.mrb[0].mxu0
        %v3123 = vadd.f32 %v2823, %v3122
        %v3124 = vpop.f32.mrb[0].mxu0
        %3125 = vmatprep.mubr.f32.mxu0 0.0
        %3126 = vmatmul.mubr.f32.gmra.mrb[0].mxu0 %v2908
        %v3127 = vpop.f32.mrb[0].mxu0
        %v3128 = vadd.f32 %v2823, %v3127
        %v3129 = vpop.f32.mrb[0].mxu0
        %3130 = vmatprep.mubr.f32.mxu0 0.0
        %3131 = vmatmul.mubr.f32.gmra.mrb[0].mxu0 %v2911
        %v3132 = vpop.f32.mrb[0].mxu0
        %v3133 = vadd.f32 %v2823, %v3132
        %v3134 = vpop.f32.mrb[0].mxu0
        %3135 = vmatprep.mubr.f32.mxu0 0.0
        %3136 = vmatmul.mubr.f32.gmra.mrb[0].mxu0 %v2914
        %v3137 = vpop.f32.mrb[0].mxu0
        %v3138 = vadd.f32 %v2823, %v3137
        %v3139 = vpop.f32.mrb[0].mxu0
        %3140 = vmatprep.mubr.f32.mxu0 0.0
        %3141 = vmatmul.mubr.f32.gmra.mrb[0].mxu0 %v2917
        %v3142 = vpop.f32.mrb[0].mxu0
        %v3143 = vadd.f32 %v2823, %v3142
        %v3144 = vpop.f32.mrb[0].mxu0
        %3145 = vmatprep.mubr.f32.mxu0 0.0
        %3146 = vmatmul.mubr.f32.gmra.mrb[0].mxu0 %v2920
        %v3147 = vpop.f32.mrb[0].mxu0
        %v3148 = vadd.f32 %v2823, %v3147
        %v3149 = vpop.f32.mrb[0].mxu0
        %3150 = vdwg.mxu0
        %3151 = vst [vmem:[%s273] sm:$0xff] %v2993
        %3152 = vst [vmem:[%s273 + $0x8] sm:$0xff] %v2998
        %3153 = vst [vmem:[%s273 + $0x10] sm:$0xff] %v3003
        %3154 = vst [vmem:[%s273 + $0x18] sm:$0xff] %v3008
        %3155 = vst [vmem:[%s273 + $0x20] sm:$0xff] %v3013
        %3156 = vst [vmem:[%s273 + $0x28] sm:$0xff] %v3018
        %3157 = vst [vmem:[%s273 + $0x30] sm:$0xff] %v3023
        %3158 = vst [vmem:[%s273 + $0x38] sm:$0xff] %v3028
        %3159 = vst [vmem:[%s273 + $0x40] sm:$0xff] %v3033
        %3160 = vst [vmem:[%s273 + $0x48] sm:$0xff] %v3038
        %3161 = vst [vmem:[%s273 + $0x50] sm:$0xff] %v3043
        %3162 = vst [vmem:[%s273 + $0x58] sm:$0xff] %v3048
        %3163 = vst [vmem:[%s273 + $0x60] sm:$0xff] %v3053
        %3164 = vst [vmem:[%s273 + $0x68] sm:$0xff] %v3058
        %3165 = vst [vmem:[%s273 + $0x70] sm:$0xff] %v3063
        %3166 = vst [vmem:[%s273 + $0x78] sm:$0xff] %v3068
        %3167 = vst [vmem:[%s273 + $0x80] sm:$0xff] %v3073
        %3168 = vst [vmem:[%s273 + $0x88] sm:$0xff] %v3078
        %3169 = vst [vmem:[%s273 + $0x90] sm:$0xff] %v3083
        %3170 = vst [vmem:[%s273 + $0x98] sm:$0xff] %v3088
        %3171 = vst [vmem:[%s273 + $0xa0] sm:$0xff] %v3093
        %3172 = vst [vmem:[%s273 + $0xa8] sm:$0xff] %v3098
        %3173 = vst [vmem:[%s273 + $0xb0] sm:$0xff] %v3103
        %3174 = vst [vmem:[%s273 + $0xb8] sm:$0xff] %v3108
        %3175 = vst [vmem:[%s273 + $0xc0] sm:$0xff] %v3113
        %3176 = vst [vmem:[%s273 + $0xc8] sm:$0xff] %v3118
        %3177 = vst [vmem:[%s273 + $0xd0] sm:$0xff] %v3123
        %3178 = vst [vmem:[%s273 + $0xd8] sm:$0xff] %v3128
        %3179 = vst [vmem:[%s273 + $0xe0] sm:$0xff] %v3133
        %3180 = vst [vmem:[%s273 + $0xe8] sm:$0xff] %v3138
        %3181 = vst [vmem:[%s273 + $0xf0] sm:$0xff] %v3143
        %3182 = vst [vmem:[%s273 + $0xf8] sm:$0xff] %v3148
        %v3183 = vld [vmem:[%s1227 + $0x1] sm:$0xff]
        %v3184 = vld [vmem:[%s1227 + $0x9] sm:$0xff]
        %v3185 = vld [vmem:[%s1227 + $0x19] sm:$0xff]
        %v3186 = vld [vmem:[%s1227 + $0x21] sm:$0xff]
        %v3187 = vld [vmem:[%s1227 + $0x31] sm:$0xff]
        %v3188 = vld [vmem:[%s1227 + $0x39] sm:$0xff]
        %v3189 = vld [vmem:[%s1227 + $0x49] sm:$0xff]
        %v3190 = vld [vmem:[%s1227 + $0x51] sm:$0xff]
        %v3191 = vld [vmem:[%s1227 + $0x61] sm:$0xff]
        %v3192 = vld [vmem:[%s1227 + $0x69] sm:$0xff]
        %v3193 = vld [vmem:[%s1227 + $0x79] sm:$0xff]
        %v3194 = vld [vmem:[%s1227 + $0x81] sm:$0xff]
        %v3195 = vld [vmem:[%s1227 + $0x91] sm:$0xff]
        %v3196 = vld [vmem:[%s1227 + $0x99] sm:$0xff]
        %v3197 = vld [vmem:[%s1227 + $0xa9] sm:$0xff]
        %v3198 = vld [vmem:[%s1227 + $0xb1] sm:$0xff]
        %v3199 = vld [vmem:[%s1227 + $0xc1] sm:$0xff]
        %v3200 = vld [vmem:[%s1227 + $0xc9] sm:$0xff]
        %v3201 = vld [vmem:[%s1227 + $0xd9] sm:$0xff]
        %v3202 = vld [vmem:[%s1227 + $0xe1] sm:$0xff]
        %v3203 = vld [vmem:[%s1227 + $0xf1] sm:$0xff]
        %v3204 = vld [vmem:[%s1227 + $0xf9] sm:$0xff]
        %v3205 = vld [vmem:[%s1227 + $0x109] sm:$0xff]
        %v3206 = vld [vmem:[%s1227 + $0x111] sm:$0xff]
        %v3207 = vld [vmem:[%s1227 + $0x121] sm:$0xff]
        %v3208 = vld [vmem:[%s1227 + $0x129] sm:$0xff]
        %v3209 = vld [vmem:[%s1227 + $0x139] sm:$0xff]
        %v3210 = vld [vmem:[%s1227 + $0x141] sm:$0xff]
        %v3211 = vld [vmem:[%s1227 + $0x151] sm:$0xff]
        %v3212 = vld [vmem:[%s1227 + $0x159] sm:$0xff]
        %v3213 = vld [vmem:[%s1227 + $0x169] sm:$0xff]
        %v3214 = vld [vmem:[%s1227 + $0x171] sm:$0xff]
        %3215 = vst.msk [vmem:[#allocation3] sm:$0xff] %vm1193, %v3183
        %3216 = vst.msk [vmem:[#allocation3 + $0x8] sm:$0xff] %vm1193, %v3184
        %3217 = vst.msk [vmem:[#allocation3 + $0x10] sm:$0xff] %vm1193, %v3185
        %3218 = vst.msk [vmem:[#allocation3 + $0x18] sm:$0xff] %vm1193, %v3186
        %3219 = vst.msk [vmem:[#allocation3 + $0x20] sm:$0xff] %vm1193, %v3187
        %3220 = vst.msk [vmem:[#allocation3 + $0x28] sm:$0xff] %vm1193, %v3188
        %3221 = vst.msk [vmem:[#allocation3 + $0x30] sm:$0xff] %vm1193, %v3189
        %3222 = vst.msk [vmem:[#allocation3 + $0x38] sm:$0xff] %vm1193, %v3190
        %3223 = vst.msk [vmem:[#allocation3 + $0x40] sm:$0xff] %vm1193, %v3191
        %3224 = vst.msk [vmem:[#allocation3 + $0x48] sm:$0xff] %vm1193, %v3192
        %3225 = vst.msk [vmem:[#allocation3 + $0x50] sm:$0xff] %vm1193, %v3193
        %3226 = vst.msk [vmem:[#allocation3 + $0x58] sm:$0xff] %vm1193, %v3194
        %3227 = vst.msk [vmem:[#allocation3 + $0x60] sm:$0xff] %vm1193, %v3195
        %3228 = vst.msk [vmem:[#allocation3 + $0x68] sm:$0xff] %vm1193, %v3196
        %3229 = vst.msk [vmem:[#allocation3 + $0x70] sm:$0xff] %vm1193, %v3197
        %3230 = vst.msk [vmem:[#allocation3 + $0x78] sm:$0xff] %vm1193, %v3198
        %3231 = vst.msk [vmem:[#allocation3 + $0x80] sm:$0xff] %vm1193, %v3199
        %3232 = vst.msk [vmem:[#allocation3 + $0x88] sm:$0xff] %vm1193, %v3200
        %3233 = vst.msk [vmem:[#allocation3 + $0x90] sm:$0xff] %vm1193, %v3201
        %3234 = vst.msk [vmem:[#allocation3 + $0x98] sm:$0xff] %vm1193, %v3202
        %3235 = vst.msk [vmem:[#allocation3 + $0xa0] sm:$0xff] %vm1193, %v3203
        %3236 = vst.msk [vmem:[#allocation3 + $0xa8] sm:$0xff] %vm1193, %v3204
        %3237 = vst.msk [vmem:[#allocation3 + $0xb0] sm:$0xff] %vm1193, %v3205
        %3238 = vst.msk [vmem:[#allocation3 + $0xb8] sm:$0xff] %vm1193, %v3206
        %3239 = vst.msk [vmem:[#allocation3 + $0xc0] sm:$0xff] %vm1193, %v3207
        %3240 = vst.msk [vmem:[#allocation3 + $0xc8] sm:$0xff] %vm1193, %v3208
        %3241 = vst.msk [vmem:[#allocation3 + $0xd0] sm:$0xff] %vm1193, %v3209
        %3242 = vst.msk [vmem:[#allocation3 + $0xd8] sm:$0xff] %vm1193, %v3210
        %3243 = vst.msk [vmem:[#allocation3 + $0xe0] sm:$0xff] %vm1193, %v3211
        %3244 = vst.msk [vmem:[#allocation3 + $0xe8] sm:$0xff] %vm1193, %v3212
        %3245 = vst.msk [vmem:[#allocation3 + $0xf0] sm:$0xff] %vm1193, %v3213
        %3246 = vst.msk [vmem:[#allocation3 + $0xf8] sm:$0xff] %vm1193, %v3214
        %v3247 = vld [vmem:[%s1160 + $0x1] sm:$0xff]
        %v3248 = vld [vmem:[%s1160 + $0x9] sm:$0xff]
        %v3249 = vld [vmem:[%s1160 + $0x19] sm:$0xff]
        %v3250 = vld [vmem:[%s1160 + $0x21] sm:$0xff]
        %v3251 = vld [vmem:[%s1160 + $0x31] sm:$0xff]
        %v3252 = vld [vmem:[%s1160 + $0x39] sm:$0xff]
        %v3253 = vld [vmem:[%s1160 + $0x49] sm:$0xff]
        %v3254 = vld [vmem:[%s1160 + $0x51] sm:$0xff]
        %v3255 = vld [vmem:[%s1160 + $0x61] sm:$0xff]
        %v3256 = vld [vmem:[%s1160 + $0x69] sm:$0xff]
        %v3257 = vld [vmem:[%s1160 + $0x79] sm:$0xff]
        %v3258 = vld [vmem:[%s1160 + $0x81] sm:$0xff]
        %v3259 = vld [vmem:[%s1160 + $0x91] sm:$0xff]
        %v3260 = vld [vmem:[%s1160 + $0x99] sm:$0xff]
        %v3261 = vld [vmem:[%s1160 + $0xa9] sm:$0xff]
        %v3262 = vld [vmem:[%s1160 + $0xb1] sm:$0xff]
        %v3263 = vld [vmem:[%s1160 + $0xc1] sm:$0xff]
        %v3264 = vld [vmem:[%s1160 + $0xc9] sm:$0xff]
        %v3265 = vld [vmem:[%s1160 + $0xd9] sm:$0xff]
        %v3266 = vld [vmem:[%s1160 + $0xe1] sm:$0xff]
        %v3267 = vld [vmem:[%s1160 + $0xf1] sm:$0xff]
        %v3268 = vld [vmem:[%s1160 + $0xf9] sm:$0xff]
        %v3269 = vld [vmem:[%s1160 + $0x109] sm:$0xff]
        %v3270 = vld [vmem:[%s1160 + $0x111] sm:$0xff]
        %v3271 = vld [vmem:[%s1160 + $0x121] sm:$0xff]
        %v3272 = vld [vmem:[%s1160 + $0x129] sm:$0xff]
        %v3273 = vld [vmem:[%s1160 + $0x139] sm:$0xff]
        %v3274 = vld [vmem:[%s1160 + $0x141] sm:$0xff]
        %v3275 = vld [vmem:[%s1160 + $0x151] sm:$0xff]
        %v3276 = vld [vmem:[%s1160 + $0x159] sm:$0xff]
        %v3277 = vld [vmem:[%s1160 + $0x169] sm:$0xff]
        %v3278 = vld [vmem:[%s1160 + $0x171] sm:$0xff]
        %3311 = vrot.lane.b32.xlu0 %v3247, 4
        %v3312 = vpop.permute.xlu0 %3311
        %3313 = vrot.lane.b32.xlu0 %v3248, 4
        %v3314 = vpop.permute.xlu0 %3313
        %3315 = vrot.lane.b32.xlu0 %v3249, 4
        %v3316 = vpop.permute.xlu0 %3315
        %3317 = vrot.lane.b32.xlu0 %v3250, 4
        %v3318 = vpop.permute.xlu0 %3317
        %3319 = vrot.lane.b32.xlu0 %v3251, 4
        %v3320 = vpop.permute.xlu0 %3319
        %3321 = vrot.lane.b32.xlu0 %v3252, 4
        %v3322 = vpop.permute.xlu0 %3321
        %3323 = vrot.lane.b32.xlu0 %v3253, 4
        %v3324 = vpop.permute.xlu0 %3323
        %3325 = vrot.lane.b32.xlu0 %v3254, 4
        %v3326 = vpop.permute.xlu0 %3325
        %3327 = vrot.lane.b32.xlu0 %v3255, 4
        %v3328 = vpop.permute.xlu0 %3327
        %3329 = vrot.lane.b32.xlu0 %v3256, 4
        %v3330 = vpop.permute.xlu0 %3329
        %3331 = vrot.lane.b32.xlu0 %v3257, 4
        %v3332 = vpop.permute.xlu0 %3331
        %3333 = vrot.lane.b32.xlu0 %v3258, 4
        %v3334 = vpop.permute.xlu0 %3333
        %3335 = vrot.lane.b32.xlu0 %v3259, 4
        %v3336 = vpop.permute.xlu0 %3335
        %3337 = vrot.lane.b32.xlu0 %v3260, 4
        %v3338 = vpop.permute.xlu0 %3337
        %3339 = vrot.lane.b32.xlu0 %v3261, 4
        %v3340 = vpop.permute.xlu0 %3339
        %3341 = vrot.lane.b32.xlu0 %v3262, 4
        %v3342 = vpop.permute.xlu0 %3341
        %3343 = vrot.lane.b32.xlu0 %v3263, 4
        %v3344 = vpop.permute.xlu0 %3343
        %3345 = vrot.lane.b32.xlu0 %v3264, 4
        %v3346 = vpop.permute.xlu0 %3345
        %3347 = vrot.lane.b32.xlu0 %v3265, 4
        %v3348 = vpop.permute.xlu0 %3347
        %3349 = vrot.lane.b32.xlu0 %v3266, 4
        %v3350 = vpop.permute.xlu0 %3349
        %3351 = vrot.lane.b32.xlu0 %v3267, 4
        %v3352 = vpop.permute.xlu0 %3351
        %3353 = vrot.lane.b32.xlu0 %v3268, 4
        %v3354 = vpop.permute.xlu0 %3353
        %3355 = vrot.lane.b32.xlu0 %v3269, 4
        %v3356 = vpop.permute.xlu0 %3355
        %3357 = vrot.lane.b32.xlu0 %v3270, 4
        %v3358 = vpop.permute.xlu0 %3357
        %3359 = vrot.lane.b32.xlu0 %v3271, 4
        %v3360 = vpop.permute.xlu0 %3359
        %3361 = vrot.lane.b32.xlu0 %v3272, 4
        %v3362 = vpop.permute.xlu0 %3361
        %3363 = vrot.lane.b32.xlu0 %v3273, 4
        %v3364 = vpop.permute.xlu0 %3363
        %3365 = vrot.lane.b32.xlu0 %v3274, 4
        %v3366 = vpop.permute.xlu0 %3365
        %3367 = vrot.lane.b32.xlu0 %v3275, 4
        %v3368 = vpop.permute.xlu0 %3367
        %3369 = vrot.lane.b32.xlu0 %v3276, 4
        %v3370 = vpop.permute.xlu0 %3369
        %3371 = vrot.lane.b32.xlu0 %v3277, 4
        %v3372 = vpop.permute.xlu0 %3371
        %3373 = vrot.lane.b32.xlu0 %v3278, 4
        %v3374 = vpop.permute.xlu0 %3373
        %3407 = vst.msk [vmem:[#allocation3] sm:$0xff] %vm1388, %v3312
        %3408 = vst.msk [vmem:[#allocation3 + $0x8] sm:$0xff] %vm1388, %v3314
        %3409 = vst.msk [vmem:[#allocation3 + $0x10] sm:$0xff] %vm1388, %v3316
        %3410 = vst.msk [vmem:[#allocation3 + $0x18] sm:$0xff] %vm1388, %v3318
        %3411 = vst.msk [vmem:[#allocation3 + $0x20] sm:$0xff] %vm1388, %v3320
        %3412 = vst.msk [vmem:[#allocation3 + $0x28] sm:$0xff] %vm1388, %v3322
        %3413 = vst.msk [vmem:[#allocation3 + $0x30] sm:$0xff] %vm1388, %v3324
        %3414 = vst.msk [vmem:[#allocation3 + $0x38] sm:$0xff] %vm1388, %v3326
        %3415 = vst.msk [vmem:[#allocation3 + $0x40] sm:$0xff] %vm1388, %v3328
        %3416 = vst.msk [vmem:[#allocation3 + $0x48] sm:$0xff] %vm1388, %v3330
        %3417 = vst.msk [vmem:[#allocation3 + $0x50] sm:$0xff] %vm1388, %v3332
        %3418 = vst.msk [vmem:[#allocation3 + $0x58] sm:$0xff] %vm1388, %v3334
        %3419 = vst.msk [vmem:[#allocation3 + $0x60] sm:$0xff] %vm1388, %v3336
        %3420 = vst.msk [vmem:[#allocation3 + $0x68] sm:$0xff] %vm1388, %v3338
        %3421 = vst.msk [vmem:[#allocation3 + $0x70] sm:$0xff] %vm1388, %v3340
        %3422 = vst.msk [vmem:[#allocation3 + $0x78] sm:$0xff] %vm1388, %v3342
        %3423 = vst.msk [vmem:[#allocation3 + $0x80] sm:$0xff] %vm1388, %v3344
        %3424 = vst.msk [vmem:[#allocation3 + $0x88] sm:$0xff] %vm1388, %v3346
        %3425 = vst.msk [vmem:[#allocation3 + $0x90] sm:$0xff] %vm1388, %v3348
        %3426 = vst.msk [vmem:[#allocation3 + $0x98] sm:$0xff] %vm1388, %v3350
        %3427 = vst.msk [vmem:[#allocation3 + $0xa0] sm:$0xff] %vm1388, %v3352
        %3428 = vst.msk [vmem:[#allocation3 + $0xa8] sm:$0xff] %vm1388, %v3354
        %3429 = vst.msk [vmem:[#allocation3 + $0xb0] sm:$0xff] %vm1388, %v3356
        %3430 = vst.msk [vmem:[#allocation3 + $0xb8] sm:$0xff] %vm1388, %v3358
        %3431 = vst.msk [vmem:[#allocation3 + $0xc0] sm:$0xff] %vm1388, %v3360
        %3432 = vst.msk [vmem:[#allocation3 + $0xc8] sm:$0xff] %vm1388, %v3362
        %3433 = vst.msk [vmem:[#allocation3 + $0xd0] sm:$0xff] %vm1388, %v3364
        %3434 = vst.msk [vmem:[#allocation3 + $0xd8] sm:$0xff] %vm1388, %v3366
        %3435 = vst.msk [vmem:[#allocation3 + $0xe0] sm:$0xff] %vm1388, %v3368
        %3436 = vst.msk [vmem:[#allocation3 + $0xe8] sm:$0xff] %vm1388, %v3370
        %3437 = vst.msk [vmem:[#allocation3 + $0xf0] sm:$0xff] %vm1388, %v3372
        %3438 = vst.msk [vmem:[#allocation3 + $0xf8] sm:$0xff] %vm1388, %v3374
        %v3439 = vld [vmem:[%s1227 + $0x2] sm:$0xff]
        %v3440 = vld [vmem:[%s1227 + $0xa] sm:$0xff]
        %v3441 = vld [vmem:[%s1227 + $0x1a] sm:$0xff]
        %v3442 = vld [vmem:[%s1227 + $0x22] sm:$0xff]
        %v3443 = vld [vmem:[%s1227 + $0x32] sm:$0xff]
        %v3444 = vld [vmem:[%s1227 + $0x3a] sm:$0xff]
        %v3445 = vld [vmem:[%s1227 + $0x4a] sm:$0xff]
        %v3446 = vld [vmem:[%s1227 + $0x52] sm:$0xff]
        %v3447 = vld [vmem:[%s1227 + $0x62] sm:$0xff]
        %v3448 = vld [vmem:[%s1227 + $0x6a] sm:$0xff]
        %v3449 = vld [vmem:[%s1227 + $0x7a] sm:$0xff]
        %v3450 = vld [vmem:[%s1227 + $0x82] sm:$0xff]
        %v3451 = vld [vmem:[%s1227 + $0x92] sm:$0xff]
        %v3452 = vld [vmem:[%s1227 + $0x9a] sm:$0xff]
        %v3453 = vld [vmem:[%s1227 + $0xaa] sm:$0xff]
        %v3454 = vld [vmem:[%s1227 + $0xb2] sm:$0xff]
        %v3455 = vld [vmem:[%s1227 + $0xc2] sm:$0xff]
        %v3456 = vld [vmem:[%s1227 + $0xca] sm:$0xff]
        %v3457 = vld [vmem:[%s1227 + $0xda] sm:$0xff]
        %v3458 = vld [vmem:[%s1227 + $0xe2] sm:$0xff]
        %v3459 = vld [vmem:[%s1227 + $0xf2] sm:$0xff]
        %v3460 = vld [vmem:[%s1227 + $0xfa] sm:$0xff]
        %v3461 = vld [vmem:[%s1227 + $0x10a] sm:$0xff]
        %v3462 = vld [vmem:[%s1227 + $0x112] sm:$0xff]
        %v3463 = vld [vmem:[%s1227 + $0x122] sm:$0xff]
        %v3464 = vld [vmem:[%s1227 + $0x12a] sm:$0xff]
        %v3465 = vld [vmem:[%s1227 + $0x13a] sm:$0xff]
        %v3466 = vld [vmem:[%s1227 + $0x142] sm:$0xff]
        %v3467 = vld [vmem:[%s1227 + $0x152] sm:$0xff]
        %v3468 = vld [vmem:[%s1227 + $0x15a] sm:$0xff]
        %v3469 = vld [vmem:[%s1227 + $0x16a] sm:$0xff]
        %v3470 = vld [vmem:[%s1227 + $0x172] sm:$0xff]
        %3503 = vrot.lane.b32.xlu0 %v3439, 8
        %v3504 = vpop.permute.xlu0 %3503
        %3505 = vrot.lane.b32.xlu0 %v3440, 8
        %v3506 = vpop.permute.xlu0 %3505
        %3507 = vrot.lane.b32.xlu0 %v3441, 8
        %v3508 = vpop.permute.xlu0 %3507
        %3509 = vrot.lane.b32.xlu0 %v3442, 8
        %v3510 = vpop.permute.xlu0 %3509
        %3511 = vrot.lane.b32.xlu0 %v3443, 8
        %v3512 = vpop.permute.xlu0 %3511
        %3513 = vrot.lane.b32.xlu0 %v3444, 8
        %v3514 = vpop.permute.xlu0 %3513
        %3515 = vrot.lane.b32.xlu0 %v3445, 8
        %v3516 = vpop.permute.xlu0 %3515
        %3517 = vrot.lane.b32.xlu0 %v3446, 8
        %v3518 = vpop.permute.xlu0 %3517
        %3519 = vrot.lane.b32.xlu0 %v3447, 8
        %v3520 = vpop.permute.xlu0 %3519
        %3521 = vrot.lane.b32.xlu0 %v3448, 8
        %v3522 = vpop.permute.xlu0 %3521
        %3523 = vrot.lane.b32.xlu0 %v3449, 8
        %v3524 = vpop.permute.xlu0 %3523
        %3525 = vrot.lane.b32.xlu0 %v3450, 8
        %v3526 = vpop.permute.xlu0 %3525
        %3527 = vrot.lane.b32.xlu0 %v3451, 8
        %v3528 = vpop.permute.xlu0 %3527
        %3529 = vrot.lane.b32.xlu0 %v3452, 8
        %v3530 = vpop.permute.xlu0 %3529
        %3531 = vrot.lane.b32.xlu0 %v3453, 8
        %v3532 = vpop.permute.xlu0 %3531
        %3533 = vrot.lane.b32.xlu0 %v3454, 8
        %v3534 = vpop.permute.xlu0 %3533
        %3535 = vrot.lane.b32.xlu0 %v3455, 8
        %v3536 = vpop.permute.xlu0 %3535
        %3537 = vrot.lane.b32.xlu0 %v3456, 8
        %v3538 = vpop.permute.xlu0 %3537
        %3539 = vrot.lane.b32.xlu0 %v3457, 8
        %v3540 = vpop.permute.xlu0 %3539
        %3541 = vrot.lane.b32.xlu0 %v3458, 8
        %v3542 = vpop.permute.xlu0 %3541
        %3543 = vrot.lane.b32.xlu0 %v3459, 8
        %v3544 = vpop.permute.xlu0 %3543
        %3545 = vrot.lane.b32.xlu0 %v3460, 8
        %v3546 = vpop.permute.xlu0 %3545
        %3547 = vrot.lane.b32.xlu0 %v3461, 8
        %v3548 = vpop.permute.xlu0 %3547
        %3549 = vrot.lane.b32.xlu0 %v3462, 8
        %v3550 = vpop.permute.xlu0 %3549
        %3551 = vrot.lane.b32.xlu0 %v3463, 8
        %v3552 = vpop.permute.xlu0 %3551
        %3553 = vrot.lane.b32.xlu0 %v3464, 8
        %v3554 = vpop.permute.xlu0 %3553
        %3555 = vrot.lane.b32.xlu0 %v3465, 8
        %v3556 = vpop.permute.xlu0 %3555
        %3557 = vrot.lane.b32.xlu0 %v3466, 8
        %v3558 = vpop.permute.xlu0 %3557
        %3559 = vrot.lane.b32.xlu0 %v3467, 8
        %v3560 = vpop.permute.xlu0 %3559
        %3561 = vrot.lane.b32.xlu0 %v3468, 8
        %v3562 = vpop.permute.xlu0 %3561
        %3563 = vrot.lane.b32.xlu0 %v3469, 8
        %v3564 = vpop.permute.xlu0 %3563
        %3565 = vrot.lane.b32.xlu0 %v3470, 8
        %v3566 = vpop.permute.xlu0 %3565
        %3599 = vst.msk [vmem:[#allocation3] sm:$0xff] %vm1581, %v3504
        %3600 = vst.msk [vmem:[#allocation3 + $0x8] sm:$0xff] %vm1581, %v3506
        %3601 = vst.msk [vmem:[#allocation3 + $0x10] sm:$0xff] %vm1581, %v3508
        %3602 = vst.msk [vmem:[#allocation3 + $0x18] sm:$0xff] %vm1581, %v3510
        %3603 = vst.msk [vmem:[#allocation3 + $0x20] sm:$0xff] %vm1581, %v3512
        %3604 = vst.msk [vmem:[#allocation3 + $0x28] sm:$0xff] %vm1581, %v3514
        %3605 = vst.msk [vmem:[#allocation3 + $0x30] sm:$0xff] %vm1581, %v3516
        %3606 = vst.msk [vmem:[#allocation3 + $0x38] sm:$0xff] %vm1581, %v3518
        %3607 = vst.msk [vmem:[#allocation3 + $0x40] sm:$0xff] %vm1581, %v3520
        %3608 = vst.msk [vmem:[#allocation3 + $0x48] sm:$0xff] %vm1581, %v3522
        %3609 = vst.msk [vmem:[#allocation3 + $0x50] sm:$0xff] %vm1581, %v3524
        %3610 = vst.msk [vmem:[#allocation3 + $0x58] sm:$0xff] %vm1581, %v3526
        %3611 = vst.msk [vmem:[#allocation3 + $0x60] sm:$0xff] %vm1581, %v3528
        %3612 = vst.msk [vmem:[#allocation3 + $0x68] sm:$0xff] %vm1581, %v3530
        %3613 = vst.msk [vmem:[#allocation3 + $0x70] sm:$0xff] %vm1581, %v3532
        %3614 = vst.msk [vmem:[#allocation3 + $0x78] sm:$0xff] %vm1581, %v3534
        %3615 = vst.msk [vmem:[#allocation3 + $0x80] sm:$0xff] %vm1581, %v3536
        %3616 = vst.msk [vmem:[#allocation3 + $0x88] sm:$0xff] %vm1581, %v3538
        %3617 = vst.msk [vmem:[#allocation3 + $0x90] sm:$0xff] %vm1581, %v3540
        %3618 = vst.msk [vmem:[#allocation3 + $0x98] sm:$0xff] %vm1581, %v3542
        %3619 = vst.msk [vmem:[#allocation3 + $0xa0] sm:$0xff] %vm1581, %v3544
        %3620 = vst.msk [vmem:[#allocation3 + $0xa8] sm:$0xff] %vm1581, %v3546
        %3621 = vst.msk [vmem:[#allocation3 + $0xb0] sm:$0xff] %vm1581, %v3548
        %3622 = vst.msk [vmem:[#allocation3 + $0xb8] sm:$0xff] %vm1581, %v3550
        %3623 = vst.msk [vmem:[#allocation3 + $0xc0] sm:$0xff] %vm1581, %v3552
        %3624 = vst.msk [vmem:[#allocation3 + $0xc8] sm:$0xff] %vm1581, %v3554
        %3625 = vst.msk [vmem:[#allocation3 + $0xd0] sm:$0xff] %vm1581, %v3556
        %3626 = vst.msk [vmem:[#allocation3 + $0xd8] sm:$0xff] %vm1581, %v3558
        %3627 = vst.msk [vmem:[#allocation3 + $0xe0] sm:$0xff] %vm1581, %v3560
        %3628 = vst.msk [vmem:[#allocation3 + $0xe8] sm:$0xff] %vm1581, %v3562
        %3629 = vst.msk [vmem:[#allocation3 + $0xf0] sm:$0xff] %vm1581, %v3564
        %3630 = vst.msk [vmem:[#allocation3 + $0xf8] sm:$0xff] %vm1581, %v3566
        %v3631 = vld [vmem:[%s1811 + $0x1] sm:$0xff]
        %v3632 = vld [vmem:[%s1811 + $0x9] sm:$0xff]
        %v3633 = vld [vmem:[%s1811 + $0x19] sm:$0xff]
        %v3634 = vld [vmem:[%s1811 + $0x21] sm:$0xff]
        %v3635 = vld [vmem:[%s1811 + $0x31] sm:$0xff]
        %v3636 = vld [vmem:[%s1811 + $0x39] sm:$0xff]
        %v3637 = vld [vmem:[%s1811 + $0x49] sm:$0xff]
        %v3638 = vld [vmem:[%s1811 + $0x51] sm:$0xff]
        %v3639 = vld [vmem:[%s1811 + $0x61] sm:$0xff]
        %v3640 = vld [vmem:[%s1811 + $0x69] sm:$0xff]
        %v3641 = vld [vmem:[%s1811 + $0x79] sm:$0xff]
        %v3642 = vld [vmem:[%s1811 + $0x81] sm:$0xff]
        %v3643 = vld [vmem:[%s1811 + $0x91] sm:$0xff]
        %v3644 = vld [vmem:[%s1811 + $0x99] sm:$0xff]
        %v3645 = vld [vmem:[%s1811 + $0xa9] sm:$0xff]
        %v3646 = vld [vmem:[%s1811 + $0xb1] sm:$0xff]
        %v3647 = vld [vmem:[%s1811 + $0xc1] sm:$0xff]
        %v3648 = vld [vmem:[%s1811 + $0xc9] sm:$0xff]
        %v3649 = vld [vmem:[%s1811 + $0xd9] sm:$0xff]
        %v3650 = vld [vmem:[%s1811 + $0xe1] sm:$0xff]
        %v3651 = vld [vmem:[%s1811 + $0xf1] sm:$0xff]
        %v3652 = vld [vmem:[%s1811 + $0xf9] sm:$0xff]
        %v3653 = vld [vmem:[%s1811 + $0x109] sm:$0xff]
        %v3654 = vld [vmem:[%s1811 + $0x111] sm:$0xff]
        %v3655 = vld [vmem:[%s1811 + $0x121] sm:$0xff]
        %v3656 = vld [vmem:[%s1811 + $0x129] sm:$0xff]
        %v3657 = vld [vmem:[%s1811 + $0x139] sm:$0xff]
        %v3658 = vld [vmem:[%s1811 + $0x141] sm:$0xff]
        %v3659 = vld [vmem:[%s1811 + $0x151] sm:$0xff]
        %v3660 = vld [vmem:[%s1811 + $0x159] sm:$0xff]
        %v3661 = vld [vmem:[%s1811 + $0x169] sm:$0xff]
        %v3662 = vld [vmem:[%s1811 + $0x171] sm:$0xff]
        %3695 = vrot.lane.b32.xlu0 %v3631, 12
        %v3696 = vpop.permute.xlu0 %3695
        %3697 = vrot.lane.b32.xlu0 %v3632, 12
        %v3698 = vpop.permute.xlu0 %3697
        %3699 = vrot.lane.b32.xlu0 %v3633, 12
        %v3700 = vpop.permute.xlu0 %3699
        %3701 = vrot.lane.b32.xlu0 %v3634, 12
        %v3702 = vpop.permute.xlu0 %3701
        %3703 = vrot.lane.b32.xlu0 %v3635, 12
        %v3704 = vpop.permute.xlu0 %3703
        %3705 = vrot.lane.b32.xlu0 %v3636, 12
        %v3706 = vpop.permute.xlu0 %3705
        %3707 = vrot.lane.b32.xlu0 %v3637, 12
        %v3708 = vpop.permute.xlu0 %3707
        %3709 = vrot.lane.b32.xlu0 %v3638, 12
        %v3710 = vpop.permute.xlu0 %3709
        %3711 = vrot.lane.b32.xlu0 %v3639, 12
        %v3712 = vpop.permute.xlu0 %3711
        %3713 = vrot.lane.b32.xlu0 %v3640, 12
        %v3714 = vpop.permute.xlu0 %3713
        %3715 = vrot.lane.b32.xlu0 %v3641, 12
        %v3716 = vpop.permute.xlu0 %3715
        %3717 = vrot.lane.b32.xlu0 %v3642, 12
        %v3718 = vpop.permute.xlu0 %3717
        %3719 = vrot.lane.b32.xlu0 %v3643, 12
        %v3720 = vpop.permute.xlu0 %3719
        %3721 = vrot.lane.b32.xlu0 %v3644, 12
        %v3722 = vpop.permute.xlu0 %3721
        %3723 = vrot.lane.b32.xlu0 %v3645, 12
        %v3724 = vpop.permute.xlu0 %3723
        %3725 = vrot.lane.b32.xlu0 %v3646, 12
        %v3726 = vpop.permute.xlu0 %3725
        %3727 = vrot.lane.b32.xlu0 %v3647, 12
        %v3728 = vpop.permute.xlu0 %3727
        %3729 = vrot.lane.b32.xlu0 %v3648, 12
        %v3730 = vpop.permute.xlu0 %3729
        %3731 = vrot.lane.b32.xlu0 %v3649, 12
        %v3732 = vpop.permute.xlu0 %3731
        %3733 = vrot.lane.b32.xlu0 %v3650, 12
        %v3734 = vpop.permute.xlu0 %3733
        %3735 = vrot.lane.b32.xlu0 %v3651, 12
        %v3736 = vpop.permute.xlu0 %3735
        %3737 = vrot.lane.b32.xlu0 %v3652, 12
        %v3738 = vpop.permute.xlu0 %3737
        %3739 = vrot.lane.b32.xlu0 %v3653, 12
        %v3740 = vpop.permute.xlu0 %3739
        %3741 = vrot.lane.b32.xlu0 %v3654, 12
        %v3742 = vpop.permute.xlu0 %3741
        %3743 = vrot.lane.b32.xlu0 %v3655, 12
        %v3744 = vpop.permute.xlu0 %3743
        %3745 = vrot.lane.b32.xlu0 %v3656, 12
        %v3746 = vpop.permute.xlu0 %3745
        %3747 = vrot.lane.b32.xlu0 %v3657, 12
        %v3748 = vpop.permute.xlu0 %3747
        %3749 = vrot.lane.b32.xlu0 %v3658, 12
        %v3750 = vpop.permute.xlu0 %3749
        %3751 = vrot.lane.b32.xlu0 %v3659, 12
        %v3752 = vpop.permute.xlu0 %3751
        %3753 = vrot.lane.b32.xlu0 %v3660, 12
        %v3754 = vpop.permute.xlu0 %3753
        %3755 = vrot.lane.b32.xlu0 %v3661, 12
        %v3756 = vpop.permute.xlu0 %3755
        %3757 = vrot.lane.b32.xlu0 %v3662, 12
        %v3758 = vpop.permute.xlu0 %3757
        %3791 = vst.msk [vmem:[#allocation3] sm:$0xff] %vm1778, %v3696
        %3792 = vst.msk [vmem:[#allocation3 + $0x8] sm:$0xff] %vm1778, %v3698
        %3793 = vst.msk [vmem:[#allocation3 + $0x10] sm:$0xff] %vm1778, %v3700
        %3794 = vst.msk [vmem:[#allocation3 + $0x18] sm:$0xff] %vm1778, %v3702
        %3795 = vst.msk [vmem:[#allocation3 + $0x20] sm:$0xff] %vm1778, %v3704
        %3796 = vst.msk [vmem:[#allocation3 + $0x28] sm:$0xff] %vm1778, %v3706
        %3797 = vst.msk [vmem:[#allocation3 + $0x30] sm:$0xff] %vm1778, %v3708
        %3798 = vst.msk [vmem:[#allocation3 + $0x38] sm:$0xff] %vm1778, %v3710
        %3799 = vst.msk [vmem:[#allocation3 + $0x40] sm:$0xff] %vm1778, %v3712
        %3800 = vst.msk [vmem:[#allocation3 + $0x48] sm:$0xff] %vm1778, %v3714
        %3801 = vst.msk [vmem:[#allocation3 + $0x50] sm:$0xff] %vm1778, %v3716
        %3802 = vst.msk [vmem:[#allocation3 + $0x58] sm:$0xff] %vm1778, %v3718
        %3803 = vst.msk [vmem:[#allocation3 + $0x60] sm:$0xff] %vm1778, %v3720
        %3804 = vst.msk [vmem:[#allocation3 + $0x68] sm:$0xff] %vm1778, %v3722
        %3805 = vst.msk [vmem:[#allocation3 + $0x70] sm:$0xff] %vm1778, %v3724
        %3806 = vst.msk [vmem:[#allocation3 + $0x78] sm:$0xff] %vm1778, %v3726
        %3807 = vst.msk [vmem:[#allocation3 + $0x80] sm:$0xff] %vm1778, %v3728
        %3808 = vst.msk [vmem:[#allocation3 + $0x88] sm:$0xff] %vm1778, %v3730
        %3809 = vst.msk [vmem:[#allocation3 + $0x90] sm:$0xff] %vm1778, %v3732
        %3810 = vst.msk [vmem:[#allocation3 + $0x98] sm:$0xff] %vm1778, %v3734
        %3811 = vst.msk [vmem:[#allocation3 + $0xa0] sm:$0xff] %vm1778, %v3736
        %3812 = vst.msk [vmem:[#allocation3 + $0xa8] sm:$0xff] %vm1778, %v3738
        %3813 = vst.msk [vmem:[#allocation3 + $0xb0] sm:$0xff] %vm1778, %v3740
        %3814 = vst.msk [vmem:[#allocation3 + $0xb8] sm:$0xff] %vm1778, %v3742
        %3815 = vst.msk [vmem:[#allocation3 + $0xc0] sm:$0xff] %vm1778, %v3744
        %3816 = vst.msk [vmem:[#allocation3 + $0xc8] sm:$0xff] %vm1778, %v3746
        %3817 = vst.msk [vmem:[#allocation3 + $0xd0] sm:$0xff] %vm1778, %v3748
        %3818 = vst.msk [vmem:[#allocation3 + $0xd8] sm:$0xff] %vm1778, %v3750
        %3819 = vst.msk [vmem:[#allocation3 + $0xe0] sm:$0xff] %vm1778, %v3752
        %3820 = vst.msk [vmem:[#allocation3 + $0xe8] sm:$0xff] %vm1778, %v3754
        %3821 = vst.msk [vmem:[#allocation3 + $0xf0] sm:$0xff] %vm1778, %v3756
        %3822 = vst.msk [vmem:[#allocation3 + $0xf8] sm:$0xff] %vm1778, %v3758
        %v3823 = vld [vmem:[%s1617 + $0x1] sm:$0xff]
        %v3824 = vld [vmem:[%s1617 + $0x9] sm:$0xff]
        %v3825 = vld [vmem:[%s1617 + $0x19] sm:$0xff]
        %v3826 = vld [vmem:[%s1617 + $0x21] sm:$0xff]
        %v3827 = vld [vmem:[%s1617 + $0x31] sm:$0xff]
        %v3828 = vld [vmem:[%s1617 + $0x39] sm:$0xff]
        %v3829 = vld [vmem:[%s1617 + $0x49] sm:$0xff]
        %v3830 = vld [vmem:[%s1617 + $0x51] sm:$0xff]
        %v3831 = vld [vmem:[%s1617 + $0x61] sm:$0xff]
        %v3832 = vld [vmem:[%s1617 + $0x69] sm:$0xff]
        %v3833 = vld [vmem:[%s1617 + $0x79] sm:$0xff]
        %v3834 = vld [vmem:[%s1617 + $0x81] sm:$0xff]
        %v3835 = vld [vmem:[%s1617 + $0x91] sm:$0xff]
        %v3836 = vld [vmem:[%s1617 + $0x99] sm:$0xff]
        %v3837 = vld [vmem:[%s1617 + $0xa9] sm:$0xff]
        %v3838 = vld [vmem:[%s1617 + $0xb1] sm:$0xff]
        %v3839 = vld [vmem:[%s1617 + $0xc1] sm:$0xff]
        %v3840 = vld [vmem:[%s1617 + $0xc9] sm:$0xff]
        %v3841 = vld [vmem:[%s1617 + $0xd9] sm:$0xff]
        %v3842 = vld [vmem:[%s1617 + $0xe1] sm:$0xff]
        %v3843 = vld [vmem:[%s1617 + $0xf1] sm:$0xff]
        %v3844 = vld [vmem:[%s1617 + $0xf9] sm:$0xff]
        %v3845 = vld [vmem:[%s1617 + $0x109] sm:$0xff]
        %v3846 = vld [vmem:[%s1617 + $0x111] sm:$0xff]
        %v3847 = vld [vmem:[%s1617 + $0x121] sm:$0xff]
        %v3848 = vld [vmem:[%s1617 + $0x129] sm:$0xff]
        %v3849 = vld [vmem:[%s1617 + $0x139] sm:$0xff]
        %v3850 = vld [vmem:[%s1617 + $0x141] sm:$0xff]
        %v3851 = vld [vmem:[%s1617 + $0x151] sm:$0xff]
        %v3852 = vld [vmem:[%s1617 + $0x159] sm:$0xff]
        %v3853 = vld [vmem:[%s1617 + $0x169] sm:$0xff]
        %v3854 = vld [vmem:[%s1617 + $0x171] sm:$0xff]
        %3887 = vrot.lane.b32.xlu0 %v3823, 16
        %v3888 = vpop.permute.xlu0 %3887
        %3889 = vrot.lane.b32.xlu0 %v3824, 16
        %v3890 = vpop.permute.xlu0 %3889
        %3891 = vrot.lane.b32.xlu0 %v3825, 16
        %v3892 = vpop.permute.xlu0 %3891
        %3893 = vrot.lane.b32.xlu0 %v3826, 16
        %v3894 = vpop.permute.xlu0 %3893
        %3895 = vrot.lane.b32.xlu0 %v3827, 16
        %v3896 = vpop.permute.xlu0 %3895
        %3897 = vrot.lane.b32.xlu0 %v3828, 16
        %v3898 = vpop.permute.xlu0 %3897
        %3899 = vrot.lane.b32.xlu0 %v3829, 16
        %v3900 = vpop.permute.xlu0 %3899
        %3901 = vrot.lane.b32.xlu0 %v3830, 16
        %v3902 = vpop.permute.xlu0 %3901
        %3903 = vrot.lane.b32.xlu0 %v3831, 16
        %v3904 = vpop.permute.xlu0 %3903
        %3905 = vrot.lane.b32.xlu0 %v3832, 16
        %v3906 = vpop.permute.xlu0 %3905
        %3907 = vrot.lane.b32.xlu0 %v3833, 16
        %v3908 = vpop.permute.xlu0 %3907
        %3909 = vrot.lane.b32.xlu0 %v3834, 16
        %v3910 = vpop.permute.xlu0 %3909
        %3911 = vrot.lane.b32.xlu0 %v3835, 16
        %v3912 = vpop.permute.xlu0 %3911
        %3913 = vrot.lane.b32.xlu0 %v3836, 16
        %v3914 = vpop.permute.xlu0 %3913
        %3915 = vrot.lane.b32.xlu0 %v3837, 16
        %v3916 = vpop.permute.xlu0 %3915
        %3917 = vrot.lane.b32.xlu0 %v3838, 16
        %v3918 = vpop.permute.xlu0 %3917
        %3919 = vrot.lane.b32.xlu0 %v3839, 16
        %v3920 = vpop.permute.xlu0 %3919
        %3921 = vrot.lane.b32.xlu0 %v3840, 16
        %v3922 = vpop.permute.xlu0 %3921
        %3923 = vrot.lane.b32.xlu0 %v3841, 16
        %v3924 = vpop.permute.xlu0 %3923
        %3925 = vrot.lane.b32.xlu0 %v3842, 16
        %v3926 = vpop.permute.xlu0 %3925
        %3927 = vrot.lane.b32.xlu0 %v3843, 16
        %v3928 = vpop.permute.xlu0 %3927
        %3929 = vrot.lane.b32.xlu0 %v3844, 16
        %v3930 = vpop.permute.xlu0 %3929
        %3931 = vrot.lane.b32.xlu0 %v3845, 16
        %v3932 = vpop.permute.xlu0 %3931
        %3933 = vrot.lane.b32.xlu0 %v3846, 16
        %v3934 = vpop.permute.xlu0 %3933
        %3935 = vrot.lane.b32.xlu0 %v3847, 16
        %v3936 = vpop.permute.xlu0 %3935
        %3937 = vrot.lane.b32.xlu0 %v3848, 16
        %v3938 = vpop.permute.xlu0 %3937
        %3939 = vrot.lane.b32.xlu0 %v3849, 16
        %v3940 = vpop.permute.xlu0 %3939
        %3941 = vrot.lane.b32.xlu0 %v3850, 16
        %v3942 = vpop.permute.xlu0 %3941
        %3943 = vrot.lane.b32.xlu0 %v3851, 16
        %v3944 = vpop.permute.xlu0 %3943
        %3945 = vrot.lane.b32.xlu0 %v3852, 16
        %v3946 = vpop.permute.xlu0 %3945
        %3947 = vrot.lane.b32.xlu0 %v3853, 16
        %v3948 = vpop.permute.xlu0 %3947
        %3949 = vrot.lane.b32.xlu0 %v3854, 16
        %v3950 = vpop.permute.xlu0 %3949
        %3983 = vst.msk [vmem:[#allocation3] sm:$0xff] %vm1972, %v3888
        %3984 = vst.msk [vmem:[#allocation3 + $0x8] sm:$0xff] %vm1972, %v3890
        %3985 = vst.msk [vmem:[#allocation3 + $0x10] sm:$0xff] %vm1972, %v3892
        %3986 = vst.msk [vmem:[#allocation3 + $0x18] sm:$0xff] %vm1972, %v3894
        %3987 = vst.msk [vmem:[#allocation3 + $0x20] sm:$0xff] %vm1972, %v3896
        %3988 = vst.msk [vmem:[#allocation3 + $0x28] sm:$0xff] %vm1972, %v3898
        %3989 = vst.msk [vmem:[#allocation3 + $0x30] sm:$0xff] %vm1972, %v3900
        %3990 = vst.msk [vmem:[#allocation3 + $0x38] sm:$0xff] %vm1972, %v3902
        %3991 = vst.msk [vmem:[#allocation3 + $0x40] sm:$0xff] %vm1972, %v3904
        %3992 = vst.msk [vmem:[#allocation3 + $0x48] sm:$0xff] %vm1972, %v3906
        %3993 = vst.msk [vmem:[#allocation3 + $0x50] sm:$0xff] %vm1972, %v3908
        %3994 = vst.msk [vmem:[#allocation3 + $0x58] sm:$0xff] %vm1972, %v3910
        %3995 = vst.msk [vmem:[#allocation3 + $0x60] sm:$0xff] %vm1972, %v3912
        %3996 = vst.msk [vmem:[#allocation3 + $0x68] sm:$0xff] %vm1972, %v3914
        %3997 = vst.msk [vmem:[#allocation3 + $0x70] sm:$0xff] %vm1972, %v3916
        %3998 = vst.msk [vmem:[#allocation3 + $0x78] sm:$0xff] %vm1972, %v3918
        %3999 = vst.msk [vmem:[#allocation3 + $0x80] sm:$0xff] %vm1972, %v3920
        %4000 = vst.msk [vmem:[#allocation3 + $0x88] sm:$0xff] %vm1972, %v3922
        %4001 = vst.msk [vmem:[#allocation3 + $0x90] sm:$0xff] %vm1972, %v3924
        %4002 = vst.msk [vmem:[#allocation3 + $0x98] sm:$0xff] %vm1972, %v3926
        %4003 = vst.msk [vmem:[#allocation3 + $0xa0] sm:$0xff] %vm1972, %v3928
        %4004 = vst.msk [vmem:[#allocation3 + $0xa8] sm:$0xff] %vm1972, %v3930
        %4005 = vst.msk [vmem:[#allocation3 + $0xb0] sm:$0xff] %vm1972, %v3932
        %4006 = vst.msk [vmem:[#allocation3 + $0xb8] sm:$0xff] %vm1972, %v3934
        %4007 = vst.msk [vmem:[#allocation3 + $0xc0] sm:$0xff] %vm1972, %v3936
        %4008 = vst.msk [vmem:[#allocation3 + $0xc8] sm:$0xff] %vm1972, %v3938
        %4009 = vst.msk [vmem:[#allocation3 + $0xd0] sm:$0xff] %vm1972, %v3940
        %4010 = vst.msk [vmem:[#allocation3 + $0xd8] sm:$0xff] %vm1972, %v3942
        %4011 = vst.msk [vmem:[#allocation3 + $0xe0] sm:$0xff] %vm1972, %v3944
        %4012 = vst.msk [vmem:[#allocation3 + $0xe8] sm:$0xff] %vm1972, %v3946
        %4013 = vst.msk [vmem:[#allocation3 + $0xf0] sm:$0xff] %vm1972, %v3948
        %4014 = vst.msk [vmem:[#allocation3 + $0xf8] sm:$0xff] %vm1972, %v3950
        %v4015 = vld [vmem:[%s1811 + $0x2] sm:$0xff]
        %v4016 = vld [vmem:[%s1811 + $0xa] sm:$0xff]
        %v4017 = vld [vmem:[%s1811 + $0x1a] sm:$0xff]
        %v4018 = vld [vmem:[%s1811 + $0x22] sm:$0xff]
        %v4019 = vld [vmem:[%s1811 + $0x32] sm:$0xff]
        %v4020 = vld [vmem:[%s1811 + $0x3a] sm:$0xff]
        %v4021 = vld [vmem:[%s1811 + $0x4a] sm:$0xff]
        %v4022 = vld [vmem:[%s1811 + $0x52] sm:$0xff]
        %v4023 = vld [vmem:[%s1811 + $0x62] sm:$0xff]
        %v4024 = vld [vmem:[%s1811 + $0x6a] sm:$0xff]
        %v4025 = vld [vmem:[%s1811 + $0x7a] sm:$0xff]
        %v4026 = vld [vmem:[%s1811 + $0x82] sm:$0xff]
        %v4027 = vld [vmem:[%s1811 + $0x92] sm:$0xff]
        %v4028 = vld [vmem:[%s1811 + $0x9a] sm:$0xff]
        %v4029 = vld [vmem:[%s1811 + $0xaa] sm:$0xff]
        %v4030 = vld [vmem:[%s1811 + $0xb2] sm:$0xff]
        %v4031 = vld [vmem:[%s1811 + $0xc2] sm:$0xff]
        %v4032 = vld [vmem:[%s1811 + $0xca] sm:$0xff]
        %v4033 = vld [vmem:[%s1811 + $0xda] sm:$0xff]
        %v4034 = vld [vmem:[%s1811 + $0xe2] sm:$0xff]
        %v4035 = vld [vmem:[%s1811 + $0xf2] sm:$0xff]
        %v4036 = vld [vmem:[%s1811 + $0xfa] sm:$0xff]
        %v4037 = vld [vmem:[%s1811 + $0x10a] sm:$0xff]
        %v4038 = vld [vmem:[%s1811 + $0x112] sm:$0xff]
        %v4039 = vld [vmem:[%s1811 + $0x122] sm:$0xff]
        %v4040 = vld [vmem:[%s1811 + $0x12a] sm:$0xff]
        %v4041 = vld [vmem:[%s1811 + $0x13a] sm:$0xff]
        %v4042 = vld [vmem:[%s1811 + $0x142] sm:$0xff]
        %v4043 = vld [vmem:[%s1811 + $0x152] sm:$0xff]
        %v4044 = vld [vmem:[%s1811 + $0x15a] sm:$0xff]
        %v4045 = vld [vmem:[%s1811 + $0x16a] sm:$0xff]
        %v4046 = vld [vmem:[%s1811 + $0x172] sm:$0xff]
        %4079 = vrot.lane.b32.xlu0 %v4015, 20
        %v4080 = vpop.permute.xlu0 %4079
        %4081 = vrot.lane.b32.xlu0 %v4016, 20
        %v4082 = vpop.permute.xlu0 %4081
        %4083 = vrot.lane.b32.xlu0 %v4017, 20
        %v4084 = vpop.permute.xlu0 %4083
        %4085 = vrot.lane.b32.xlu0 %v4018, 20
        %v4086 = vpop.permute.xlu0 %4085
        %4087 = vrot.lane.b32.xlu0 %v4019, 20
        %v4088 = vpop.permute.xlu0 %4087
        %4089 = vrot.lane.b32.xlu0 %v4020, 20
        %v4090 = vpop.permute.xlu0 %4089
        %4091 = vrot.lane.b32.xlu0 %v4021, 20
        %v4092 = vpop.permute.xlu0 %4091
        %4093 = vrot.lane.b32.xlu0 %v4022, 20
        %v4094 = vpop.permute.xlu0 %4093
        %4095 = vrot.lane.b32.xlu0 %v4023, 20
        %v4096 = vpop.permute.xlu0 %4095
        %4097 = vrot.lane.b32.xlu0 %v4024, 20
        %v4098 = vpop.permute.xlu0 %4097
        %4099 = vrot.lane.b32.xlu0 %v4025, 20
        %v4100 = vpop.permute.xlu0 %4099
        %4101 = vrot.lane.b32.xlu0 %v4026, 20
        %v4102 = vpop.permute.xlu0 %4101
        %4103 = vrot.lane.b32.xlu0 %v4027, 20
        %v4104 = vpop.permute.xlu0 %4103
        %4105 = vrot.lane.b32.xlu0 %v4028, 20
        %v4106 = vpop.permute.xlu0 %4105
        %4107 = vrot.lane.b32.xlu0 %v4029, 20
        %v4108 = vpop.permute.xlu0 %4107
        %4109 = vrot.lane.b32.xlu0 %v4030, 20
        %v4110 = vpop.permute.xlu0 %4109
        %4111 = vrot.lane.b32.xlu0 %v4031, 20
        %v4112 = vpop.permute.xlu0 %4111
        %4113 = vrot.lane.b32.xlu0 %v4032, 20
        %v4114 = vpop.permute.xlu0 %4113
        %4115 = vrot.lane.b32.xlu0 %v4033, 20
        %v4116 = vpop.permute.xlu0 %4115
        %4117 = vrot.lane.b32.xlu0 %v4034, 20
        %v4118 = vpop.permute.xlu0 %4117
        %4119 = vrot.lane.b32.xlu0 %v4035, 20
        %v4120 = vpop.permute.xlu0 %4119
        %4121 = vrot.lane.b32.xlu0 %v4036, 20
        %v4122 = vpop.permute.xlu0 %4121
        %4123 = vrot.lane.b32.xlu0 %v4037, 20
        %v4124 = vpop.permute.xlu0 %4123
        %4125 = vrot.lane.b32.xlu0 %v4038, 20
        %v4126 = vpop.permute.xlu0 %4125
        %4127 = vrot.lane.b32.xlu0 %v4039, 20
        %v4128 = vpop.permute.xlu0 %4127
        %4129 = vrot.lane.b32.xlu0 %v4040, 20
        %v4130 = vpop.permute.xlu0 %4129
        %4131 = vrot.lane.b32.xlu0 %v4041, 20
        %v4132 = vpop.permute.xlu0 %4131
        %4133 = vrot.lane.b32.xlu0 %v4042, 20
        %v4134 = vpop.permute.xlu0 %4133
        %4135 = vrot.lane.b32.xlu0 %v4043, 20
        %v4136 = vpop.permute.xlu0 %4135
        %4137 = vrot.lane.b32.xlu0 %v4044, 20
        %v4138 = vpop.permute.xlu0 %4137
        %4139 = vrot.lane.b32.xlu0 %v4045, 20
        %v4140 = vpop.permute.xlu0 %4139
        %4141 = vrot.lane.b32.xlu0 %v4046, 20
        %v4142 = vpop.permute.xlu0 %4141
        %4175 = vst.msk [vmem:[#allocation3] sm:$0xff] %vm2165, %v4080
        %4176 = vst.msk [vmem:[#allocation3 + $0x8] sm:$0xff] %vm2165, %v4082
        %4177 = vst.msk [vmem:[#allocation3 + $0x10] sm:$0xff] %vm2165, %v4084
        %4178 = vst.msk [vmem:[#allocation3 + $0x18] sm:$0xff] %vm2165, %v4086
        %4179 = vst.msk [vmem:[#allocation3 + $0x20] sm:$0xff] %vm2165, %v4088
        %4180 = vst.msk [vmem:[#allocation3 + $0x28] sm:$0xff] %vm2165, %v4090
        %4181 = vst.msk [vmem:[#allocation3 + $0x30] sm:$0xff] %vm2165, %v4092
        %4182 = vst.msk [vmem:[#allocation3 + $0x38] sm:$0xff] %vm2165, %v4094
        %4183 = vst.msk [vmem:[#allocation3 + $0x40] sm:$0xff] %vm2165, %v4096
        %4184 = vst.msk [vmem:[#allocation3 + $0x48] sm:$0xff] %vm2165, %v4098
        %4185 = vst.msk [vmem:[#allocation3 + $0x50] sm:$0xff] %vm2165, %v4100
        %4186 = vst.msk [vmem:[#allocation3 + $0x58] sm:$0xff] %vm2165, %v4102
        %4187 = vst.msk [vmem:[#allocation3 + $0x60] sm:$0xff] %vm2165, %v4104
        %4188 = vst.msk [vmem:[#allocation3 + $0x68] sm:$0xff] %vm2165, %v4106
        %4189 = vst.msk [vmem:[#allocation3 + $0x70] sm:$0xff] %vm2165, %v4108
        %4190 = vst.msk [vmem:[#allocation3 + $0x78] sm:$0xff] %vm2165, %v4110
        %4191 = vst.msk [vmem:[#allocation3 + $0x80] sm:$0xff] %vm2165, %v4112
        %4192 = vst.msk [vmem:[#allocation3 + $0x88] sm:$0xff] %vm2165, %v4114
        %4193 = vst.msk [vmem:[#allocation3 + $0x90] sm:$0xff] %vm2165, %v4116
        %4194 = vst.msk [vmem:[#allocation3 + $0x98] sm:$0xff] %vm2165, %v4118
        %4195 = vst.msk [vmem:[#allocation3 + $0xa0] sm:$0xff] %vm2165, %v4120
        %4196 = vst.msk [vmem:[#allocation3 + $0xa8] sm:$0xff] %vm2165, %v4122
        %4197 = vst.msk [vmem:[#allocation3 + $0xb0] sm:$0xff] %vm2165, %v4124
        %4198 = vst.msk [vmem:[#allocation3 + $0xb8] sm:$0xff] %vm2165, %v4126
        %4199 = vst.msk [vmem:[#allocation3 + $0xc0] sm:$0xff] %vm2165, %v4128
        %4200 = vst.msk [vmem:[#allocation3 + $0xc8] sm:$0xff] %vm2165, %v4130
        %4201 = vst.msk [vmem:[#allocation3 + $0xd0] sm:$0xff] %vm2165, %v4132
        %4202 = vst.msk [vmem:[#allocation3 + $0xd8] sm:$0xff] %vm2165, %v4134
        %4203 = vst.msk [vmem:[#allocation3 + $0xe0] sm:$0xff] %vm2165, %v4136
        %4204 = vst.msk [vmem:[#allocation3 + $0xe8] sm:$0xff] %vm2165, %v4138
        %4205 = vst.msk [vmem:[#allocation3 + $0xf0] sm:$0xff] %vm2165, %v4140
        %4206 = vst.msk [vmem:[#allocation3 + $0xf8] sm:$0xff] %vm2165, %v4142
        %v4207 = vld [vmem:[%s2394 + $0x1] sm:$0xff]
        %v4208 = vld [vmem:[%s2394 + $0x9] sm:$0xff]
        %v4209 = vld [vmem:[%s2394 + $0x19] sm:$0xff]
        %v4210 = vld [vmem:[%s2394 + $0x21] sm:$0xff]
        %v4211 = vld [vmem:[%s2394 + $0x31] sm:$0xff]
        %v4212 = vld [vmem:[%s2394 + $0x39] sm:$0xff]
        %v4213 = vld [vmem:[%s2394 + $0x49] sm:$0xff]
        %v4214 = vld [vmem:[%s2394 + $0x51] sm:$0xff]
        %v4215 = vld [vmem:[%s2394 + $0x61] sm:$0xff]
        %v4216 = vld [vmem:[%s2394 + $0x69] sm:$0xff]
        %v4217 = vld [vmem:[%s2394 + $0x79] sm:$0xff]
        %v4218 = vld [vmem:[%s2394 + $0x81] sm:$0xff]
        %v4219 = vld [vmem:[%s2394 + $0x91] sm:$0xff]
        %v4220 = vld [vmem:[%s2394 + $0x99] sm:$0xff]
        %v4221 = vld [vmem:[%s2394 + $0xa9] sm:$0xff]
        %v4222 = vld [vmem:[%s2394 + $0xb1] sm:$0xff]
        %v4223 = vld [vmem:[%s2394 + $0xc1] sm:$0xff]
        %v4224 = vld [vmem:[%s2394 + $0xc9] sm:$0xff]
        %v4225 = vld [vmem:[%s2394 + $0xd9] sm:$0xff]
        %v4226 = vld [vmem:[%s2394 + $0xe1] sm:$0xff]
        %v4227 = vld [vmem:[%s2394 + $0xf1] sm:$0xff]
        %v4228 = vld [vmem:[%s2394 + $0xf9] sm:$0xff]
        %v4229 = vld [vmem:[%s2394 + $0x109] sm:$0xff]
        %v4230 = vld [vmem:[%s2394 + $0x111] sm:$0xff]
        %v4231 = vld [vmem:[%s2394 + $0x121] sm:$0xff]
        %v4232 = vld [vmem:[%s2394 + $0x129] sm:$0xff]
        %v4233 = vld [vmem:[%s2394 + $0x139] sm:$0xff]
        %v4234 = vld [vmem:[%s2394 + $0x141] sm:$0xff]
        %v4235 = vld [vmem:[%s2394 + $0x151] sm:$0xff]
        %v4236 = vld [vmem:[%s2394 + $0x159] sm:$0xff]
        %v4237 = vld [vmem:[%s2394 + $0x169] sm:$0xff]
        %v4238 = vld [vmem:[%s2394 + $0x171] sm:$0xff]
        %4271 = vrot.lane.b32.xlu0 %v4207, 24
        %v4272 = vpop.permute.xlu0 %4271
        %4273 = vrot.lane.b32.xlu0 %v4208, 24
        %v4274 = vpop.permute.xlu0 %4273
        %4275 = vrot.lane.b32.xlu0 %v4209, 24
        %v4276 = vpop.permute.xlu0 %4275
        %4277 = vrot.lane.b32.xlu0 %v4210, 24
        %v4278 = vpop.permute.xlu0 %4277
        %4279 = vrot.lane.b32.xlu0 %v4211, 24
        %v4280 = vpop.permute.xlu0 %4279
        %4281 = vrot.lane.b32.xlu0 %v4212, 24
        %v4282 = vpop.permute.xlu0 %4281
        %4283 = vrot.lane.b32.xlu0 %v4213, 24
        %v4284 = vpop.permute.xlu0 %4283
        %4285 = vrot.lane.b32.xlu0 %v4214, 24
        %v4286 = vpop.permute.xlu0 %4285
        %4287 = vrot.lane.b32.xlu0 %v4215, 24
        %v4288 = vpop.permute.xlu0 %4287
        %4289 = vrot.lane.b32.xlu0 %v4216, 24
        %v4290 = vpop.permute.xlu0 %4289
        %4291 = vrot.lane.b32.xlu0 %v4217, 24
        %v4292 = vpop.permute.xlu0 %4291
        %4293 = vrot.lane.b32.xlu0 %v4218, 24
        %v4294 = vpop.permute.xlu0 %4293
        %4295 = vrot.lane.b32.xlu0 %v4219, 24
        %v4296 = vpop.permute.xlu0 %4295
        %4297 = vrot.lane.b32.xlu0 %v4220, 24
        %v4298 = vpop.permute.xlu0 %4297
        %4299 = vrot.lane.b32.xlu0 %v4221, 24
        %v4300 = vpop.permute.xlu0 %4299
        %4301 = vrot.lane.b32.xlu0 %v4222, 24
        %v4302 = vpop.permute.xlu0 %4301
        %4303 = vrot.lane.b32.xlu0 %v4223, 24
        %v4304 = vpop.permute.xlu0 %4303
        %4305 = vrot.lane.b32.xlu0 %v4224, 24
        %v4306 = vpop.permute.xlu0 %4305
        %4307 = vrot.lane.b32.xlu0 %v4225, 24
        %v4308 = vpop.permute.xlu0 %4307
        %4309 = vrot.lane.b32.xlu0 %v4226, 24
        %v4310 = vpop.permute.xlu0 %4309
        %4311 = vrot.lane.b32.xlu0 %v4227, 24
        %v4312 = vpop.permute.xlu0 %4311
        %4313 = vrot.lane.b32.xlu0 %v4228, 24
        %v4314 = vpop.permute.xlu0 %4313
        %4315 = vrot.lane.b32.xlu0 %v4229, 24
        %v4316 = vpop.permute.xlu0 %4315
        %4317 = vrot.lane.b32.xlu0 %v4230, 24
        %v4318 = vpop.permute.xlu0 %4317
        %4319 = vrot.lane.b32.xlu0 %v4231, 24
        %v4320 = vpop.permute.xlu0 %4319
        %4321 = vrot.lane.b32.xlu0 %v4232, 24
        %v4322 = vpop.permute.xlu0 %4321
        %4323 = vrot.lane.b32.xlu0 %v4233, 24
        %v4324 = vpop.permute.xlu0 %4323
        %4325 = vrot.lane.b32.xlu0 %v4234, 24
        %v4326 = vpop.permute.xlu0 %4325
        %4327 = vrot.lane.b32.xlu0 %v4235, 24
        %v4328 = vpop.permute.xlu0 %4327
        %4329 = vrot.lane.b32.xlu0 %v4236, 24
        %v4330 = vpop.permute.xlu0 %4329
        %4331 = vrot.lane.b32.xlu0 %v4237, 24
        %v4332 = vpop.permute.xlu0 %4331
        %4333 = vrot.lane.b32.xlu0 %v4238, 24
        %v4334 = vpop.permute.xlu0 %4333
        %4367 = vst.msk [vmem:[#allocation3] sm:$0xff] %vm2360, %v4272
        %4368 = vst.msk [vmem:[#allocation3 + $0x8] sm:$0xff] %vm2360, %v4274
        %4369 = vst.msk [vmem:[#allocation3 + $0x10] sm:$0xff] %vm2360, %v4276
        %4370 = vst.msk [vmem:[#allocation3 + $0x18] sm:$0xff] %vm2360, %v4278
        %4371 = vst.msk [vmem:[#allocation3 + $0x20] sm:$0xff] %vm2360, %v4280
        %4372 = vst.msk [vmem:[#allocation3 + $0x28] sm:$0xff] %vm2360, %v4282
        %4373 = vst.msk [vmem:[#allocation3 + $0x30] sm:$0xff] %vm2360, %v4284
        %4374 = vst.msk [vmem:[#allocation3 + $0x38] sm:$0xff] %vm2360, %v4286
        %4375 = vst.msk [vmem:[#allocation3 + $0x40] sm:$0xff] %vm2360, %v4288
        %4376 = vst.msk [vmem:[#allocation3 + $0x48] sm:$0xff] %vm2360, %v4290
        %4377 = vst.msk [vmem:[#allocation3 + $0x50] sm:$0xff] %vm2360, %v4292
        %4378 = vst.msk [vmem:[#allocation3 + $0x58] sm:$0xff] %vm2360, %v4294
        %4379 = vst.msk [vmem:[#allocation3 + $0x60] sm:$0xff] %vm2360, %v4296
        %4380 = vst.msk [vmem:[#allocation3 + $0x68] sm:$0xff] %vm2360, %v4298
        %4381 = vst.msk [vmem:[#allocation3 + $0x70] sm:$0xff] %vm2360, %v4300
        %4382 = vst.msk [vmem:[#allocation3 + $0x78] sm:$0xff] %vm2360, %v4302
        %4383 = vst.msk [vmem:[#allocation3 + $0x80] sm:$0xff] %vm2360, %v4304
        %4384 = vst.msk [vmem:[#allocation3 + $0x88] sm:$0xff] %vm2360, %v4306
        %4385 = vst.msk [vmem:[#allocation3 + $0x90] sm:$0xff] %vm2360, %v4308
        %4386 = vst.msk [vmem:[#allocation3 + $0x98] sm:$0xff] %vm2360, %v4310
        %4387 = vst.msk [vmem:[#allocation3 + $0xa0] sm:$0xff] %vm2360, %v4312
        %4388 = vst.msk [vmem:[#allocation3 + $0xa8] sm:$0xff] %vm2360, %v4314
        %4389 = vst.msk [vmem:[#allocation3 + $0xb0] sm:$0xff] %vm2360, %v4316
        %4390 = vst.msk [vmem:[#allocation3 + $0xb8] sm:$0xff] %vm2360, %v4318
        %4391 = vst.msk [vmem:[#allocation3 + $0xc0] sm:$0xff] %vm2360, %v4320
        %4392 = vst.msk [vmem:[#allocation3 + $0xc8] sm:$0xff] %vm2360, %v4322
        %4393 = vst.msk [vmem:[#allocation3 + $0xd0] sm:$0xff] %vm2360, %v4324
        %4394 = vst.msk [vmem:[#allocation3 + $0xd8] sm:$0xff] %vm2360, %v4326
        %4395 = vst.msk [vmem:[#allocation3 + $0xe0] sm:$0xff] %vm2360, %v4328
        %4396 = vst.msk [vmem:[#allocation3 + $0xe8] sm:$0xff] %vm2360, %v4330
        %4397 = vst.msk [vmem:[#allocation3 + $0xf0] sm:$0xff] %vm2360, %v4332
        %4398 = vst.msk [vmem:[#allocation3 + $0xf8] sm:$0xff] %vm2360, %v4334
        %v4399 = vld [vmem:[%s2199 + $0x1] sm:$0xff]
        %v4400 = vld [vmem:[%s2199 + $0x9] sm:$0xff]
        %v4401 = vld [vmem:[%s2199 + $0x19] sm:$0xff]
        %v4402 = vld [vmem:[%s2199 + $0x21] sm:$0xff]
        %v4403 = vld [vmem:[%s2199 + $0x31] sm:$0xff]
        %v4404 = vld [vmem:[%s2199 + $0x39] sm:$0xff]
        %v4405 = vld [vmem:[%s2199 + $0x49] sm:$0xff]
        %v4406 = vld [vmem:[%s2199 + $0x51] sm:$0xff]
        %v4407 = vld [vmem:[%s2199 + $0x61] sm:$0xff]
        %v4408 = vld [vmem:[%s2199 + $0x69] sm:$0xff]
        %v4409 = vld [vmem:[%s2199 + $0x79] sm:$0xff]
        %v4410 = vld [vmem:[%s2199 + $0x81] sm:$0xff]
        %v4411 = vld [vmem:[%s2199 + $0x91] sm:$0xff]
        %v4412 = vld [vmem:[%s2199 + $0x99] sm:$0xff]
        %v4413 = vld [vmem:[%s2199 + $0xa9] sm:$0xff]
        %v4414 = vld [vmem:[%s2199 + $0xb1] sm:$0xff]
        %v4415 = vld [vmem:[%s2199 + $0xc1] sm:$0xff]
        %v4416 = vld [vmem:[%s2199 + $0xc9] sm:$0xff]
        %v4417 = vld [vmem:[%s2199 + $0xd9] sm:$0xff]
        %v4418 = vld [vmem:[%s2199 + $0xe1] sm:$0xff]
        %v4419 = vld [vmem:[%s2199 + $0xf1] sm:$0xff]
        %v4420 = vld [vmem:[%s2199 + $0xf9] sm:$0xff]
        %v4421 = vld [vmem:[%s2199 + $0x109] sm:$0xff]
        %v4422 = vld [vmem:[%s2199 + $0x111] sm:$0xff]
        %v4423 = vld [vmem:[%s2199 + $0x121] sm:$0xff]
        %v4424 = vld [vmem:[%s2199 + $0x129] sm:$0xff]
        %v4425 = vld [vmem:[%s2199 + $0x139] sm:$0xff]
        %v4426 = vld [vmem:[%s2199 + $0x141] sm:$0xff]
        %v4427 = vld [vmem:[%s2199 + $0x151] sm:$0xff]
        %v4428 = vld [vmem:[%s2199 + $0x159] sm:$0xff]
        %v4429 = vld [vmem:[%s2199 + $0x169] sm:$0xff]
        %v4430 = vld [vmem:[%s2199 + $0x171] sm:$0xff]
        %4463 = vrot.lane.b32.xlu0 %v4399, 28
        %v4464 = vpop.permute.xlu0 %4463
        %4465 = vrot.lane.b32.xlu0 %v4400, 28
        %v4466 = vpop.permute.xlu0 %4465
        %4467 = vrot.lane.b32.xlu0 %v4401, 28
        %v4468 = vpop.permute.xlu0 %4467
        %4469 = vrot.lane.b32.xlu0 %v4402, 28
        %v4470 = vpop.permute.xlu0 %4469
        %4471 = vrot.lane.b32.xlu0 %v4403, 28
        %v4472 = vpop.permute.xlu0 %4471
        %4473 = vrot.lane.b32.xlu0 %v4404, 28
        %v4474 = vpop.permute.xlu0 %4473
        %4475 = vrot.lane.b32.xlu0 %v4405, 28
        %v4476 = vpop.permute.xlu0 %4475
        %4477 = vrot.lane.b32.xlu0 %v4406, 28
        %v4478 = vpop.permute.xlu0 %4477
        %4479 = vrot.lane.b32.xlu0 %v4407, 28
        %v4480 = vpop.permute.xlu0 %4479
        %4481 = vrot.lane.b32.xlu0 %v4408, 28
        %v4482 = vpop.permute.xlu0 %4481
        %4483 = vrot.lane.b32.xlu0 %v4409, 28
        %v4484 = vpop.permute.xlu0 %4483
        %4485 = vrot.lane.b32.xlu0 %v4410, 28
        %v4486 = vpop.permute.xlu0 %4485
        %4487 = vrot.lane.b32.xlu0 %v4411, 28
        %v4488 = vpop.permute.xlu0 %4487
        %4489 = vrot.lane.b32.xlu0 %v4412, 28
        %v4490 = vpop.permute.xlu0 %4489
        %4491 = vrot.lane.b32.xlu0 %v4413, 28
        %v4492 = vpop.permute.xlu0 %4491
        %4493 = vrot.lane.b32.xlu0 %v4414, 28
        %v4494 = vpop.permute.xlu0 %4493
        %4495 = vrot.lane.b32.xlu0 %v4415, 28
        %v4496 = vpop.permute.xlu0 %4495
        %4497 = vrot.lane.b32.xlu0 %v4416, 28
        %v4498 = vpop.permute.xlu0 %4497
        %4499 = vrot.lane.b32.xlu0 %v4417, 28
        %v4500 = vpop.permute.xlu0 %4499
        %4501 = vrot.lane.b32.xlu0 %v4418, 28
        %v4502 = vpop.permute.xlu0 %4501
        %4503 = vrot.lane.b32.xlu0 %v4419, 28
        %v4504 = vpop.permute.xlu0 %4503
        %4505 = vrot.lane.b32.xlu0 %v4420, 28
        %v4506 = vpop.permute.xlu0 %4505
        %4507 = vrot.lane.b32.xlu0 %v4421, 28
        %v4508 = vpop.permute.xlu0 %4507
        %4509 = vrot.lane.b32.xlu0 %v4422, 28
        %v4510 = vpop.permute.xlu0 %4509
        %4511 = vrot.lane.b32.xlu0 %v4423, 28
        %v4512 = vpop.permute.xlu0 %4511
        %4513 = vrot.lane.b32.xlu0 %v4424, 28
        %v4514 = vpop.permute.xlu0 %4513
        %4515 = vrot.lane.b32.xlu0 %v4425, 28
        %v4516 = vpop.permute.xlu0 %4515
        %4517 = vrot.lane.b32.xlu0 %v4426, 28
        %v4518 = vpop.permute.xlu0 %4517
        %4519 = vrot.lane.b32.xlu0 %v4427, 28
        %v4520 = vpop.permute.xlu0 %4519
        %4521 = vrot.lane.b32.xlu0 %v4428, 28
        %v4522 = vpop.permute.xlu0 %4521
        %4523 = vrot.lane.b32.xlu0 %v4429, 28
        %v4524 = vpop.permute.xlu0 %4523
        %4525 = vrot.lane.b32.xlu0 %v4430, 28
        %v4526 = vpop.permute.xlu0 %4525
        %4559 = vst.msk [vmem:[#allocation3] sm:$0xff] %vm2555, %v4464
        %4560 = vst.msk [vmem:[#allocation3 + $0x8] sm:$0xff] %vm2555, %v4466
        %4561 = vst.msk [vmem:[#allocation3 + $0x10] sm:$0xff] %vm2555, %v4468
        %4562 = vst.msk [vmem:[#allocation3 + $0x18] sm:$0xff] %vm2555, %v4470
        %4563 = vst.msk [vmem:[#allocation3 + $0x20] sm:$0xff] %vm2555, %v4472
        %4564 = vst.msk [vmem:[#allocation3 + $0x28] sm:$0xff] %vm2555, %v4474
        %4565 = vst.msk [vmem:[#allocation3 + $0x30] sm:$0xff] %vm2555, %v4476
        %4566 = vst.msk [vmem:[#allocation3 + $0x38] sm:$0xff] %vm2555, %v4478
        %4567 = vst.msk [vmem:[#allocation3 + $0x40] sm:$0xff] %vm2555, %v4480
        %4568 = vst.msk [vmem:[#allocation3 + $0x48] sm:$0xff] %vm2555, %v4482
        %4569 = vst.msk [vmem:[#allocation3 + $0x50] sm:$0xff] %vm2555, %v4484
        %4570 = vst.msk [vmem:[#allocation3 + $0x58] sm:$0xff] %vm2555, %v4486
        %4571 = vst.msk [vmem:[#allocation3 + $0x60] sm:$0xff] %vm2555, %v4488
        %4572 = vst.msk [vmem:[#allocation3 + $0x68] sm:$0xff] %vm2555, %v4490
        %4573 = vst.msk [vmem:[#allocation3 + $0x70] sm:$0xff] %vm2555, %v4492
        %4574 = vst.msk [vmem:[#allocation3 + $0x78] sm:$0xff] %vm2555, %v4494
        %4575 = vst.msk [vmem:[#allocation3 + $0x80] sm:$0xff] %vm2555, %v4496
        %4576 = vst.msk [vmem:[#allocation3 + $0x88] sm:$0xff] %vm2555, %v4498
        %4577 = vst.msk [vmem:[#allocation3 + $0x90] sm:$0xff] %vm2555, %v4500
        %4578 = vst.msk [vmem:[#allocation3 + $0x98] sm:$0xff] %vm2555, %v4502
        %4579 = vst.msk [vmem:[#allocation3 + $0xa0] sm:$0xff] %vm2555, %v4504
        %4580 = vst.msk [vmem:[#allocation3 + $0xa8] sm:$0xff] %vm2555, %v4506
        %4581 = vst.msk [vmem:[#allocation3 + $0xb0] sm:$0xff] %vm2555, %v4508
        %4582 = vst.msk [vmem:[#allocation3 + $0xb8] sm:$0xff] %vm2555, %v4510
        %4583 = vst.msk [vmem:[#allocation3 + $0xc0] sm:$0xff] %vm2555, %v4512
        %4584 = vst.msk [vmem:[#allocation3 + $0xc8] sm:$0xff] %vm2555, %v4514
        %4585 = vst.msk [vmem:[#allocation3 + $0xd0] sm:$0xff] %vm2555, %v4516
        %4586 = vst.msk [vmem:[#allocation3 + $0xd8] sm:$0xff] %vm2555, %v4518
        %4587 = vst.msk [vmem:[#allocation3 + $0xe0] sm:$0xff] %vm2555, %v4520
        %4588 = vst.msk [vmem:[#allocation3 + $0xe8] sm:$0xff] %vm2555, %v4522
        %4589 = vst.msk [vmem:[#allocation3 + $0xf0] sm:$0xff] %vm2555, %v4524
        %4590 = vst.msk [vmem:[#allocation3 + $0xf8] sm:$0xff] %vm2555, %v4526
        %v4591 = vld [vmem:[%s2394 + $0x2] sm:$0xff]
        %v4592 = vld [vmem:[%s2394 + $0xa] sm:$0xff]
        %v4593 = vld [vmem:[%s2394 + $0x1a] sm:$0xff]
        %v4594 = vld [vmem:[%s2394 + $0x22] sm:$0xff]
        %v4595 = vld [vmem:[%s2394 + $0x32] sm:$0xff]
        %v4596 = vld [vmem:[%s2394 + $0x3a] sm:$0xff]
        %v4597 = vld [vmem:[%s2394 + $0x4a] sm:$0xff]
        %v4598 = vld [vmem:[%s2394 + $0x52] sm:$0xff]
        %v4599 = vld [vmem:[%s2394 + $0x62] sm:$0xff]
        %v4600 = vld [vmem:[%s2394 + $0x6a] sm:$0xff]
        %v4601 = vld [vmem:[%s2394 + $0x7a] sm:$0xff]
        %v4602 = vld [vmem:[%s2394 + $0x82] sm:$0xff]
        %v4603 = vld [vmem:[%s2394 + $0x92] sm:$0xff]
        %v4604 = vld [vmem:[%s2394 + $0x9a] sm:$0xff]
        %v4605 = vld [vmem:[%s2394 + $0xaa] sm:$0xff]
        %v4606 = vld [vmem:[%s2394 + $0xb2] sm:$0xff]
        %v4607 = vld [vmem:[%s2394 + $0xc2] sm:$0xff]
        %v4608 = vld [vmem:[%s2394 + $0xca] sm:$0xff]
        %v4609 = vld [vmem:[%s2394 + $0xda] sm:$0xff]
        %v4610 = vld [vmem:[%s2394 + $0xe2] sm:$0xff]
        %v4611 = vld [vmem:[%s2394 + $0xf2] sm:$0xff]
        %v4612 = vld [vmem:[%s2394 + $0xfa] sm:$0xff]
        %v4613 = vld [vmem:[%s2394 + $0x10a] sm:$0xff]
        %v4614 = vld [vmem:[%s2394 + $0x112] sm:$0xff]
        %v4615 = vld [vmem:[%s2394 + $0x122] sm:$0xff]
        %v4616 = vld [vmem:[%s2394 + $0x12a] sm:$0xff]
        %v4617 = vld [vmem:[%s2394 + $0x13a] sm:$0xff]
        %v4618 = vld [vmem:[%s2394 + $0x142] sm:$0xff]
        %v4619 = vld [vmem:[%s2394 + $0x152] sm:$0xff]
        %v4620 = vld [vmem:[%s2394 + $0x15a] sm:$0xff]
        %v4621 = vld [vmem:[%s2394 + $0x16a] sm:$0xff]
        %v4622 = vld [vmem:[%s2394 + $0x172] sm:$0xff]
        %4655 = vrot.lane.b32.xlu0 %v4591, 32
        %v4656 = vpop.permute.xlu0 %4655
        %4657 = vrot.lane.b32.xlu0 %v4592, 32
        %v4658 = vpop.permute.xlu0 %4657
        %4659 = vrot.lane.b32.xlu0 %v4593, 32
        %v4660 = vpop.permute.xlu0 %4659
        %4661 = vrot.lane.b32.xlu0 %v4594, 32
        %v4662 = vpop.permute.xlu0 %4661
        %4663 = vrot.lane.b32.xlu0 %v4595, 32
        %v4664 = vpop.permute.xlu0 %4663
        %4665 = vrot.lane.b32.xlu0 %v4596, 32
        %v4666 = vpop.permute.xlu0 %4665
        %4667 = vrot.lane.b32.xlu0 %v4597, 32
        %v4668 = vpop.permute.xlu0 %4667
        %4669 = vrot.lane.b32.xlu0 %v4598, 32
        %v4670 = vpop.permute.xlu0 %4669
        %4671 = vrot.lane.b32.xlu0 %v4599, 32
        %v4672 = vpop.permute.xlu0 %4671
        %4673 = vrot.lane.b32.xlu0 %v4600, 32
        %v4674 = vpop.permute.xlu0 %4673
        %4675 = vrot.lane.b32.xlu0 %v4601, 32
        %v4676 = vpop.permute.xlu0 %4675
        %4677 = vrot.lane.b32.xlu0 %v4602, 32
        %v4678 = vpop.permute.xlu0 %4677
        %4679 = vrot.lane.b32.xlu0 %v4603, 32
        %v4680 = vpop.permute.xlu0 %4679
        %4681 = vrot.lane.b32.xlu0 %v4604, 32
        %v4682 = vpop.permute.xlu0 %4681
        %4683 = vrot.lane.b32.xlu0 %v4605, 32
        %v4684 = vpop.permute.xlu0 %4683
        %4685 = vrot.lane.b32.xlu0 %v4606, 32
        %v4686 = vpop.permute.xlu0 %4685
        %4687 = vrot.lane.b32.xlu0 %v4607, 32
        %v4688 = vpop.permute.xlu0 %4687
        %4689 = vrot.lane.b32.xlu0 %v4608, 32
        %v4690 = vpop.permute.xlu0 %4689
        %4691 = vrot.lane.b32.xlu0 %v4609, 32
        %v4692 = vpop.permute.xlu0 %4691
        %4693 = vrot.lane.b32.xlu0 %v4610, 32
        %v4694 = vpop.permute.xlu0 %4693
        %4695 = vrot.lane.b32.xlu0 %v4611, 32
        %v4696 = vpop.permute.xlu0 %4695
        %4697 = vrot.lane.b32.xlu0 %v4612, 32
        %v4698 = vpop.permute.xlu0 %4697
        %4699 = vrot.lane.b32.xlu0 %v4613, 32
        %v4700 = vpop.permute.xlu0 %4699
        %4701 = vrot.lane.b32.xlu0 %v4614, 32
        %v4702 = vpop.permute.xlu0 %4701
        %4703 = vrot.lane.b32.xlu0 %v4615, 32
        %v4704 = vpop.permute.xlu0 %4703
        %4705 = vrot.lane.b32.xlu0 %v4616, 32
        %v4706 = vpop.permute.xlu0 %4705
        %4707 = vrot.lane.b32.xlu0 %v4617, 32
        %v4708 = vpop.permute.xlu0 %4707
        %4709 = vrot.lane.b32.xlu0 %v4618, 32
        %v4710 = vpop.permute.xlu0 %4709
        %4711 = vrot.lane.b32.xlu0 %v4619, 32
        %v4712 = vpop.permute.xlu0 %4711
        %4713 = vrot.lane.b32.xlu0 %v4620, 32
        %v4714 = vpop.permute.xlu0 %4713
        %4715 = vrot.lane.b32.xlu0 %v4621, 32
        %v4716 = vpop.permute.xlu0 %4715
        %4717 = vrot.lane.b32.xlu0 %v4622, 32
        %v4718 = vpop.permute.xlu0 %4717
        %4751 = vst.msk [vmem:[#allocation3] sm:$0xff] %vm2748, %v4656
        %4752 = vst.msk [vmem:[#allocation3 + $0x8] sm:$0xff] %vm2748, %v4658
        %4753 = vst.msk [vmem:[#allocation3 + $0x10] sm:$0xff] %vm2748, %v4660
        %4754 = vst.msk [vmem:[#allocation3 + $0x18] sm:$0xff] %vm2748, %v4662
        %4755 = vst.msk [vmem:[#allocation3 + $0x20] sm:$0xff] %vm2748, %v4664
        %4756 = vst.msk [vmem:[#allocation3 + $0x28] sm:$0xff] %vm2748, %v4666
        %4757 = vst.msk [vmem:[#allocation3 + $0x30] sm:$0xff] %vm2748, %v4668
        %4758 = vst.msk [vmem:[#allocation3 + $0x38] sm:$0xff] %vm2748, %v4670
        %4759 = vst.msk [vmem:[#allocation3 + $0x40] sm:$0xff] %vm2748, %v4672
        %4760 = vst.msk [vmem:[#allocation3 + $0x48] sm:$0xff] %vm2748, %v4674
        %4761 = vst.msk [vmem:[#allocation3 + $0x50] sm:$0xff] %vm2748, %v4676
        %4762 = vst.msk [vmem:[#allocation3 + $0x58] sm:$0xff] %vm2748, %v4678
        %4763 = vst.msk [vmem:[#allocation3 + $0x60] sm:$0xff] %vm2748, %v4680
        %4764 = vst.msk [vmem:[#allocation3 + $0x68] sm:$0xff] %vm2748, %v4682
        %4765 = vst.msk [vmem:[#allocation3 + $0x70] sm:$0xff] %vm2748, %v4684
        %4766 = vst.msk [vmem:[#allocation3 + $0x78] sm:$0xff] %vm2748, %v4686
        %4767 = vst.msk [vmem:[#allocation3 + $0x80] sm:$0xff] %vm2748, %v4688
        %4768 = vst.msk [vmem:[#allocation3 + $0x88] sm:$0xff] %vm2748, %v4690
        %4769 = vst.msk [vmem:[#allocation3 + $0x90] sm:$0xff] %vm2748, %v4692
        %4770 = vst.msk [vmem:[#allocation3 + $0x98] sm:$0xff] %vm2748, %v4694
        %4771 = vst.msk [vmem:[#allocation3 + $0xa0] sm:$0xff] %vm2748, %v4696
        %4772 = vst.msk [vmem:[#allocation3 + $0xa8] sm:$0xff] %vm2748, %v4698
        %4773 = vst.msk [vmem:[#allocation3 + $0xb0] sm:$0xff] %vm2748, %v4700
        %4774 = vst.msk [vmem:[#allocation3 + $0xb8] sm:$0xff] %vm2748, %v4702
        %4775 = vst.msk [vmem:[#allocation3 + $0xc0] sm:$0xff] %vm2748, %v4704
        %4776 = vst.msk [vmem:[#allocation3 + $0xc8] sm:$0xff] %vm2748, %v4706
        %4777 = vst.msk [vmem:[#allocation3 + $0xd0] sm:$0xff] %vm2748, %v4708
        %4778 = vst.msk [vmem:[#allocation3 + $0xd8] sm:$0xff] %vm2748, %v4710
        %4779 = vst.msk [vmem:[#allocation3 + $0xe0] sm:$0xff] %vm2748, %v4712
        %4780 = vst.msk [vmem:[#allocation3 + $0xe8] sm:$0xff] %vm2748, %v4714
        %4781 = vst.msk [vmem:[#allocation3 + $0xf0] sm:$0xff] %vm2748, %v4716
        %4782 = vst.msk [vmem:[#allocation3 + $0xf8] sm:$0xff] %vm2748, %v4718
        %v4783 = vld [vmem:[#allocation3] sm:$0xff]
        %v4784 = vld [vmem:[#allocation3 + $0x8] sm:$0xff]
        %v4785 = vld [vmem:[#allocation3 + $0x10] sm:$0xff]
        %v4786 = vld [vmem:[#allocation3 + $0x18] sm:$0xff]
        %v4787 = vld [vmem:[#allocation3 + $0x20] sm:$0xff]
        %v4788 = vld [vmem:[#allocation3 + $0x28] sm:$0xff]
        %v4789 = vld [vmem:[#allocation3 + $0x30] sm:$0xff]
        %v4790 = vld [vmem:[#allocation3 + $0x38] sm:$0xff]
        %v4791 = vld [vmem:[#allocation3 + $0x40] sm:$0xff]
        %v4792 = vld [vmem:[#allocation3 + $0x48] sm:$0xff]
        %v4793 = vld [vmem:[#allocation3 + $0x50] sm:$0xff]
        %v4794 = vld [vmem:[#allocation3 + $0x58] sm:$0xff]
        %v4795 = vld [vmem:[#allocation3 + $0x60] sm:$0xff]
        %v4796 = vld [vmem:[#allocation3 + $0x68] sm:$0xff]
        %v4797 = vld [vmem:[#allocation3 + $0x70] sm:$0xff]
        %v4798 = vld [vmem:[#allocation3 + $0x78] sm:$0xff]
        %v4799 = vld [vmem:[#allocation3 + $0x80] sm:$0xff]
        %v4800 = vld [vmem:[#allocation3 + $0x88] sm:$0xff]
        %v4801 = vld [vmem:[#allocation3 + $0x90] sm:$0xff]
        %v4802 = vld [vmem:[#allocation3 + $0x98] sm:$0xff]
        %v4803 = vld [vmem:[#allocation3 + $0xa0] sm:$0xff]
        %v4804 = vld [vmem:[#allocation3 + $0xa8] sm:$0xff]
        %v4805 = vld [vmem:[#allocation3 + $0xb0] sm:$0xff]
        %v4806 = vld [vmem:[#allocation3 + $0xb8] sm:$0xff]
        %v4807 = vld [vmem:[#allocation3 + $0xc0] sm:$0xff]
        %v4808 = vld [vmem:[#allocation3 + $0xc8] sm:$0xff]
        %v4809 = vld [vmem:[#allocation3 + $0xd0] sm:$0xff]
        %v4810 = vld [vmem:[#allocation3 + $0xd8] sm:$0xff]
        %v4811 = vld [vmem:[#allocation3 + $0xe0] sm:$0xff]
        %v4812 = vld [vmem:[#allocation3 + $0xe8] sm:$0xff]
        %v4813 = vld [vmem:[#allocation3 + $0xf0] sm:$0xff]
        %v4814 = vld [vmem:[#allocation3 + $0xf8] sm:$0xff]
        %v4815 = vld [vmem:[%s4] sm:$0xff]
        %v4816 = vld [vmem:[%s4 + $0x8] sm:$0xff]
        %v4817 = vld [vmem:[%s4 + $0x10] sm:$0xff]
        %v4818 = vld [vmem:[%s4 + $0x18] sm:$0xff]
        %v4819 = vld [vmem:[%s4 + $0x20] sm:$0xf]
        %v4820 = vld [vmem:[%s5] sm:$0x1]
        %v4822 = vlaneseq
        %v4823 = vshrl.u32 %v4822, 7
        %v4824 = vsub.s32 0, %v4823
        %v4825 = vrot.slane %v4820, %v4824
        %v4828 = vsel %vm2825, %v4783, 0
        %v4831 = vsel %vm2825, %v4784, 0
        %v4834 = vsel %vm2825, %v4785, 0
        %v4837 = vsel %vm2825, %v4786, 0
        %v4840 = vsel %vm2825, %v4787, 0
        %v4843 = vsel %vm2825, %v4788, 0
        %v4846 = vsel %vm2825, %v4789, 0
        %v4849 = vsel %vm2825, %v4790, 0
        %v4852 = vsel %vm2825, %v4791, 0
        %v4855 = vsel %vm2825, %v4792, 0
        %v4858 = vsel %vm2825, %v4793, 0
        %v4861 = vsel %vm2825, %v4794, 0
        %v4864 = vsel %vm2825, %v4795, 0
        %v4867 = vsel %vm2825, %v4796, 0
        %v4870 = vsel %vm2825, %v4797, 0
        %v4873 = vsel %vm2825, %v4798, 0
        %v4876 = vsel %vm2825, %v4799, 0
        %v4879 = vsel %vm2825, %v4800, 0
        %v4882 = vsel %vm2825, %v4801, 0
        %v4885 = vsel %vm2825, %v4802, 0
        %v4888 = vsel %vm2825, %v4803, 0
        %v4891 = vsel %vm2825, %v4804, 0
        %v4894 = vsel %vm2825, %v4805, 0
        %v4897 = vsel %vm2825, %v4806, 0
        %v4900 = vsel %vm2825, %v4807, 0
        %v4903 = vsel %vm2825, %v4808, 0
        %v4906 = vsel %vm2825, %v4809, 0
        %v4909 = vsel %vm2825, %v4810, 0
        %v4912 = vsel %vm2825, %v4811, 0
        %v4915 = vsel %vm2825, %v4812, 0
        %v4918 = vsel %vm2825, %v4813, 0
        %v4921 = vsel %vm2825, %v4814, 0
        %v4924 = vsel %vm2922, %v4819, 0
        %4926 = vmatprep.subr.mxu0 0.0
        %4927 = vmatpush1.msra.mxu0 %v4815
        %4928 = vmatprep.subr.mxu0 0.0
        %4929 = vmatpush1.msra.mxu0 %v4816
        %4930 = vmatprep.subr.mxu0 0.0
        %4931 = vmatpush1.msra.mxu0 %v4817
        %4932 = vmatprep.subr.mxu0 0.0
        %4933 = vmatpush1.msra.mxu0 %v4818
        %4934 = vmatprep.subr.mxu0 0.0
        %4935 = vmatpush1.msra.mxu0 %v4924
        %4936 = vmatprep.subr.mxu0 0.0
        %4937 = vmatpush1.msra.mxu0 0.0
        %4938 = vmatprep.subr.mxu0 0.0
        %4939 = vmatpush1.msra.mxu0 0.0
        %4940 = vmatprep.subr.mxu0 0.0
        %4941 = vmatpush1.msra.mxu0 0.0
        %4942 = vmatprep.subr.mxu0 0.0
        %4943 = vmatpush1.msra.mxu0 0.0
        %4944 = vmatprep.subr.mxu0 0.0
        %4945 = vmatpush1.msra.mxu0 0.0
        %4946 = vmatprep.subr.mxu0 0.0
        %4947 = vmatpush1.msra.mxu0 0.0
        %4948 = vmatprep.subr.mxu0 0.0
        %4949 = vmatpush1.msra.mxu0 0.0
        %4950 = vmatprep.subr.mxu0 0.0
        %4951 = vmatpush1.msra.mxu0 0.0
        %4952 = vmatprep.subr.mxu0 0.0
        %4953 = vmatpush1.msra.mxu0 0.0
        %4954 = vmatprep.subr.mxu0 0.0
        %4955 = vmatpush1.msra.mxu0 0.0
        %4956 = vmatprep.subr.mxu0 0.0
        %4957 = vmatpush1.msra.mxu0 0.0
        %4958 = vmatprep.subr.mxu0 0.0
        %4959 = vmatpush1.msra.mxu0 0.0
        %4960 = vmatprep.subr.mxu0 0.0
        %4961 = vmatpush1.msra.mxu0 0.0
        %4962 = vmatprep.subr.mxu0 0.0
        %4963 = vmatpush1.msra.mxu0 0.0
        %4964 = vmatprep.subr.mxu0 0.0
        %4965 = vmatpush1.msra.mxu0 0.0
        %4966 = vmatprep.subr.mxu0 0.0
        %4967 = vmatpush1.msra.mxu0 0.0
        %4968 = vmatprep.subr.mxu0 0.0
        %4969 = vmatpush1.msra.mxu0 0.0
        %4970 = vmatprep.subr.mxu0 0.0
        %4971 = vmatpush1.msra.mxu0 0.0
        %4972 = vmatprep.subr.mxu0 0.0
        %4973 = vmatpush1.msra.mxu0 0.0
        %4974 = vmatprep.subr.mxu0 0.0
        %4975 = vmatpush1.msra.mxu0 0.0
        %4976 = vmatprep.subr.mxu0 0.0
        %4977 = vmatpush1.msra.mxu0 0.0
        %4978 = vmatprep.subr.mxu0 0.0
        %4979 = vmatpush1.msra.mxu0 0.0
        %4980 = vmatprep.subr.mxu0 0.0
        %4981 = vmatpush1.msra.mxu0 0.0
        %4982 = vmatprep.subr.mxu0 0.0
        %4983 = vmatpush1.msra.mxu0 0.0
        %4984 = vmatprep.subr.mxu0 0.0
        %4985 = vmatpush1.msra.mxu0 0.0
        %4986 = vmatprep.subr.mxu0 0.0
        %4987 = vmatpush1.msra.mxu0 0.0
        %4988 = vmatprep.subr.mxu0 0.0
        %4989 = vmatpush1.msra.mxu0 0.0
        %4990 = vmatprep.mubr.f32.mxu0 0.0
        %4991 = vmatmul.mubr.f32.gmra.mrb[0].mxu0 %v4828
        %v4992 = vpop.f32.mrb[0].mxu0
        %v4993 = vadd.f32 %v4825, %v4992
        %v4994 = vpop.f32.mrb[0].mxu0
        %4995 = vmatprep.mubr.f32.mxu0 0.0
        %4996 = vmatmul.mubr.f32.gmra.mrb[0].mxu0 %v4831
        %v4997 = vpop.f32.mrb[0].mxu0
        %v4998 = vadd.f32 %v4825, %v4997
        %v4999 = vpop.f32.mrb[0].mxu0
        %5000 = vmatprep.mubr.f32.mxu0 0.0
        %5001 = vmatmul.mubr.f32.gmra.mrb[0].mxu0 %v4834
        %v5002 = vpop.f32.mrb[0].mxu0
        %v5003 = vadd.f32 %v4825, %v5002
        %v5004 = vpop.f32.mrb[0].mxu0
        %5005 = vmatprep.mubr.f32.mxu0 0.0
        %5006 = vmatmul.mubr.f32.gmra.mrb[0].mxu0 %v4837
        %v5007 = vpop.f32.mrb[0].mxu0
        %v5008 = vadd.f32 %v4825, %v5007
        %v5009 = vpop.f32.mrb[0].mxu0
        %5010 = vmatprep.mubr.f32.mxu0 0.0
        %5011 = vmatmul.mubr.f32.gmra.mrb[0].mxu0 %v4840
        %v5012 = vpop.f32.mrb[0].mxu0
        %v5013 = vadd.f32 %v4825, %v5012
        %v5014 = vpop.f32.mrb[0].mxu0
        %5015 = vmatprep.mubr.f32.mxu0 0.0
        %5016 = vmatmul.mubr.f32.gmra.mrb[0].mxu0 %v4843
        %v5017 = vpop.f32.mrb[0].mxu0
        %v5018 = vadd.f32 %v4825, %v5017
        %v5019 = vpop.f32.mrb[0].mxu0
        %5020 = vmatprep.mubr.f32.mxu0 0.0
        %5021 = vmatmul.mubr.f32.gmra.mrb[0].mxu0 %v4846
        %v5022 = vpop.f32.mrb[0].mxu0
        %v5023 = vadd.f32 %v4825, %v5022
        %v5024 = vpop.f32.mrb[0].mxu0
        %5025 = vmatprep.mubr.f32.mxu0 0.0
        %5026 = vmatmul.mubr.f32.gmra.mrb[0].mxu0 %v4849
        %v5027 = vpop.f32.mrb[0].mxu0
        %v5028 = vadd.f32 %v4825, %v5027
        %v5029 = vpop.f32.mrb[0].mxu0
        %5030 = vmatprep.mubr.f32.mxu0 0.0
        %5031 = vmatmul.mubr.f32.gmra.mrb[0].mxu0 %v4852
        %v5032 = vpop.f32.mrb[0].mxu0
        %v5033 = vadd.f32 %v4825, %v5032
        %v5034 = vpop.f32.mrb[0].mxu0
        %5035 = vmatprep.mubr.f32.mxu0 0.0
        %5036 = vmatmul.mubr.f32.gmra.mrb[0].mxu0 %v4855
        %v5037 = vpop.f32.mrb[0].mxu0
        %v5038 = vadd.f32 %v4825, %v5037
        %v5039 = vpop.f32.mrb[0].mxu0
        %5040 = vmatprep.mubr.f32.mxu0 0.0
        %5041 = vmatmul.mubr.f32.gmra.mrb[0].mxu0 %v4858
        %v5042 = vpop.f32.mrb[0].mxu0
        %v5043 = vadd.f32 %v4825, %v5042
        %v5044 = vpop.f32.mrb[0].mxu0
        %5045 = vmatprep.mubr.f32.mxu0 0.0
        %5046 = vmatmul.mubr.f32.gmra.mrb[0].mxu0 %v4861
        %v5047 = vpop.f32.mrb[0].mxu0
        %v5048 = vadd.f32 %v4825, %v5047
        %v5049 = vpop.f32.mrb[0].mxu0
        %5050 = vmatprep.mubr.f32.mxu0 0.0
        %5051 = vmatmul.mubr.f32.gmra.mrb[0].mxu0 %v4864
        %v5052 = vpop.f32.mrb[0].mxu0
        %v5053 = vadd.f32 %v4825, %v5052
        %v5054 = vpop.f32.mrb[0].mxu0
        %5055 = vmatprep.mubr.f32.mxu0 0.0
        %5056 = vmatmul.mubr.f32.gmra.mrb[0].mxu0 %v4867
        %v5057 = vpop.f32.mrb[0].mxu0
        %v5058 = vadd.f32 %v4825, %v5057
        %v5059 = vpop.f32.mrb[0].mxu0
        %5060 = vmatprep.mubr.f32.mxu0 0.0
        %5061 = vmatmul.mubr.f32.gmra.mrb[0].mxu0 %v4870
        %v5062 = vpop.f32.mrb[0].mxu0
        %v5063 = vadd.f32 %v4825, %v5062
        %v5064 = vpop.f32.mrb[0].mxu0
        %5065 = vmatprep.mubr.f32.mxu0 0.0
        %5066 = vmatmul.mubr.f32.gmra.mrb[0].mxu0 %v4873
        %v5067 = vpop.f32.mrb[0].mxu0
        %v5068 = vadd.f32 %v4825, %v5067
        %v5069 = vpop.f32.mrb[0].mxu0
        %5070 = vmatprep.mubr.f32.mxu0 0.0
        %5071 = vmatmul.mubr.f32.gmra.mrb[0].mxu0 %v4876
        %v5072 = vpop.f32.mrb[0].mxu0
        %v5073 = vadd.f32 %v4825, %v5072
        %v5074 = vpop.f32.mrb[0].mxu0
        %5075 = vmatprep.mubr.f32.mxu0 0.0
        %5076 = vmatmul.mubr.f32.gmra.mrb[0].mxu0 %v4879
        %v5077 = vpop.f32.mrb[0].mxu0
        %v5078 = vadd.f32 %v4825, %v5077
        %v5079 = vpop.f32.mrb[0].mxu0
        %5080 = vmatprep.mubr.f32.mxu0 0.0
        %5081 = vmatmul.mubr.f32.gmra.mrb[0].mxu0 %v4882
        %v5082 = vpop.f32.mrb[0].mxu0
        %v5083 = vadd.f32 %v4825, %v5082
        %v5084 = vpop.f32.mrb[0].mxu0
        %5085 = vmatprep.mubr.f32.mxu0 0.0
        %5086 = vmatmul.mubr.f32.gmra.mrb[0].mxu0 %v4885
        %v5087 = vpop.f32.mrb[0].mxu0
        %v5088 = vadd.f32 %v4825, %v5087
        %v5089 = vpop.f32.mrb[0].mxu0
        %5090 = vmatprep.mubr.f32.mxu0 0.0
        %5091 = vmatmul.mubr.f32.gmra.mrb[0].mxu0 %v4888
        %v5092 = vpop.f32.mrb[0].mxu0
        %v5093 = vadd.f32 %v4825, %v5092
        %v5094 = vpop.f32.mrb[0].mxu0
        %5095 = vmatprep.mubr.f32.mxu0 0.0
        %5096 = vmatmul.mubr.f32.gmra.mrb[0].mxu0 %v4891
        %v5097 = vpop.f32.mrb[0].mxu0
        %v5098 = vadd.f32 %v4825, %v5097
        %v5099 = vpop.f32.mrb[0].mxu0
        %5100 = vmatprep.mubr.f32.mxu0 0.0
        %5101 = vmatmul.mubr.f32.gmra.mrb[0].mxu0 %v4894
        %v5102 = vpop.f32.mrb[0].mxu0
        %v5103 = vadd.f32 %v4825, %v5102
        %v5104 = vpop.f32.mrb[0].mxu0
        %5105 = vmatprep.mubr.f32.mxu0 0.0
        %5106 = vmatmul.mubr.f32.gmra.mrb[0].mxu0 %v4897
        %v5107 = vpop.f32.mrb[0].mxu0
        %v5108 = vadd.f32 %v4825, %v5107
        %v5109 = vpop.f32.mrb[0].mxu0
        %5110 = vmatprep.mubr.f32.mxu0 0.0
        %5111 = vmatmul.mubr.f32.gmra.mrb[0].mxu0 %v4900
        %v5112 = vpop.f32.mrb[0].mxu0
        %v5113 = vadd.f32 %v4825, %v5112
        %v5114 = vpop.f32.mrb[0].mxu0
        %5115 = vmatprep.mubr.f32.mxu0 0.0
        %5116 = vmatmul.mubr.f32.gmra.mrb[0].mxu0 %v4903
        %v5117 = vpop.f32.mrb[0].mxu0
        %v5118 = vadd.f32 %v4825, %v5117
        %v5119 = vpop.f32.mrb[0].mxu0
        %5120 = vmatprep.mubr.f32.mxu0 0.0
        %5121 = vmatmul.mubr.f32.gmra.mrb[0].mxu0 %v4906
        %v5122 = vpop.f32.mrb[0].mxu0
        %v5123 = vadd.f32 %v4825, %v5122
        %v5124 = vpop.f32.mrb[0].mxu0
        %5125 = vmatprep.mubr.f32.mxu0 0.0
        %5126 = vmatmul.mubr.f32.gmra.mrb[0].mxu0 %v4909
        %v5127 = vpop.f32.mrb[0].mxu0
        %v5128 = vadd.f32 %v4825, %v5127
        %v5129 = vpop.f32.mrb[0].mxu0
        %5130 = vmatprep.mubr.f32.mxu0 0.0
        %5131 = vmatmul.mubr.f32.gmra.mrb[0].mxu0 %v4912
        %v5132 = vpop.f32.mrb[0].mxu0
        %v5133 = vadd.f32 %v4825, %v5132
        %v5134 = vpop.f32.mrb[0].mxu0
        %5135 = vmatprep.mubr.f32.mxu0 0.0
        %5136 = vmatmul.mubr.f32.gmra.mrb[0].mxu0 %v4915
        %v5137 = vpop.f32.mrb[0].mxu0
        %v5138 = vadd.f32 %v4825, %v5137
        %v5139 = vpop.f32.mrb[0].mxu0
        %5140 = vmatprep.mubr.f32.mxu0 0.0
        %5141 = vmatmul.mubr.f32.gmra.mrb[0].mxu0 %v4918
        %v5142 = vpop.f32.mrb[0].mxu0
        %v5143 = vadd.f32 %v4825, %v5142
        %v5144 = vpop.f32.mrb[0].mxu0
        %5145 = vmatprep.mubr.f32.mxu0 0.0
        %5146 = vmatmul.mubr.f32.gmra.mrb[0].mxu0 %v4921
        %v5147 = vpop.f32.mrb[0].mxu0
        %v5148 = vadd.f32 %v4825, %v5147
        %v5149 = vpop.f32.mrb[0].mxu0
        %5150 = vdwg.mxu0
        %s5151 = scalar_lea.vmem %s273, 256 [#allocation4]
        %5152 = vst [vmem:[%s5151] sm:$0xff] %v4993
        %5153 = vst [vmem:[%s5151 + $0x8] sm:$0xff] %v4998
        %5154 = vst [vmem:[%s5151 + $0x10] sm:$0xff] %v5003
        %5155 = vst [vmem:[%s5151 + $0x18] sm:$0xff] %v5008
        %5156 = vst [vmem:[%s5151 + $0x20] sm:$0xff] %v5013
        %5157 = vst [vmem:[%s5151 + $0x28] sm:$0xff] %v5018
        %5158 = vst [vmem:[%s5151 + $0x30] sm:$0xff] %v5023
        %5159 = vst [vmem:[%s5151 + $0x38] sm:$0xff] %v5028
        %5160 = vst [vmem:[%s5151 + $0x40] sm:$0xff] %v5033
        %5161 = vst [vmem:[%s5151 + $0x48] sm:$0xff] %v5038
        %5162 = vst [vmem:[%s5151 + $0x50] sm:$0xff] %v5043
        %5163 = vst [vmem:[%s5151 + $0x58] sm:$0xff] %v5048
        %5164 = vst [vmem:[%s5151 + $0x60] sm:$0xff] %v5053
        %5165 = vst [vmem:[%s5151 + $0x68] sm:$0xff] %v5058
        %5166 = vst [vmem:[%s5151 + $0x70] sm:$0xff] %v5063
        %5167 = vst [vmem:[%s5151 + $0x78] sm:$0xff] %v5068
        %5168 = vst [vmem:[%s5151 + $0x80] sm:$0xff] %v5073
        %5169 = vst [vmem:[%s5151 + $0x88] sm:$0xff] %v5078
        %5170 = vst [vmem:[%s5151 + $0x90] sm:$0xff] %v5083
        %5171 = vst [vmem:[%s5151 + $0x98] sm:$0xff] %v5088
        %5172 = vst [vmem:[%s5151 + $0xa0] sm:$0xff] %v5093
        %5173 = vst [vmem:[%s5151 + $0xa8] sm:$0xff] %v5098
        %5174 = vst [vmem:[%s5151 + $0xb0] sm:$0xff] %v5103
        %5175 = vst [vmem:[%s5151 + $0xb8] sm:$0xff] %v5108
        %5176 = vst [vmem:[%s5151 + $0xc0] sm:$0xff] %v5113
        %5177 = vst [vmem:[%s5151 + $0xc8] sm:$0xff] %v5118
        %5178 = vst [vmem:[%s5151 + $0xd0] sm:$0xff] %v5123
        %5179 = vst [vmem:[%s5151 + $0xd8] sm:$0xff] %v5128
        %5180 = vst [vmem:[%s5151 + $0xe0] sm:$0xff] %v5133
        %5181 = vst [vmem:[%s5151 + $0xe8] sm:$0xff] %v5138
        %5182 = vst [vmem:[%s5151 + $0xf0] sm:$0xff] %v5143
        %5183 = vst [vmem:[%s5151 + $0xf8] sm:$0xff] %v5148
        %v5184 = vld [vmem:[%s1617] sm:$0xff]
        %v5185 = vld [vmem:[%s1617 + $0x8] sm:$0xff]
        %v5186 = vld [vmem:[%s1617 + $0x18] sm:$0xff]
        %v5187 = vld [vmem:[%s1617 + $0x20] sm:$0xff]
        %v5188 = vld [vmem:[%s1617 + $0x30] sm:$0xff]
        %v5189 = vld [vmem:[%s1617 + $0x38] sm:$0xff]
        %v5190 = vld [vmem:[%s1617 + $0x48] sm:$0xff]
        %v5191 = vld [vmem:[%s1617 + $0x50] sm:$0xff]
        %v5192 = vld [vmem:[%s1617 + $0x60] sm:$0xff]
        %v5193 = vld [vmem:[%s1617 + $0x68] sm:$0xff]
        %v5194 = vld [vmem:[%s1617 + $0x78] sm:$0xff]
        %v5195 = vld [vmem:[%s1617 + $0x80] sm:$0xff]
        %v5196 = vld [vmem:[%s1617 + $0x90] sm:$0xff]
        %v5197 = vld [vmem:[%s1617 + $0x98] sm:$0xff]
        %v5198 = vld [vmem:[%s1617 + $0xa8] sm:$0xff]
        %v5199 = vld [vmem:[%s1617 + $0xb0] sm:$0xff]
        %v5200 = vld [vmem:[%s1617 + $0xc0] sm:$0xff]
        %v5201 = vld [vmem:[%s1617 + $0xc8] sm:$0xff]
        %v5202 = vld [vmem:[%s1617 + $0xd8] sm:$0xff]
        %v5203 = vld [vmem:[%s1617 + $0xe0] sm:$0xff]
        %v5204 = vld [vmem:[%s1617 + $0xf0] sm:$0xff]
        %v5205 = vld [vmem:[%s1617 + $0xf8] sm:$0xff]
        %v5206 = vld [vmem:[%s1617 + $0x108] sm:$0xff]
        %v5207 = vld [vmem:[%s1617 + $0x110] sm:$0xff]
        %v5208 = vld [vmem:[%s1617 + $0x120] sm:$0xff]
        %v5209 = vld [vmem:[%s1617 + $0x128] sm:$0xff]
        %v5210 = vld [vmem:[%s1617 + $0x138] sm:$0xff]
        %v5211 = vld [vmem:[%s1617 + $0x140] sm:$0xff]
        %v5212 = vld [vmem:[%s1617 + $0x150] sm:$0xff]
        %v5213 = vld [vmem:[%s1617 + $0x158] sm:$0xff]
        %v5214 = vld [vmem:[%s1617 + $0x168] sm:$0xff]
        %v5215 = vld [vmem:[%s1617 + $0x170] sm:$0xff]
        %5216 = vst.msk [vmem:[#allocation3] sm:$0xff] %vm1193, %v5184
        %5217 = vst.msk [vmem:[#allocation3 + $0x8] sm:$0xff] %vm1193, %v5185
        %5218 = vst.msk [vmem:[#allocation3 + $0x10] sm:$0xff] %vm1193, %v5186
        %5219 = vst.msk [vmem:[#allocation3 + $0x18] sm:$0xff] %vm1193, %v5187
        %5220 = vst.msk [vmem:[#allocation3 + $0x20] sm:$0xff] %vm1193, %v5188
        %5221 = vst.msk [vmem:[#allocation3 + $0x28] sm:$0xff] %vm1193, %v5189
        %5222 = vst.msk [vmem:[#allocation3 + $0x30] sm:$0xff] %vm1193, %v5190
        %5223 = vst.msk [vmem:[#allocation3 + $0x38] sm:$0xff] %vm1193, %v5191
        %5224 = vst.msk [vmem:[#allocation3 + $0x40] sm:$0xff] %vm1193, %v5192
        %5225 = vst.msk [vmem:[#allocation3 + $0x48] sm:$0xff] %vm1193, %v5193
        %5226 = vst.msk [vmem:[#allocation3 + $0x50] sm:$0xff] %vm1193, %v5194
        %5227 = vst.msk [vmem:[#allocation3 + $0x58] sm:$0xff] %vm1193, %v5195
        %5228 = vst.msk [vmem:[#allocation3 + $0x60] sm:$0xff] %vm1193, %v5196
        %5229 = vst.msk [vmem:[#allocation3 + $0x68] sm:$0xff] %vm1193, %v5197
        %5230 = vst.msk [vmem:[#allocation3 + $0x70] sm:$0xff] %vm1193, %v5198
        %5231 = vst.msk [vmem:[#allocation3 + $0x78] sm:$0xff] %vm1193, %v5199
        %5232 = vst.msk [vmem:[#allocation3 + $0x80] sm:$0xff] %vm1193, %v5200
        %5233 = vst.msk [vmem:[#allocation3 + $0x88] sm:$0xff] %vm1193, %v5201
        %5234 = vst.msk [vmem:[#allocation3 + $0x90] sm:$0xff] %vm1193, %v5202
        %5235 = vst.msk [vmem:[#allocation3 + $0x98] sm:$0xff] %vm1193, %v5203
        %5236 = vst.msk [vmem:[#allocation3 + $0xa0] sm:$0xff] %vm1193, %v5204
        %5237 = vst.msk [vmem:[#allocation3 + $0xa8] sm:$0xff] %vm1193, %v5205
        %5238 = vst.msk [vmem:[#allocation3 + $0xb0] sm:$0xff] %vm1193, %v5206
        %5239 = vst.msk [vmem:[#allocation3 + $0xb8] sm:$0xff] %vm1193, %v5207
        %5240 = vst.msk [vmem:[#allocation3 + $0xc0] sm:$0xff] %vm1193, %v5208
        %5241 = vst.msk [vmem:[#allocation3 + $0xc8] sm:$0xff] %vm1193, %v5209
        %5242 = vst.msk [vmem:[#allocation3 + $0xd0] sm:$0xff] %vm1193, %v5210
        %5243 = vst.msk [vmem:[#allocation3 + $0xd8] sm:$0xff] %vm1193, %v5211
        %5244 = vst.msk [vmem:[#allocation3 + $0xe0] sm:$0xff] %vm1193, %v5212
        %5245 = vst.msk [vmem:[#allocation3 + $0xe8] sm:$0xff] %vm1193, %v5213
        %5246 = vst.msk [vmem:[#allocation3 + $0xf0] sm:$0xff] %vm1193, %v5214
        %5247 = vst.msk [vmem:[#allocation3 + $0xf8] sm:$0xff] %vm1193, %v5215
        %v5248 = vld [vmem:[%s1811 + $0x1] sm:$0xff]
        %v5249 = vld [vmem:[%s1811 + $0x9] sm:$0xff]
        %v5250 = vld [vmem:[%s1811 + $0x19] sm:$0xff]
        %v5251 = vld [vmem:[%s1811 + $0x21] sm:$0xff]
        %v5252 = vld [vmem:[%s1811 + $0x31] sm:$0xff]
        %v5253 = vld [vmem:[%s1811 + $0x39] sm:$0xff]
        %v5254 = vld [vmem:[%s1811 + $0x49] sm:$0xff]
        %v5255 = vld [vmem:[%s1811 + $0x51] sm:$0xff]
        %v5256 = vld [vmem:[%s1811 + $0x61] sm:$0xff]
        %v5257 = vld [vmem:[%s1811 + $0x69] sm:$0xff]
        %v5258 = vld [vmem:[%s1811 + $0x79] sm:$0xff]
        %v5259 = vld [vmem:[%s1811 + $0x81] sm:$0xff]
        %v5260 = vld [vmem:[%s1811 + $0x91] sm:$0xff]
        %v5261 = vld [vmem:[%s1811 + $0x99] sm:$0xff]
        %v5262 = vld [vmem:[%s1811 + $0xa9] sm:$0xff]
        %v5263 = vld [vmem:[%s1811 + $0xb1] sm:$0xff]
        %v5264 = vld [vmem:[%s1811 + $0xc1] sm:$0xff]
        %v5265 = vld [vmem:[%s1811 + $0xc9] sm:$0xff]
        %v5266 = vld [vmem:[%s1811 + $0xd9] sm:$0xff]
        %v5267 = vld [vmem:[%s1811 + $0xe1] sm:$0xff]
        %v5268 = vld [vmem:[%s1811 + $0xf1] sm:$0xff]
        %v5269 = vld [vmem:[%s1811 + $0xf9] sm:$0xff]
        %v5270 = vld [vmem:[%s1811 + $0x109] sm:$0xff]
        %v5271 = vld [vmem:[%s1811 + $0x111] sm:$0xff]
        %v5272 = vld [vmem:[%s1811 + $0x121] sm:$0xff]
        %v5273 = vld [vmem:[%s1811 + $0x129] sm:$0xff]
        %v5274 = vld [vmem:[%s1811 + $0x139] sm:$0xff]
        %v5275 = vld [vmem:[%s1811 + $0x141] sm:$0xff]
        %v5276 = vld [vmem:[%s1811 + $0x151] sm:$0xff]
        %v5277 = vld [vmem:[%s1811 + $0x159] sm:$0xff]
        %v5278 = vld [vmem:[%s1811 + $0x169] sm:$0xff]
        %v5279 = vld [vmem:[%s1811 + $0x171] sm:$0xff]
        %5312 = vrot.lane.b32.xlu0 %v5248, 4
        %v5313 = vpop.permute.xlu0 %5312
        %5314 = vrot.lane.b32.xlu0 %v5249, 4
        %v5315 = vpop.permute.xlu0 %5314
        %5316 = vrot.lane.b32.xlu0 %v5250, 4
        %v5317 = vpop.permute.xlu0 %5316
        %5318 = vrot.lane.b32.xlu0 %v5251, 4
        %v5319 = vpop.permute.xlu0 %5318
        %5320 = vrot.lane.b32.xlu0 %v5252, 4
        %v5321 = vpop.permute.xlu0 %5320
        %5322 = vrot.lane.b32.xlu0 %v5253, 4
        %v5323 = vpop.permute.xlu0 %5322
        %5324 = vrot.lane.b32.xlu0 %v5254, 4
        %v5325 = vpop.permute.xlu0 %5324
        %5326 = vrot.lane.b32.xlu0 %v5255, 4
        %v5327 = vpop.permute.xlu0 %5326
        %5328 = vrot.lane.b32.xlu0 %v5256, 4
        %v5329 = vpop.permute.xlu0 %5328
        %5330 = vrot.lane.b32.xlu0 %v5257, 4
        %v5331 = vpop.permute.xlu0 %5330
        %5332 = vrot.lane.b32.xlu0 %v5258, 4
        %v5333 = vpop.permute.xlu0 %5332
        %5334 = vrot.lane.b32.xlu0 %v5259, 4
        %v5335 = vpop.permute.xlu0 %5334
        %5336 = vrot.lane.b32.xlu0 %v5260, 4
        %v5337 = vpop.permute.xlu0 %5336
        %5338 = vrot.lane.b32.xlu0 %v5261, 4
        %v5339 = vpop.permute.xlu0 %5338
        %5340 = vrot.lane.b32.xlu0 %v5262, 4
        %v5341 = vpop.permute.xlu0 %5340
        %5342 = vrot.lane.b32.xlu0 %v5263, 4
        %v5343 = vpop.permute.xlu0 %5342
        %5344 = vrot.lane.b32.xlu0 %v5264, 4
        %v5345 = vpop.permute.xlu0 %5344
        %5346 = vrot.lane.b32.xlu0 %v5265, 4
        %v5347 = vpop.permute.xlu0 %5346
        %5348 = vrot.lane.b32.xlu0 %v5266, 4
        %v5349 = vpop.permute.xlu0 %5348
        %5350 = vrot.lane.b32.xlu0 %v5267, 4
        %v5351 = vpop.permute.xlu0 %5350
        %5352 = vrot.lane.b32.xlu0 %v5268, 4
        %v5353 = vpop.permute.xlu0 %5352
        %5354 = vrot.lane.b32.xlu0 %v5269, 4
        %v5355 = vpop.permute.xlu0 %5354
        %5356 = vrot.lane.b32.xlu0 %v5270, 4
        %v5357 = vpop.permute.xlu0 %5356
        %5358 = vrot.lane.b32.xlu0 %v5271, 4
        %v5359 = vpop.permute.xlu0 %5358
        %5360 = vrot.lane.b32.xlu0 %v5272, 4
        %v5361 = vpop.permute.xlu0 %5360
        %5362 = vrot.lane.b32.xlu0 %v5273, 4
        %v5363 = vpop.permute.xlu0 %5362
        %5364 = vrot.lane.b32.xlu0 %v5274, 4
        %v5365 = vpop.permute.xlu0 %5364
        %5366 = vrot.lane.b32.xlu0 %v5275, 4
        %v5367 = vpop.permute.xlu0 %5366
        %5368 = vrot.lane.b32.xlu0 %v5276, 4
        %v5369 = vpop.permute.xlu0 %5368
        %5370 = vrot.lane.b32.xlu0 %v5277, 4
        %v5371 = vpop.permute.xlu0 %5370
        %5372 = vrot.lane.b32.xlu0 %v5278, 4
        %v5373 = vpop.permute.xlu0 %5372
        %5374 = vrot.lane.b32.xlu0 %v5279, 4
        %v5375 = vpop.permute.xlu0 %5374
        %5408 = vst.msk [vmem:[#allocation3] sm:$0xff] %vm1388, %v5313
        %5409 = vst.msk [vmem:[#allocation3 + $0x8] sm:$0xff] %vm1388, %v5315
        %5410 = vst.msk [vmem:[#allocation3 + $0x10] sm:$0xff] %vm1388, %v5317
        %5411 = vst.msk [vmem:[#allocation3 + $0x18] sm:$0xff] %vm1388, %v5319
        %5412 = vst.msk [vmem:[#allocation3 + $0x20] sm:$0xff] %vm1388, %v5321
        %5413 = vst.msk [vmem:[#allocation3 + $0x28] sm:$0xff] %vm1388, %v5323
        %5414 = vst.msk [vmem:[#allocation3 + $0x30] sm:$0xff] %vm1388, %v5325
        %5415 = vst.msk [vmem:[#allocation3 + $0x38] sm:$0xff] %vm1388, %v5327
        %5416 = vst.msk [vmem:[#allocation3 + $0x40] sm:$0xff] %vm1388, %v5329
        %5417 = vst.msk [vmem:[#allocation3 + $0x48] sm:$0xff] %vm1388, %v5331
        %5418 = vst.msk [vmem:[#allocation3 + $0x50] sm:$0xff] %vm1388, %v5333
        %5419 = vst.msk [vmem:[#allocation3 + $0x58] sm:$0xff] %vm1388, %v5335
        %5420 = vst.msk [vmem:[#allocation3 + $0x60] sm:$0xff] %vm1388, %v5337
        %5421 = vst.msk [vmem:[#allocation3 + $0x68] sm:$0xff] %vm1388, %v5339
        %5422 = vst.msk [vmem:[#allocation3 + $0x70] sm:$0xff] %vm1388, %v5341
        %5423 = vst.msk [vmem:[#allocation3 + $0x78] sm:$0xff] %vm1388, %v5343
        %5424 = vst.msk [vmem:[#allocation3 + $0x80] sm:$0xff] %vm1388, %v5345
        %5425 = vst.msk [vmem:[#allocation3 + $0x88] sm:$0xff] %vm1388, %v5347
        %5426 = vst.msk [vmem:[#allocation3 + $0x90] sm:$0xff] %vm1388, %v5349
        %5427 = vst.msk [vmem:[#allocation3 + $0x98] sm:$0xff] %vm1388, %v5351
        %5428 = vst.msk [vmem:[#allocation3 + $0xa0] sm:$0xff] %vm1388, %v5353
        %5429 = vst.msk [vmem:[#allocation3 + $0xa8] sm:$0xff] %vm1388, %v5355
        %5430 = vst.msk [vmem:[#allocation3 + $0xb0] sm:$0xff] %vm1388, %v5357
        %5431 = vst.msk [vmem:[#allocation3 + $0xb8] sm:$0xff] %vm1388, %v5359
        %5432 = vst.msk [vmem:[#allocation3 + $0xc0] sm:$0xff] %vm1388, %v5361
        %5433 = vst.msk [vmem:[#allocation3 + $0xc8] sm:$0xff] %vm1388, %v5363
        %5434 = vst.msk [vmem:[#allocation3 + $0xd0] sm:$0xff] %vm1388, %v5365
        %5435 = vst.msk [vmem:[#allocation3 + $0xd8] sm:$0xff] %vm1388, %v5367
        %5436 = vst.msk [vmem:[#allocation3 + $0xe0] sm:$0xff] %vm1388, %v5369
        %5437 = vst.msk [vmem:[#allocation3 + $0xe8] sm:$0xff] %vm1388, %v5371
        %5438 = vst.msk [vmem:[#allocation3 + $0xf0] sm:$0xff] %vm1388, %v5373
        %5439 = vst.msk [vmem:[#allocation3 + $0xf8] sm:$0xff] %vm1388, %v5375
        %v5440 = vld [vmem:[%s1617 + $0x1] sm:$0xff]
        %v5441 = vld [vmem:[%s1617 + $0x9] sm:$0xff]
        %v5442 = vld [vmem:[%s1617 + $0x19] sm:$0xff]
        %v5443 = vld [vmem:[%s1617 + $0x21] sm:$0xff]
        %v5444 = vld [vmem:[%s1617 + $0x31] sm:$0xff]
        %v5445 = vld [vmem:[%s1617 + $0x39] sm:$0xff]
        %v5446 = vld [vmem:[%s1617 + $0x49] sm:$0xff]
        %v5447 = vld [vmem:[%s1617 + $0x51] sm:$0xff]
        %v5448 = vld [vmem:[%s1617 + $0x61] sm:$0xff]
        %v5449 = vld [vmem:[%s1617 + $0x69] sm:$0xff]
        %v5450 = vld [vmem:[%s1617 + $0x79] sm:$0xff]
        %v5451 = vld [vmem:[%s1617 + $0x81] sm:$0xff]
        %v5452 = vld [vmem:[%s1617 + $0x91] sm:$0xff]
        %v5453 = vld [vmem:[%s1617 + $0x99] sm:$0xff]
        %v5454 = vld [vmem:[%s1617 + $0xa9] sm:$0xff]
        %v5455 = vld [vmem:[%s1617 + $0xb1] sm:$0xff]
        %v5456 = vld [vmem:[%s1617 + $0xc1] sm:$0xff]
        %v5457 = vld [vmem:[%s1617 + $0xc9] sm:$0xff]
        %v5458 = vld [vmem:[%s1617 + $0xd9] sm:$0xff]
        %v5459 = vld [vmem:[%s1617 + $0xe1] sm:$0xff]
        %v5460 = vld [vmem:[%s1617 + $0xf1] sm:$0xff]
        %v5461 = vld [vmem:[%s1617 + $0xf9] sm:$0xff]
        %v5462 = vld [vmem:[%s1617 + $0x109] sm:$0xff]
        %v5463 = vld [vmem:[%s1617 + $0x111] sm:$0xff]
        %v5464 = vld [vmem:[%s1617 + $0x121] sm:$0xff]
        %v5465 = vld [vmem:[%s1617 + $0x129] sm:$0xff]
        %v5466 = vld [vmem:[%s1617 + $0x139] sm:$0xff]
        %v5467 = vld [vmem:[%s1617 + $0x141] sm:$0xff]
        %v5468 = vld [vmem:[%s1617 + $0x151] sm:$0xff]
        %v5469 = vld [vmem:[%s1617 + $0x159] sm:$0xff]
        %v5470 = vld [vmem:[%s1617 + $0x169] sm:$0xff]
        %v5471 = vld [vmem:[%s1617 + $0x171] sm:$0xff]
        %5504 = vrot.lane.b32.xlu0 %v5440, 8
        %v5505 = vpop.permute.xlu0 %5504
        %5506 = vrot.lane.b32.xlu0 %v5441, 8
        %v5507 = vpop.permute.xlu0 %5506
        %5508 = vrot.lane.b32.xlu0 %v5442, 8
        %v5509 = vpop.permute.xlu0 %5508
        %5510 = vrot.lane.b32.xlu0 %v5443, 8
        %v5511 = vpop.permute.xlu0 %5510
        %5512 = vrot.lane.b32.xlu0 %v5444, 8
        %v5513 = vpop.permute.xlu0 %5512
        %5514 = vrot.lane.b32.xlu0 %v5445, 8
        %v5515 = vpop.permute.xlu0 %5514
        %5516 = vrot.lane.b32.xlu0 %v5446, 8
        %v5517 = vpop.permute.xlu0 %5516
        %5518 = vrot.lane.b32.xlu0 %v5447, 8
        %v5519 = vpop.permute.xlu0 %5518
        %5520 = vrot.lane.b32.xlu0 %v5448, 8
        %v5521 = vpop.permute.xlu0 %5520
        %5522 = vrot.lane.b32.xlu0 %v5449, 8
        %v5523 = vpop.permute.xlu0 %5522
        %5524 = vrot.lane.b32.xlu0 %v5450, 8
        %v5525 = vpop.permute.xlu0 %5524
        %5526 = vrot.lane.b32.xlu0 %v5451, 8
        %v5527 = vpop.permute.xlu0 %5526
        %5528 = vrot.lane.b32.xlu0 %v5452, 8
        %v5529 = vpop.permute.xlu0 %5528
        %5530 = vrot.lane.b32.xlu0 %v5453, 8
        %v5531 = vpop.permute.xlu0 %5530
        %5532 = vrot.lane.b32.xlu0 %v5454, 8
        %v5533 = vpop.permute.xlu0 %5532
        %5534 = vrot.lane.b32.xlu0 %v5455, 8
        %v5535 = vpop.permute.xlu0 %5534
        %5536 = vrot.lane.b32.xlu0 %v5456, 8
        %v5537 = vpop.permute.xlu0 %5536
        %5538 = vrot.lane.b32.xlu0 %v5457, 8
        %v5539 = vpop.permute.xlu0 %5538
        %5540 = vrot.lane.b32.xlu0 %v5458, 8
        %v5541 = vpop.permute.xlu0 %5540
        %5542 = vrot.lane.b32.xlu0 %v5459, 8
        %v5543 = vpop.permute.xlu0 %5542
        %5544 = vrot.lane.b32.xlu0 %v5460, 8
        %v5545 = vpop.permute.xlu0 %5544
        %5546 = vrot.lane.b32.xlu0 %v5461, 8
        %v5547 = vpop.permute.xlu0 %5546
        %5548 = vrot.lane.b32.xlu0 %v5462, 8
        %v5549 = vpop.permute.xlu0 %5548
        %5550 = vrot.lane.b32.xlu0 %v5463, 8
        %v5551 = vpop.permute.xlu0 %5550
        %5552 = vrot.lane.b32.xlu0 %v5464, 8
        %v5553 = vpop.permute.xlu0 %5552
        %5554 = vrot.lane.b32.xlu0 %v5465, 8
        %v5555 = vpop.permute.xlu0 %5554
        %5556 = vrot.lane.b32.xlu0 %v5466, 8
        %v5557 = vpop.permute.xlu0 %5556
        %5558 = vrot.lane.b32.xlu0 %v5467, 8
        %v5559 = vpop.permute.xlu0 %5558
        %5560 = vrot.lane.b32.xlu0 %v5468, 8
        %v5561 = vpop.permute.xlu0 %5560
        %5562 = vrot.lane.b32.xlu0 %v5469, 8
        %v5563 = vpop.permute.xlu0 %5562
        %5564 = vrot.lane.b32.xlu0 %v5470, 8
        %v5565 = vpop.permute.xlu0 %5564
        %5566 = vrot.lane.b32.xlu0 %v5471, 8
        %v5567 = vpop.permute.xlu0 %5566
        %5600 = vst.msk [vmem:[#allocation3] sm:$0xff] %vm1581, %v5505
        %5601 = vst.msk [vmem:[#allocation3 + $0x8] sm:$0xff] %vm1581, %v5507
        %5602 = vst.msk [vmem:[#allocation3 + $0x10] sm:$0xff] %vm1581, %v5509
        %5603 = vst.msk [vmem:[#allocation3 + $0x18] sm:$0xff] %vm1581, %v5511
        %5604 = vst.msk [vmem:[#allocation3 + $0x20] sm:$0xff] %vm1581, %v5513
        %5605 = vst.msk [vmem:[#allocation3 + $0x28] sm:$0xff] %vm1581, %v5515
        %5606 = vst.msk [vmem:[#allocation3 + $0x30] sm:$0xff] %vm1581, %v5517
        %5607 = vst.msk [vmem:[#allocation3 + $0x38] sm:$0xff] %vm1581, %v5519
        %5608 = vst.msk [vmem:[#allocation3 + $0x40] sm:$0xff] %vm1581, %v5521
        %5609 = vst.msk [vmem:[#allocation3 + $0x48] sm:$0xff] %vm1581, %v5523
        %5610 = vst.msk [vmem:[#allocation3 + $0x50] sm:$0xff] %vm1581, %v5525
        %5611 = vst.msk [vmem:[#allocation3 + $0x58] sm:$0xff] %vm1581, %v5527
        %5612 = vst.msk [vmem:[#allocation3 + $0x60] sm:$0xff] %vm1581, %v5529
        %5613 = vst.msk [vmem:[#allocation3 + $0x68] sm:$0xff] %vm1581, %v5531
        %5614 = vst.msk [vmem:[#allocation3 + $0x70] sm:$0xff] %vm1581, %v5533
        %5615 = vst.msk [vmem:[#allocation3 + $0x78] sm:$0xff] %vm1581, %v5535
        %5616 = vst.msk [vmem:[#allocation3 + $0x80] sm:$0xff] %vm1581, %v5537
        %5617 = vst.msk [vmem:[#allocation3 + $0x88] sm:$0xff] %vm1581, %v5539
        %5618 = vst.msk [vmem:[#allocation3 + $0x90] sm:$0xff] %vm1581, %v5541
        %5619 = vst.msk [vmem:[#allocation3 + $0x98] sm:$0xff] %vm1581, %v5543
        %5620 = vst.msk [vmem:[#allocation3 + $0xa0] sm:$0xff] %vm1581, %v5545
        %5621 = vst.msk [vmem:[#allocation3 + $0xa8] sm:$0xff] %vm1581, %v5547
        %5622 = vst.msk [vmem:[#allocation3 + $0xb0] sm:$0xff] %vm1581, %v5549
        %5623 = vst.msk [vmem:[#allocation3 + $0xb8] sm:$0xff] %vm1581, %v5551
        %5624 = vst.msk [vmem:[#allocation3 + $0xc0] sm:$0xff] %vm1581, %v5553
        %5625 = vst.msk [vmem:[#allocation3 + $0xc8] sm:$0xff] %vm1581, %v5555
        %5626 = vst.msk [vmem:[#allocation3 + $0xd0] sm:$0xff] %vm1581, %v5557
        %5627 = vst.msk [vmem:[#allocation3 + $0xd8] sm:$0xff] %vm1581, %v5559
        %5628 = vst.msk [vmem:[#allocation3 + $0xe0] sm:$0xff] %vm1581, %v5561
        %5629 = vst.msk [vmem:[#allocation3 + $0xe8] sm:$0xff] %vm1581, %v5563
        %5630 = vst.msk [vmem:[#allocation3 + $0xf0] sm:$0xff] %vm1581, %v5565
        %5631 = vst.msk [vmem:[#allocation3 + $0xf8] sm:$0xff] %vm1581, %v5567
        %v5632 = vld [vmem:[%s2199] sm:$0xff]
        %v5633 = vld [vmem:[%s2199 + $0x8] sm:$0xff]
        %v5634 = vld [vmem:[%s2199 + $0x18] sm:$0xff]
        %v5635 = vld [vmem:[%s2199 + $0x20] sm:$0xff]
        %v5636 = vld [vmem:[%s2199 + $0x30] sm:$0xff]
        %v5637 = vld [vmem:[%s2199 + $0x38] sm:$0xff]
        %v5638 = vld [vmem:[%s2199 + $0x48] sm:$0xff]
        %v5639 = vld [vmem:[%s2199 + $0x50] sm:$0xff]
        %v5640 = vld [vmem:[%s2199 + $0x60] sm:$0xff]
        %v5641 = vld [vmem:[%s2199 + $0x68] sm:$0xff]
        %v5642 = vld [vmem:[%s2199 + $0x78] sm:$0xff]
        %v5643 = vld [vmem:[%s2199 + $0x80] sm:$0xff]
        %v5644 = vld [vmem:[%s2199 + $0x90] sm:$0xff]
        %v5645 = vld [vmem:[%s2199 + $0x98] sm:$0xff]
        %v5646 = vld [vmem:[%s2199 + $0xa8] sm:$0xff]
        %v5647 = vld [vmem:[%s2199 + $0xb0] sm:$0xff]
        %v5648 = vld [vmem:[%s2199 + $0xc0] sm:$0xff]
        %v5649 = vld [vmem:[%s2199 + $0xc8] sm:$0xff]
        %v5650 = vld [vmem:[%s2199 + $0xd8] sm:$0xff]
        %v5651 = vld [vmem:[%s2199 + $0xe0] sm:$0xff]
        %v5652 = vld [vmem:[%s2199 + $0xf0] sm:$0xff]
        %v5653 = vld [vmem:[%s2199 + $0xf8] sm:$0xff]
        %v5654 = vld [vmem:[%s2199 + $0x108] sm:$0xff]
        %v5655 = vld [vmem:[%s2199 + $0x110] sm:$0xff]
        %v5656 = vld [vmem:[%s2199 + $0x120] sm:$0xff]
        %v5657 = vld [vmem:[%s2199 + $0x128] sm:$0xff]
        %v5658 = vld [vmem:[%s2199 + $0x138] sm:$0xff]
        %v5659 = vld [vmem:[%s2199 + $0x140] sm:$0xff]
        %v5660 = vld [vmem:[%s2199 + $0x150] sm:$0xff]
        %v5661 = vld [vmem:[%s2199 + $0x158] sm:$0xff]
        %v5662 = vld [vmem:[%s2199 + $0x168] sm:$0xff]
        %v5663 = vld [vmem:[%s2199 + $0x170] sm:$0xff]
        %5696 = vrot.lane.b32.xlu0 %v5632, 12
        %v5697 = vpop.permute.xlu0 %5696
        %5698 = vrot.lane.b32.xlu0 %v5633, 12
        %v5699 = vpop.permute.xlu0 %5698
        %5700 = vrot.lane.b32.xlu0 %v5634, 12
        %v5701 = vpop.permute.xlu0 %5700
        %5702 = vrot.lane.b32.xlu0 %v5635, 12
        %v5703 = vpop.permute.xlu0 %5702
        %5704 = vrot.lane.b32.xlu0 %v5636, 12
        %v5705 = vpop.permute.xlu0 %5704
        %5706 = vrot.lane.b32.xlu0 %v5637, 12
        %v5707 = vpop.permute.xlu0 %5706
        %5708 = vrot.lane.b32.xlu0 %v5638, 12
        %v5709 = vpop.permute.xlu0 %5708
        %5710 = vrot.lane.b32.xlu0 %v5639, 12
        %v5711 = vpop.permute.xlu0 %5710
        %5712 = vrot.lane.b32.xlu0 %v5640, 12
        %v5713 = vpop.permute.xlu0 %5712
        %5714 = vrot.lane.b32.xlu0 %v5641, 12
        %v5715 = vpop.permute.xlu0 %5714
        %5716 = vrot.lane.b32.xlu0 %v5642, 12
        %v5717 = vpop.permute.xlu0 %5716
        %5718 = vrot.lane.b32.xlu0 %v5643, 12
        %v5719 = vpop.permute.xlu0 %5718
        %5720 = vrot.lane.b32.xlu0 %v5644, 12
        %v5721 = vpop.permute.xlu0 %5720
        %5722 = vrot.lane.b32.xlu0 %v5645, 12
        %v5723 = vpop.permute.xlu0 %5722
        %5724 = vrot.lane.b32.xlu0 %v5646, 12
        %v5725 = vpop.permute.xlu0 %5724
        %5726 = vrot.lane.b32.xlu0 %v5647, 12
        %v5727 = vpop.permute.xlu0 %5726
        %5728 = vrot.lane.b32.xlu0 %v5648, 12
        %v5729 = vpop.permute.xlu0 %5728
        %5730 = vrot.lane.b32.xlu0 %v5649, 12
        %v5731 = vpop.permute.xlu0 %5730
        %5732 = vrot.lane.b32.xlu0 %v5650, 12
        %v5733 = vpop.permute.xlu0 %5732
        %5734 = vrot.lane.b32.xlu0 %v5651, 12
        %v5735 = vpop.permute.xlu0 %5734
        %5736 = vrot.lane.b32.xlu0 %v5652, 12
        %v5737 = vpop.permute.xlu0 %5736
        %5738 = vrot.lane.b32.xlu0 %v5653, 12
        %v5739 = vpop.permute.xlu0 %5738
        %5740 = vrot.lane.b32.xlu0 %v5654, 12
        %v5741 = vpop.permute.xlu0 %5740
        %5742 = vrot.lane.b32.xlu0 %v5655, 12
        %v5743 = vpop.permute.xlu0 %5742
        %5744 = vrot.lane.b32.xlu0 %v5656, 12
        %v5745 = vpop.permute.xlu0 %5744
        %5746 = vrot.lane.b32.xlu0 %v5657, 12
        %v5747 = vpop.permute.xlu0 %5746
        %5748 = vrot.lane.b32.xlu0 %v5658, 12
        %v5749 = vpop.permute.xlu0 %5748
        %5750 = vrot.lane.b32.xlu0 %v5659, 12
        %v5751 = vpop.permute.xlu0 %5750
        %5752 = vrot.lane.b32.xlu0 %v5660, 12
        %v5753 = vpop.permute.xlu0 %5752
        %5754 = vrot.lane.b32.xlu0 %v5661, 12
        %v5755 = vpop.permute.xlu0 %5754
        %5756 = vrot.lane.b32.xlu0 %v5662, 12
        %v5757 = vpop.permute.xlu0 %5756
        %5758 = vrot.lane.b32.xlu0 %v5663, 12
        %v5759 = vpop.permute.xlu0 %5758
        %5792 = vst.msk [vmem:[#allocation3] sm:$0xff] %vm1778, %v5697
        %5793 = vst.msk [vmem:[#allocation3 + $0x8] sm:$0xff] %vm1778, %v5699
        %5794 = vst.msk [vmem:[#allocation3 + $0x10] sm:$0xff] %vm1778, %v5701
        %5795 = vst.msk [vmem:[#allocation3 + $0x18] sm:$0xff] %vm1778, %v5703
        %5796 = vst.msk [vmem:[#allocation3 + $0x20] sm:$0xff] %vm1778, %v5705
        %5797 = vst.msk [vmem:[#allocation3 + $0x28] sm:$0xff] %vm1778, %v5707
        %5798 = vst.msk [vmem:[#allocation3 + $0x30] sm:$0xff] %vm1778, %v5709
        %5799 = vst.msk [vmem:[#allocation3 + $0x38] sm:$0xff] %vm1778, %v5711
        %5800 = vst.msk [vmem:[#allocation3 + $0x40] sm:$0xff] %vm1778, %v5713
        %5801 = vst.msk [vmem:[#allocation3 + $0x48] sm:$0xff] %vm1778, %v5715
        %5802 = vst.msk [vmem:[#allocation3 + $0x50] sm:$0xff] %vm1778, %v5717
        %5803 = vst.msk [vmem:[#allocation3 + $0x58] sm:$0xff] %vm1778, %v5719
        %5804 = vst.msk [vmem:[#allocation3 + $0x60] sm:$0xff] %vm1778, %v5721
        %5805 = vst.msk [vmem:[#allocation3 + $0x68] sm:$0xff] %vm1778, %v5723
        %5806 = vst.msk [vmem:[#allocation3 + $0x70] sm:$0xff] %vm1778, %v5725
        %5807 = vst.msk [vmem:[#allocation3 + $0x78] sm:$0xff] %vm1778, %v5727
        %5808 = vst.msk [vmem:[#allocation3 + $0x80] sm:$0xff] %vm1778, %v5729
        %5809 = vst.msk [vmem:[#allocation3 + $0x88] sm:$0xff] %vm1778, %v5731
        %5810 = vst.msk [vmem:[#allocation3 + $0x90] sm:$0xff] %vm1778, %v5733
        %5811 = vst.msk [vmem:[#allocation3 + $0x98] sm:$0xff] %vm1778, %v5735
        %5812 = vst.msk [vmem:[#allocation3 + $0xa0] sm:$0xff] %vm1778, %v5737
        %5813 = vst.msk [vmem:[#allocation3 + $0xa8] sm:$0xff] %vm1778, %v5739
        %5814 = vst.msk [vmem:[#allocation3 + $0xb0] sm:$0xff] %vm1778, %v5741
        %5815 = vst.msk [vmem:[#allocation3 + $0xb8] sm:$0xff] %vm1778, %v5743
        %5816 = vst.msk [vmem:[#allocation3 + $0xc0] sm:$0xff] %vm1778, %v5745
        %5817 = vst.msk [vmem:[#allocation3 + $0xc8] sm:$0xff] %vm1778, %v5747
        %5818 = vst.msk [vmem:[#allocation3 + $0xd0] sm:$0xff] %vm1778, %v5749
        %5819 = vst.msk [vmem:[#allocation3 + $0xd8] sm:$0xff] %vm1778, %v5751
        %5820 = vst.msk [vmem:[#allocation3 + $0xe0] sm:$0xff] %vm1778, %v5753
        %5821 = vst.msk [vmem:[#allocation3 + $0xe8] sm:$0xff] %vm1778, %v5755
        %5822 = vst.msk [vmem:[#allocation3 + $0xf0] sm:$0xff] %vm1778, %v5757
        %5823 = vst.msk [vmem:[#allocation3 + $0xf8] sm:$0xff] %vm1778, %v5759
        %v5824 = vld [vmem:[%s2394 + $0x1] sm:$0xff]
        %v5825 = vld [vmem:[%s2394 + $0x9] sm:$0xff]
        %v5826 = vld [vmem:[%s2394 + $0x19] sm:$0xff]
        %v5827 = vld [vmem:[%s2394 + $0x21] sm:$0xff]
        %v5828 = vld [vmem:[%s2394 + $0x31] sm:$0xff]
        %v5829 = vld [vmem:[%s2394 + $0x39] sm:$0xff]
        %v5830 = vld [vmem:[%s2394 + $0x49] sm:$0xff]
        %v5831 = vld [vmem:[%s2394 + $0x51] sm:$0xff]
        %v5832 = vld [vmem:[%s2394 + $0x61] sm:$0xff]
        %v5833 = vld [vmem:[%s2394 + $0x69] sm:$0xff]
        %v5834 = vld [vmem:[%s2394 + $0x79] sm:$0xff]
        %v5835 = vld [vmem:[%s2394 + $0x81] sm:$0xff]
        %v5836 = vld [vmem:[%s2394 + $0x91] sm:$0xff]
        %v5837 = vld [vmem:[%s2394 + $0x99] sm:$0xff]
        %v5838 = vld [vmem:[%s2394 + $0xa9] sm:$0xff]
        %v5839 = vld [vmem:[%s2394 + $0xb1] sm:$0xff]
        %v5840 = vld [vmem:[%s2394 + $0xc1] sm:$0xff]
        %v5841 = vld [vmem:[%s2394 + $0xc9] sm:$0xff]
        %v5842 = vld [vmem:[%s2394 + $0xd9] sm:$0xff]
        %v5843 = vld [vmem:[%s2394 + $0xe1] sm:$0xff]
        %v5844 = vld [vmem:[%s2394 + $0xf1] sm:$0xff]
        %v5845 = vld [vmem:[%s2394 + $0xf9] sm:$0xff]
        %v5846 = vld [vmem:[%s2394 + $0x109] sm:$0xff]
        %v5847 = vld [vmem:[%s2394 + $0x111] sm:$0xff]
        %v5848 = vld [vmem:[%s2394 + $0x121] sm:$0xff]
        %v5849 = vld [vmem:[%s2394 + $0x129] sm:$0xff]
        %v5850 = vld [vmem:[%s2394 + $0x139] sm:$0xff]
        %v5851 = vld [vmem:[%s2394 + $0x141] sm:$0xff]
        %v5852 = vld [vmem:[%s2394 + $0x151] sm:$0xff]
        %v5853 = vld [vmem:[%s2394 + $0x159] sm:$0xff]
        %v5854 = vld [vmem:[%s2394 + $0x169] sm:$0xff]
        %v5855 = vld [vmem:[%s2394 + $0x171] sm:$0xff]
        %5888 = vrot.lane.b32.xlu0 %v5824, 16
        %v5889 = vpop.permute.xlu0 %5888
        %5890 = vrot.lane.b32.xlu0 %v5825, 16
        %v5891 = vpop.permute.xlu0 %5890
        %5892 = vrot.lane.b32.xlu0 %v5826, 16
        %v5893 = vpop.permute.xlu0 %5892
        %5894 = vrot.lane.b32.xlu0 %v5827, 16
        %v5895 = vpop.permute.xlu0 %5894
        %5896 = vrot.lane.b32.xlu0 %v5828, 16
        %v5897 = vpop.permute.xlu0 %5896
        %5898 = vrot.lane.b32.xlu0 %v5829, 16
        %v5899 = vpop.permute.xlu0 %5898
        %5900 = vrot.lane.b32.xlu0 %v5830, 16
        %v5901 = vpop.permute.xlu0 %5900
        %5902 = vrot.lane.b32.xlu0 %v5831, 16
        %v5903 = vpop.permute.xlu0 %5902
        %5904 = vrot.lane.b32.xlu0 %v5832, 16
        %v5905 = vpop.permute.xlu0 %5904
        %5906 = vrot.lane.b32.xlu0 %v5833, 16
        %v5907 = vpop.permute.xlu0 %5906
        %5908 = vrot.lane.b32.xlu0 %v5834, 16
        %v5909 = vpop.permute.xlu0 %5908
        %5910 = vrot.lane.b32.xlu0 %v5835, 16
        %v5911 = vpop.permute.xlu0 %5910
        %5912 = vrot.lane.b32.xlu0 %v5836, 16
        %v5913 = vpop.permute.xlu0 %5912
        %5914 = vrot.lane.b32.xlu0 %v5837, 16
        %v5915 = vpop.permute.xlu0 %5914
        %5916 = vrot.lane.b32.xlu0 %v5838, 16
        %v5917 = vpop.permute.xlu0 %5916
        %5918 = vrot.lane.b32.xlu0 %v5839, 16
        %v5919 = vpop.permute.xlu0 %5918
        %5920 = vrot.lane.b32.xlu0 %v5840, 16
        %v5921 = vpop.permute.xlu0 %5920
        %5922 = vrot.lane.b32.xlu0 %v5841, 16
        %v5923 = vpop.permute.xlu0 %5922
        %5924 = vrot.lane.b32.xlu0 %v5842, 16
        %v5925 = vpop.permute.xlu0 %5924
        %5926 = vrot.lane.b32.xlu0 %v5843, 16
        %v5927 = vpop.permute.xlu0 %5926
        %5928 = vrot.lane.b32.xlu0 %v5844, 16
        %v5929 = vpop.permute.xlu0 %5928
        %5930 = vrot.lane.b32.xlu0 %v5845, 16
        %v5931 = vpop.permute.xlu0 %5930
        %5932 = vrot.lane.b32.xlu0 %v5846, 16
        %v5933 = vpop.permute.xlu0 %5932
        %5934 = vrot.lane.b32.xlu0 %v5847, 16
        %v5935 = vpop.permute.xlu0 %5934
        %5936 = vrot.lane.b32.xlu0 %v5848, 16
        %v5937 = vpop.permute.xlu0 %5936
        %5938 = vrot.lane.b32.xlu0 %v5849, 16
        %v5939 = vpop.permute.xlu0 %5938
        %5940 = vrot.lane.b32.xlu0 %v5850, 16
        %v5941 = vpop.permute.xlu0 %5940
        %5942 = vrot.lane.b32.xlu0 %v5851, 16
        %v5943 = vpop.permute.xlu0 %5942
        %5944 = vrot.lane.b32.xlu0 %v5852, 16
        %v5945 = vpop.permute.xlu0 %5944
        %5946 = vrot.lane.b32.xlu0 %v5853, 16
        %v5947 = vpop.permute.xlu0 %5946
        %5948 = vrot.lane.b32.xlu0 %v5854, 16
        %v5949 = vpop.permute.xlu0 %5948
        %5950 = vrot.lane.b32.xlu0 %v5855, 16
        %v5951 = vpop.permute.xlu0 %5950
        %5984 = vst.msk [vmem:[#allocation3] sm:$0xff] %vm1972, %v5889
        %5985 = vst.msk [vmem:[#allocation3 + $0x8] sm:$0xff] %vm1972, %v5891
        %5986 = vst.msk [vmem:[#allocation3 + $0x10] sm:$0xff] %vm1972, %v5893
        %5987 = vst.msk [vmem:[#allocation3 + $0x18] sm:$0xff] %vm1972, %v5895
        %5988 = vst.msk [vmem:[#allocation3 + $0x20] sm:$0xff] %vm1972, %v5897
        %5989 = vst.msk [vmem:[#allocation3 + $0x28] sm:$0xff] %vm1972, %v5899
        %5990 = vst.msk [vmem:[#allocation3 + $0x30] sm:$0xff] %vm1972, %v5901
        %5991 = vst.msk [vmem:[#allocation3 + $0x38] sm:$0xff] %vm1972, %v5903
        %5992 = vst.msk [vmem:[#allocation3 + $0x40] sm:$0xff] %vm1972, %v5905
        %5993 = vst.msk [vmem:[#allocation3 + $0x48] sm:$0xff] %vm1972, %v5907
        %5994 = vst.msk [vmem:[#allocation3 + $0x50] sm:$0xff] %vm1972, %v5909
        %5995 = vst.msk [vmem:[#allocation3 + $0x58] sm:$0xff] %vm1972, %v5911
        %5996 = vst.msk [vmem:[#allocation3 + $0x60] sm:$0xff] %vm1972, %v5913
        %5997 = vst.msk [vmem:[#allocation3 + $0x68] sm:$0xff] %vm1972, %v5915
        %5998 = vst.msk [vmem:[#allocation3 + $0x70] sm:$0xff] %vm1972, %v5917
        %5999 = vst.msk [vmem:[#allocation3 + $0x78] sm:$0xff] %vm1972, %v5919
        %6000 = vst.msk [vmem:[#allocation3 + $0x80] sm:$0xff] %vm1972, %v5921
        %6001 = vst.msk [vmem:[#allocation3 + $0x88] sm:$0xff] %vm1972, %v5923
        %6002 = vst.msk [vmem:[#allocation3 + $0x90] sm:$0xff] %vm1972, %v5925
        %6003 = vst.msk [vmem:[#allocation3 + $0x98] sm:$0xff] %vm1972, %v5927
        %6004 = vst.msk [vmem:[#allocation3 + $0xa0] sm:$0xff] %vm1972, %v5929
        %6005 = vst.msk [vmem:[#allocation3 + $0xa8] sm:$0xff] %vm1972, %v5931
        %6006 = vst.msk [vmem:[#allocation3 + $0xb0] sm:$0xff] %vm1972, %v5933
        %6007 = vst.msk [vmem:[#allocation3 + $0xb8] sm:$0xff] %vm1972, %v5935
        %6008 = vst.msk [vmem:[#allocation3 + $0xc0] sm:$0xff] %vm1972, %v5937
        %6009 = vst.msk [vmem:[#allocation3 + $0xc8] sm:$0xff] %vm1972, %v5939
        %6010 = vst.msk [vmem:[#allocation3 + $0xd0] sm:$0xff] %vm1972, %v5941
        %6011 = vst.msk [vmem:[#allocation3 + $0xd8] sm:$0xff] %vm1972, %v5943
        %6012 = vst.msk [vmem:[#allocation3 + $0xe0] sm:$0xff] %vm1972, %v5945
        %6013 = vst.msk [vmem:[#allocation3 + $0xe8] sm:$0xff] %vm1972, %v5947
        %6014 = vst.msk [vmem:[#allocation3 + $0xf0] sm:$0xff] %vm1972, %v5949
        %6015 = vst.msk [vmem:[#allocation3 + $0xf8] sm:$0xff] %vm1972, %v5951
        %v6016 = vld [vmem:[%s2199 + $0x1] sm:$0xff]
        %v6017 = vld [vmem:[%s2199 + $0x9] sm:$0xff]
        %v6018 = vld [vmem:[%s2199 + $0x19] sm:$0xff]
        %v6019 = vld [vmem:[%s2199 + $0x21] sm:$0xff]
        %v6020 = vld [vmem:[%s2199 + $0x31] sm:$0xff]
        %v6021 = vld [vmem:[%s2199 + $0x39] sm:$0xff]
        %v6022 = vld [vmem:[%s2199 + $0x49] sm:$0xff]
        %v6023 = vld [vmem:[%s2199 + $0x51] sm:$0xff]
        %v6024 = vld [vmem:[%s2199 + $0x61] sm:$0xff]
        %v6025 = vld [vmem:[%s2199 + $0x69] sm:$0xff]
        %v6026 = vld [vmem:[%s2199 + $0x79] sm:$0xff]
        %v6027 = vld [vmem:[%s2199 + $0x81] sm:$0xff]
        %v6028 = vld [vmem:[%s2199 + $0x91] sm:$0xff]
        %v6029 = vld [vmem:[%s2199 + $0x99] sm:$0xff]
        %v6030 = vld [vmem:[%s2199 + $0xa9] sm:$0xff]
        %v6031 = vld [vmem:[%s2199 + $0xb1] sm:$0xff]
        %v6032 = vld [vmem:[%s2199 + $0xc1] sm:$0xff]
        %v6033 = vld [vmem:[%s2199 + $0xc9] sm:$0xff]
        %v6034 = vld [vmem:[%s2199 + $0xd9] sm:$0xff]
        %v6035 = vld [vmem:[%s2199 + $0xe1] sm:$0xff]
        %v6036 = vld [vmem:[%s2199 + $0xf1] sm:$0xff]
        %v6037 = vld [vmem:[%s2199 + $0xf9] sm:$0xff]
        %v6038 = vld [vmem:[%s2199 + $0x109] sm:$0xff]
        %v6039 = vld [vmem:[%s2199 + $0x111] sm:$0xff]
        %v6040 = vld [vmem:[%s2199 + $0x121] sm:$0xff]
        %v6041 = vld [vmem:[%s2199 + $0x129] sm:$0xff]
        %v6042 = vld [vmem:[%s2199 + $0x139] sm:$0xff]
        %v6043 = vld [vmem:[%s2199 + $0x141] sm:$0xff]
        %v6044 = vld [vmem:[%s2199 + $0x151] sm:$0xff]
        %v6045 = vld [vmem:[%s2199 + $0x159] sm:$0xff]
        %v6046 = vld [vmem:[%s2199 + $0x169] sm:$0xff]
        %v6047 = vld [vmem:[%s2199 + $0x171] sm:$0xff]
        %6080 = vrot.lane.b32.xlu0 %v6016, 20
        %v6081 = vpop.permute.xlu0 %6080
        %6082 = vrot.lane.b32.xlu0 %v6017, 20
        %v6083 = vpop.permute.xlu0 %6082
        %6084 = vrot.lane.b32.xlu0 %v6018, 20
        %v6085 = vpop.permute.xlu0 %6084
        %6086 = vrot.lane.b32.xlu0 %v6019, 20
        %v6087 = vpop.permute.xlu0 %6086
        %6088 = vrot.lane.b32.xlu0 %v6020, 20
        %v6089 = vpop.permute.xlu0 %6088
        %6090 = vrot.lane.b32.xlu0 %v6021, 20
        %v6091 = vpop.permute.xlu0 %6090
        %6092 = vrot.lane.b32.xlu0 %v6022, 20
        %v6093 = vpop.permute.xlu0 %6092
        %6094 = vrot.lane.b32.xlu0 %v6023, 20
        %v6095 = vpop.permute.xlu0 %6094
        %6096 = vrot.lane.b32.xlu0 %v6024, 20
        %v6097 = vpop.permute.xlu0 %6096
        %6098 = vrot.lane.b32.xlu0 %v6025, 20
        %v6099 = vpop.permute.xlu0 %6098
        %6100 = vrot.lane.b32.xlu0 %v6026, 20
        %v6101 = vpop.permute.xlu0 %6100
        %6102 = vrot.lane.b32.xlu0 %v6027, 20
        %v6103 = vpop.permute.xlu0 %6102
        %6104 = vrot.lane.b32.xlu0 %v6028, 20
        %v6105 = vpop.permute.xlu0 %6104
        %6106 = vrot.lane.b32.xlu0 %v6029, 20
        %v6107 = vpop.permute.xlu0 %6106
        %6108 = vrot.lane.b32.xlu0 %v6030, 20
        %v6109 = vpop.permute.xlu0 %6108
        %6110 = vrot.lane.b32.xlu0 %v6031, 20
        %v6111 = vpop.permute.xlu0 %6110
        %6112 = vrot.lane.b32.xlu0 %v6032, 20
        %v6113 = vpop.permute.xlu0 %6112
        %6114 = vrot.lane.b32.xlu0 %v6033, 20
        %v6115 = vpop.permute.xlu0 %6114
        %6116 = vrot.lane.b32.xlu0 %v6034, 20
        %v6117 = vpop.permute.xlu0 %6116
        %6118 = vrot.lane.b32.xlu0 %v6035, 20
        %v6119 = vpop.permute.xlu0 %6118
        %6120 = vrot.lane.b32.xlu0 %v6036, 20
        %v6121 = vpop.permute.xlu0 %6120
        %6122 = vrot.lane.b32.xlu0 %v6037, 20
        %v6123 = vpop.permute.xlu0 %6122
        %6124 = vrot.lane.b32.xlu0 %v6038, 20
        %v6125 = vpop.permute.xlu0 %6124
        %6126 = vrot.lane.b32.xlu0 %v6039, 20
        %v6127 = vpop.permute.xlu0 %6126
        %6128 = vrot.lane.b32.xlu0 %v6040, 20
        %v6129 = vpop.permute.xlu0 %6128
        %6130 = vrot.lane.b32.xlu0 %v6041, 20
        %v6131 = vpop.permute.xlu0 %6130
        %6132 = vrot.lane.b32.xlu0 %v6042, 20
        %v6133 = vpop.permute.xlu0 %6132
        %6134 = vrot.lane.b32.xlu0 %v6043, 20
        %v6135 = vpop.permute.xlu0 %6134
        %6136 = vrot.lane.b32.xlu0 %v6044, 20
        %v6137 = vpop.permute.xlu0 %6136
        %6138 = vrot.lane.b32.xlu0 %v6045, 20
        %v6139 = vpop.permute.xlu0 %6138
        %6140 = vrot.lane.b32.xlu0 %v6046, 20
        %v6141 = vpop.permute.xlu0 %6140
        %6142 = vrot.lane.b32.xlu0 %v6047, 20
        %v6143 = vpop.permute.xlu0 %6142
        %6176 = vst.msk [vmem:[#allocation3] sm:$0xff] %vm2165, %v6081
        %6177 = vst.msk [vmem:[#allocation3 + $0x8] sm:$0xff] %vm2165, %v6083
        %6178 = vst.msk [vmem:[#allocation3 + $0x10] sm:$0xff] %vm2165, %v6085
        %6179 = vst.msk [vmem:[#allocation3 + $0x18] sm:$0xff] %vm2165, %v6087
        %6180 = vst.msk [vmem:[#allocation3 + $0x20] sm:$0xff] %vm2165, %v6089
        %6181 = vst.msk [vmem:[#allocation3 + $0x28] sm:$0xff] %vm2165, %v6091
        %6182 = vst.msk [vmem:[#allocation3 + $0x30] sm:$0xff] %vm2165, %v6093
        %6183 = vst.msk [vmem:[#allocation3 + $0x38] sm:$0xff] %vm2165, %v6095
        %6184 = vst.msk [vmem:[#allocation3 + $0x40] sm:$0xff] %vm2165, %v6097
        %6185 = vst.msk [vmem:[#allocation3 + $0x48] sm:$0xff] %vm2165, %v6099
        %6186 = vst.msk [vmem:[#allocation3 + $0x50] sm:$0xff] %vm2165, %v6101
        %6187 = vst.msk [vmem:[#allocation3 + $0x58] sm:$0xff] %vm2165, %v6103
        %6188 = vst.msk [vmem:[#allocation3 + $0x60] sm:$0xff] %vm2165, %v6105
        %6189 = vst.msk [vmem:[#allocation3 + $0x68] sm:$0xff] %vm2165, %v6107
        %6190 = vst.msk [vmem:[#allocation3 + $0x70] sm:$0xff] %vm2165, %v6109
        %6191 = vst.msk [vmem:[#allocation3 + $0x78] sm:$0xff] %vm2165, %v6111
        %6192 = vst.msk [vmem:[#allocation3 + $0x80] sm:$0xff] %vm2165, %v6113
        %6193 = vst.msk [vmem:[#allocation3 + $0x88] sm:$0xff] %vm2165, %v6115
        %6194 = vst.msk [vmem:[#allocation3 + $0x90] sm:$0xff] %vm2165, %v6117
        %6195 = vst.msk [vmem:[#allocation3 + $0x98] sm:$0xff] %vm2165, %v6119
        %6196 = vst.msk [vmem:[#allocation3 + $0xa0] sm:$0xff] %vm2165, %v6121
        %6197 = vst.msk [vmem:[#allocation3 + $0xa8] sm:$0xff] %vm2165, %v6123
        %6198 = vst.msk [vmem:[#allocation3 + $0xb0] sm:$0xff] %vm2165, %v6125
        %6199 = vst.msk [vmem:[#allocation3 + $0xb8] sm:$0xff] %vm2165, %v6127
        %6200 = vst.msk [vmem:[#allocation3 + $0xc0] sm:$0xff] %vm2165, %v6129
        %6201 = vst.msk [vmem:[#allocation3 + $0xc8] sm:$0xff] %vm2165, %v6131
        %6202 = vst.msk [vmem:[#allocation3 + $0xd0] sm:$0xff] %vm2165, %v6133
        %6203 = vst.msk [vmem:[#allocation3 + $0xd8] sm:$0xff] %vm2165, %v6135
        %6204 = vst.msk [vmem:[#allocation3 + $0xe0] sm:$0xff] %vm2165, %v6137
        %6205 = vst.msk [vmem:[#allocation3 + $0xe8] sm:$0xff] %vm2165, %v6139
        %6206 = vst.msk [vmem:[#allocation3 + $0xf0] sm:$0xff] %vm2165, %v6141
        %6207 = vst.msk [vmem:[#allocation3 + $0xf8] sm:$0xff] %vm2165, %v6143
        %s6208 = sadd.s32 %s1157, 2
        %s6209 = smul.u32 %s6208, 24
        %s6210 = sadd.s32 %s6209, 432
        %s6211 = scalar_lea.vmem [#allocation2], %s6210
        %v6212 = vld [vmem:[%s6211] sm:$0xff]
        %v6213 = vld [vmem:[%s6211 + $0x8] sm:$0xff]
        %v6214 = vld [vmem:[%s6211 + $0x18] sm:$0xff]
        %v6215 = vld [vmem:[%s6211 + $0x20] sm:$0xff]
        %v6216 = vld [vmem:[%s6211 + $0x30] sm:$0xff]
        %v6217 = vld [vmem:[%s6211 + $0x38] sm:$0xff]
        %v6218 = vld [vmem:[%s6211 + $0x48] sm:$0xff]
        %v6219 = vld [vmem:[%s6211 + $0x50] sm:$0xff]
        %v6220 = vld [vmem:[%s6211 + $0x60] sm:$0xff]
        %v6221 = vld [vmem:[%s6211 + $0x68] sm:$0xff]
        %v6222 = vld [vmem:[%s6211 + $0x78] sm:$0xff]
        %v6223 = vld [vmem:[%s6211 + $0x80] sm:$0xff]
        %v6224 = vld [vmem:[%s6211 + $0x90] sm:$0xff]
        %v6225 = vld [vmem:[%s6211 + $0x98] sm:$0xff]
        %v6226 = vld [vmem:[%s6211 + $0xa8] sm:$0xff]
        %v6227 = vld [vmem:[%s6211 + $0xb0] sm:$0xff]
        %v6228 = vld [vmem:[%s6211 + $0xc0] sm:$0xff]
        %v6229 = vld [vmem:[%s6211 + $0xc8] sm:$0xff]
        %v6230 = vld [vmem:[%s6211 + $0xd8] sm:$0xff]
        %v6231 = vld [vmem:[%s6211 + $0xe0] sm:$0xff]
        %v6232 = vld [vmem:[%s6211 + $0xf0] sm:$0xff]
        %v6233 = vld [vmem:[%s6211 + $0xf8] sm:$0xff]
        %v6234 = vld [vmem:[%s6211 + $0x108] sm:$0xff]
        %v6235 = vld [vmem:[%s6211 + $0x110] sm:$0xff]
        %v6236 = vld [vmem:[%s6211 + $0x120] sm:$0xff]
        %v6237 = vld [vmem:[%s6211 + $0x128] sm:$0xff]
        %v6238 = vld [vmem:[%s6211 + $0x138] sm:$0xff]
        %v6239 = vld [vmem:[%s6211 + $0x140] sm:$0xff]
        %v6240 = vld [vmem:[%s6211 + $0x150] sm:$0xff]
        %v6241 = vld [vmem:[%s6211 + $0x158] sm:$0xff]
        %v6242 = vld [vmem:[%s6211 + $0x168] sm:$0xff]
        %v6243 = vld [vmem:[%s6211 + $0x170] sm:$0xff]
        %6276 = vrot.lane.b32.xlu0 %v6212, 24
        %v6277 = vpop.permute.xlu0 %6276
        %6278 = vrot.lane.b32.xlu0 %v6213, 24
        %v6279 = vpop.permute.xlu0 %6278
        %6280 = vrot.lane.b32.xlu0 %v6214, 24
        %v6281 = vpop.permute.xlu0 %6280
        %6282 = vrot.lane.b32.xlu0 %v6215, 24
        %v6283 = vpop.permute.xlu0 %6282
        %6284 = vrot.lane.b32.xlu0 %v6216, 24
        %v6285 = vpop.permute.xlu0 %6284
        %6286 = vrot.lane.b32.xlu0 %v6217, 24
        %v6287 = vpop.permute.xlu0 %6286
        %6288 = vrot.lane.b32.xlu0 %v6218, 24
        %v6289 = vpop.permute.xlu0 %6288
        %6290 = vrot.lane.b32.xlu0 %v6219, 24
        %v6291 = vpop.permute.xlu0 %6290
        %6292 = vrot.lane.b32.xlu0 %v6220, 24
        %v6293 = vpop.permute.xlu0 %6292
        %6294 = vrot.lane.b32.xlu0 %v6221, 24
        %v6295 = vpop.permute.xlu0 %6294
        %6296 = vrot.lane.b32.xlu0 %v6222, 24
        %v6297 = vpop.permute.xlu0 %6296
        %6298 = vrot.lane.b32.xlu0 %v6223, 24
        %v6299 = vpop.permute.xlu0 %6298
        %6300 = vrot.lane.b32.xlu0 %v6224, 24
        %v6301 = vpop.permute.xlu0 %6300
        %6302 = vrot.lane.b32.xlu0 %v6225, 24
        %v6303 = vpop.permute.xlu0 %6302
        %6304 = vrot.lane.b32.xlu0 %v6226, 24
        %v6305 = vpop.permute.xlu0 %6304
        %6306 = vrot.lane.b32.xlu0 %v6227, 24
        %v6307 = vpop.permute.xlu0 %6306
        %6308 = vrot.lane.b32.xlu0 %v6228, 24
        %v6309 = vpop.permute.xlu0 %6308
        %6310 = vrot.lane.b32.xlu0 %v6229, 24
        %v6311 = vpop.permute.xlu0 %6310
        %6312 = vrot.lane.b32.xlu0 %v6230, 24
        %v6313 = vpop.permute.xlu0 %6312
        %6314 = vrot.lane.b32.xlu0 %v6231, 24
        %v6315 = vpop.permute.xlu0 %6314
        %6316 = vrot.lane.b32.xlu0 %v6232, 24
        %v6317 = vpop.permute.xlu0 %6316
        %6318 = vrot.lane.b32.xlu0 %v6233, 24
        %v6319 = vpop.permute.xlu0 %6318
        %6320 = vrot.lane.b32.xlu0 %v6234, 24
        %v6321 = vpop.permute.xlu0 %6320
        %6322 = vrot.lane.b32.xlu0 %v6235, 24
        %v6323 = vpop.permute.xlu0 %6322
        %6324 = vrot.lane.b32.xlu0 %v6236, 24
        %v6325 = vpop.permute.xlu0 %6324
        %6326 = vrot.lane.b32.xlu0 %v6237, 24
        %v6327 = vpop.permute.xlu0 %6326
        %6328 = vrot.lane.b32.xlu0 %v6238, 24
        %v6329 = vpop.permute.xlu0 %6328
        %6330 = vrot.lane.b32.xlu0 %v6239, 24
        %v6331 = vpop.permute.xlu0 %6330
        %6332 = vrot.lane.b32.xlu0 %v6240, 24
        %v6333 = vpop.permute.xlu0 %6332
        %6334 = vrot.lane.b32.xlu0 %v6241, 24
        %v6335 = vpop.permute.xlu0 %6334
        %6336 = vrot.lane.b32.xlu0 %v6242, 24
        %v6337 = vpop.permute.xlu0 %6336
        %6338 = vrot.lane.b32.xlu0 %v6243, 24
        %v6339 = vpop.permute.xlu0 %6338
        %6372 = vst.msk [vmem:[#allocation3] sm:$0xff] %vm2360, %v6277
        %6373 = vst.msk [vmem:[#allocation3 + $0x8] sm:$0xff] %vm2360, %v6279
        %6374 = vst.msk [vmem:[#allocation3 + $0x10] sm:$0xff] %vm2360, %v6281
        %6375 = vst.msk [vmem:[#allocation3 + $0x18] sm:$0xff] %vm2360, %v6283
        %6376 = vst.msk [vmem:[#allocation3 + $0x20] sm:$0xff] %vm2360, %v6285
        %6377 = vst.msk [vmem:[#allocation3 + $0x28] sm:$0xff] %vm2360, %v6287
        %6378 = vst.msk [vmem:[#allocation3 + $0x30] sm:$0xff] %vm2360, %v6289
        %6379 = vst.msk [vmem:[#allocation3 + $0x38] sm:$0xff] %vm2360, %v6291
        %6380 = vst.msk [vmem:[#allocation3 + $0x40] sm:$0xff] %vm2360, %v6293
        %6381 = vst.msk [vmem:[#allocation3 + $0x48] sm:$0xff] %vm2360, %v6295
        %6382 = vst.msk [vmem:[#allocation3 + $0x50] sm:$0xff] %vm2360, %v6297
        %6383 = vst.msk [vmem:[#allocation3 + $0x58] sm:$0xff] %vm2360, %v6299
        %6384 = vst.msk [vmem:[#allocation3 + $0x60] sm:$0xff] %vm2360, %v6301
        %6385 = vst.msk [vmem:[#allocation3 + $0x68] sm:$0xff] %vm2360, %v6303
        %6386 = vst.msk [vmem:[#allocation3 + $0x70] sm:$0xff] %vm2360, %v6305
        %6387 = vst.msk [vmem:[#allocation3 + $0x78] sm:$0xff] %vm2360, %v6307
        %6388 = vst.msk [vmem:[#allocation3 + $0x80] sm:$0xff] %vm2360, %v6309
        %6389 = vst.msk [vmem:[#allocation3 + $0x88] sm:$0xff] %vm2360, %v6311
        %6390 = vst.msk [vmem:[#allocation3 + $0x90] sm:$0xff] %vm2360, %v6313
        %6391 = vst.msk [vmem:[#allocation3 + $0x98] sm:$0xff] %vm2360, %v6315
        %6392 = vst.msk [vmem:[#allocation3 + $0xa0] sm:$0xff] %vm2360, %v6317
        %6393 = vst.msk [vmem:[#allocation3 + $0xa8] sm:$0xff] %vm2360, %v6319
        %6394 = vst.msk [vmem:[#allocation3 + $0xb0] sm:$0xff] %vm2360, %v6321
        %6395 = vst.msk [vmem:[#allocation3 + $0xb8] sm:$0xff] %vm2360, %v6323
        %6396 = vst.msk [vmem:[#allocation3 + $0xc0] sm:$0xff] %vm2360, %v6325
        %6397 = vst.msk [vmem:[#allocation3 + $0xc8] sm:$0xff] %vm2360, %v6327
        %6398 = vst.msk [vmem:[#allocation3 + $0xd0] sm:$0xff] %vm2360, %v6329
        %6399 = vst.msk [vmem:[#allocation3 + $0xd8] sm:$0xff] %vm2360, %v6331
        %6400 = vst.msk [vmem:[#allocation3 + $0xe0] sm:$0xff] %vm2360, %v6333
        %6401 = vst.msk [vmem:[#allocation3 + $0xe8] sm:$0xff] %vm2360, %v6335
        %6402 = vst.msk [vmem:[#allocation3 + $0xf0] sm:$0xff] %vm2360, %v6337
        %6403 = vst.msk [vmem:[#allocation3 + $0xf8] sm:$0xff] %vm2360, %v6339
        %s6404 = scalar_lea.vmem [#allocation2], %s6209
        %v6405 = vld [vmem:[%s6404 + $0x1] sm:$0xff]
        %v6406 = vld [vmem:[%s6404 + $0x9] sm:$0xff]
        %v6407 = vld [vmem:[%s6404 + $0x19] sm:$0xff]
        %v6408 = vld [vmem:[%s6404 + $0x21] sm:$0xff]
        %v6409 = vld [vmem:[%s6404 + $0x31] sm:$0xff]
        %v6410 = vld [vmem:[%s6404 + $0x39] sm:$0xff]
        %v6411 = vld [vmem:[%s6404 + $0x49] sm:$0xff]
        %v6412 = vld [vmem:[%s6404 + $0x51] sm:$0xff]
        %v6413 = vld [vmem:[%s6404 + $0x61] sm:$0xff]
        %v6414 = vld [vmem:[%s6404 + $0x69] sm:$0xff]
        %v6415 = vld [vmem:[%s6404 + $0x79] sm:$0xff]
        %v6416 = vld [vmem:[%s6404 + $0x81] sm:$0xff]
        %v6417 = vld [vmem:[%s6404 + $0x91] sm:$0xff]
        %v6418 = vld [vmem:[%s6404 + $0x99] sm:$0xff]
        %v6419 = vld [vmem:[%s6404 + $0xa9] sm:$0xff]
        %v6420 = vld [vmem:[%s6404 + $0xb1] sm:$0xff]
        %v6421 = vld [vmem:[%s6404 + $0xc1] sm:$0xff]
        %v6422 = vld [vmem:[%s6404 + $0xc9] sm:$0xff]
        %v6423 = vld [vmem:[%s6404 + $0xd9] sm:$0xff]
        %v6424 = vld [vmem:[%s6404 + $0xe1] sm:$0xff]
        %v6425 = vld [vmem:[%s6404 + $0xf1] sm:$0xff]
        %v6426 = vld [vmem:[%s6404 + $0xf9] sm:$0xff]
        %v6427 = vld [vmem:[%s6404 + $0x109] sm:$0xff]
        %v6428 = vld [vmem:[%s6404 + $0x111] sm:$0xff]
        %v6429 = vld [vmem:[%s6404 + $0x121] sm:$0xff]
        %v6430 = vld [vmem:[%s6404 + $0x129] sm:$0xff]
        %v6431 = vld [vmem:[%s6404 + $0x139] sm:$0xff]
        %v6432 = vld [vmem:[%s6404 + $0x141] sm:$0xff]
        %v6433 = vld [vmem:[%s6404 + $0x151] sm:$0xff]
        %v6434 = vld [vmem:[%s6404 + $0x159] sm:$0xff]
        %v6435 = vld [vmem:[%s6404 + $0x169] sm:$0xff]
        %v6436 = vld [vmem:[%s6404 + $0x171] sm:$0xff]
        %6469 = vrot.lane.b32.xlu0 %v6405, 28
        %v6470 = vpop.permute.xlu0 %6469
        %6471 = vrot.lane.b32.xlu0 %v6406, 28
        %v6472 = vpop.permute.xlu0 %6471
        %6473 = vrot.lane.b32.xlu0 %v6407, 28
        %v6474 = vpop.permute.xlu0 %6473
        %6475 = vrot.lane.b32.xlu0 %v6408, 28
        %v6476 = vpop.permute.xlu0 %6475
        %6477 = vrot.lane.b32.xlu0 %v6409, 28
        %v6478 = vpop.permute.xlu0 %6477
        %6479 = vrot.lane.b32.xlu0 %v6410, 28
        %v6480 = vpop.permute.xlu0 %6479
        %6481 = vrot.lane.b32.xlu0 %v6411, 28
        %v6482 = vpop.permute.xlu0 %6481
        %6483 = vrot.lane.b32.xlu0 %v6412, 28
        %v6484 = vpop.permute.xlu0 %6483
        %6485 = vrot.lane.b32.xlu0 %v6413, 28
        %v6486 = vpop.permute.xlu0 %6485
        %6487 = vrot.lane.b32.xlu0 %v6414, 28
        %v6488 = vpop.permute.xlu0 %6487
        %6489 = vrot.lane.b32.xlu0 %v6415, 28
        %v6490 = vpop.permute.xlu0 %6489
        %6491 = vrot.lane.b32.xlu0 %v6416, 28
        %v6492 = vpop.permute.xlu0 %6491
        %6493 = vrot.lane.b32.xlu0 %v6417, 28
        %v6494 = vpop.permute.xlu0 %6493
        %6495 = vrot.lane.b32.xlu0 %v6418, 28
        %v6496 = vpop.permute.xlu0 %6495
        %6497 = vrot.lane.b32.xlu0 %v6419, 28
        %v6498 = vpop.permute.xlu0 %6497
        %6499 = vrot.lane.b32.xlu0 %v6420, 28
        %v6500 = vpop.permute.xlu0 %6499
        %6501 = vrot.lane.b32.xlu0 %v6421, 28
        %v6502 = vpop.permute.xlu0 %6501
        %6503 = vrot.lane.b32.xlu0 %v6422, 28
        %v6504 = vpop.permute.xlu0 %6503
        %6505 = vrot.lane.b32.xlu0 %v6423, 28
        %v6506 = vpop.permute.xlu0 %6505
        %6507 = vrot.lane.b32.xlu0 %v6424, 28
        %v6508 = vpop.permute.xlu0 %6507
        %6509 = vrot.lane.b32.xlu0 %v6425, 28
        %v6510 = vpop.permute.xlu0 %6509
        %6511 = vrot.lane.b32.xlu0 %v6426, 28
        %v6512 = vpop.permute.xlu0 %6511
        %6513 = vrot.lane.b32.xlu0 %v6427, 28
        %v6514 = vpop.permute.xlu0 %6513
        %6515 = vrot.lane.b32.xlu0 %v6428, 28
        %v6516 = vpop.permute.xlu0 %6515
        %6517 = vrot.lane.b32.xlu0 %v6429, 28
        %v6518 = vpop.permute.xlu0 %6517
        %6519 = vrot.lane.b32.xlu0 %v6430, 28
        %v6520 = vpop.permute.xlu0 %6519
        %6521 = vrot.lane.b32.xlu0 %v6431, 28
        %v6522 = vpop.permute.xlu0 %6521
        %6523 = vrot.lane.b32.xlu0 %v6432, 28
        %v6524 = vpop.permute.xlu0 %6523
        %6525 = vrot.lane.b32.xlu0 %v6433, 28
        %v6526 = vpop.permute.xlu0 %6525
        %6527 = vrot.lane.b32.xlu0 %v6434, 28
        %v6528 = vpop.permute.xlu0 %6527
        %6529 = vrot.lane.b32.xlu0 %v6435, 28
        %v6530 = vpop.permute.xlu0 %6529
        %6531 = vrot.lane.b32.xlu0 %v6436, 28
        %v6532 = vpop.permute.xlu0 %6531
        %6565 = vst.msk [vmem:[#allocation3] sm:$0xff] %vm2555, %v6470
        %6566 = vst.msk [vmem:[#allocation3 + $0x8] sm:$0xff] %vm2555, %v6472
        %6567 = vst.msk [vmem:[#allocation3 + $0x10] sm:$0xff] %vm2555, %v6474
        %6568 = vst.msk [vmem:[#allocation3 + $0x18] sm:$0xff] %vm2555, %v6476
        %6569 = vst.msk [vmem:[#allocation3 + $0x20] sm:$0xff] %vm2555, %v6478
        %6570 = vst.msk [vmem:[#allocation3 + $0x28] sm:$0xff] %vm2555, %v6480
        %6571 = vst.msk [vmem:[#allocation3 + $0x30] sm:$0xff] %vm2555, %v6482
        %6572 = vst.msk [vmem:[#allocation3 + $0x38] sm:$0xff] %vm2555, %v6484
        %6573 = vst.msk [vmem:[#allocation3 + $0x40] sm:$0xff] %vm2555, %v6486
        %6574 = vst.msk [vmem:[#allocation3 + $0x48] sm:$0xff] %vm2555, %v6488
        %6575 = vst.msk [vmem:[#allocation3 + $0x50] sm:$0xff] %vm2555, %v6490
        %6576 = vst.msk [vmem:[#allocation3 + $0x58] sm:$0xff] %vm2555, %v6492
        %6577 = vst.msk [vmem:[#allocation3 + $0x60] sm:$0xff] %vm2555, %v6494
        %6578 = vst.msk [vmem:[#allocation3 + $0x68] sm:$0xff] %vm2555, %v6496
        %6579 = vst.msk [vmem:[#allocation3 + $0x70] sm:$0xff] %vm2555, %v6498
        %6580 = vst.msk [vmem:[#allocation3 + $0x78] sm:$0xff] %vm2555, %v6500
        %6581 = vst.msk [vmem:[#allocation3 + $0x80] sm:$0xff] %vm2555, %v6502
        %6582 = vst.msk [vmem:[#allocation3 + $0x88] sm:$0xff] %vm2555, %v6504
        %6583 = vst.msk [vmem:[#allocation3 + $0x90] sm:$0xff] %vm2555, %v6506
        %6584 = vst.msk [vmem:[#allocation3 + $0x98] sm:$0xff] %vm2555, %v6508
        %6585 = vst.msk [vmem:[#allocation3 + $0xa0] sm:$0xff] %vm2555, %v6510
        %6586 = vst.msk [vmem:[#allocation3 + $0xa8] sm:$0xff] %vm2555, %v6512
        %6587 = vst.msk [vmem:[#allocation3 + $0xb0] sm:$0xff] %vm2555, %v6514
        %6588 = vst.msk [vmem:[#allocation3 + $0xb8] sm:$0xff] %vm2555, %v6516
        %6589 = vst.msk [vmem:[#allocation3 + $0xc0] sm:$0xff] %vm2555, %v6518
        %6590 = vst.msk [vmem:[#allocation3 + $0xc8] sm:$0xff] %vm2555, %v6520
        %6591 = vst.msk [vmem:[#allocation3 + $0xd0] sm:$0xff] %vm2555, %v6522
        %6592 = vst.msk [vmem:[#allocation3 + $0xd8] sm:$0xff] %vm2555, %v6524
        %6593 = vst.msk [vmem:[#allocation3 + $0xe0] sm:$0xff] %vm2555, %v6526
        %6594 = vst.msk [vmem:[#allocation3 + $0xe8] sm:$0xff] %vm2555, %v6528
        %6595 = vst.msk [vmem:[#allocation3 + $0xf0] sm:$0xff] %vm2555, %v6530
        %6596 = vst.msk [vmem:[#allocation3 + $0xf8] sm:$0xff] %vm2555, %v6532
        %v6597 = vld [vmem:[%s6211 + $0x1] sm:$0xff]
        %v6598 = vld [vmem:[%s6211 + $0x9] sm:$0xff]
        %v6599 = vld [vmem:[%s6211 + $0x19] sm:$0xff]
        %v6600 = vld [vmem:[%s6211 + $0x21] sm:$0xff]
        %v6601 = vld [vmem:[%s6211 + $0x31] sm:$0xff]
        %v6602 = vld [vmem:[%s6211 + $0x39] sm:$0xff]
        %v6603 = vld [vmem:[%s6211 + $0x49] sm:$0xff]
        %v6604 = vld [vmem:[%s6211 + $0x51] sm:$0xff]
        %v6605 = vld [vmem:[%s6211 + $0x61] sm:$0xff]
        %v6606 = vld [vmem:[%s6211 + $0x69] sm:$0xff]
        %v6607 = vld [vmem:[%s6211 + $0x79] sm:$0xff]
        %v6608 = vld [vmem:[%s6211 + $0x81] sm:$0xff]
        %v6609 = vld [vmem:[%s6211 + $0x91] sm:$0xff]
        %v6610 = vld [vmem:[%s6211 + $0x99] sm:$0xff]
        %v6611 = vld [vmem:[%s6211 + $0xa9] sm:$0xff]
        %v6612 = vld [vmem:[%s6211 + $0xb1] sm:$0xff]
        %v6613 = vld [vmem:[%s6211 + $0xc1] sm:$0xff]
        %v6614 = vld [vmem:[%s6211 + $0xc9] sm:$0xff]
        %v6615 = vld [vmem:[%s6211 + $0xd9] sm:$0xff]
        %v6616 = vld [vmem:[%s6211 + $0xe1] sm:$0xff]
        %v6617 = vld [vmem:[%s6211 + $0xf1] sm:$0xff]
        %v6618 = vld [vmem:[%s6211 + $0xf9] sm:$0xff]
        %v6619 = vld [vmem:[%s6211 + $0x109] sm:$0xff]
        %v6620 = vld [vmem:[%s6211 + $0x111] sm:$0xff]
        %v6621 = vld [vmem:[%s6211 + $0x121] sm:$0xff]
        %v6622 = vld [vmem:[%s6211 + $0x129] sm:$0xff]
        %v6623 = vld [vmem:[%s6211 + $0x139] sm:$0xff]
        %v6624 = vld [vmem:[%s6211 + $0x141] sm:$0xff]
        %v6625 = vld [vmem:[%s6211 + $0x151] sm:$0xff]
        %v6626 = vld [vmem:[%s6211 + $0x159] sm:$0xff]
        %v6627 = vld [vmem:[%s6211 + $0x169] sm:$0xff]
        %v6628 = vld [vmem:[%s6211 + $0x171] sm:$0xff]
        %6661 = vrot.lane.b32.xlu0 %v6597, 32
        %v6662 = vpop.permute.xlu0 %6661
        %6663 = vrot.lane.b32.xlu0 %v6598, 32
        %v6664 = vpop.permute.xlu0 %6663
        %6665 = vrot.lane.b32.xlu0 %v6599, 32
        %v6666 = vpop.permute.xlu0 %6665
        %6667 = vrot.lane.b32.xlu0 %v6600, 32
        %v6668 = vpop.permute.xlu0 %6667
        %6669 = vrot.lane.b32.xlu0 %v6601, 32
        %v6670 = vpop.permute.xlu0 %6669
        %6671 = vrot.lane.b32.xlu0 %v6602, 32
        %v6672 = vpop.permute.xlu0 %6671
        %6673 = vrot.lane.b32.xlu0 %v6603, 32
        %v6674 = vpop.permute.xlu0 %6673
        %6675 = vrot.lane.b32.xlu0 %v6604, 32
        %v6676 = vpop.permute.xlu0 %6675
        %6677 = vrot.lane.b32.xlu0 %v6605, 32
        %v6678 = vpop.permute.xlu0 %6677
        %6679 = vrot.lane.b32.xlu0 %v6606, 32
        %v6680 = vpop.permute.xlu0 %6679
        %6681 = vrot.lane.b32.xlu0 %v6607, 32
        %v6682 = vpop.permute.xlu0 %6681
        %6683 = vrot.lane.b32.xlu0 %v6608, 32
        %v6684 = vpop.permute.xlu0 %6683
        %6685 = vrot.lane.b32.xlu0 %v6609, 32
        %v6686 = vpop.permute.xlu0 %6685
        %6687 = vrot.lane.b32.xlu0 %v6610, 32
        %v6688 = vpop.permute.xlu0 %6687
        %6689 = vrot.lane.b32.xlu0 %v6611, 32
        %v6690 = vpop.permute.xlu0 %6689
        %6691 = vrot.lane.b32.xlu0 %v6612, 32
        %v6692 = vpop.permute.xlu0 %6691
        %6693 = vrot.lane.b32.xlu0 %v6613, 32
        %v6694 = vpop.permute.xlu0 %6693
        %6695 = vrot.lane.b32.xlu0 %v6614, 32
        %v6696 = vpop.permute.xlu0 %6695
        %6697 = vrot.lane.b32.xlu0 %v6615, 32
        %v6698 = vpop.permute.xlu0 %6697
        %6699 = vrot.lane.b32.xlu0 %v6616, 32
        %v6700 = vpop.permute.xlu0 %6699
        %6701 = vrot.lane.b32.xlu0 %v6617, 32
        %v6702 = vpop.permute.xlu0 %6701
        %6703 = vrot.lane.b32.xlu0 %v6618, 32
        %v6704 = vpop.permute.xlu0 %6703
        %6705 = vrot.lane.b32.xlu0 %v6619, 32
        %v6706 = vpop.permute.xlu0 %6705
        %6707 = vrot.lane.b32.xlu0 %v6620, 32
        %v6708 = vpop.permute.xlu0 %6707
        %6709 = vrot.lane.b32.xlu0 %v6621, 32
        %v6710 = vpop.permute.xlu0 %6709
        %6711 = vrot.lane.b32.xlu0 %v6622, 32
        %v6712 = vpop.permute.xlu0 %6711
        %6713 = vrot.lane.b32.xlu0 %v6623, 32
        %v6714 = vpop.permute.xlu0 %6713
        %6715 = vrot.lane.b32.xlu0 %v6624, 32
        %v6716 = vpop.permute.xlu0 %6715
        %6717 = vrot.lane.b32.xlu0 %v6625, 32
        %v6718 = vpop.permute.xlu0 %6717
        %6719 = vrot.lane.b32.xlu0 %v6626, 32
        %v6720 = vpop.permute.xlu0 %6719
        %6721 = vrot.lane.b32.xlu0 %v6627, 32
        %v6722 = vpop.permute.xlu0 %6721
        %6723 = vrot.lane.b32.xlu0 %v6628, 32
        %v6724 = vpop.permute.xlu0 %6723
        %6757 = vst.msk [vmem:[#allocation3] sm:$0xff] %vm2748, %v6662
        %6758 = vst.msk [vmem:[#allocation3 + $0x8] sm:$0xff] %vm2748, %v6664
        %6759 = vst.msk [vmem:[#allocation3 + $0x10] sm:$0xff] %vm2748, %v6666
        %6760 = vst.msk [vmem:[#allocation3 + $0x18] sm:$0xff] %vm2748, %v6668
        %6761 = vst.msk [vmem:[#allocation3 + $0x20] sm:$0xff] %vm2748, %v6670
        %6762 = vst.msk [vmem:[#allocation3 + $0x28] sm:$0xff] %vm2748, %v6672
        %6763 = vst.msk [vmem:[#allocation3 + $0x30] sm:$0xff] %vm2748, %v6674
        %6764 = vst.msk [vmem:[#allocation3 + $0x38] sm:$0xff] %vm2748, %v6676
        %6765 = vst.msk [vmem:[#allocation3 + $0x40] sm:$0xff] %vm2748, %v6678
        %6766 = vst.msk [vmem:[#allocation3 + $0x48] sm:$0xff] %vm2748, %v6680
        %6767 = vst.msk [vmem:[#allocation3 + $0x50] sm:$0xff] %vm2748, %v6682
        %6768 = vst.msk [vmem:[#allocation3 + $0x58] sm:$0xff] %vm2748, %v6684
        %6769 = vst.msk [vmem:[#allocation3 + $0x60] sm:$0xff] %vm2748, %v6686
        %6770 = vst.msk [vmem:[#allocation3 + $0x68] sm:$0xff] %vm2748, %v6688
        %6771 = vst.msk [vmem:[#allocation3 + $0x70] sm:$0xff] %vm2748, %v6690
        %6772 = vst.msk [vmem:[#allocation3 + $0x78] sm:$0xff] %vm2748, %v6692
        %6773 = vst.msk [vmem:[#allocation3 + $0x80] sm:$0xff] %vm2748, %v6694
        %6774 = vst.msk [vmem:[#allocation3 + $0x88] sm:$0xff] %vm2748, %v6696
        %6775 = vst.msk [vmem:[#allocation3 + $0x90] sm:$0xff] %vm2748, %v6698
        %6776 = vst.msk [vmem:[#allocation3 + $0x98] sm:$0xff] %vm2748, %v6700
        %6777 = vst.msk [vmem:[#allocation3 + $0xa0] sm:$0xff] %vm2748, %v6702
        %6778 = vst.msk [vmem:[#allocation3 + $0xa8] sm:$0xff] %vm2748, %v6704
        %6779 = vst.msk [vmem:[#allocation3 + $0xb0] sm:$0xff] %vm2748, %v6706
        %6780 = vst.msk [vmem:[#allocation3 + $0xb8] sm:$0xff] %vm2748, %v6708
        %6781 = vst.msk [vmem:[#allocation3 + $0xc0] sm:$0xff] %vm2748, %v6710
        %6782 = vst.msk [vmem:[#allocation3 + $0xc8] sm:$0xff] %vm2748, %v6712
        %6783 = vst.msk [vmem:[#allocation3 + $0xd0] sm:$0xff] %vm2748, %v6714
        %6784 = vst.msk [vmem:[#allocation3 + $0xd8] sm:$0xff] %vm2748, %v6716
        %6785 = vst.msk [vmem:[#allocation3 + $0xe0] sm:$0xff] %vm2748, %v6718
        %6786 = vst.msk [vmem:[#allocation3 + $0xe8] sm:$0xff] %vm2748, %v6720
        %6787 = vst.msk [vmem:[#allocation3 + $0xf0] sm:$0xff] %vm2748, %v6722
        %6788 = vst.msk [vmem:[#allocation3 + $0xf8] sm:$0xff] %vm2748, %v6724
        %v6789 = vld [vmem:[#allocation3] sm:$0xff]
        %v6790 = vld [vmem:[#allocation3 + $0x8] sm:$0xff]
        %v6791 = vld [vmem:[#allocation3 + $0x10] sm:$0xff]
        %v6792 = vld [vmem:[#allocation3 + $0x18] sm:$0xff]
        %v6793 = vld [vmem:[#allocation3 + $0x20] sm:$0xff]
        %v6794 = vld [vmem:[#allocation3 + $0x28] sm:$0xff]
        %v6795 = vld [vmem:[#allocation3 + $0x30] sm:$0xff]
        %v6796 = vld [vmem:[#allocation3 + $0x38] sm:$0xff]
        %v6797 = vld [vmem:[#allocation3 + $0x40] sm:$0xff]
        %v6798 = vld [vmem:[#allocation3 + $0x48] sm:$0xff]
        %v6799 = vld [vmem:[#allocation3 + $0x50] sm:$0xff]
        %v6800 = vld [vmem:[#allocation3 + $0x58] sm:$0xff]
        %v6801 = vld [vmem:[#allocation3 + $0x60] sm:$0xff]
        %v6802 = vld [vmem:[#allocation3 + $0x68] sm:$0xff]
        %v6803 = vld [vmem:[#allocation3 + $0x70] sm:$0xff]
        %v6804 = vld [vmem:[#allocation3 + $0x78] sm:$0xff]
        %v6805 = vld [vmem:[#allocation3 + $0x80] sm:$0xff]
        %v6806 = vld [vmem:[#allocation3 + $0x88] sm:$0xff]
        %v6807 = vld [vmem:[#allocation3 + $0x90] sm:$0xff]
        %v6808 = vld [vmem:[#allocation3 + $0x98] sm:$0xff]
        %v6809 = vld [vmem:[#allocation3 + $0xa0] sm:$0xff]
        %v6810 = vld [vmem:[#allocation3 + $0xa8] sm:$0xff]
        %v6811 = vld [vmem:[#allocation3 + $0xb0] sm:$0xff]
        %v6812 = vld [vmem:[#allocation3 + $0xb8] sm:$0xff]
        %v6813 = vld [vmem:[#allocation3 + $0xc0] sm:$0xff]
        %v6814 = vld [vmem:[#allocation3 + $0xc8] sm:$0xff]
        %v6815 = vld [vmem:[#allocation3 + $0xd0] sm:$0xff]
        %v6816 = vld [vmem:[#allocation3 + $0xd8] sm:$0xff]
        %v6817 = vld [vmem:[#allocation3 + $0xe0] sm:$0xff]
        %v6818 = vld [vmem:[#allocation3 + $0xe8] sm:$0xff]
        %v6819 = vld [vmem:[#allocation3 + $0xf0] sm:$0xff]
        %v6820 = vld [vmem:[#allocation3 + $0xf8] sm:$0xff]
        %v6821 = vld [vmem:[%s4] sm:$0xff]
        %v6822 = vld [vmem:[%s4 + $0x8] sm:$0xff]
        %v6823 = vld [vmem:[%s4 + $0x10] sm:$0xff]
        %v6824 = vld [vmem:[%s4 + $0x18] sm:$0xff]
        %v6825 = vld [vmem:[%s4 + $0x20] sm:$0xf]
        %v6826 = vld [vmem:[%s5] sm:$0x1]
        %v6828 = vlaneseq
        %v6829 = vshrl.u32 %v6828, 7
        %v6830 = vsub.s32 0, %v6829
        %v6831 = vrot.slane %v6826, %v6830
        %v6834 = vsel %vm2825, %v6789, 0
        %v6837 = vsel %vm2825, %v6790, 0
        %v6840 = vsel %vm2825, %v6791, 0
        %v6843 = vsel %vm2825, %v6792, 0
        %v6846 = vsel %vm2825, %v6793, 0
        %v6849 = vsel %vm2825, %v6794, 0
        %v6852 = vsel %vm2825, %v6795, 0
        %v6855 = vsel %vm2825, %v6796, 0
        %v6858 = vsel %vm2825, %v6797, 0
        %v6861 = vsel %vm2825, %v6798, 0
        %v6864 = vsel %vm2825, %v6799, 0
        %v6867 = vsel %vm2825, %v6800, 0
        %v6870 = vsel %vm2825, %v6801, 0
        %v6873 = vsel %vm2825, %v6802, 0
        %v6876 = vsel %vm2825, %v6803, 0
        %v6879 = vsel %vm2825, %v6804, 0
        %v6882 = vsel %vm2825, %v6805, 0
        %v6885 = vsel %vm2825, %v6806, 0
        %v6888 = vsel %vm2825, %v6807, 0
        %v6891 = vsel %vm2825, %v6808, 0
        %v6894 = vsel %vm2825, %v6809, 0
        %v6897 = vsel %vm2825, %v6810, 0
        %v6900 = vsel %vm2825, %v6811, 0
        %v6903 = vsel %vm2825, %v6812, 0
        %v6906 = vsel %vm2825, %v6813, 0
        %v6909 = vsel %vm2825, %v6814, 0
        %v6912 = vsel %vm2825, %v6815, 0
        %v6915 = vsel %vm2825, %v6816, 0
        %v6918 = vsel %vm2825, %v6817, 0
        %v6921 = vsel %vm2825, %v6818, 0
        %v6924 = vsel %vm2825, %v6819, 0
        %v6927 = vsel %vm2825, %v6820, 0
        %v6930 = vsel %vm2922, %v6825, 0
        %6932 = vmatprep.subr.mxu0 0.0
        %6933 = vmatpush1.msra.mxu0 %v6821
        %6934 = vmatprep.subr.mxu0 0.0
        %6935 = vmatpush1.msra.mxu0 %v6822
        %6936 = vmatprep.subr.mxu0 0.0
        %6937 = vmatpush1.msra.mxu0 %v6823
        %6938 = vmatprep.subr.mxu0 0.0
        %6939 = vmatpush1.msra.mxu0 %v6824
        %6940 = vmatprep.subr.mxu0 0.0
        %6941 = vmatpush1.msra.mxu0 %v6930
        %6942 = vmatprep.subr.mxu0 0.0
        %6943 = vmatpush1.msra.mxu0 0.0
        %6944 = vmatprep.subr.mxu0 0.0
        %6945 = vmatpush1.msra.mxu0 0.0
        %6946 = vmatprep.subr.mxu0 0.0
        %6947 = vmatpush1.msra.mxu0 0.0
        %6948 = vmatprep.subr.mxu0 0.0
        %6949 = vmatpush1.msra.mxu0 0.0
        %6950 = vmatprep.subr.mxu0 0.0
        %6951 = vmatpush1.msra.mxu0 0.0
        %6952 = vmatprep.subr.mxu0 0.0
        %6953 = vmatpush1.msra.mxu0 0.0
        %6954 = vmatprep.subr.mxu0 0.0
        %6955 = vmatpush1.msra.mxu0 0.0
        %6956 = vmatprep.subr.mxu0 0.0
        %6957 = vmatpush1.msra.mxu0 0.0
        %6958 = vmatprep.subr.mxu0 0.0
        %6959 = vmatpush1.msra.mxu0 0.0
        %6960 = vmatprep.subr.mxu0 0.0
        %6961 = vmatpush1.msra.mxu0 0.0
        %6962 = vmatprep.subr.mxu0 0.0
        %6963 = vmatpush1.msra.mxu0 0.0
        %6964 = vmatprep.subr.mxu0 0.0
        %6965 = vmatpush1.msra.mxu0 0.0
        %6966 = vmatprep.subr.mxu0 0.0
        %6967 = vmatpush1.msra.mxu0 0.0
        %6968 = vmatprep.subr.mxu0 0.0
        %6969 = vmatpush1.msra.mxu0 0.0
        %6970 = vmatprep.subr.mxu0 0.0
        %6971 = vmatpush1.msra.mxu0 0.0
        %6972 = vmatprep.subr.mxu0 0.0
        %6973 = vmatpush1.msra.mxu0 0.0
        %6974 = vmatprep.subr.mxu0 0.0
        %6975 = vmatpush1.msra.mxu0 0.0
        %6976 = vmatprep.subr.mxu0 0.0
        %6977 = vmatpush1.msra.mxu0 0.0
        %6978 = vmatprep.subr.mxu0 0.0
        %6979 = vmatpush1.msra.mxu0 0.0
        %6980 = vmatprep.subr.mxu0 0.0
        %6981 = vmatpush1.msra.mxu0 0.0
        %6982 = vmatprep.subr.mxu0 0.0
        %6983 = vmatpush1.msra.mxu0 0.0
        %6984 = vmatprep.subr.mxu0 0.0
        %6985 = vmatpush1.msra.mxu0 0.0
        %6986 = vmatprep.subr.mxu0 0.0
        %6987 = vmatpush1.msra.mxu0 0.0
        %6988 = vmatprep.subr.mxu0 0.0
        %6989 = vmatpush1.msra.mxu0 0.0
        %6990 = vmatprep.subr.mxu0 0.0
        %6991 = vmatpush1.msra.mxu0 0.0
        %6992 = vmatprep.subr.mxu0 0.0
        %6993 = vmatpush1.msra.mxu0 0.0
        %6994 = vmatprep.subr.mxu0 0.0
        %6995 = vmatpush1.msra.mxu0 0.0
        %6996 = vmatprep.mubr.f32.mxu0 0.0
        %6997 = vmatmul.mubr.f32.gmra.mrb[0].mxu0 %v6834
        %v6998 = vpop.f32.mrb[0].mxu0
        %v6999 = vadd.f32 %v6831, %v6998
        %v7000 = vpop.f32.mrb[0].mxu0
        %7001 = vmatprep.mubr.f32.mxu0 0.0
        %7002 = vmatmul.mubr.f32.gmra.mrb[0].mxu0 %v6837
        %v7003 = vpop.f32.mrb[0].mxu0
        %v7004 = vadd.f32 %v6831, %v7003
        %v7005 = vpop.f32.mrb[0].mxu0
        %7006 = vmatprep.mubr.f32.mxu0 0.0
        %7007 = vmatmul.mubr.f32.gmra.mrb[0].mxu0 %v6840
        %v7008 = vpop.f32.mrb[0].mxu0
        %v7009 = vadd.f32 %v6831, %v7008
        %v7010 = vpop.f32.mrb[0].mxu0
        %7011 = vmatprep.mubr.f32.mxu0 0.0
        %7012 = vmatmul.mubr.f32.gmra.mrb[0].mxu0 %v6843
        %v7013 = vpop.f32.mrb[0].mxu0
        %v7014 = vadd.f32 %v6831, %v7013
        %v7015 = vpop.f32.mrb[0].mxu0
        %7016 = vmatprep.mubr.f32.mxu0 0.0
        %7017 = vmatmul.mubr.f32.gmra.mrb[0].mxu0 %v6846
        %v7018 = vpop.f32.mrb[0].mxu0
        %v7019 = vadd.f32 %v6831, %v7018
        %v7020 = vpop.f32.mrb[0].mxu0
        %7021 = vmatprep.mubr.f32.mxu0 0.0
        %7022 = vmatmul.mubr.f32.gmra.mrb[0].mxu0 %v6849
        %v7023 = vpop.f32.mrb[0].mxu0
        %v7024 = vadd.f32 %v6831, %v7023
        %v7025 = vpop.f32.mrb[0].mxu0
        %7026 = vmatprep.mubr.f32.mxu0 0.0
        %7027 = vmatmul.mubr.f32.gmra.mrb[0].mxu0 %v6852
        %v7028 = vpop.f32.mrb[0].mxu0
        %v7029 = vadd.f32 %v6831, %v7028
        %v7030 = vpop.f32.mrb[0].mxu0
        %7031 = vmatprep.mubr.f32.mxu0 0.0
        %7032 = vmatmul.mubr.f32.gmra.mrb[0].mxu0 %v6855
        %v7033 = vpop.f32.mrb[0].mxu0
        %v7034 = vadd.f32 %v6831, %v7033
        %v7035 = vpop.f32.mrb[0].mxu0
        %7036 = vmatprep.mubr.f32.mxu0 0.0
        %7037 = vmatmul.mubr.f32.gmra.mrb[0].mxu0 %v6858
        %v7038 = vpop.f32.mrb[0].mxu0
        %v7039 = vadd.f32 %v6831, %v7038
        %v7040 = vpop.f32.mrb[0].mxu0
        %7041 = vmatprep.mubr.f32.mxu0 0.0
        %7042 = vmatmul.mubr.f32.gmra.mrb[0].mxu0 %v6861
        %v7043 = vpop.f32.mrb[0].mxu0
        %v7044 = vadd.f32 %v6831, %v7043
        %v7045 = vpop.f32.mrb[0].mxu0
        %7046 = vmatprep.mubr.f32.mxu0 0.0
        %7047 = vmatmul.mubr.f32.gmra.mrb[0].mxu0 %v6864
        %v7048 = vpop.f32.mrb[0].mxu0
        %v7049 = vadd.f32 %v6831, %v7048
        %v7050 = vpop.f32.mrb[0].mxu0
        %7051 = vmatprep.mubr.f32.mxu0 0.0
        %7052 = vmatmul.mubr.f32.gmra.mrb[0].mxu0 %v6867
        %v7053 = vpop.f32.mrb[0].mxu0
        %v7054 = vadd.f32 %v6831, %v7053
        %v7055 = vpop.f32.mrb[0].mxu0
        %7056 = vmatprep.mubr.f32.mxu0 0.0
        %7057 = vmatmul.mubr.f32.gmra.mrb[0].mxu0 %v6870
        %v7058 = vpop.f32.mrb[0].mxu0
        %v7059 = vadd.f32 %v6831, %v7058
        %v7060 = vpop.f32.mrb[0].mxu0
        %7061 = vmatprep.mubr.f32.mxu0 0.0
        %7062 = vmatmul.mubr.f32.gmra.mrb[0].mxu0 %v6873
        %v7063 = vpop.f32.mrb[0].mxu0
        %v7064 = vadd.f32 %v6831, %v7063
        %v7065 = vpop.f32.mrb[0].mxu0
        %7066 = vmatprep.mubr.f32.mxu0 0.0
        %7067 = vmatmul.mubr.f32.gmra.mrb[0].mxu0 %v6876
        %v7068 = vpop.f32.mrb[0].mxu0
        %v7069 = vadd.f32 %v6831, %v7068
        %v7070 = vpop.f32.mrb[0].mxu0
        %7071 = vmatprep.mubr.f32.mxu0 0.0
        %7072 = vmatmul.mubr.f32.gmra.mrb[0].mxu0 %v6879
        %v7073 = vpop.f32.mrb[0].mxu0
        %v7074 = vadd.f32 %v6831, %v7073
        %v7075 = vpop.f32.mrb[0].mxu0
        %7076 = vmatprep.mubr.f32.mxu0 0.0
        %7077 = vmatmul.mubr.f32.gmra.mrb[0].mxu0 %v6882
        %v7078 = vpop.f32.mrb[0].mxu0
        %v7079 = vadd.f32 %v6831, %v7078
        %v7080 = vpop.f32.mrb[0].mxu0
        %7081 = vmatprep.mubr.f32.mxu0 0.0
        %7082 = vmatmul.mubr.f32.gmra.mrb[0].mxu0 %v6885
        %v7083 = vpop.f32.mrb[0].mxu0
        %v7084 = vadd.f32 %v6831, %v7083
        %v7085 = vpop.f32.mrb[0].mxu0
        %7086 = vmatprep.mubr.f32.mxu0 0.0
        %7087 = vmatmul.mubr.f32.gmra.mrb[0].mxu0 %v6888
        %v7088 = vpop.f32.mrb[0].mxu0
        %v7089 = vadd.f32 %v6831, %v7088
        %v7090 = vpop.f32.mrb[0].mxu0
        %7091 = vmatprep.mubr.f32.mxu0 0.0
        %7092 = vmatmul.mubr.f32.gmra.mrb[0].mxu0 %v6891
        %v7093 = vpop.f32.mrb[0].mxu0
        %v7094 = vadd.f32 %v6831, %v7093
        %v7095 = vpop.f32.mrb[0].mxu0
        %7096 = vmatprep.mubr.f32.mxu0 0.0
        %7097 = vmatmul.mubr.f32.gmra.mrb[0].mxu0 %v6894
        %v7098 = vpop.f32.mrb[0].mxu0
        %v7099 = vadd.f32 %v6831, %v7098
        %v7100 = vpop.f32.mrb[0].mxu0
        %7101 = vmatprep.mubr.f32.mxu0 0.0
        %7102 = vmatmul.mubr.f32.gmra.mrb[0].mxu0 %v6897
        %v7103 = vpop.f32.mrb[0].mxu0
        %v7104 = vadd.f32 %v6831, %v7103
        %v7105 = vpop.f32.mrb[0].mxu0
        %7106 = vmatprep.mubr.f32.mxu0 0.0
        %7107 = vmatmul.mubr.f32.gmra.mrb[0].mxu0 %v6900
        %v7108 = vpop.f32.mrb[0].mxu0
        %v7109 = vadd.f32 %v6831, %v7108
        %v7110 = vpop.f32.mrb[0].mxu0
        %7111 = vmatprep.mubr.f32.mxu0 0.0
        %7112 = vmatmul.mubr.f32.gmra.mrb[0].mxu0 %v6903
        %v7113 = vpop.f32.mrb[0].mxu0
        %v7114 = vadd.f32 %v6831, %v7113
        %v7115 = vpop.f32.mrb[0].mxu0
        %7116 = vmatprep.mubr.f32.mxu0 0.0
        %7117 = vmatmul.mubr.f32.gmra.mrb[0].mxu0 %v6906
        %v7118 = vpop.f32.mrb[0].mxu0
        %v7119 = vadd.f32 %v6831, %v7118
        %v7120 = vpop.f32.mrb[0].mxu0
        %7121 = vmatprep.mubr.f32.mxu0 0.0
        %7122 = vmatmul.mubr.f32.gmra.mrb[0].mxu0 %v6909
        %v7123 = vpop.f32.mrb[0].mxu0
        %v7124 = vadd.f32 %v6831, %v7123
        %v7125 = vpop.f32.mrb[0].mxu0
        %7126 = vmatprep.mubr.f32.mxu0 0.0
        %7127 = vmatmul.mubr.f32.gmra.mrb[0].mxu0 %v6912
        %v7128 = vpop.f32.mrb[0].mxu0
        %v7129 = vadd.f32 %v6831, %v7128
        %v7130 = vpop.f32.mrb[0].mxu0
        %7131 = vmatprep.mubr.f32.mxu0 0.0
        %7132 = vmatmul.mubr.f32.gmra.mrb[0].mxu0 %v6915
        %v7133 = vpop.f32.mrb[0].mxu0
        %v7134 = vadd.f32 %v6831, %v7133
        %v7135 = vpop.f32.mrb[0].mxu0
        %7136 = vmatprep.mubr.f32.mxu0 0.0
        %7137 = vmatmul.mubr.f32.gmra.mrb[0].mxu0 %v6918
        %v7138 = vpop.f32.mrb[0].mxu0
        %v7139 = vadd.f32 %v6831, %v7138
        %v7140 = vpop.f32.mrb[0].mxu0
        %7141 = vmatprep.mubr.f32.mxu0 0.0
        %7142 = vmatmul.mubr.f32.gmra.mrb[0].mxu0 %v6921
        %v7143 = vpop.f32.mrb[0].mxu0
        %v7144 = vadd.f32 %v6831, %v7143
        %v7145 = vpop.f32.mrb[0].mxu0
        %7146 = vmatprep.mubr.f32.mxu0 0.0
        %7147 = vmatmul.mubr.f32.gmra.mrb[0].mxu0 %v6924
        %v7148 = vpop.f32.mrb[0].mxu0
        %v7149 = vadd.f32 %v6831, %v7148
        %v7150 = vpop.f32.mrb[0].mxu0
        %7151 = vmatprep.mubr.f32.mxu0 0.0
        %7152 = vmatmul.mubr.f32.gmra.mrb[0].mxu0 %v6927
        %v7153 = vpop.f32.mrb[0].mxu0
        %v7154 = vadd.f32 %v6831, %v7153
        %v7155 = vpop.f32.mrb[0].mxu0
        %7156 = vdwg.mxu0
        %s7157 = scalar_lea.vmem %s273, 512 [#allocation4]
        %7158 = vst [vmem:[%s7157] sm:$0xff] %v6999
        %7159 = vst [vmem:[%s7157 + $0x8] sm:$0xff] %v7004
        %7160 = vst [vmem:[%s7157 + $0x10] sm:$0xff] %v7009
        %7161 = vst [vmem:[%s7157 + $0x18] sm:$0xff] %v7014
        %7162 = vst [vmem:[%s7157 + $0x20] sm:$0xff] %v7019
        %7163 = vst [vmem:[%s7157 + $0x28] sm:$0xff] %v7024
        %7164 = vst [vmem:[%s7157 + $0x30] sm:$0xff] %v7029
        %7165 = vst [vmem:[%s7157 + $0x38] sm:$0xff] %v7034
        %7166 = vst [vmem:[%s7157 + $0x40] sm:$0xff] %v7039
        %7167 = vst [vmem:[%s7157 + $0x48] sm:$0xff] %v7044
        %7168 = vst [vmem:[%s7157 + $0x50] sm:$0xff] %v7049
        %7169 = vst [vmem:[%s7157 + $0x58] sm:$0xff] %v7054
        %7170 = vst [vmem:[%s7157 + $0x60] sm:$0xff] %v7059
        %7171 = vst [vmem:[%s7157 + $0x68] sm:$0xff] %v7064
        %7172 = vst [vmem:[%s7157 + $0x70] sm:$0xff] %v7069
        %7173 = vst [vmem:[%s7157 + $0x78] sm:$0xff] %v7074
        %7174 = vst [vmem:[%s7157 + $0x80] sm:$0xff] %v7079
        %7175 = vst [vmem:[%s7157 + $0x88] sm:$0xff] %v7084
        %7176 = vst [vmem:[%s7157 + $0x90] sm:$0xff] %v7089
        %7177 = vst [vmem:[%s7157 + $0x98] sm:$0xff] %v7094
        %7178 = vst [vmem:[%s7157 + $0xa0] sm:$0xff] %v7099
        %7179 = vst [vmem:[%s7157 + $0xa8] sm:$0xff] %v7104
        %7180 = vst [vmem:[%s7157 + $0xb0] sm:$0xff] %v7109
        %7181 = vst [vmem:[%s7157 + $0xb8] sm:$0xff] %v7114
        %7182 = vst [vmem:[%s7157 + $0xc0] sm:$0xff] %v7119
        %7183 = vst [vmem:[%s7157 + $0xc8] sm:$0xff] %v7124
        %7184 = vst [vmem:[%s7157 + $0xd0] sm:$0xff] %v7129
        %7185 = vst [vmem:[%s7157 + $0xd8] sm:$0xff] %v7134
        %7186 = vst [vmem:[%s7157 + $0xe0] sm:$0xff] %v7139
        %7187 = vst [vmem:[%s7157 + $0xe8] sm:$0xff] %v7144
        %7188 = vst [vmem:[%s7157 + $0xf0] sm:$0xff] %v7149
        %7189 = vst [vmem:[%s7157 + $0xf8] sm:$0xff] %v7154
        %v7190 = vld [vmem:[%s1811 + $0x1] sm:$0xff]
        %v7191 = vld [vmem:[%s1811 + $0x9] sm:$0xff]
        %v7192 = vld [vmem:[%s1811 + $0x19] sm:$0xff]
        %v7193 = vld [vmem:[%s1811 + $0x21] sm:$0xff]
        %v7194 = vld [vmem:[%s1811 + $0x31] sm:$0xff]
        %v7195 = vld [vmem:[%s1811 + $0x39] sm:$0xff]
        %v7196 = vld [vmem:[%s1811 + $0x49] sm:$0xff]
        %v7197 = vld [vmem:[%s1811 + $0x51] sm:$0xff]
        %v7198 = vld [vmem:[%s1811 + $0x61] sm:$0xff]
        %v7199 = vld [vmem:[%s1811 + $0x69] sm:$0xff]
        %v7200 = vld [vmem:[%s1811 + $0x79] sm:$0xff]
        %v7201 = vld [vmem:[%s1811 + $0x81] sm:$0xff]
        %v7202 = vld [vmem:[%s1811 + $0x91] sm:$0xff]
        %v7203 = vld [vmem:[%s1811 + $0x99] sm:$0xff]
        %v7204 = vld [vmem:[%s1811 + $0xa9] sm:$0xff]
        %v7205 = vld [vmem:[%s1811 + $0xb1] sm:$0xff]
        %v7206 = vld [vmem:[%s1811 + $0xc1] sm:$0xff]
        %v7207 = vld [vmem:[%s1811 + $0xc9] sm:$0xff]
        %v7208 = vld [vmem:[%s1811 + $0xd9] sm:$0xff]
        %v7209 = vld [vmem:[%s1811 + $0xe1] sm:$0xff]
        %v7210 = vld [vmem:[%s1811 + $0xf1] sm:$0xff]
        %v7211 = vld [vmem:[%s1811 + $0xf9] sm:$0xff]
        %v7212 = vld [vmem:[%s1811 + $0x109] sm:$0xff]
        %v7213 = vld [vmem:[%s1811 + $0x111] sm:$0xff]
        %v7214 = vld [vmem:[%s1811 + $0x121] sm:$0xff]
        %v7215 = vld [vmem:[%s1811 + $0x129] sm:$0xff]
        %v7216 = vld [vmem:[%s1811 + $0x139] sm:$0xff]
        %v7217 = vld [vmem:[%s1811 + $0x141] sm:$0xff]
        %v7218 = vld [vmem:[%s1811 + $0x151] sm:$0xff]
        %v7219 = vld [vmem:[%s1811 + $0x159] sm:$0xff]
        %v7220 = vld [vmem:[%s1811 + $0x169] sm:$0xff]
        %v7221 = vld [vmem:[%s1811 + $0x171] sm:$0xff]
        %7222 = vst.msk [vmem:[#allocation3] sm:$0xff] %vm1193, %v7190
        %7223 = vst.msk [vmem:[#allocation3 + $0x8] sm:$0xff] %vm1193, %v7191
        %7224 = vst.msk [vmem:[#allocation3 + $0x10] sm:$0xff] %vm1193, %v7192
        %7225 = vst.msk [vmem:[#allocation3 + $0x18] sm:$0xff] %vm1193, %v7193
        %7226 = vst.msk [vmem:[#allocation3 + $0x20] sm:$0xff] %vm1193, %v7194
        %7227 = vst.msk [vmem:[#allocation3 + $0x28] sm:$0xff] %vm1193, %v7195
        %7228 = vst.msk [vmem:[#allocation3 + $0x30] sm:$0xff] %vm1193, %v7196
        %7229 = vst.msk [vmem:[#allocation3 + $0x38] sm:$0xff] %vm1193, %v7197
        %7230 = vst.msk [vmem:[#allocation3 + $0x40] sm:$0xff] %vm1193, %v7198
        %7231 = vst.msk [vmem:[#allocation3 + $0x48] sm:$0xff] %vm1193, %v7199
        %7232 = vst.msk [vmem:[#allocation3 + $0x50] sm:$0xff] %vm1193, %v7200
        %7233 = vst.msk [vmem:[#allocation3 + $0x58] sm:$0xff] %vm1193, %v7201
        %7234 = vst.msk [vmem:[#allocation3 + $0x60] sm:$0xff] %vm1193, %v7202
        %7235 = vst.msk [vmem:[#allocation3 + $0x68] sm:$0xff] %vm1193, %v7203
        %7236 = vst.msk [vmem:[#allocation3 + $0x70] sm:$0xff] %vm1193, %v7204
        %7237 = vst.msk [vmem:[#allocation3 + $0x78] sm:$0xff] %vm1193, %v7205
        %7238 = vst.msk [vmem:[#allocation3 + $0x80] sm:$0xff] %vm1193, %v7206
        %7239 = vst.msk [vmem:[#allocation3 + $0x88] sm:$0xff] %vm1193, %v7207
        %7240 = vst.msk [vmem:[#allocation3 + $0x90] sm:$0xff] %vm1193, %v7208
        %7241 = vst.msk [vmem:[#allocation3 + $0x98] sm:$0xff] %vm1193, %v7209
        %7242 = vst.msk [vmem:[#allocation3 + $0xa0] sm:$0xff] %vm1193, %v7210
        %7243 = vst.msk [vmem:[#allocation3 + $0xa8] sm:$0xff] %vm1193, %v7211
        %7244 = vst.msk [vmem:[#allocation3 + $0xb0] sm:$0xff] %vm1193, %v7212
        %7245 = vst.msk [vmem:[#allocation3 + $0xb8] sm:$0xff] %vm1193, %v7213
        %7246 = vst.msk [vmem:[#allocation3 + $0xc0] sm:$0xff] %vm1193, %v7214
        %7247 = vst.msk [vmem:[#allocation3 + $0xc8] sm:$0xff] %vm1193, %v7215
        %7248 = vst.msk [vmem:[#allocation3 + $0xd0] sm:$0xff] %vm1193, %v7216
        %7249 = vst.msk [vmem:[#allocation3 + $0xd8] sm:$0xff] %vm1193, %v7217
        %7250 = vst.msk [vmem:[#allocation3 + $0xe0] sm:$0xff] %vm1193, %v7218
        %7251 = vst.msk [vmem:[#allocation3 + $0xe8] sm:$0xff] %vm1193, %v7219
        %7252 = vst.msk [vmem:[#allocation3 + $0xf0] sm:$0xff] %vm1193, %v7220
        %7253 = vst.msk [vmem:[#allocation3 + $0xf8] sm:$0xff] %vm1193, %v7221
        %v7254 = vld [vmem:[%s1617 + $0x1] sm:$0xff]
        %v7255 = vld [vmem:[%s1617 + $0x9] sm:$0xff]
        %v7256 = vld [vmem:[%s1617 + $0x19] sm:$0xff]
        %v7257 = vld [vmem:[%s1617 + $0x21] sm:$0xff]
        %v7258 = vld [vmem:[%s1617 + $0x31] sm:$0xff]
        %v7259 = vld [vmem:[%s1617 + $0x39] sm:$0xff]
        %v7260 = vld [vmem:[%s1617 + $0x49] sm:$0xff]
        %v7261 = vld [vmem:[%s1617 + $0x51] sm:$0xff]
        %v7262 = vld [vmem:[%s1617 + $0x61] sm:$0xff]
        %v7263 = vld [vmem:[%s1617 + $0x69] sm:$0xff]
        %v7264 = vld [vmem:[%s1617 + $0x79] sm:$0xff]
        %v7265 = vld [vmem:[%s1617 + $0x81] sm:$0xff]
        %v7266 = vld [vmem:[%s1617 + $0x91] sm:$0xff]
        %v7267 = vld [vmem:[%s1617 + $0x99] sm:$0xff]
        %v7268 = vld [vmem:[%s1617 + $0xa9] sm:$0xff]
        %v7269 = vld [vmem:[%s1617 + $0xb1] sm:$0xff]
        %v7270 = vld [vmem:[%s1617 + $0xc1] sm:$0xff]
        %v7271 = vld [vmem:[%s1617 + $0xc9] sm:$0xff]
        %v7272 = vld [vmem:[%s1617 + $0xd9] sm:$0xff]
        %v7273 = vld [vmem:[%s1617 + $0xe1] sm:$0xff]
        %v7274 = vld [vmem:[%s1617 + $0xf1] sm:$0xff]
        %v7275 = vld [vmem:[%s1617 + $0xf9] sm:$0xff]
        %v7276 = vld [vmem:[%s1617 + $0x109] sm:$0xff]
        %v7277 = vld [vmem:[%s1617 + $0x111] sm:$0xff]
        %v7278 = vld [vmem:[%s1617 + $0x121] sm:$0xff]
        %v7279 = vld [vmem:[%s1617 + $0x129] sm:$0xff]
        %v7280 = vld [vmem:[%s1617 + $0x139] sm:$0xff]
        %v7281 = vld [vmem:[%s1617 + $0x141] sm:$0xff]
        %v7282 = vld [vmem:[%s1617 + $0x151] sm:$0xff]
        %v7283 = vld [vmem:[%s1617 + $0x159] sm:$0xff]
        %v7284 = vld [vmem:[%s1617 + $0x169] sm:$0xff]
        %v7285 = vld [vmem:[%s1617 + $0x171] sm:$0xff]
        %7318 = vrot.lane.b32.xlu0 %v7254, 4
        %v7319 = vpop.permute.xlu0 %7318
        %7320 = vrot.lane.b32.xlu0 %v7255, 4
        %v7321 = vpop.permute.xlu0 %7320
        %7322 = vrot.lane.b32.xlu0 %v7256, 4
        %v7323 = vpop.permute.xlu0 %7322
        %7324 = vrot.lane.b32.xlu0 %v7257, 4
        %v7325 = vpop.permute.xlu0 %7324
        %7326 = vrot.lane.b32.xlu0 %v7258, 4
        %v7327 = vpop.permute.xlu0 %7326
        %7328 = vrot.lane.b32.xlu0 %v7259, 4
        %v7329 = vpop.permute.xlu0 %7328
        %7330 = vrot.lane.b32.xlu0 %v7260, 4
        %v7331 = vpop.permute.xlu0 %7330
        %7332 = vrot.lane.b32.xlu0 %v7261, 4
        %v7333 = vpop.permute.xlu0 %7332
        %7334 = vrot.lane.b32.xlu0 %v7262, 4
        %v7335 = vpop.permute.xlu0 %7334
        %7336 = vrot.lane.b32.xlu0 %v7263, 4
        %v7337 = vpop.permute.xlu0 %7336
        %7338 = vrot.lane.b32.xlu0 %v7264, 4
        %v7339 = vpop.permute.xlu0 %7338
        %7340 = vrot.lane.b32.xlu0 %v7265, 4
        %v7341 = vpop.permute.xlu0 %7340
        %7342 = vrot.lane.b32.xlu0 %v7266, 4
        %v7343 = vpop.permute.xlu0 %7342
        %7344 = vrot.lane.b32.xlu0 %v7267, 4
        %v7345 = vpop.permute.xlu0 %7344
        %7346 = vrot.lane.b32.xlu0 %v7268, 4
        %v7347 = vpop.permute.xlu0 %7346
        %7348 = vrot.lane.b32.xlu0 %v7269, 4
        %v7349 = vpop.permute.xlu0 %7348
        %7350 = vrot.lane.b32.xlu0 %v7270, 4
        %v7351 = vpop.permute.xlu0 %7350
        %7352 = vrot.lane.b32.xlu0 %v7271, 4
        %v7353 = vpop.permute.xlu0 %7352
        %7354 = vrot.lane.b32.xlu0 %v7272, 4
        %v7355 = vpop.permute.xlu0 %7354
        %7356 = vrot.lane.b32.xlu0 %v7273, 4
        %v7357 = vpop.permute.xlu0 %7356
        %7358 = vrot.lane.b32.xlu0 %v7274, 4
        %v7359 = vpop.permute.xlu0 %7358
        %7360 = vrot.lane.b32.xlu0 %v7275, 4
        %v7361 = vpop.permute.xlu0 %7360
        %7362 = vrot.lane.b32.xlu0 %v7276, 4
        %v7363 = vpop.permute.xlu0 %7362
        %7364 = vrot.lane.b32.xlu0 %v7277, 4
        %v7365 = vpop.permute.xlu0 %7364
        %7366 = vrot.lane.b32.xlu0 %v7278, 4
        %v7367 = vpop.permute.xlu0 %7366
        %7368 = vrot.lane.b32.xlu0 %v7279, 4
        %v7369 = vpop.permute.xlu0 %7368
        %7370 = vrot.lane.b32.xlu0 %v7280, 4
        %v7371 = vpop.permute.xlu0 %7370
        %7372 = vrot.lane.b32.xlu0 %v7281, 4
        %v7373 = vpop.permute.xlu0 %7372
        %7374 = vrot.lane.b32.xlu0 %v7282, 4
        %v7375 = vpop.permute.xlu0 %7374
        %7376 = vrot.lane.b32.xlu0 %v7283, 4
        %v7377 = vpop.permute.xlu0 %7376
        %7378 = vrot.lane.b32.xlu0 %v7284, 4
        %v7379 = vpop.permute.xlu0 %7378
        %7380 = vrot.lane.b32.xlu0 %v7285, 4
        %v7381 = vpop.permute.xlu0 %7380
        %7414 = vst.msk [vmem:[#allocation3] sm:$0xff] %vm1388, %v7319
        %7415 = vst.msk [vmem:[#allocation3 + $0x8] sm:$0xff] %vm1388, %v7321
        %7416 = vst.msk [vmem:[#allocation3 + $0x10] sm:$0xff] %vm1388, %v7323
        %7417 = vst.msk [vmem:[#allocation3 + $0x18] sm:$0xff] %vm1388, %v7325
        %7418 = vst.msk [vmem:[#allocation3 + $0x20] sm:$0xff] %vm1388, %v7327
        %7419 = vst.msk [vmem:[#allocation3 + $0x28] sm:$0xff] %vm1388, %v7329
        %7420 = vst.msk [vmem:[#allocation3 + $0x30] sm:$0xff] %vm1388, %v7331
        %7421 = vst.msk [vmem:[#allocation3 + $0x38] sm:$0xff] %vm1388, %v7333
        %7422 = vst.msk [vmem:[#allocation3 + $0x40] sm:$0xff] %vm1388, %v7335
        %7423 = vst.msk [vmem:[#allocation3 + $0x48] sm:$0xff] %vm1388, %v7337
        %7424 = vst.msk [vmem:[#allocation3 + $0x50] sm:$0xff] %vm1388, %v7339
        %7425 = vst.msk [vmem:[#allocation3 + $0x58] sm:$0xff] %vm1388, %v7341
        %7426 = vst.msk [vmem:[#allocation3 + $0x60] sm:$0xff] %vm1388, %v7343
        %7427 = vst.msk [vmem:[#allocation3 + $0x68] sm:$0xff] %vm1388, %v7345
        %7428 = vst.msk [vmem:[#allocation3 + $0x70] sm:$0xff] %vm1388, %v7347
        %7429 = vst.msk [vmem:[#allocation3 + $0x78] sm:$0xff] %vm1388, %v7349
        %7430 = vst.msk [vmem:[#allocation3 + $0x80] sm:$0xff] %vm1388, %v7351
        %7431 = vst.msk [vmem:[#allocation3 + $0x88] sm:$0xff] %vm1388, %v7353
        %7432 = vst.msk [vmem:[#allocation3 + $0x90] sm:$0xff] %vm1388, %v7355
        %7433 = vst.msk [vmem:[#allocation3 + $0x98] sm:$0xff] %vm1388, %v7357
        %7434 = vst.msk [vmem:[#allocation3 + $0xa0] sm:$0xff] %vm1388, %v7359
        %7435 = vst.msk [vmem:[#allocation3 + $0xa8] sm:$0xff] %vm1388, %v7361
        %7436 = vst.msk [vmem:[#allocation3 + $0xb0] sm:$0xff] %vm1388, %v7363
        %7437 = vst.msk [vmem:[#allocation3 + $0xb8] sm:$0xff] %vm1388, %v7365
        %7438 = vst.msk [vmem:[#allocation3 + $0xc0] sm:$0xff] %vm1388, %v7367
        %7439 = vst.msk [vmem:[#allocation3 + $0xc8] sm:$0xff] %vm1388, %v7369
        %7440 = vst.msk [vmem:[#allocation3 + $0xd0] sm:$0xff] %vm1388, %v7371
        %7441 = vst.msk [vmem:[#allocation3 + $0xd8] sm:$0xff] %vm1388, %v7373
        %7442 = vst.msk [vmem:[#allocation3 + $0xe0] sm:$0xff] %vm1388, %v7375
        %7443 = vst.msk [vmem:[#allocation3 + $0xe8] sm:$0xff] %vm1388, %v7377
        %7444 = vst.msk [vmem:[#allocation3 + $0xf0] sm:$0xff] %vm1388, %v7379
        %7445 = vst.msk [vmem:[#allocation3 + $0xf8] sm:$0xff] %vm1388, %v7381
        %v7446 = vld [vmem:[%s1811 + $0x2] sm:$0xff]
        %v7447 = vld [vmem:[%s1811 + $0xa] sm:$0xff]
        %v7448 = vld [vmem:[%s1811 + $0x1a] sm:$0xff]
        %v7449 = vld [vmem:[%s1811 + $0x22] sm:$0xff]
        %v7450 = vld [vmem:[%s1811 + $0x32] sm:$0xff]
        %v7451 = vld [vmem:[%s1811 + $0x3a] sm:$0xff]
        %v7452 = vld [vmem:[%s1811 + $0x4a] sm:$0xff]
        %v7453 = vld [vmem:[%s1811 + $0x52] sm:$0xff]
        %v7454 = vld [vmem:[%s1811 + $0x62] sm:$0xff]
        %v7455 = vld [vmem:[%s1811 + $0x6a] sm:$0xff]
        %v7456 = vld [vmem:[%s1811 + $0x7a] sm:$0xff]
        %v7457 = vld [vmem:[%s1811 + $0x82] sm:$0xff]
        %v7458 = vld [vmem:[%s1811 + $0x92] sm:$0xff]
        %v7459 = vld [vmem:[%s1811 + $0x9a] sm:$0xff]
        %v7460 = vld [vmem:[%s1811 + $0xaa] sm:$0xff]
        %v7461 = vld [vmem:[%s1811 + $0xb2] sm:$0xff]
        %v7462 = vld [vmem:[%s1811 + $0xc2] sm:$0xff]
        %v7463 = vld [vmem:[%s1811 + $0xca] sm:$0xff]
        %v7464 = vld [vmem:[%s1811 + $0xda] sm:$0xff]
        %v7465 = vld [vmem:[%s1811 + $0xe2] sm:$0xff]
        %v7466 = vld [vmem:[%s1811 + $0xf2] sm:$0xff]
        %v7467 = vld [vmem:[%s1811 + $0xfa] sm:$0xff]
        %v7468 = vld [vmem:[%s1811 + $0x10a] sm:$0xff]
        %v7469 = vld [vmem:[%s1811 + $0x112] sm:$0xff]
        %v7470 = vld [vmem:[%s1811 + $0x122] sm:$0xff]
        %v7471 = vld [vmem:[%s1811 + $0x12a] sm:$0xff]
        %v7472 = vld [vmem:[%s1811 + $0x13a] sm:$0xff]
        %v7473 = vld [vmem:[%s1811 + $0x142] sm:$0xff]
        %v7474 = vld [vmem:[%s1811 + $0x152] sm:$0xff]
        %v7475 = vld [vmem:[%s1811 + $0x15a] sm:$0xff]
        %v7476 = vld [vmem:[%s1811 + $0x16a] sm:$0xff]
        %v7477 = vld [vmem:[%s1811 + $0x172] sm:$0xff]
        %7510 = vrot.lane.b32.xlu0 %v7446, 8
        %v7511 = vpop.permute.xlu0 %7510
        %7512 = vrot.lane.b32.xlu0 %v7447, 8
        %v7513 = vpop.permute.xlu0 %7512
        %7514 = vrot.lane.b32.xlu0 %v7448, 8
        %v7515 = vpop.permute.xlu0 %7514
        %7516 = vrot.lane.b32.xlu0 %v7449, 8
        %v7517 = vpop.permute.xlu0 %7516
        %7518 = vrot.lane.b32.xlu0 %v7450, 8
        %v7519 = vpop.permute.xlu0 %7518
        %7520 = vrot.lane.b32.xlu0 %v7451, 8
        %v7521 = vpop.permute.xlu0 %7520
        %7522 = vrot.lane.b32.xlu0 %v7452, 8
        %v7523 = vpop.permute.xlu0 %7522
        %7524 = vrot.lane.b32.xlu0 %v7453, 8
        %v7525 = vpop.permute.xlu0 %7524
        %7526 = vrot.lane.b32.xlu0 %v7454, 8
        %v7527 = vpop.permute.xlu0 %7526
        %7528 = vrot.lane.b32.xlu0 %v7455, 8
        %v7529 = vpop.permute.xlu0 %7528
        %7530 = vrot.lane.b32.xlu0 %v7456, 8
        %v7531 = vpop.permute.xlu0 %7530
        %7532 = vrot.lane.b32.xlu0 %v7457, 8
        %v7533 = vpop.permute.xlu0 %7532
        %7534 = vrot.lane.b32.xlu0 %v7458, 8
        %v7535 = vpop.permute.xlu0 %7534
        %7536 = vrot.lane.b32.xlu0 %v7459, 8
        %v7537 = vpop.permute.xlu0 %7536
        %7538 = vrot.lane.b32.xlu0 %v7460, 8
        %v7539 = vpop.permute.xlu0 %7538
        %7540 = vrot.lane.b32.xlu0 %v7461, 8
        %v7541 = vpop.permute.xlu0 %7540
        %7542 = vrot.lane.b32.xlu0 %v7462, 8
        %v7543 = vpop.permute.xlu0 %7542
        %7544 = vrot.lane.b32.xlu0 %v7463, 8
        %v7545 = vpop.permute.xlu0 %7544
        %7546 = vrot.lane.b32.xlu0 %v7464, 8
        %v7547 = vpop.permute.xlu0 %7546
        %7548 = vrot.lane.b32.xlu0 %v7465, 8
        %v7549 = vpop.permute.xlu0 %7548
        %7550 = vrot.lane.b32.xlu0 %v7466, 8
        %v7551 = vpop.permute.xlu0 %7550
        %7552 = vrot.lane.b32.xlu0 %v7467, 8
        %v7553 = vpop.permute.xlu0 %7552
        %7554 = vrot.lane.b32.xlu0 %v7468, 8
        %v7555 = vpop.permute.xlu0 %7554
        %7556 = vrot.lane.b32.xlu0 %v7469, 8
        %v7557 = vpop.permute.xlu0 %7556
        %7558 = vrot.lane.b32.xlu0 %v7470, 8
        %v7559 = vpop.permute.xlu0 %7558
        %7560 = vrot.lane.b32.xlu0 %v7471, 8
        %v7561 = vpop.permute.xlu0 %7560
        %7562 = vrot.lane.b32.xlu0 %v7472, 8
        %v7563 = vpop.permute.xlu0 %7562
        %7564 = vrot.lane.b32.xlu0 %v7473, 8
        %v7565 = vpop.permute.xlu0 %7564
        %7566 = vrot.lane.b32.xlu0 %v7474, 8
        %v7567 = vpop.permute.xlu0 %7566
        %7568 = vrot.lane.b32.xlu0 %v7475, 8
        %v7569 = vpop.permute.xlu0 %7568
        %7570 = vrot.lane.b32.xlu0 %v7476, 8
        %v7571 = vpop.permute.xlu0 %7570
        %7572 = vrot.lane.b32.xlu0 %v7477, 8
        %v7573 = vpop.permute.xlu0 %7572
        %7606 = vst.msk [vmem:[#allocation3] sm:$0xff] %vm1581, %v7511
        %7607 = vst.msk [vmem:[#allocation3 + $0x8] sm:$0xff] %vm1581, %v7513
        %7608 = vst.msk [vmem:[#allocation3 + $0x10] sm:$0xff] %vm1581, %v7515
        %7609 = vst.msk [vmem:[#allocation3 + $0x18] sm:$0xff] %vm1581, %v7517
        %7610 = vst.msk [vmem:[#allocation3 + $0x20] sm:$0xff] %vm1581, %v7519
        %7611 = vst.msk [vmem:[#allocation3 + $0x28] sm:$0xff] %vm1581, %v7521
        %7612 = vst.msk [vmem:[#allocation3 + $0x30] sm:$0xff] %vm1581, %v7523
        %7613 = vst.msk [vmem:[#allocation3 + $0x38] sm:$0xff] %vm1581, %v7525
        %7614 = vst.msk [vmem:[#allocation3 + $0x40] sm:$0xff] %vm1581, %v7527
        %7615 = vst.msk [vmem:[#allocation3 + $0x48] sm:$0xff] %vm1581, %v7529
        %7616 = vst.msk [vmem:[#allocation3 + $0x50] sm:$0xff] %vm1581, %v7531
        %7617 = vst.msk [vmem:[#allocation3 + $0x58] sm:$0xff] %vm1581, %v7533
        %7618 = vst.msk [vmem:[#allocation3 + $0x60] sm:$0xff] %vm1581, %v7535
        %7619 = vst.msk [vmem:[#allocation3 + $0x68] sm:$0xff] %vm1581, %v7537
        %7620 = vst.msk [vmem:[#allocation3 + $0x70] sm:$0xff] %vm1581, %v7539
        %7621 = vst.msk [vmem:[#allocation3 + $0x78] sm:$0xff] %vm1581, %v7541
        %7622 = vst.msk [vmem:[#allocation3 + $0x80] sm:$0xff] %vm1581, %v7543
        %7623 = vst.msk [vmem:[#allocation3 + $0x88] sm:$0xff] %vm1581, %v7545
        %7624 = vst.msk [vmem:[#allocation3 + $0x90] sm:$0xff] %vm1581, %v7547
        %7625 = vst.msk [vmem:[#allocation3 + $0x98] sm:$0xff] %vm1581, %v7549
        %7626 = vst.msk [vmem:[#allocation3 + $0xa0] sm:$0xff] %vm1581, %v7551
        %7627 = vst.msk [vmem:[#allocation3 + $0xa8] sm:$0xff] %vm1581, %v7553
        %7628 = vst.msk [vmem:[#allocation3 + $0xb0] sm:$0xff] %vm1581, %v7555
        %7629 = vst.msk [vmem:[#allocation3 + $0xb8] sm:$0xff] %vm1581, %v7557
        %7630 = vst.msk [vmem:[#allocation3 + $0xc0] sm:$0xff] %vm1581, %v7559
        %7631 = vst.msk [vmem:[#allocation3 + $0xc8] sm:$0xff] %vm1581, %v7561
        %7632 = vst.msk [vmem:[#allocation3 + $0xd0] sm:$0xff] %vm1581, %v7563
        %7633 = vst.msk [vmem:[#allocation3 + $0xd8] sm:$0xff] %vm1581, %v7565
        %7634 = vst.msk [vmem:[#allocation3 + $0xe0] sm:$0xff] %vm1581, %v7567
        %7635 = vst.msk [vmem:[#allocation3 + $0xe8] sm:$0xff] %vm1581, %v7569
        %7636 = vst.msk [vmem:[#allocation3 + $0xf0] sm:$0xff] %vm1581, %v7571
        %7637 = vst.msk [vmem:[#allocation3 + $0xf8] sm:$0xff] %vm1581, %v7573
        %v7638 = vld [vmem:[%s2394 + $0x1] sm:$0xff]
        %v7639 = vld [vmem:[%s2394 + $0x9] sm:$0xff]
        %v7640 = vld [vmem:[%s2394 + $0x19] sm:$0xff]
        %v7641 = vld [vmem:[%s2394 + $0x21] sm:$0xff]
        %v7642 = vld [vmem:[%s2394 + $0x31] sm:$0xff]
        %v7643 = vld [vmem:[%s2394 + $0x39] sm:$0xff]
        %v7644 = vld [vmem:[%s2394 + $0x49] sm:$0xff]
        %v7645 = vld [vmem:[%s2394 + $0x51] sm:$0xff]
        %v7646 = vld [vmem:[%s2394 + $0x61] sm:$0xff]
        %v7647 = vld [vmem:[%s2394 + $0x69] sm:$0xff]
        %v7648 = vld [vmem:[%s2394 + $0x79] sm:$0xff]
        %v7649 = vld [vmem:[%s2394 + $0x81] sm:$0xff]
        %v7650 = vld [vmem:[%s2394 + $0x91] sm:$0xff]
        %v7651 = vld [vmem:[%s2394 + $0x99] sm:$0xff]
        %v7652 = vld [vmem:[%s2394 + $0xa9] sm:$0xff]
        %v7653 = vld [vmem:[%s2394 + $0xb1] sm:$0xff]
        %v7654 = vld [vmem:[%s2394 + $0xc1] sm:$0xff]
        %v7655 = vld [vmem:[%s2394 + $0xc9] sm:$0xff]
        %v7656 = vld [vmem:[%s2394 + $0xd9] sm:$0xff]
        %v7657 = vld [vmem:[%s2394 + $0xe1] sm:$0xff]
        %v7658 = vld [vmem:[%s2394 + $0xf1] sm:$0xff]
        %v7659 = vld [vmem:[%s2394 + $0xf9] sm:$0xff]
        %v7660 = vld [vmem:[%s2394 + $0x109] sm:$0xff]
        %v7661 = vld [vmem:[%s2394 + $0x111] sm:$0xff]
        %v7662 = vld [vmem:[%s2394 + $0x121] sm:$0xff]
        %v7663 = vld [vmem:[%s2394 + $0x129] sm:$0xff]
        %v7664 = vld [vmem:[%s2394 + $0x139] sm:$0xff]
        %v7665 = vld [vmem:[%s2394 + $0x141] sm:$0xff]
        %v7666 = vld [vmem:[%s2394 + $0x151] sm:$0xff]
        %v7667 = vld [vmem:[%s2394 + $0x159] sm:$0xff]
        %v7668 = vld [vmem:[%s2394 + $0x169] sm:$0xff]
        %v7669 = vld [vmem:[%s2394 + $0x171] sm:$0xff]
        %7702 = vrot.lane.b32.xlu0 %v7638, 12
        %v7703 = vpop.permute.xlu0 %7702
        %7704 = vrot.lane.b32.xlu0 %v7639, 12
        %v7705 = vpop.permute.xlu0 %7704
        %7706 = vrot.lane.b32.xlu0 %v7640, 12
        %v7707 = vpop.permute.xlu0 %7706
        %7708 = vrot.lane.b32.xlu0 %v7641, 12
        %v7709 = vpop.permute.xlu0 %7708
        %7710 = vrot.lane.b32.xlu0 %v7642, 12
        %v7711 = vpop.permute.xlu0 %7710
        %7712 = vrot.lane.b32.xlu0 %v7643, 12
        %v7713 = vpop.permute.xlu0 %7712
        %7714 = vrot.lane.b32.xlu0 %v7644, 12
        %v7715 = vpop.permute.xlu0 %7714
        %7716 = vrot.lane.b32.xlu0 %v7645, 12
        %v7717 = vpop.permute.xlu0 %7716
        %7718 = vrot.lane.b32.xlu0 %v7646, 12
        %v7719 = vpop.permute.xlu0 %7718
        %7720 = vrot.lane.b32.xlu0 %v7647, 12
        %v7721 = vpop.permute.xlu0 %7720
        %7722 = vrot.lane.b32.xlu0 %v7648, 12
        %v7723 = vpop.permute.xlu0 %7722
        %7724 = vrot.lane.b32.xlu0 %v7649, 12
        %v7725 = vpop.permute.xlu0 %7724
        %7726 = vrot.lane.b32.xlu0 %v7650, 12
        %v7727 = vpop.permute.xlu0 %7726
        %7728 = vrot.lane.b32.xlu0 %v7651, 12
        %v7729 = vpop.permute.xlu0 %7728
        %7730 = vrot.lane.b32.xlu0 %v7652, 12
        %v7731 = vpop.permute.xlu0 %7730
        %7732 = vrot.lane.b32.xlu0 %v7653, 12
        %v7733 = vpop.permute.xlu0 %7732
        %7734 = vrot.lane.b32.xlu0 %v7654, 12
        %v7735 = vpop.permute.xlu0 %7734
        %7736 = vrot.lane.b32.xlu0 %v7655, 12
        %v7737 = vpop.permute.xlu0 %7736
        %7738 = vrot.lane.b32.xlu0 %v7656, 12
        %v7739 = vpop.permute.xlu0 %7738
        %7740 = vrot.lane.b32.xlu0 %v7657, 12
        %v7741 = vpop.permute.xlu0 %7740
        %7742 = vrot.lane.b32.xlu0 %v7658, 12
        %v7743 = vpop.permute.xlu0 %7742
        %7744 = vrot.lane.b32.xlu0 %v7659, 12
        %v7745 = vpop.permute.xlu0 %7744
        %7746 = vrot.lane.b32.xlu0 %v7660, 12
        %v7747 = vpop.permute.xlu0 %7746
        %7748 = vrot.lane.b32.xlu0 %v7661, 12
        %v7749 = vpop.permute.xlu0 %7748
        %7750 = vrot.lane.b32.xlu0 %v7662, 12
        %v7751 = vpop.permute.xlu0 %7750
        %7752 = vrot.lane.b32.xlu0 %v7663, 12
        %v7753 = vpop.permute.xlu0 %7752
        %7754 = vrot.lane.b32.xlu0 %v7664, 12
        %v7755 = vpop.permute.xlu0 %7754
        %7756 = vrot.lane.b32.xlu0 %v7665, 12
        %v7757 = vpop.permute.xlu0 %7756
        %7758 = vrot.lane.b32.xlu0 %v7666, 12
        %v7759 = vpop.permute.xlu0 %7758
        %7760 = vrot.lane.b32.xlu0 %v7667, 12
        %v7761 = vpop.permute.xlu0 %7760
        %7762 = vrot.lane.b32.xlu0 %v7668, 12
        %v7763 = vpop.permute.xlu0 %7762
        %7764 = vrot.lane.b32.xlu0 %v7669, 12
        %v7765 = vpop.permute.xlu0 %7764
        %7798 = vst.msk [vmem:[#allocation3] sm:$0xff] %vm1778, %v7703
        %7799 = vst.msk [vmem:[#allocation3 + $0x8] sm:$0xff] %vm1778, %v7705
        %7800 = vst.msk [vmem:[#allocation3 + $0x10] sm:$0xff] %vm1778, %v7707
        %7801 = vst.msk [vmem:[#allocation3 + $0x18] sm:$0xff] %vm1778, %v7709
        %7802 = vst.msk [vmem:[#allocation3 + $0x20] sm:$0xff] %vm1778, %v7711
        %7803 = vst.msk [vmem:[#allocation3 + $0x28] sm:$0xff] %vm1778, %v7713
        %7804 = vst.msk [vmem:[#allocation3 + $0x30] sm:$0xff] %vm1778, %v7715
        %7805 = vst.msk [vmem:[#allocation3 + $0x38] sm:$0xff] %vm1778, %v7717
        %7806 = vst.msk [vmem:[#allocation3 + $0x40] sm:$0xff] %vm1778, %v7719
        %7807 = vst.msk [vmem:[#allocation3 + $0x48] sm:$0xff] %vm1778, %v7721
        %7808 = vst.msk [vmem:[#allocation3 + $0x50] sm:$0xff] %vm1778, %v7723
        %7809 = vst.msk [vmem:[#allocation3 + $0x58] sm:$0xff] %vm1778, %v7725
        %7810 = vst.msk [vmem:[#allocation3 + $0x60] sm:$0xff] %vm1778, %v7727
        %7811 = vst.msk [vmem:[#allocation3 + $0x68] sm:$0xff] %vm1778, %v7729
        %7812 = vst.msk [vmem:[#allocation3 + $0x70] sm:$0xff] %vm1778, %v7731
        %7813 = vst.msk [vmem:[#allocation3 + $0x78] sm:$0xff] %vm1778, %v7733
        %7814 = vst.msk [vmem:[#allocation3 + $0x80] sm:$0xff] %vm1778, %v7735
        %7815 = vst.msk [vmem:[#allocation3 + $0x88] sm:$0xff] %vm1778, %v7737
        %7816 = vst.msk [vmem:[#allocation3 + $0x90] sm:$0xff] %vm1778, %v7739
        %7817 = vst.msk [vmem:[#allocation3 + $0x98] sm:$0xff] %vm1778, %v7741
        %7818 = vst.msk [vmem:[#allocation3 + $0xa0] sm:$0xff] %vm1778, %v7743
        %7819 = vst.msk [vmem:[#allocation3 + $0xa8] sm:$0xff] %vm1778, %v7745
        %7820 = vst.msk [vmem:[#allocation3 + $0xb0] sm:$0xff] %vm1778, %v7747
        %7821 = vst.msk [vmem:[#allocation3 + $0xb8] sm:$0xff] %vm1778, %v7749
        %7822 = vst.msk [vmem:[#allocation3 + $0xc0] sm:$0xff] %vm1778, %v7751
        %7823 = vst.msk [vmem:[#allocation3 + $0xc8] sm:$0xff] %vm1778, %v7753
        %7824 = vst.msk [vmem:[#allocation3 + $0xd0] sm:$0xff] %vm1778, %v7755
        %7825 = vst.msk [vmem:[#allocation3 + $0xd8] sm:$0xff] %vm1778, %v7757
        %7826 = vst.msk [vmem:[#allocation3 + $0xe0] sm:$0xff] %vm1778, %v7759
        %7827 = vst.msk [vmem:[#allocation3 + $0xe8] sm:$0xff] %vm1778, %v7761
        %7828 = vst.msk [vmem:[#allocation3 + $0xf0] sm:$0xff] %vm1778, %v7763
        %7829 = vst.msk [vmem:[#allocation3 + $0xf8] sm:$0xff] %vm1778, %v7765
        %v7830 = vld [vmem:[%s2199 + $0x1] sm:$0xff]
        %v7831 = vld [vmem:[%s2199 + $0x9] sm:$0xff]
        %v7832 = vld [vmem:[%s2199 + $0x19] sm:$0xff]
        %v7833 = vld [vmem:[%s2199 + $0x21] sm:$0xff]
        %v7834 = vld [vmem:[%s2199 + $0x31] sm:$0xff]
        %v7835 = vld [vmem:[%s2199 + $0x39] sm:$0xff]
        %v7836 = vld [vmem:[%s2199 + $0x49] sm:$0xff]
        %v7837 = vld [vmem:[%s2199 + $0x51] sm:$0xff]
        %v7838 = vld [vmem:[%s2199 + $0x61] sm:$0xff]
        %v7839 = vld [vmem:[%s2199 + $0x69] sm:$0xff]
        %v7840 = vld [vmem:[%s2199 + $0x79] sm:$0xff]
        %v7841 = vld [vmem:[%s2199 + $0x81] sm:$0xff]
        %v7842 = vld [vmem:[%s2199 + $0x91] sm:$0xff]
        %v7843 = vld [vmem:[%s2199 + $0x99] sm:$0xff]
        %v7844 = vld [vmem:[%s2199 + $0xa9] sm:$0xff]
        %v7845 = vld [vmem:[%s2199 + $0xb1] sm:$0xff]
        %v7846 = vld [vmem:[%s2199 + $0xc1] sm:$0xff]
        %v7847 = vld [vmem:[%s2199 + $0xc9] sm:$0xff]
        %v7848 = vld [vmem:[%s2199 + $0xd9] sm:$0xff]
        %v7849 = vld [vmem:[%s2199 + $0xe1] sm:$0xff]
        %v7850 = vld [vmem:[%s2199 + $0xf1] sm:$0xff]
        %v7851 = vld [vmem:[%s2199 + $0xf9] sm:$0xff]
        %v7852 = vld [vmem:[%s2199 + $0x109] sm:$0xff]
        %v7853 = vld [vmem:[%s2199 + $0x111] sm:$0xff]
        %v7854 = vld [vmem:[%s2199 + $0x121] sm:$0xff]
        %v7855 = vld [vmem:[%s2199 + $0x129] sm:$0xff]
        %v7856 = vld [vmem:[%s2199 + $0x139] sm:$0xff]
        %v7857 = vld [vmem:[%s2199 + $0x141] sm:$0xff]
        %v7858 = vld [vmem:[%s2199 + $0x151] sm:$0xff]
        %v7859 = vld [vmem:[%s2199 + $0x159] sm:$0xff]
        %v7860 = vld [vmem:[%s2199 + $0x169] sm:$0xff]
        %v7861 = vld [vmem:[%s2199 + $0x171] sm:$0xff]
        %7894 = vrot.lane.b32.xlu0 %v7830, 16
        %v7895 = vpop.permute.xlu0 %7894
        %7896 = vrot.lane.b32.xlu0 %v7831, 16
        %v7897 = vpop.permute.xlu0 %7896
        %7898 = vrot.lane.b32.xlu0 %v7832, 16
        %v7899 = vpop.permute.xlu0 %7898
        %7900 = vrot.lane.b32.xlu0 %v7833, 16
        %v7901 = vpop.permute.xlu0 %7900
        %7902 = vrot.lane.b32.xlu0 %v7834, 16
        %v7903 = vpop.permute.xlu0 %7902
        %7904 = vrot.lane.b32.xlu0 %v7835, 16
        %v7905 = vpop.permute.xlu0 %7904
        %7906 = vrot.lane.b32.xlu0 %v7836, 16
        %v7907 = vpop.permute.xlu0 %7906
        %7908 = vrot.lane.b32.xlu0 %v7837, 16
        %v7909 = vpop.permute.xlu0 %7908
        %7910 = vrot.lane.b32.xlu0 %v7838, 16
        %v7911 = vpop.permute.xlu0 %7910
        %7912 = vrot.lane.b32.xlu0 %v7839, 16
        %v7913 = vpop.permute.xlu0 %7912
        %7914 = vrot.lane.b32.xlu0 %v7840, 16
        %v7915 = vpop.permute.xlu0 %7914
        %7916 = vrot.lane.b32.xlu0 %v7841, 16
        %v7917 = vpop.permute.xlu0 %7916
        %7918 = vrot.lane.b32.xlu0 %v7842, 16
        %v7919 = vpop.permute.xlu0 %7918
        %7920 = vrot.lane.b32.xlu0 %v7843, 16
        %v7921 = vpop.permute.xlu0 %7920
        %7922 = vrot.lane.b32.xlu0 %v7844, 16
        %v7923 = vpop.permute.xlu0 %7922
        %7924 = vrot.lane.b32.xlu0 %v7845, 16
        %v7925 = vpop.permute.xlu0 %7924
        %7926 = vrot.lane.b32.xlu0 %v7846, 16
        %v7927 = vpop.permute.xlu0 %7926
        %7928 = vrot.lane.b32.xlu0 %v7847, 16
        %v7929 = vpop.permute.xlu0 %7928
        %7930 = vrot.lane.b32.xlu0 %v7848, 16
        %v7931 = vpop.permute.xlu0 %7930
        %7932 = vrot.lane.b32.xlu0 %v7849, 16
        %v7933 = vpop.permute.xlu0 %7932
        %7934 = vrot.lane.b32.xlu0 %v7850, 16
        %v7935 = vpop.permute.xlu0 %7934
        %7936 = vrot.lane.b32.xlu0 %v7851, 16
        %v7937 = vpop.permute.xlu0 %7936
        %7938 = vrot.lane.b32.xlu0 %v7852, 16
        %v7939 = vpop.permute.xlu0 %7938
        %7940 = vrot.lane.b32.xlu0 %v7853, 16
        %v7941 = vpop.permute.xlu0 %7940
        %7942 = vrot.lane.b32.xlu0 %v7854, 16
        %v7943 = vpop.permute.xlu0 %7942
        %7944 = vrot.lane.b32.xlu0 %v7855, 16
        %v7945 = vpop.permute.xlu0 %7944
        %7946 = vrot.lane.b32.xlu0 %v7856, 16
        %v7947 = vpop.permute.xlu0 %7946
        %7948 = vrot.lane.b32.xlu0 %v7857, 16
        %v7949 = vpop.permute.xlu0 %7948
        %7950 = vrot.lane.b32.xlu0 %v7858, 16
        %v7951 = vpop.permute.xlu0 %7950
        %7952 = vrot.lane.b32.xlu0 %v7859, 16
        %v7953 = vpop.permute.xlu0 %7952
        %7954 = vrot.lane.b32.xlu0 %v7860, 16
        %v7955 = vpop.permute.xlu0 %7954
        %7956 = vrot.lane.b32.xlu0 %v7861, 16
        %v7957 = vpop.permute.xlu0 %7956
        %7990 = vst.msk [vmem:[#allocation3] sm:$0xff] %vm1972, %v7895
        %7991 = vst.msk [vmem:[#allocation3 + $0x8] sm:$0xff] %vm1972, %v7897
        %7992 = vst.msk [vmem:[#allocation3 + $0x10] sm:$0xff] %vm1972, %v7899
        %7993 = vst.msk [vmem:[#allocation3 + $0x18] sm:$0xff] %vm1972, %v7901
        %7994 = vst.msk [vmem:[#allocation3 + $0x20] sm:$0xff] %vm1972, %v7903
        %7995 = vst.msk [vmem:[#allocation3 + $0x28] sm:$0xff] %vm1972, %v7905
        %7996 = vst.msk [vmem:[#allocation3 + $0x30] sm:$0xff] %vm1972, %v7907
        %7997 = vst.msk [vmem:[#allocation3 + $0x38] sm:$0xff] %vm1972, %v7909
        %7998 = vst.msk [vmem:[#allocation3 + $0x40] sm:$0xff] %vm1972, %v7911
        %7999 = vst.msk [vmem:[#allocation3 + $0x48] sm:$0xff] %vm1972, %v7913
        %8000 = vst.msk [vmem:[#allocation3 + $0x50] sm:$0xff] %vm1972, %v7915
        %8001 = vst.msk [vmem:[#allocation3 + $0x58] sm:$0xff] %vm1972, %v7917
        %8002 = vst.msk [vmem:[#allocation3 + $0x60] sm:$0xff] %vm1972, %v7919
        %8003 = vst.msk [vmem:[#allocation3 + $0x68] sm:$0xff] %vm1972, %v7921
        %8004 = vst.msk [vmem:[#allocation3 + $0x70] sm:$0xff] %vm1972, %v7923
        %8005 = vst.msk [vmem:[#allocation3 + $0x78] sm:$0xff] %vm1972, %v7925
        %8006 = vst.msk [vmem:[#allocation3 + $0x80] sm:$0xff] %vm1972, %v7927
        %8007 = vst.msk [vmem:[#allocation3 + $0x88] sm:$0xff] %vm1972, %v7929
        %8008 = vst.msk [vmem:[#allocation3 + $0x90] sm:$0xff] %vm1972, %v7931
        %8009 = vst.msk [vmem:[#allocation3 + $0x98] sm:$0xff] %vm1972, %v7933
        %8010 = vst.msk [vmem:[#allocation3 + $0xa0] sm:$0xff] %vm1972, %v7935
        %8011 = vst.msk [vmem:[#allocation3 + $0xa8] sm:$0xff] %vm1972, %v7937
        %8012 = vst.msk [vmem:[#allocation3 + $0xb0] sm:$0xff] %vm1972, %v7939
        %8013 = vst.msk [vmem:[#allocation3 + $0xb8] sm:$0xff] %vm1972, %v7941
        %8014 = vst.msk [vmem:[#allocation3 + $0xc0] sm:$0xff] %vm1972, %v7943
        %8015 = vst.msk [vmem:[#allocation3 + $0xc8] sm:$0xff] %vm1972, %v7945
        %8016 = vst.msk [vmem:[#allocation3 + $0xd0] sm:$0xff] %vm1972, %v7947
        %8017 = vst.msk [vmem:[#allocation3 + $0xd8] sm:$0xff] %vm1972, %v7949
        %8018 = vst.msk [vmem:[#allocation3 + $0xe0] sm:$0xff] %vm1972, %v7951
        %8019 = vst.msk [vmem:[#allocation3 + $0xe8] sm:$0xff] %vm1972, %v7953
        %8020 = vst.msk [vmem:[#allocation3 + $0xf0] sm:$0xff] %vm1972, %v7955
        %8021 = vst.msk [vmem:[#allocation3 + $0xf8] sm:$0xff] %vm1972, %v7957
        %v8022 = vld [vmem:[%s2394 + $0x2] sm:$0xff]
        %v8023 = vld [vmem:[%s2394 + $0xa] sm:$0xff]
        %v8024 = vld [vmem:[%s2394 + $0x1a] sm:$0xff]
        %v8025 = vld [vmem:[%s2394 + $0x22] sm:$0xff]
        %v8026 = vld [vmem:[%s2394 + $0x32] sm:$0xff]
        %v8027 = vld [vmem:[%s2394 + $0x3a] sm:$0xff]
        %v8028 = vld [vmem:[%s2394 + $0x4a] sm:$0xff]
        %v8029 = vld [vmem:[%s2394 + $0x52] sm:$0xff]
        %v8030 = vld [vmem:[%s2394 + $0x62] sm:$0xff]
        %v8031 = vld [vmem:[%s2394 + $0x6a] sm:$0xff]
        %v8032 = vld [vmem:[%s2394 + $0x7a] sm:$0xff]
        %v8033 = vld [vmem:[%s2394 + $0x82] sm:$0xff]
        %v8034 = vld [vmem:[%s2394 + $0x92] sm:$0xff]
        %v8035 = vld [vmem:[%s2394 + $0x9a] sm:$0xff]
        %v8036 = vld [vmem:[%s2394 + $0xaa] sm:$0xff]
        %v8037 = vld [vmem:[%s2394 + $0xb2] sm:$0xff]
        %v8038 = vld [vmem:[%s2394 + $0xc2] sm:$0xff]
        %v8039 = vld [vmem:[%s2394 + $0xca] sm:$0xff]
        %v8040 = vld [vmem:[%s2394 + $0xda] sm:$0xff]
        %v8041 = vld [vmem:[%s2394 + $0xe2] sm:$0xff]
        %v8042 = vld [vmem:[%s2394 + $0xf2] sm:$0xff]
        %v8043 = vld [vmem:[%s2394 + $0xfa] sm:$0xff]
        %v8044 = vld [vmem:[%s2394 + $0x10a] sm:$0xff]
        %v8045 = vld [vmem:[%s2394 + $0x112] sm:$0xff]
        %v8046 = vld [vmem:[%s2394 + $0x122] sm:$0xff]
        %v8047 = vld [vmem:[%s2394 + $0x12a] sm:$0xff]
        %v8048 = vld [vmem:[%s2394 + $0x13a] sm:$0xff]
        %v8049 = vld [vmem:[%s2394 + $0x142] sm:$0xff]
        %v8050 = vld [vmem:[%s2394 + $0x152] sm:$0xff]
        %v8051 = vld [vmem:[%s2394 + $0x15a] sm:$0xff]
        %v8052 = vld [vmem:[%s2394 + $0x16a] sm:$0xff]
        %v8053 = vld [vmem:[%s2394 + $0x172] sm:$0xff]
        %8086 = vrot.lane.b32.xlu0 %v8022, 20
        %v8087 = vpop.permute.xlu0 %8086
        %8088 = vrot.lane.b32.xlu0 %v8023, 20
        %v8089 = vpop.permute.xlu0 %8088
        %8090 = vrot.lane.b32.xlu0 %v8024, 20
        %v8091 = vpop.permute.xlu0 %8090
        %8092 = vrot.lane.b32.xlu0 %v8025, 20
        %v8093 = vpop.permute.xlu0 %8092
        %8094 = vrot.lane.b32.xlu0 %v8026, 20
        %v8095 = vpop.permute.xlu0 %8094
        %8096 = vrot.lane.b32.xlu0 %v8027, 20
        %v8097 = vpop.permute.xlu0 %8096
        %8098 = vrot.lane.b32.xlu0 %v8028, 20
        %v8099 = vpop.permute.xlu0 %8098
        %8100 = vrot.lane.b32.xlu0 %v8029, 20
        %v8101 = vpop.permute.xlu0 %8100
        %8102 = vrot.lane.b32.xlu0 %v8030, 20
        %v8103 = vpop.permute.xlu0 %8102
        %8104 = vrot.lane.b32.xlu0 %v8031, 20
        %v8105 = vpop.permute.xlu0 %8104
        %8106 = vrot.lane.b32.xlu0 %v8032, 20
        %v8107 = vpop.permute.xlu0 %8106
        %8108 = vrot.lane.b32.xlu0 %v8033, 20
        %v8109 = vpop.permute.xlu0 %8108
        %8110 = vrot.lane.b32.xlu0 %v8034, 20
        %v8111 = vpop.permute.xlu0 %8110
        %8112 = vrot.lane.b32.xlu0 %v8035, 20
        %v8113 = vpop.permute.xlu0 %8112
        %8114 = vrot.lane.b32.xlu0 %v8036, 20
        %v8115 = vpop.permute.xlu0 %8114
        %8116 = vrot.lane.b32.xlu0 %v8037, 20
        %v8117 = vpop.permute.xlu0 %8116
        %8118 = vrot.lane.b32.xlu0 %v8038, 20
        %v8119 = vpop.permute.xlu0 %8118
        %8120 = vrot.lane.b32.xlu0 %v8039, 20
        %v8121 = vpop.permute.xlu0 %8120
        %8122 = vrot.lane.b32.xlu0 %v8040, 20
        %v8123 = vpop.permute.xlu0 %8122
        %8124 = vrot.lane.b32.xlu0 %v8041, 20
        %v8125 = vpop.permute.xlu0 %8124
        %8126 = vrot.lane.b32.xlu0 %v8042, 20
        %v8127 = vpop.permute.xlu0 %8126
        %8128 = vrot.lane.b32.xlu0 %v8043, 20
        %v8129 = vpop.permute.xlu0 %8128
        %8130 = vrot.lane.b32.xlu0 %v8044, 20
        %v8131 = vpop.permute.xlu0 %8130
        %8132 = vrot.lane.b32.xlu0 %v8045, 20
        %v8133 = vpop.permute.xlu0 %8132
        %8134 = vrot.lane.b32.xlu0 %v8046, 20
        %v8135 = vpop.permute.xlu0 %8134
        %8136 = vrot.lane.b32.xlu0 %v8047, 20
        %v8137 = vpop.permute.xlu0 %8136
        %8138 = vrot.lane.b32.xlu0 %v8048, 20
        %v8139 = vpop.permute.xlu0 %8138
        %8140 = vrot.lane.b32.xlu0 %v8049, 20
        %v8141 = vpop.permute.xlu0 %8140
        %8142 = vrot.lane.b32.xlu0 %v8050, 20
        %v8143 = vpop.permute.xlu0 %8142
        %8144 = vrot.lane.b32.xlu0 %v8051, 20
        %v8145 = vpop.permute.xlu0 %8144
        %8146 = vrot.lane.b32.xlu0 %v8052, 20
        %v8147 = vpop.permute.xlu0 %8146
        %8148 = vrot.lane.b32.xlu0 %v8053, 20
        %v8149 = vpop.permute.xlu0 %8148
        %8182 = vst.msk [vmem:[#allocation3] sm:$0xff] %vm2165, %v8087
        %8183 = vst.msk [vmem:[#allocation3 + $0x8] sm:$0xff] %vm2165, %v8089
        %8184 = vst.msk [vmem:[#allocation3 + $0x10] sm:$0xff] %vm2165, %v8091
        %8185 = vst.msk [vmem:[#allocation3 + $0x18] sm:$0xff] %vm2165, %v8093
        %8186 = vst.msk [vmem:[#allocation3 + $0x20] sm:$0xff] %vm2165, %v8095
        %8187 = vst.msk [vmem:[#allocation3 + $0x28] sm:$0xff] %vm2165, %v8097
        %8188 = vst.msk [vmem:[#allocation3 + $0x30] sm:$0xff] %vm2165, %v8099
        %8189 = vst.msk [vmem:[#allocation3 + $0x38] sm:$0xff] %vm2165, %v8101
        %8190 = vst.msk [vmem:[#allocation3 + $0x40] sm:$0xff] %vm2165, %v8103
        %8191 = vst.msk [vmem:[#allocation3 + $0x48] sm:$0xff] %vm2165, %v8105
        %8192 = vst.msk [vmem:[#allocation3 + $0x50] sm:$0xff] %vm2165, %v8107
        %8193 = vst.msk [vmem:[#allocation3 + $0x58] sm:$0xff] %vm2165, %v8109
        %8194 = vst.msk [vmem:[#allocation3 + $0x60] sm:$0xff] %vm2165, %v8111
        %8195 = vst.msk [vmem:[#allocation3 + $0x68] sm:$0xff] %vm2165, %v8113
        %8196 = vst.msk [vmem:[#allocation3 + $0x70] sm:$0xff] %vm2165, %v8115
        %8197 = vst.msk [vmem:[#allocation3 + $0x78] sm:$0xff] %vm2165, %v8117
        %8198 = vst.msk [vmem:[#allocation3 + $0x80] sm:$0xff] %vm2165, %v8119
        %8199 = vst.msk [vmem:[#allocation3 + $0x88] sm:$0xff] %vm2165, %v8121
        %8200 = vst.msk [vmem:[#allocation3 + $0x90] sm:$0xff] %vm2165, %v8123
        %8201 = vst.msk [vmem:[#allocation3 + $0x98] sm:$0xff] %vm2165, %v8125
        %8202 = vst.msk [vmem:[#allocation3 + $0xa0] sm:$0xff] %vm2165, %v8127
        %8203 = vst.msk [vmem:[#allocation3 + $0xa8] sm:$0xff] %vm2165, %v8129
        %8204 = vst.msk [vmem:[#allocation3 + $0xb0] sm:$0xff] %vm2165, %v8131
        %8205 = vst.msk [vmem:[#allocation3 + $0xb8] sm:$0xff] %vm2165, %v8133
        %8206 = vst.msk [vmem:[#allocation3 + $0xc0] sm:$0xff] %vm2165, %v8135
        %8207 = vst.msk [vmem:[#allocation3 + $0xc8] sm:$0xff] %vm2165, %v8137
        %8208 = vst.msk [vmem:[#allocation3 + $0xd0] sm:$0xff] %vm2165, %v8139
        %8209 = vst.msk [vmem:[#allocation3 + $0xd8] sm:$0xff] %vm2165, %v8141
        %8210 = vst.msk [vmem:[#allocation3 + $0xe0] sm:$0xff] %vm2165, %v8143
        %8211 = vst.msk [vmem:[#allocation3 + $0xe8] sm:$0xff] %vm2165, %v8145
        %8212 = vst.msk [vmem:[#allocation3 + $0xf0] sm:$0xff] %vm2165, %v8147
        %8213 = vst.msk [vmem:[#allocation3 + $0xf8] sm:$0xff] %vm2165, %v8149
        %v8214 = vld [vmem:[%s6404 + $0x1] sm:$0xff]
        %v8215 = vld [vmem:[%s6404 + $0x9] sm:$0xff]
        %v8216 = vld [vmem:[%s6404 + $0x19] sm:$0xff]
        %v8217 = vld [vmem:[%s6404 + $0x21] sm:$0xff]
        %v8218 = vld [vmem:[%s6404 + $0x31] sm:$0xff]
        %v8219 = vld [vmem:[%s6404 + $0x39] sm:$0xff]
        %v8220 = vld [vmem:[%s6404 + $0x49] sm:$0xff]
        %v8221 = vld [vmem:[%s6404 + $0x51] sm:$0xff]
        %v8222 = vld [vmem:[%s6404 + $0x61] sm:$0xff]
        %v8223 = vld [vmem:[%s6404 + $0x69] sm:$0xff]
        %v8224 = vld [vmem:[%s6404 + $0x79] sm:$0xff]
        %v8225 = vld [vmem:[%s6404 + $0x81] sm:$0xff]
        %v8226 = vld [vmem:[%s6404 + $0x91] sm:$0xff]
        %v8227 = vld [vmem:[%s6404 + $0x99] sm:$0xff]
        %v8228 = vld [vmem:[%s6404 + $0xa9] sm:$0xff]
        %v8229 = vld [vmem:[%s6404 + $0xb1] sm:$0xff]
        %v8230 = vld [vmem:[%s6404 + $0xc1] sm:$0xff]
        %v8231 = vld [vmem:[%s6404 + $0xc9] sm:$0xff]
        %v8232 = vld [vmem:[%s6404 + $0xd9] sm:$0xff]
        %v8233 = vld [vmem:[%s6404 + $0xe1] sm:$0xff]
        %v8234 = vld [vmem:[%s6404 + $0xf1] sm:$0xff]
        %v8235 = vld [vmem:[%s6404 + $0xf9] sm:$0xff]
        %v8236 = vld [vmem:[%s6404 + $0x109] sm:$0xff]
        %v8237 = vld [vmem:[%s6404 + $0x111] sm:$0xff]
        %v8238 = vld [vmem:[%s6404 + $0x121] sm:$0xff]
        %v8239 = vld [vmem:[%s6404 + $0x129] sm:$0xff]
        %v8240 = vld [vmem:[%s6404 + $0x139] sm:$0xff]
        %v8241 = vld [vmem:[%s6404 + $0x141] sm:$0xff]
        %v8242 = vld [vmem:[%s6404 + $0x151] sm:$0xff]
        %v8243 = vld [vmem:[%s6404 + $0x159] sm:$0xff]
        %v8244 = vld [vmem:[%s6404 + $0x169] sm:$0xff]
        %v8245 = vld [vmem:[%s6404 + $0x171] sm:$0xff]
        %8278 = vrot.lane.b32.xlu0 %v8214, 24
        %v8279 = vpop.permute.xlu0 %8278
        %8280 = vrot.lane.b32.xlu0 %v8215, 24
        %v8281 = vpop.permute.xlu0 %8280
        %8282 = vrot.lane.b32.xlu0 %v8216, 24
        %v8283 = vpop.permute.xlu0 %8282
        %8284 = vrot.lane.b32.xlu0 %v8217, 24
        %v8285 = vpop.permute.xlu0 %8284
        %8286 = vrot.lane.b32.xlu0 %v8218, 24
        %v8287 = vpop.permute.xlu0 %8286
        %8288 = vrot.lane.b32.xlu0 %v8219, 24
        %v8289 = vpop.permute.xlu0 %8288
        %8290 = vrot.lane.b32.xlu0 %v8220, 24
        %v8291 = vpop.permute.xlu0 %8290
        %8292 = vrot.lane.b32.xlu0 %v8221, 24
        %v8293 = vpop.permute.xlu0 %8292
        %8294 = vrot.lane.b32.xlu0 %v8222, 24
        %v8295 = vpop.permute.xlu0 %8294
        %8296 = vrot.lane.b32.xlu0 %v8223, 24
        %v8297 = vpop.permute.xlu0 %8296
        %8298 = vrot.lane.b32.xlu0 %v8224, 24
        %v8299 = vpop.permute.xlu0 %8298
        %8300 = vrot.lane.b32.xlu0 %v8225, 24
        %v8301 = vpop.permute.xlu0 %8300
        %8302 = vrot.lane.b32.xlu0 %v8226, 24
        %v8303 = vpop.permute.xlu0 %8302
        %8304 = vrot.lane.b32.xlu0 %v8227, 24
        %v8305 = vpop.permute.xlu0 %8304
        %8306 = vrot.lane.b32.xlu0 %v8228, 24
        %v8307 = vpop.permute.xlu0 %8306
        %8308 = vrot.lane.b32.xlu0 %v8229, 24
        %v8309 = vpop.permute.xlu0 %8308
        %8310 = vrot.lane.b32.xlu0 %v8230, 24
        %v8311 = vpop.permute.xlu0 %8310
        %8312 = vrot.lane.b32.xlu0 %v8231, 24
        %v8313 = vpop.permute.xlu0 %8312
        %8314 = vrot.lane.b32.xlu0 %v8232, 24
        %v8315 = vpop.permute.xlu0 %8314
        %8316 = vrot.lane.b32.xlu0 %v8233, 24
        %v8317 = vpop.permute.xlu0 %8316
        %8318 = vrot.lane.b32.xlu0 %v8234, 24
        %v8319 = vpop.permute.xlu0 %8318
        %8320 = vrot.lane.b32.xlu0 %v8235, 24
        %v8321 = vpop.permute.xlu0 %8320
        %8322 = vrot.lane.b32.xlu0 %v8236, 24
        %v8323 = vpop.permute.xlu0 %8322
        %8324 = vrot.lane.b32.xlu0 %v8237, 24
        %v8325 = vpop.permute.xlu0 %8324
        %8326 = vrot.lane.b32.xlu0 %v8238, 24
        %v8327 = vpop.permute.xlu0 %8326
        %8328 = vrot.lane.b32.xlu0 %v8239, 24
        %v8329 = vpop.permute.xlu0 %8328
        %8330 = vrot.lane.b32.xlu0 %v8240, 24
        %v8331 = vpop.permute.xlu0 %8330
        %8332 = vrot.lane.b32.xlu0 %v8241, 24
        %v8333 = vpop.permute.xlu0 %8332
        %8334 = vrot.lane.b32.xlu0 %v8242, 24
        %v8335 = vpop.permute.xlu0 %8334
        %8336 = vrot.lane.b32.xlu0 %v8243, 24
        %v8337 = vpop.permute.xlu0 %8336
        %8338 = vrot.lane.b32.xlu0 %v8244, 24
        %v8339 = vpop.permute.xlu0 %8338
        %8340 = vrot.lane.b32.xlu0 %v8245, 24
        %v8341 = vpop.permute.xlu0 %8340
        %8374 = vst.msk [vmem:[#allocation3] sm:$0xff] %vm2360, %v8279
        %8375 = vst.msk [vmem:[#allocation3 + $0x8] sm:$0xff] %vm2360, %v8281
        %8376 = vst.msk [vmem:[#allocation3 + $0x10] sm:$0xff] %vm2360, %v8283
        %8377 = vst.msk [vmem:[#allocation3 + $0x18] sm:$0xff] %vm2360, %v8285
        %8378 = vst.msk [vmem:[#allocation3 + $0x20] sm:$0xff] %vm2360, %v8287
        %8379 = vst.msk [vmem:[#allocation3 + $0x28] sm:$0xff] %vm2360, %v8289
        %8380 = vst.msk [vmem:[#allocation3 + $0x30] sm:$0xff] %vm2360, %v8291
        %8381 = vst.msk [vmem:[#allocation3 + $0x38] sm:$0xff] %vm2360, %v8293
        %8382 = vst.msk [vmem:[#allocation3 + $0x40] sm:$0xff] %vm2360, %v8295
        %8383 = vst.msk [vmem:[#allocation3 + $0x48] sm:$0xff] %vm2360, %v8297
        %8384 = vst.msk [vmem:[#allocation3 + $0x50] sm:$0xff] %vm2360, %v8299
        %8385 = vst.msk [vmem:[#allocation3 + $0x58] sm:$0xff] %vm2360, %v8301
        %8386 = vst.msk [vmem:[#allocation3 + $0x60] sm:$0xff] %vm2360, %v8303
        %8387 = vst.msk [vmem:[#allocation3 + $0x68] sm:$0xff] %vm2360, %v8305
        %8388 = vst.msk [vmem:[#allocation3 + $0x70] sm:$0xff] %vm2360, %v8307
        %8389 = vst.msk [vmem:[#allocation3 + $0x78] sm:$0xff] %vm2360, %v8309
        %8390 = vst.msk [vmem:[#allocation3 + $0x80] sm:$0xff] %vm2360, %v8311
        %8391 = vst.msk [vmem:[#allocation3 + $0x88] sm:$0xff] %vm2360, %v8313
        %8392 = vst.msk [vmem:[#allocation3 + $0x90] sm:$0xff] %vm2360, %v8315
        %8393 = vst.msk [vmem:[#allocation3 + $0x98] sm:$0xff] %vm2360, %v8317
        %8394 = vst.msk [vmem:[#allocation3 + $0xa0] sm:$0xff] %vm2360, %v8319
        %8395 = vst.msk [vmem:[#allocation3 + $0xa8] sm:$0xff] %vm2360, %v8321
        %8396 = vst.msk [vmem:[#allocation3 + $0xb0] sm:$0xff] %vm2360, %v8323
        %8397 = vst.msk [vmem:[#allocation3 + $0xb8] sm:$0xff] %vm2360, %v8325
        %8398 = vst.msk [vmem:[#allocation3 + $0xc0] sm:$0xff] %vm2360, %v8327
        %8399 = vst.msk [vmem:[#allocation3 + $0xc8] sm:$0xff] %vm2360, %v8329
        %8400 = vst.msk [vmem:[#allocation3 + $0xd0] sm:$0xff] %vm2360, %v8331
        %8401 = vst.msk [vmem:[#allocation3 + $0xd8] sm:$0xff] %vm2360, %v8333
        %8402 = vst.msk [vmem:[#allocation3 + $0xe0] sm:$0xff] %vm2360, %v8335
        %8403 = vst.msk [vmem:[#allocation3 + $0xe8] sm:$0xff] %vm2360, %v8337
        %8404 = vst.msk [vmem:[#allocation3 + $0xf0] sm:$0xff] %vm2360, %v8339
        %8405 = vst.msk [vmem:[#allocation3 + $0xf8] sm:$0xff] %vm2360, %v8341
        %v8406 = vld [vmem:[%s6211 + $0x1] sm:$0xff]
        %v8407 = vld [vmem:[%s6211 + $0x9] sm:$0xff]
        %v8408 = vld [vmem:[%s6211 + $0x19] sm:$0xff]
        %v8409 = vld [vmem:[%s6211 + $0x21] sm:$0xff]
        %v8410 = vld [vmem:[%s6211 + $0x31] sm:$0xff]
        %v8411 = vld [vmem:[%s6211 + $0x39] sm:$0xff]
        %v8412 = vld [vmem:[%s6211 + $0x49] sm:$0xff]
        %v8413 = vld [vmem:[%s6211 + $0x51] sm:$0xff]
        %v8414 = vld [vmem:[%s6211 + $0x61] sm:$0xff]
        %v8415 = vld [vmem:[%s6211 + $0x69] sm:$0xff]
        %v8416 = vld [vmem:[%s6211 + $0x79] sm:$0xff]
        %v8417 = vld [vmem:[%s6211 + $0x81] sm:$0xff]
        %v8418 = vld [vmem:[%s6211 + $0x91] sm:$0xff]
        %v8419 = vld [vmem:[%s6211 + $0x99] sm:$0xff]
        %v8420 = vld [vmem:[%s6211 + $0xa9] sm:$0xff]
        %v8421 = vld [vmem:[%s6211 + $0xb1] sm:$0xff]
        %v8422 = vld [vmem:[%s6211 + $0xc1] sm:$0xff]
        %v8423 = vld [vmem:[%s6211 + $0xc9] sm:$0xff]
        %v8424 = vld [vmem:[%s6211 + $0xd9] sm:$0xff]
        %v8425 = vld [vmem:[%s6211 + $0xe1] sm:$0xff]
        %v8426 = vld [vmem:[%s6211 + $0xf1] sm:$0xff]
        %v8427 = vld [vmem:[%s6211 + $0xf9] sm:$0xff]
        %v8428 = vld [vmem:[%s6211 + $0x109] sm:$0xff]
        %v8429 = vld [vmem:[%s6211 + $0x111] sm:$0xff]
        %v8430 = vld [vmem:[%s6211 + $0x121] sm:$0xff]
        %v8431 = vld [vmem:[%s6211 + $0x129] sm:$0xff]
        %v8432 = vld [vmem:[%s6211 + $0x139] sm:$0xff]
        %v8433 = vld [vmem:[%s6211 + $0x141] sm:$0xff]
        %v8434 = vld [vmem:[%s6211 + $0x151] sm:$0xff]
        %v8435 = vld [vmem:[%s6211 + $0x159] sm:$0xff]
        %v8436 = vld [vmem:[%s6211 + $0x169] sm:$0xff]
        %v8437 = vld [vmem:[%s6211 + $0x171] sm:$0xff]
        %8470 = vrot.lane.b32.xlu0 %v8406, 28
        %v8471 = vpop.permute.xlu0 %8470
        %8472 = vrot.lane.b32.xlu0 %v8407, 28
        %v8473 = vpop.permute.xlu0 %8472
        %8474 = vrot.lane.b32.xlu0 %v8408, 28
        %v8475 = vpop.permute.xlu0 %8474
        %8476 = vrot.lane.b32.xlu0 %v8409, 28
        %v8477 = vpop.permute.xlu0 %8476
        %8478 = vrot.lane.b32.xlu0 %v8410, 28
        %v8479 = vpop.permute.xlu0 %8478
        %8480 = vrot.lane.b32.xlu0 %v8411, 28
        %v8481 = vpop.permute.xlu0 %8480
        %8482 = vrot.lane.b32.xlu0 %v8412, 28
        %v8483 = vpop.permute.xlu0 %8482
        %8484 = vrot.lane.b32.xlu0 %v8413, 28
        %v8485 = vpop.permute.xlu0 %8484
        %8486 = vrot.lane.b32.xlu0 %v8414, 28
        %v8487 = vpop.permute.xlu0 %8486
        %8488 = vrot.lane.b32.xlu0 %v8415, 28
        %v8489 = vpop.permute.xlu0 %8488
        %8490 = vrot.lane.b32.xlu0 %v8416, 28
        %v8491 = vpop.permute.xlu0 %8490
        %8492 = vrot.lane.b32.xlu0 %v8417, 28
        %v8493 = vpop.permute.xlu0 %8492
        %8494 = vrot.lane.b32.xlu0 %v8418, 28
        %v8495 = vpop.permute.xlu0 %8494
        %8496 = vrot.lane.b32.xlu0 %v8419, 28
        %v8497 = vpop.permute.xlu0 %8496
        %8498 = vrot.lane.b32.xlu0 %v8420, 28
        %v8499 = vpop.permute.xlu0 %8498
        %8500 = vrot.lane.b32.xlu0 %v8421, 28
        %v8501 = vpop.permute.xlu0 %8500
        %8502 = vrot.lane.b32.xlu0 %v8422, 28
        %v8503 = vpop.permute.xlu0 %8502
        %8504 = vrot.lane.b32.xlu0 %v8423, 28
        %v8505 = vpop.permute.xlu0 %8504
        %8506 = vrot.lane.b32.xlu0 %v8424, 28
        %v8507 = vpop.permute.xlu0 %8506
        %8508 = vrot.lane.b32.xlu0 %v8425, 28
        %v8509 = vpop.permute.xlu0 %8508
        %8510 = vrot.lane.b32.xlu0 %v8426, 28
        %v8511 = vpop.permute.xlu0 %8510
        %8512 = vrot.lane.b32.xlu0 %v8427, 28
        %v8513 = vpop.permute.xlu0 %8512
        %8514 = vrot.lane.b32.xlu0 %v8428, 28
        %v8515 = vpop.permute.xlu0 %8514
        %8516 = vrot.lane.b32.xlu0 %v8429, 28
        %v8517 = vpop.permute.xlu0 %8516
        %8518 = vrot.lane.b32.xlu0 %v8430, 28
        %v8519 = vpop.permute.xlu0 %8518
        %8520 = vrot.lane.b32.xlu0 %v8431, 28
        %v8521 = vpop.permute.xlu0 %8520
        %8522 = vrot.lane.b32.xlu0 %v8432, 28
        %v8523 = vpop.permute.xlu0 %8522
        %8524 = vrot.lane.b32.xlu0 %v8433, 28
        %v8525 = vpop.permute.xlu0 %8524
        %8526 = vrot.lane.b32.xlu0 %v8434, 28
        %v8527 = vpop.permute.xlu0 %8526
        %8528 = vrot.lane.b32.xlu0 %v8435, 28
        %v8529 = vpop.permute.xlu0 %8528
        %8530 = vrot.lane.b32.xlu0 %v8436, 28
        %v8531 = vpop.permute.xlu0 %8530
        %8532 = vrot.lane.b32.xlu0 %v8437, 28
        %v8533 = vpop.permute.xlu0 %8532
        %8566 = vst.msk [vmem:[#allocation3] sm:$0xff] %vm2555, %v8471
        %8567 = vst.msk [vmem:[#allocation3 + $0x8] sm:$0xff] %vm2555, %v8473
        %8568 = vst.msk [vmem:[#allocation3 + $0x10] sm:$0xff] %vm2555, %v8475
        %8569 = vst.msk [vmem:[#allocation3 + $0x18] sm:$0xff] %vm2555, %v8477
        %8570 = vst.msk [vmem:[#allocation3 + $0x20] sm:$0xff] %vm2555, %v8479
        %8571 = vst.msk [vmem:[#allocation3 + $0x28] sm:$0xff] %vm2555, %v8481
        %8572 = vst.msk [vmem:[#allocation3 + $0x30] sm:$0xff] %vm2555, %v8483
        %8573 = vst.msk [vmem:[#allocation3 + $0x38] sm:$0xff] %vm2555, %v8485
        %8574 = vst.msk [vmem:[#allocation3 + $0x40] sm:$0xff] %vm2555, %v8487
        %8575 = vst.msk [vmem:[#allocation3 + $0x48] sm:$0xff] %vm2555, %v8489
        %8576 = vst.msk [vmem:[#allocation3 + $0x50] sm:$0xff] %vm2555, %v8491
        %8577 = vst.msk [vmem:[#allocation3 + $0x58] sm:$0xff] %vm2555, %v8493
        %8578 = vst.msk [vmem:[#allocation3 + $0x60] sm:$0xff] %vm2555, %v8495
        %8579 = vst.msk [vmem:[#allocation3 + $0x68] sm:$0xff] %vm2555, %v8497
        %8580 = vst.msk [vmem:[#allocation3 + $0x70] sm:$0xff] %vm2555, %v8499
        %8581 = vst.msk [vmem:[#allocation3 + $0x78] sm:$0xff] %vm2555, %v8501
        %8582 = vst.msk [vmem:[#allocation3 + $0x80] sm:$0xff] %vm2555, %v8503
        %8583 = vst.msk [vmem:[#allocation3 + $0x88] sm:$0xff] %vm2555, %v8505
        %8584 = vst.msk [vmem:[#allocation3 + $0x90] sm:$0xff] %vm2555, %v8507
        %8585 = vst.msk [vmem:[#allocation3 + $0x98] sm:$0xff] %vm2555, %v8509
        %8586 = vst.msk [vmem:[#allocation3 + $0xa0] sm:$0xff] %vm2555, %v8511
        %8587 = vst.msk [vmem:[#allocation3 + $0xa8] sm:$0xff] %vm2555, %v8513
        %8588 = vst.msk [vmem:[#allocation3 + $0xb0] sm:$0xff] %vm2555, %v8515
        %8589 = vst.msk [vmem:[#allocation3 + $0xb8] sm:$0xff] %vm2555, %v8517
        %8590 = vst.msk [vmem:[#allocation3 + $0xc0] sm:$0xff] %vm2555, %v8519
        %8591 = vst.msk [vmem:[#allocation3 + $0xc8] sm:$0xff] %vm2555, %v8521
        %8592 = vst.msk [vmem:[#allocation3 + $0xd0] sm:$0xff] %vm2555, %v8523
        %8593 = vst.msk [vmem:[#allocation3 + $0xd8] sm:$0xff] %vm2555, %v8525
        %8594 = vst.msk [vmem:[#allocation3 + $0xe0] sm:$0xff] %vm2555, %v8527
        %8595 = vst.msk [vmem:[#allocation3 + $0xe8] sm:$0xff] %vm2555, %v8529
        %8596 = vst.msk [vmem:[#allocation3 + $0xf0] sm:$0xff] %vm2555, %v8531
        %8597 = vst.msk [vmem:[#allocation3 + $0xf8] sm:$0xff] %vm2555, %v8533
        %v8598 = vld [vmem:[%s6404 + $0x2] sm:$0xff]
        %v8599 = vld [vmem:[%s6404 + $0xa] sm:$0xff]
        %v8600 = vld [vmem:[%s6404 + $0x1a] sm:$0xff]
        %v8601 = vld [vmem:[%s6404 + $0x22] sm:$0xff]
        %v8602 = vld [vmem:[%s6404 + $0x32] sm:$0xff]
        %v8603 = vld [vmem:[%s6404 + $0x3a] sm:$0xff]
        %v8604 = vld [vmem:[%s6404 + $0x4a] sm:$0xff]
        %v8605 = vld [vmem:[%s6404 + $0x52] sm:$0xff]
        %v8606 = vld [vmem:[%s6404 + $0x62] sm:$0xff]
        %v8607 = vld [vmem:[%s6404 + $0x6a] sm:$0xff]
        %v8608 = vld [vmem:[%s6404 + $0x7a] sm:$0xff]
        %v8609 = vld [vmem:[%s6404 + $0x82] sm:$0xff]
        %v8610 = vld [vmem:[%s6404 + $0x92] sm:$0xff]
        %v8611 = vld [vmem:[%s6404 + $0x9a] sm:$0xff]
        %v8612 = vld [vmem:[%s6404 + $0xaa] sm:$0xff]
        %v8613 = vld [vmem:[%s6404 + $0xb2] sm:$0xff]
        %v8614 = vld [vmem:[%s6404 + $0xc2] sm:$0xff]
        %v8615 = vld [vmem:[%s6404 + $0xca] sm:$0xff]
        %v8616 = vld [vmem:[%s6404 + $0xda] sm:$0xff]
        %v8617 = vld [vmem:[%s6404 + $0xe2] sm:$0xff]
        %v8618 = vld [vmem:[%s6404 + $0xf2] sm:$0xff]
        %v8619 = vld [vmem:[%s6404 + $0xfa] sm:$0xff]
        %v8620 = vld [vmem:[%s6404 + $0x10a] sm:$0xff]
        %v8621 = vld [vmem:[%s6404 + $0x112] sm:$0xff]
        %v8622 = vld [vmem:[%s6404 + $0x122] sm:$0xff]
        %v8623 = vld [vmem:[%s6404 + $0x12a] sm:$0xff]
        %v8624 = vld [vmem:[%s6404 + $0x13a] sm:$0xff]
        %v8625 = vld [vmem:[%s6404 + $0x142] sm:$0xff]
        %v8626 = vld [vmem:[%s6404 + $0x152] sm:$0xff]
        %v8627 = vld [vmem:[%s6404 + $0x15a] sm:$0xff]
        %v8628 = vld [vmem:[%s6404 + $0x16a] sm:$0xff]
        %v8629 = vld [vmem:[%s6404 + $0x172] sm:$0xff]
        %8662 = vrot.lane.b32.xlu0 %v8598, 32
        %v8663 = vpop.permute.xlu0 %8662
        %8664 = vrot.lane.b32.xlu0 %v8599, 32
        %v8665 = vpop.permute.xlu0 %8664
        %8666 = vrot.lane.b32.xlu0 %v8600, 32
        %v8667 = vpop.permute.xlu0 %8666
        %8668 = vrot.lane.b32.xlu0 %v8601, 32
        %v8669 = vpop.permute.xlu0 %8668
        %8670 = vrot.lane.b32.xlu0 %v8602, 32
        %v8671 = vpop.permute.xlu0 %8670
        %8672 = vrot.lane.b32.xlu0 %v8603, 32
        %v8673 = vpop.permute.xlu0 %8672
        %8674 = vrot.lane.b32.xlu0 %v8604, 32
        %v8675 = vpop.permute.xlu0 %8674
        %8676 = vrot.lane.b32.xlu0 %v8605, 32
        %v8677 = vpop.permute.xlu0 %8676
        %8678 = vrot.lane.b32.xlu0 %v8606, 32
        %v8679 = vpop.permute.xlu0 %8678
        %8680 = vrot.lane.b32.xlu0 %v8607, 32
        %v8681 = vpop.permute.xlu0 %8680
        %8682 = vrot.lane.b32.xlu0 %v8608, 32
        %v8683 = vpop.permute.xlu0 %8682
        %8684 = vrot.lane.b32.xlu0 %v8609, 32
        %v8685 = vpop.permute.xlu0 %8684
        %8686 = vrot.lane.b32.xlu0 %v8610, 32
        %v8687 = vpop.permute.xlu0 %8686
        %8688 = vrot.lane.b32.xlu0 %v8611, 32
        %v8689 = vpop.permute.xlu0 %8688
        %8690 = vrot.lane.b32.xlu0 %v8612, 32
        %v8691 = vpop.permute.xlu0 %8690
        %8692 = vrot.lane.b32.xlu0 %v8613, 32
        %v8693 = vpop.permute.xlu0 %8692
        %8694 = vrot.lane.b32.xlu0 %v8614, 32
        %v8695 = vpop.permute.xlu0 %8694
        %8696 = vrot.lane.b32.xlu0 %v8615, 32
        %v8697 = vpop.permute.xlu0 %8696
        %8698 = vrot.lane.b32.xlu0 %v8616, 32
        %v8699 = vpop.permute.xlu0 %8698
        %8700 = vrot.lane.b32.xlu0 %v8617, 32
        %v8701 = vpop.permute.xlu0 %8700
        %8702 = vrot.lane.b32.xlu0 %v8618, 32
        %v8703 = vpop.permute.xlu0 %8702
        %8704 = vrot.lane.b32.xlu0 %v8619, 32
        %v8705 = vpop.permute.xlu0 %8704
        %8706 = vrot.lane.b32.xlu0 %v8620, 32
        %v8707 = vpop.permute.xlu0 %8706
        %8708 = vrot.lane.b32.xlu0 %v8621, 32
        %v8709 = vpop.permute.xlu0 %8708
        %8710 = vrot.lane.b32.xlu0 %v8622, 32
        %v8711 = vpop.permute.xlu0 %8710
        %8712 = vrot.lane.b32.xlu0 %v8623, 32
        %v8713 = vpop.permute.xlu0 %8712
        %8714 = vrot.lane.b32.xlu0 %v8624, 32
        %v8715 = vpop.permute.xlu0 %8714
        %8716 = vrot.lane.b32.xlu0 %v8625, 32
        %v8717 = vpop.permute.xlu0 %8716
        %8718 = vrot.lane.b32.xlu0 %v8626, 32
        %v8719 = vpop.permute.xlu0 %8718
        %8720 = vrot.lane.b32.xlu0 %v8627, 32
        %v8721 = vpop.permute.xlu0 %8720
        %8722 = vrot.lane.b32.xlu0 %v8628, 32
        %v8723 = vpop.permute.xlu0 %8722
        %8724 = vrot.lane.b32.xlu0 %v8629, 32
        %v8725 = vpop.permute.xlu0 %8724
        %8758 = vst.msk [vmem:[#allocation3] sm:$0xff] %vm2748, %v8663
        %8759 = vst.msk [vmem:[#allocation3 + $0x8] sm:$0xff] %vm2748, %v8665
        %8760 = vst.msk [vmem:[#allocation3 + $0x10] sm:$0xff] %vm2748, %v8667
        %8761 = vst.msk [vmem:[#allocation3 + $0x18] sm:$0xff] %vm2748, %v8669
        %8762 = vst.msk [vmem:[#allocation3 + $0x20] sm:$0xff] %vm2748, %v8671
        %8763 = vst.msk [vmem:[#allocation3 + $0x28] sm:$0xff] %vm2748, %v8673
        %8764 = vst.msk [vmem:[#allocation3 + $0x30] sm:$0xff] %vm2748, %v8675
        %8765 = vst.msk [vmem:[#allocation3 + $0x38] sm:$0xff] %vm2748, %v8677
        %8766 = vst.msk [vmem:[#allocation3 + $0x40] sm:$0xff] %vm2748, %v8679
        %8767 = vst.msk [vmem:[#allocation3 + $0x48] sm:$0xff] %vm2748, %v8681
        %8768 = vst.msk [vmem:[#allocation3 + $0x50] sm:$0xff] %vm2748, %v8683
        %8769 = vst.msk [vmem:[#allocation3 + $0x58] sm:$0xff] %vm2748, %v8685
        %8770 = vst.msk [vmem:[#allocation3 + $0x60] sm:$0xff] %vm2748, %v8687
        %8771 = vst.msk [vmem:[#allocation3 + $0x68] sm:$0xff] %vm2748, %v8689
        %8772 = vst.msk [vmem:[#allocation3 + $0x70] sm:$0xff] %vm2748, %v8691
        %8773 = vst.msk [vmem:[#allocation3 + $0x78] sm:$0xff] %vm2748, %v8693
        %8774 = vst.msk [vmem:[#allocation3 + $0x80] sm:$0xff] %vm2748, %v8695
        %8775 = vst.msk [vmem:[#allocation3 + $0x88] sm:$0xff] %vm2748, %v8697
        %8776 = vst.msk [vmem:[#allocation3 + $0x90] sm:$0xff] %vm2748, %v8699
        %8777 = vst.msk [vmem:[#allocation3 + $0x98] sm:$0xff] %vm2748, %v8701
        %8778 = vst.msk [vmem:[#allocation3 + $0xa0] sm:$0xff] %vm2748, %v8703
        %8779 = vst.msk [vmem:[#allocation3 + $0xa8] sm:$0xff] %vm2748, %v8705
        %8780 = vst.msk [vmem:[#allocation3 + $0xb0] sm:$0xff] %vm2748, %v8707
        %8781 = vst.msk [vmem:[#allocation3 + $0xb8] sm:$0xff] %vm2748, %v8709
        %8782 = vst.msk [vmem:[#allocation3 + $0xc0] sm:$0xff] %vm2748, %v8711
        %8783 = vst.msk [vmem:[#allocation3 + $0xc8] sm:$0xff] %vm2748, %v8713
        %8784 = vst.msk [vmem:[#allocation3 + $0xd0] sm:$0xff] %vm2748, %v8715
        %8785 = vst.msk [vmem:[#allocation3 + $0xd8] sm:$0xff] %vm2748, %v8717
        %8786 = vst.msk [vmem:[#allocation3 + $0xe0] sm:$0xff] %vm2748, %v8719
        %8787 = vst.msk [vmem:[#allocation3 + $0xe8] sm:$0xff] %vm2748, %v8721
        %8788 = vst.msk [vmem:[#allocation3 + $0xf0] sm:$0xff] %vm2748, %v8723
        %8789 = vst.msk [vmem:[#allocation3 + $0xf8] sm:$0xff] %vm2748, %v8725
        %v8790 = vld [vmem:[#allocation3] sm:$0xff]
        %v8791 = vld [vmem:[#allocation3 + $0x8] sm:$0xff]
        %v8792 = vld [vmem:[#allocation3 + $0x10] sm:$0xff]
        %v8793 = vld [vmem:[#allocation3 + $0x18] sm:$0xff]
        %v8794 = vld [vmem:[#allocation3 + $0x20] sm:$0xff]
        %v8795 = vld [vmem:[#allocation3 + $0x28] sm:$0xff]
        %v8796 = vld [vmem:[#allocation3 + $0x30] sm:$0xff]
        %v8797 = vld [vmem:[#allocation3 + $0x38] sm:$0xff]
        %v8798 = vld [vmem:[#allocation3 + $0x40] sm:$0xff]
        %v8799 = vld [vmem:[#allocation3 + $0x48] sm:$0xff]
        %v8800 = vld [vmem:[#allocation3 + $0x50] sm:$0xff]
        %v8801 = vld [vmem:[#allocation3 + $0x58] sm:$0xff]
        %v8802 = vld [vmem:[#allocation3 + $0x60] sm:$0xff]
        %v8803 = vld [vmem:[#allocation3 + $0x68] sm:$0xff]
        %v8804 = vld [vmem:[#allocation3 + $0x70] sm:$0xff]
        %v8805 = vld [vmem:[#allocation3 + $0x78] sm:$0xff]
        %v8806 = vld [vmem:[#allocation3 + $0x80] sm:$0xff]
        %v8807 = vld [vmem:[#allocation3 + $0x88] sm:$0xff]
        %v8808 = vld [vmem:[#allocation3 + $0x90] sm:$0xff]
        %v8809 = vld [vmem:[#allocation3 + $0x98] sm:$0xff]
        %v8810 = vld [vmem:[#allocation3 + $0xa0] sm:$0xff]
        %v8811 = vld [vmem:[#allocation3 + $0xa8] sm:$0xff]
        %v8812 = vld [vmem:[#allocation3 + $0xb0] sm:$0xff]
        %v8813 = vld [vmem:[#allocation3 + $0xb8] sm:$0xff]
        %v8814 = vld [vmem:[#allocation3 + $0xc0] sm:$0xff]
        %v8815 = vld [vmem:[#allocation3 + $0xc8] sm:$0xff]
        %v8816 = vld [vmem:[#allocation3 + $0xd0] sm:$0xff]
        %v8817 = vld [vmem:[#allocation3 + $0xd8] sm:$0xff]
        %v8818 = vld [vmem:[#allocation3 + $0xe0] sm:$0xff]
        %v8819 = vld [vmem:[#allocation3 + $0xe8] sm:$0xff]
        %v8820 = vld [vmem:[#allocation3 + $0xf0] sm:$0xff]
        %v8821 = vld [vmem:[#allocation3 + $0xf8] sm:$0xff]
        %v8822 = vld [vmem:[%s4] sm:$0xff]
        %v8823 = vld [vmem:[%s4 + $0x8] sm:$0xff]
        %v8824 = vld [vmem:[%s4 + $0x10] sm:$0xff]
        %v8825 = vld [vmem:[%s4 + $0x18] sm:$0xff]
        %v8826 = vld [vmem:[%s4 + $0x20] sm:$0xf]
        %v8827 = vld [vmem:[%s5] sm:$0x1]
        %v8829 = vlaneseq
        %v8830 = vshrl.u32 %v8829, 7
        %v8831 = vsub.s32 0, %v8830
        %v8832 = vrot.slane %v8827, %v8831
        %v8835 = vsel %vm2825, %v8790, 0
        %v8838 = vsel %vm2825, %v8791, 0
        %v8841 = vsel %vm2825, %v8792, 0
        %v8844 = vsel %vm2825, %v8793, 0
        %v8847 = vsel %vm2825, %v8794, 0
        %v8850 = vsel %vm2825, %v8795, 0
        %v8853 = vsel %vm2825, %v8796, 0
        %v8856 = vsel %vm2825, %v8797, 0
        %v8859 = vsel %vm2825, %v8798, 0
        %v8862 = vsel %vm2825, %v8799, 0
        %v8865 = vsel %vm2825, %v8800, 0
        %v8868 = vsel %vm2825, %v8801, 0
        %v8871 = vsel %vm2825, %v8802, 0
        %v8874 = vsel %vm2825, %v8803, 0
        %v8877 = vsel %vm2825, %v8804, 0
        %v8880 = vsel %vm2825, %v8805, 0
        %v8883 = vsel %vm2825, %v8806, 0
        %v8886 = vsel %vm2825, %v8807, 0
        %v8889 = vsel %vm2825, %v8808, 0
        %v8892 = vsel %vm2825, %v8809, 0
        %v8895 = vsel %vm2825, %v8810, 0
        %v8898 = vsel %vm2825, %v8811, 0
        %v8901 = vsel %vm2825, %v8812, 0
        %v8904 = vsel %vm2825, %v8813, 0
        %v8907 = vsel %vm2825, %v8814, 0
        %v8910 = vsel %vm2825, %v8815, 0
        %v8913 = vsel %vm2825, %v8816, 0
        %v8916 = vsel %vm2825, %v8817, 0
        %v8919 = vsel %vm2825, %v8818, 0
        %v8922 = vsel %vm2825, %v8819, 0
        %v8925 = vsel %vm2825, %v8820, 0
        %v8928 = vsel %vm2825, %v8821, 0
        %v8931 = vsel %vm2922, %v8826, 0
        %8933 = vmatprep.subr.mxu0 0.0
        %8934 = vmatpush1.msra.mxu0 %v8822
        %8935 = vmatprep.subr.mxu0 0.0
        %8936 = vmatpush1.msra.mxu0 %v8823
        %8937 = vmatprep.subr.mxu0 0.0
        %8938 = vmatpush1.msra.mxu0 %v8824
        %8939 = vmatprep.subr.mxu0 0.0
        %8940 = vmatpush1.msra.mxu0 %v8825
        %8941 = vmatprep.subr.mxu0 0.0
        %8942 = vmatpush1.msra.mxu0 %v8931
        %8943 = vmatprep.subr.mxu0 0.0
        %8944 = vmatpush1.msra.mxu0 0.0
        %8945 = vmatprep.subr.mxu0 0.0
        %8946 = vmatpush1.msra.mxu0 0.0
        %8947 = vmatprep.subr.mxu0 0.0
        %8948 = vmatpush1.msra.mxu0 0.0
        %8949 = vmatprep.subr.mxu0 0.0
        %8950 = vmatpush1.msra.mxu0 0.0
        %8951 = vmatprep.subr.mxu0 0.0
        %8952 = vmatpush1.msra.mxu0 0.0
        %8953 = vmatprep.subr.mxu0 0.0
        %8954 = vmatpush1.msra.mxu0 0.0
        %8955 = vmatprep.subr.mxu0 0.0
        %8956 = vmatpush1.msra.mxu0 0.0
        %8957 = vmatprep.subr.mxu0 0.0
        %8958 = vmatpush1.msra.mxu0 0.0
        %8959 = vmatprep.subr.mxu0 0.0
        %8960 = vmatpush1.msra.mxu0 0.0
        %8961 = vmatprep.subr.mxu0 0.0
        %8962 = vmatpush1.msra.mxu0 0.0
        %8963 = vmatprep.subr.mxu0 0.0
        %8964 = vmatpush1.msra.mxu0 0.0
        %8965 = vmatprep.subr.mxu0 0.0
        %8966 = vmatpush1.msra.mxu0 0.0
        %8967 = vmatprep.subr.mxu0 0.0
        %8968 = vmatpush1.msra.mxu0 0.0
        %8969 = vmatprep.subr.mxu0 0.0
        %8970 = vmatpush1.msra.mxu0 0.0
        %8971 = vmatprep.subr.mxu0 0.0
        %8972 = vmatpush1.msra.mxu0 0.0
        %8973 = vmatprep.subr.mxu0 0.0
        %8974 = vmatpush1.msra.mxu0 0.0
        %8975 = vmatprep.subr.mxu0 0.0
        %8976 = vmatpush1.msra.mxu0 0.0
        %8977 = vmatprep.subr.mxu0 0.0
        %8978 = vmatpush1.msra.mxu0 0.0
        %8979 = vmatprep.subr.mxu0 0.0
        %8980 = vmatpush1.msra.mxu0 0.0
        %8981 = vmatprep.subr.mxu0 0.0
        %8982 = vmatpush1.msra.mxu0 0.0
        %8983 = vmatprep.subr.mxu0 0.0
        %8984 = vmatpush1.msra.mxu0 0.0
        %8985 = vmatprep.subr.mxu0 0.0
        %8986 = vmatpush1.msra.mxu0 0.0
        %8987 = vmatprep.subr.mxu0 0.0
        %8988 = vmatpush1.msra.mxu0 0.0
        %8989 = vmatprep.subr.mxu0 0.0
        %8990 = vmatpush1.msra.mxu0 0.0
        %8991 = vmatprep.subr.mxu0 0.0
        %8992 = vmatpush1.msra.mxu0 0.0
        %8993 = vmatprep.subr.mxu0 0.0
        %8994 = vmatpush1.msra.mxu0 0.0
        %8995 = vmatprep.subr.mxu0 0.0
        %8996 = vmatpush1.msra.mxu0 0.0
        %8997 = vmatprep.mubr.f32.mxu0 0.0
        %8998 = vmatmul.mubr.f32.gmra.mrb[0].mxu0 %v8835
        %v8999 = vpop.f32.mrb[0].mxu0
        %v9000 = vadd.f32 %v8832, %v8999
        %v9001 = vpop.f32.mrb[0].mxu0
        %9002 = vmatprep.mubr.f32.mxu0 0.0
        %9003 = vmatmul.mubr.f32.gmra.mrb[0].mxu0 %v8838
        %v9004 = vpop.f32.mrb[0].mxu0
        %v9005 = vadd.f32 %v8832, %v9004
        %v9006 = vpop.f32.mrb[0].mxu0
        %9007 = vmatprep.mubr.f32.mxu0 0.0
        %9008 = vmatmul.mubr.f32.gmra.mrb[0].mxu0 %v8841
        %v9009 = vpop.f32.mrb[0].mxu0
        %v9010 = vadd.f32 %v8832, %v9009
        %v9011 = vpop.f32.mrb[0].mxu0
        %9012 = vmatprep.mubr.f32.mxu0 0.0
        %9013 = vmatmul.mubr.f32.gmra.mrb[0].mxu0 %v8844
        %v9014 = vpop.f32.mrb[0].mxu0
        %v9015 = vadd.f32 %v8832, %v9014
        %v9016 = vpop.f32.mrb[0].mxu0
        %9017 = vmatprep.mubr.f32.mxu0 0.0
        %9018 = vmatmul.mubr.f32.gmra.mrb[0].mxu0 %v8847
        %v9019 = vpop.f32.mrb[0].mxu0
        %v9020 = vadd.f32 %v8832, %v9019
        %v9021 = vpop.f32.mrb[0].mxu0
        %9022 = vmatprep.mubr.f32.mxu0 0.0
        %9023 = vmatmul.mubr.f32.gmra.mrb[0].mxu0 %v8850
        %v9024 = vpop.f32.mrb[0].mxu0
        %v9025 = vadd.f32 %v8832, %v9024
        %v9026 = vpop.f32.mrb[0].mxu0
        %9027 = vmatprep.mubr.f32.mxu0 0.0
        %9028 = vmatmul.mubr.f32.gmra.mrb[0].mxu0 %v8853
        %v9029 = vpop.f32.mrb[0].mxu0
        %v9030 = vadd.f32 %v8832, %v9029
        %v9031 = vpop.f32.mrb[0].mxu0
        %9032 = vmatprep.mubr.f32.mxu0 0.0
        %9033 = vmatmul.mubr.f32.gmra.mrb[0].mxu0 %v8856
        %v9034 = vpop.f32.mrb[0].mxu0
        %v9035 = vadd.f32 %v8832, %v9034
        %v9036 = vpop.f32.mrb[0].mxu0
        %9037 = vmatprep.mubr.f32.mxu0 0.0
        %9038 = vmatmul.mubr.f32.gmra.mrb[0].mxu0 %v8859
        %v9039 = vpop.f32.mrb[0].mxu0
        %v9040 = vadd.f32 %v8832, %v9039
        %v9041 = vpop.f32.mrb[0].mxu0
        %9042 = vmatprep.mubr.f32.mxu0 0.0
        %9043 = vmatmul.mubr.f32.gmra.mrb[0].mxu0 %v8862
        %v9044 = vpop.f32.mrb[0].mxu0
        %v9045 = vadd.f32 %v8832, %v9044
        %v9046 = vpop.f32.mrb[0].mxu0
        %9047 = vmatprep.mubr.f32.mxu0 0.0
        %9048 = vmatmul.mubr.f32.gmra.mrb[0].mxu0 %v8865
        %v9049 = vpop.f32.mrb[0].mxu0
        %v9050 = vadd.f32 %v8832, %v9049
        %v9051 = vpop.f32.mrb[0].mxu0
        %9052 = vmatprep.mubr.f32.mxu0 0.0
        %9053 = vmatmul.mubr.f32.gmra.mrb[0].mxu0 %v8868
        %v9054 = vpop.f32.mrb[0].mxu0
        %v9055 = vadd.f32 %v8832, %v9054
        %v9056 = vpop.f32.mrb[0].mxu0
        %9057 = vmatprep.mubr.f32.mxu0 0.0
        %9058 = vmatmul.mubr.f32.gmra.mrb[0].mxu0 %v8871
        %v9059 = vpop.f32.mrb[0].mxu0
        %v9060 = vadd.f32 %v8832, %v9059
        %v9061 = vpop.f32.mrb[0].mxu0
        %9062 = vmatprep.mubr.f32.mxu0 0.0
        %9063 = vmatmul.mubr.f32.gmra.mrb[0].mxu0 %v8874
        %v9064 = vpop.f32.mrb[0].mxu0
        %v9065 = vadd.f32 %v8832, %v9064
        %v9066 = vpop.f32.mrb[0].mxu0
        %9067 = vmatprep.mubr.f32.mxu0 0.0
        %9068 = vmatmul.mubr.f32.gmra.mrb[0].mxu0 %v8877
        %v9069 = vpop.f32.mrb[0].mxu0
        %v9070 = vadd.f32 %v8832, %v9069
        %v9071 = vpop.f32.mrb[0].mxu0
        %9072 = vmatprep.mubr.f32.mxu0 0.0
        %9073 = vmatmul.mubr.f32.gmra.mrb[0].mxu0 %v8880
        %v9074 = vpop.f32.mrb[0].mxu0
        %v9075 = vadd.f32 %v8832, %v9074
        %v9076 = vpop.f32.mrb[0].mxu0
        %9077 = vmatprep.mubr.f32.mxu0 0.0
        %9078 = vmatmul.mubr.f32.gmra.mrb[0].mxu0 %v8883
        %v9079 = vpop.f32.mrb[0].mxu0
        %v9080 = vadd.f32 %v8832, %v9079
        %v9081 = vpop.f32.mrb[0].mxu0
        %9082 = vmatprep.mubr.f32.mxu0 0.0
        %9083 = vmatmul.mubr.f32.gmra.mrb[0].mxu0 %v8886
        %v9084 = vpop.f32.mrb[0].mxu0
        %v9085 = vadd.f32 %v8832, %v9084
        %v9086 = vpop.f32.mrb[0].mxu0
        %9087 = vmatprep.mubr.f32.mxu0 0.0
        %9088 = vmatmul.mubr.f32.gmra.mrb[0].mxu0 %v8889
        %v9089 = vpop.f32.mrb[0].mxu0
        %v9090 = vadd.f32 %v8832, %v9089
        %v9091 = vpop.f32.mrb[0].mxu0
        %9092 = vmatprep.mubr.f32.mxu0 0.0
        %9093 = vmatmul.mubr.f32.gmra.mrb[0].mxu0 %v8892
        %v9094 = vpop.f32.mrb[0].mxu0
        %v9095 = vadd.f32 %v8832, %v9094
        %v9096 = vpop.f32.mrb[0].mxu0
        %9097 = vmatprep.mubr.f32.mxu0 0.0
        %9098 = vmatmul.mubr.f32.gmra.mrb[0].mxu0 %v8895
        %v9099 = vpop.f32.mrb[0].mxu0
        %v9100 = vadd.f32 %v8832, %v9099
        %v9101 = vpop.f32.mrb[0].mxu0
        %9102 = vmatprep.mubr.f32.mxu0 0.0
        %9103 = vmatmul.mubr.f32.gmra.mrb[0].mxu0 %v8898
        %v9104 = vpop.f32.mrb[0].mxu0
        %v9105 = vadd.f32 %v8832, %v9104
        %v9106 = vpop.f32.mrb[0].mxu0
        %9107 = vmatprep.mubr.f32.mxu0 0.0
        %9108 = vmatmul.mubr.f32.gmra.mrb[0].mxu0 %v8901
        %v9109 = vpop.f32.mrb[0].mxu0
        %v9110 = vadd.f32 %v8832, %v9109
        %v9111 = vpop.f32.mrb[0].mxu0
        %9112 = vmatprep.mubr.f32.mxu0 0.0
        %9113 = vmatmul.mubr.f32.gmra.mrb[0].mxu0 %v8904
        %v9114 = vpop.f32.mrb[0].mxu0
        %v9115 = vadd.f32 %v8832, %v9114
        %v9116 = vpop.f32.mrb[0].mxu0
        %9117 = vmatprep.mubr.f32.mxu0 0.0
        %9118 = vmatmul.mubr.f32.gmra.mrb[0].mxu0 %v8907
        %v9119 = vpop.f32.mrb[0].mxu0
        %v9120 = vadd.f32 %v8832, %v9119
        %v9121 = vpop.f32.mrb[0].mxu0
        %9122 = vmatprep.mubr.f32.mxu0 0.0
        %9123 = vmatmul.mubr.f32.gmra.mrb[0].mxu0 %v8910
        %v9124 = vpop.f32.mrb[0].mxu0
        %v9125 = vadd.f32 %v8832, %v9124
        %v9126 = vpop.f32.mrb[0].mxu0
        %9127 = vmatprep.mubr.f32.mxu0 0.0
        %9128 = vmatmul.mubr.f32.gmra.mrb[0].mxu0 %v8913
        %v9129 = vpop.f32.mrb[0].mxu0
        %v9130 = vadd.f32 %v8832, %v9129
        %v9131 = vpop.f32.mrb[0].mxu0
        %9132 = vmatprep.mubr.f32.mxu0 0.0
        %9133 = vmatmul.mubr.f32.gmra.mrb[0].mxu0 %v8916
        %v9134 = vpop.f32.mrb[0].mxu0
        %v9135 = vadd.f32 %v8832, %v9134
        %v9136 = vpop.f32.mrb[0].mxu0
        %9137 = vmatprep.mubr.f32.mxu0 0.0
        %9138 = vmatmul.mubr.f32.gmra.mrb[0].mxu0 %v8919
        %v9139 = vpop.f32.mrb[0].mxu0
        %v9140 = vadd.f32 %v8832, %v9139
        %v9141 = vpop.f32.mrb[0].mxu0
        %9142 = vmatprep.mubr.f32.mxu0 0.0
        %9143 = vmatmul.mubr.f32.gmra.mrb[0].mxu0 %v8922
        %v9144 = vpop.f32.mrb[0].mxu0
        %v9145 = vadd.f32 %v8832, %v9144
        %v9146 = vpop.f32.mrb[0].mxu0
        %9147 = vmatprep.mubr.f32.mxu0 0.0
        %9148 = vmatmul.mubr.f32.gmra.mrb[0].mxu0 %v8925
        %v9149 = vpop.f32.mrb[0].mxu0
        %v9150 = vadd.f32 %v8832, %v9149
        %v9151 = vpop.f32.mrb[0].mxu0
        %9152 = vmatprep.mubr.f32.mxu0 0.0
        %9153 = vmatmul.mubr.f32.gmra.mrb[0].mxu0 %v8928
        %v9154 = vpop.f32.mrb[0].mxu0
        %v9155 = vadd.f32 %v8832, %v9154
        %v9156 = vpop.f32.mrb[0].mxu0
        %9157 = vdwg.mxu0
        %s9158 = scalar_lea.vmem %s273, 768 [#allocation4]
        %9159 = vst [vmem:[%s9158] sm:$0xff] %v9000
        %9160 = vst [vmem:[%s9158 + $0x8] sm:$0xff] %v9005
        %9161 = vst [vmem:[%s9158 + $0x10] sm:$0xff] %v9010
        %9162 = vst [vmem:[%s9158 + $0x18] sm:$0xff] %v9015
        %9163 = vst [vmem:[%s9158 + $0x20] sm:$0xff] %v9020
        %9164 = vst [vmem:[%s9158 + $0x28] sm:$0xff] %v9025
        %9165 = vst [vmem:[%s9158 + $0x30] sm:$0xff] %v9030
        %9166 = vst [vmem:[%s9158 + $0x38] sm:$0xff] %v9035
        %9167 = vst [vmem:[%s9158 + $0x40] sm:$0xff] %v9040
        %9168 = vst [vmem:[%s9158 + $0x48] sm:$0xff] %v9045
        %9169 = vst [vmem:[%s9158 + $0x50] sm:$0xff] %v9050
        %9170 = vst [vmem:[%s9158 + $0x58] sm:$0xff] %v9055
        %9171 = vst [vmem:[%s9158 + $0x60] sm:$0xff] %v9060
        %9172 = vst [vmem:[%s9158 + $0x68] sm:$0xff] %v9065
        %9173 = vst [vmem:[%s9158 + $0x70] sm:$0xff] %v9070
        %9174 = vst [vmem:[%s9158 + $0x78] sm:$0xff] %v9075
        %9175 = vst [vmem:[%s9158 + $0x80] sm:$0xff] %v9080
        %9176 = vst [vmem:[%s9158 + $0x88] sm:$0xff] %v9085
        %9177 = vst [vmem:[%s9158 + $0x90] sm:$0xff] %v9090
        %9178 = vst [vmem:[%s9158 + $0x98] sm:$0xff] %v9095
        %9179 = vst [vmem:[%s9158 + $0xa0] sm:$0xff] %v9100
        %9180 = vst [vmem:[%s9158 + $0xa8] sm:$0xff] %v9105
        %9181 = vst [vmem:[%s9158 + $0xb0] sm:$0xff] %v9110
        %9182 = vst [vmem:[%s9158 + $0xb8] sm:$0xff] %v9115
        %9183 = vst [vmem:[%s9158 + $0xc0] sm:$0xff] %v9120
        %9184 = vst [vmem:[%s9158 + $0xc8] sm:$0xff] %v9125
        %9185 = vst [vmem:[%s9158 + $0xd0] sm:$0xff] %v9130
        %9186 = vst [vmem:[%s9158 + $0xd8] sm:$0xff] %v9135
        %9187 = vst [vmem:[%s9158 + $0xe0] sm:$0xff] %v9140
        %9188 = vst [vmem:[%s9158 + $0xe8] sm:$0xff] %v9145
        %9189 = vst [vmem:[%s9158 + $0xf0] sm:$0xff] %v9150
        %9190 = vst [vmem:[%s9158 + $0xf8] sm:$0xff] %v9155
        %s9191 = sand.u32 %s178, 1
        %s9192 = scalar_lea.sflag [#allocation5], %s9191
        %s9193 = sand.u32 %s178, 1
        %s9194 = smul.addr %s9193, 1024
        %s9195 = scalar_lea.vmem [#allocation4], %s9194
        // Predicated region
        $region49: #{tpu_custom_call.1} parent=43 // pred_check
          %p9196 = pneg %p188
        $region50: #{tpu_custom_call.1} parent=43 // pred_check_branch
          %9198 = sbr.rel (%p9196) target = $region52
        $region51: #{tpu_custom_call.1} parent=43 // pred_region
          %s9199 = smul.u32 32, %s25
          %s9201 = ssub.s32 16384, 16384
          %9202 = vsyncadd %s9192, %s9201
          %s9203 = smul.addr %s24, 128
          %s9204 = sadd.s32 %s9199, %s9203
          %s9205 = smul.addr %s9204, 128
          %s9206 = scalar_lea.hbm %s6, %s9205
          %s9207 = sshll.u32 %s9195, 4
          %s9208 = int_to_ptr.vmem [resolvable:$true] %s9207
          %9213 = dma.vmem_to_hbm [thread:$0]  %s9208, 16384, %s9206, %s9192, 128, 128, 8
        $region52: #{tpu_custom_call.1} parent=43 // pred_fallthru
          _
      $region44: #{tpu_custom_call.1} parent=5 // pred_fallthru
        _
      %p9214 = scmp.le.s32.totalorder 2, %s15
      // Predicated region
      $region53: #{tpu_custom_call.1} parent=5 // pred_check
        %p9215 = pneg %p9214
      $region54: #{tpu_custom_call.1} parent=5 // pred_check_branch
        %9217 = sbr.rel (%p9215) target = $region56
      $region55: #{tpu_custom_call.1} parent=5 // pred_region
        %s9218 = ssub.s32 %s15, 2
        // Predicated region
        $region57: #{tpu_custom_call.1} parent=55 // pred_check
          %p9219 = pneg %p194
        $region58: #{tpu_custom_call.1} parent=55 // pred_check_branch
          %9221 = sbr.rel (%p9219) target = $region60
        $region59: #{tpu_custom_call.1} parent=55 // pred_region
          %s9222 = sand.u32 %s179, 1
          %s9223 = scalar_lea.sflag [#allocation5], %s9222
          %s9224 = sand.u32 %s179, 1
          %s9225 = smul.addr %s9224, 1024
          %s9226 = scalar_lea.vmem [#allocation4], %s9225
          %9227 = dma.done %s9223, 16384
        $region60: #{tpu_custom_call.1} parent=55 // pred_fallthru
          _
      $region56: #{tpu_custom_call.1} parent=5 // pred_fallthru
        _
    $region6: #{tpu_custom_call.1} parent=1 // loop_footer
      %s19 = sadd.s32 1, %s15
    $region7: #{tpu_custom_call.1} parent=1 // loop_footer_branch
      %14 = sbr.rel target = $region3
    $region8: #{tpu_custom_call.1} parent=1 // loop_exit
      _
    %9228 = vsyncpa [#allocation5], 1
    %s9229 = scalar_lea.sflag [#allocation5], 1
    %9230 = vsyncpa %s9229, 1

</llo_original>
